<compile_context>
chip_gen: v6e
topology: v6e:2x2x1
jax: 0.10.0
libtpu: 0.0.40
codegen_flags: <defaults>
</compile_context>

<pallas_src>
import functools

import numpy as np
import jax
import jax.numpy as jnp
from jax import lax
from jax.experimental import pallas as pl
from jax.experimental.pallas import tpu as pltpu


# ------------------------------------------------------------------ config ---
NUM_ROUTINGS = 3      # args.num_routings
NUM_STAINS   = 3      # args.num_stains
NUM_GROUPS   = 4      # args.num_groups
GROUP_WIDTH  = 8      # args.group_width
NUM_CLASSES  = 4
C_IN         = 3      # RGB input
OUT_PACK     = 8      # packed SSC output rows: [0:S) lengths, [S:S+C_IN) recon
CONV_OUT     = 64     # conv0 output channels (DenseNet stem)
TP_MAX       = 4096   # SSC pixel tile (lanes)
TR_MAX       = 512    # conv0 row tile (sublanes)
VMEM_LIMIT   = 32 * 1024 * 1024   # safe on v5e/v6e/v7x (v7x has 64 MiB total)


def _round_up(x, m):
    return ((x + m - 1) // m) * m


# --------------------------------------------------------- selector packing ---
def make_ssc_constants(w_prim_t, w_rec):
    """Constant 0/1 selectors (transposed / lane-dense orientation: they are
    applied from the left onto (rows, TP) state) packed into two slabs whose
    internal row boundaries are all multiples of 8."""
    S, G, D = NUM_STAINS, NUM_GROUPS, GROUP_WIDTH
    SG, SD, SGD = S * G, S * D, S * G * D

    sgd = np.arange(SGD)
    s_sgd, g_sgd, d_sgd = sgd // (G * D), (sgd // D) % G, sgd % D
    sg = np.arange(SG)
    s_sg, g_sg = sg // G, sg % G
    sd = np.arange(SD)
    s_sd, d_sd = sd // D, sd % D

    # softmax normalizer: sum over stains within each group
    m_group = (g_sg[:, None] == g_sg[None, :]).astype(np.float32)               # (SG,SG)
    # expand per-(s,g) coupling coefficient over the D capsule lanes
    m_cexp = ((s_sgd[:, None] == s_sg[None, :]) &
              (g_sgd[:, None] == g_sg[None, :])).astype(np.float32)             # (SGD,SG)
    # sum predictions over groups -> per-stain capsule vector
    m_gsum = ((s_sd[:, None] == s_sgd[None, :]) &
              (d_sd[:, None] == d_sgd[None, :])).astype(np.float32)             # (SD,SGD)
    # reduce over D for the b-update dot(u, v)
    m_dred = np.ascontiguousarray(m_cexp.T)                                     # (SG,SGD)
    # per-stain squared-norm broadcast back over D (squash)
    m_stain = (s_sd[:, None] == s_sd[None, :]).astype(np.float32)               # (SD,SD)
    # expand v over groups for the b update
    m_gexp = np.ascontiguousarray(m_gsum.T)                                     # (SGD,SD)
    # capsule lengths into packed-output rows [0:S)
    m_len = np.zeros((OUT_PACK, SD), np.float32)
    m_len[s_sd, np.arange(SD)] = 1.0                                            # (8,SD)

    # reconstruction weights into packed-output rows [S, S+C_IN)
    w_rec_pack = jnp.zeros((OUT_PACK, SD), jnp.float32).at[S:S + C_IN, :].set(w_rec.T)

    slab96 = jnp.asarray(np.concatenate([m_gsum, m_dred], axis=0))              # (36, SGD)
    slab24 = jnp.concatenate([jnp.asarray(m_stain), jnp.asarray(m_gexp),
                              jnp.asarray(m_len), w_rec_pack], axis=0)          # (136, SD)
    return (w_prim_t, jnp.asarray(m_group), jnp.asarray(m_cexp), slab96, slab24)


# --------------------------------------------------------------- SSC kernel ---
def ssc_kernel(x_ref, wprim_ref, mgroup_ref, mcexp_ref, slab96_ref, slab24_ref,
               out_ref, *, routing_iter):
    """Per-pixel stain capsule with dynamic routing, pixels on lanes.

    x_ref:   (C_IN, TP)      pixel colors (channel-major)
    out_ref: (OUT_PACK, TP)  rows [0:S) = capsule lengths, [S:S+C_IN) = recon
    """
    S, G, D = NUM_STAINS, NUM_GROUPS, GROUP_WIDTH
    SG, SD, SGD = S * G, S * D, S * G * D

    x = x_ref[...]                                                        # (Cin, TP)
    # prediction vectors for all (stain, group, d) in one MXU matmul
    u = jnp.dot(wprim_ref[...], x, preferred_element_type=jnp.float32)   # (SGD, TP)

    # unpack constant slabs (static, 8-aligned row slices)
    m_gsum = slab96_ref[0:SD, :]                                          # (SD, SGD)
    m_dred = slab96_ref[SD:SD + SG, :]                                    # (SG, SGD)
    m_stain = slab24_ref[0:SD, :]                                         # (SD, SD)
    m_gexp = slab24_ref[SD:SD + SGD, :]                                   # (SGD, SD)
    m_len = slab24_ref[SD + SGD:SD + SGD + OUT_PACK, :]                   # (8, SD)
    w_rec = slab24_ref[SD + SGD + OUT_PACK:SD + SGD + 2 * OUT_PACK, :]    # (8, SD)

    b = None
    v = None
    for it in range(routing_iter):
        if it == 0:
            # b == 0  =>  coupling coefficient is the constant 1/S: skip the
            # softmax (max/exp/reciprocal + 2 selector matmuls) entirely.
            s_vec = jnp.dot(m_gsum, u, preferred_element_type=jnp.float32) * (1.0 / S)
        else:
            # softmax over stains within each group (global-max shift is valid
            # per group since it is a per-pixel constant)
            m = jnp.max(b, axis=0, keepdims=True)                         # (1, TP)
            e = jnp.exp(b - m)                                            # (SG, TP)
            z = jnp.dot(mgroup_ref[...], e, preferred_element_type=jnp.float32)
            c = e * pl.reciprocal(jnp.maximum(z, 1e-30))                  # exact recip
            c_exp = jnp.dot(mcexp_ref[...], c, preferred_element_type=jnp.float32)
            s_vec = jnp.dot(m_gsum, c_exp * u, preferred_element_type=jnp.float32)
        # squash
        sq = jnp.dot(m_stain, s_vec * s_vec, preferred_element_type=jnp.float32)
        scale = sq / (1.0 + sq) * lax.rsqrt(sq + 1e-8)
        v = scale * s_vec                                                 # (SD, TP)
        # routing-logit update (skipped after final iteration)
        if it + 1 < routing_iter:
            v_exp = jnp.dot(m_gexp, v, preferred_element_type=jnp.float32)
            db = jnp.dot(m_dred, u * v_exp, preferred_element_type=jnp.float32)
            b = db if b is None else b + db

    # packed output: capsule lengths in rows [0:S), reconstruction in [S:S+Cin)
    lengths = jnp.sqrt(jnp.dot(m_len, v * v, preferred_element_type=jnp.float32))
    recon = jnp.dot(w_rec, v, preferred_element_type=jnp.float32)
    out_ref[...] = lengths + recon                                        # (8, TP)


def ssc_forward(x_ncp, consts, *, routing_iter, tp_max=TP_MAX):
    """x_ncp: (N, C_IN, P) channel-major pixels -> packed (N, OUT_PACK, P)."""
    N, C, P = x_ncp.shape
    tp = min(tp_max, _round_up(P, 128))
    Pp = _round_up(P, tp)
    if Pp != P:
        x_ncp = jnp.pad(x_ncp, ((0, 0), (0, 0), (0, Pp - P)))
    const_specs = [pl.BlockSpec(c.shape, lambda n, t: (0, 0)) for c in consts]
    packed = pl.pallas_call(
        functools.partial(ssc_kernel, routing_iter=routing_iter),
        out_shape=jax.ShapeDtypeStruct((N, OUT_PACK, Pp), jnp.float32),
        grid=(N, Pp // tp),
        in_specs=[pl.BlockSpec((None, C, tp), lambda n, t: (n, 0, t))] + const_specs,
        out_specs=pl.BlockSpec((None, OUT_PACK, tp), lambda n, t: (n, 0, t)),
        compiler_params=pltpu.CompilerParams(
            dimension_semantics=("parallel", "parallel"),
            vmem_limit_bytes=VMEM_LIMIT),
    )(x_ncp, *consts)
    return packed[:, :, :P]


# --------------------------------------------------------------- app kernel ---
def app_kernel(patch_ref, w0_ref, wcls_ref, bcls_ref, out_ref, acc_ref, *, inv_hw):
    """conv0 (im2col matmul, bf16 x bf16 -> f32) + ReLU + streaming GAP +
    linear classifier.  Grid = (sample, row-tile); the row-tile axis reduces
    into the per-sample (8, 64) accumulator scratch."""
    r = pl.program_id(1)

    @pl.when(r == 0)
    def _init():
        acc_ref[...] = jnp.zeros_like(acc_ref)

    feat = jnp.dot(patch_ref[...], w0_ref[...],
                   preferred_element_type=jnp.float32)            # (TR, 64)
    feat = jnp.maximum(feat, 0.0)                                 # ReLU
    # sublane-preserving partial sum: (TR,64) -> (TR/8, 8, 64) -> sum leading axis
    acc_ref[...] += jnp.sum(feat.reshape(-1, 8, CONV_OUT), axis=0)

    @pl.when(r == pl.num_programs(1) - 1)
    def _finalize():
        # NOTE: zero-padded patch rows contribute 0 because conv0 has no bias.
        pooled = jnp.sum(acc_ref[...], axis=0, keepdims=True) * inv_hw    # (1, 64)
        logits = jnp.dot(pooled, wcls_ref[...],
                         preferred_element_type=jnp.float32) + bcls_ref[...]
        out_ref[...] = jnp.zeros((8, NUM_CLASSES), jnp.float32) + logits  # (8, NC)


def app_forward(patches, w0, w_cls, b_cls, *, hw_true, tr):
    N, HWp, K = patches.shape
    R = HWp // tr
    out = pl.pallas_call(
        functools.partial(app_kernel, inv_hw=1.0 / float(hw_true)),
        out_shape=jax.ShapeDtypeStruct((N, 8, NUM_CLASSES), jnp.float32),
        grid=(N, R),
        in_specs=[pl.BlockSpec((None, tr, K), lambda n, r: (n, r, 0)),
                  pl.BlockSpec((K, CONV_OUT), lambda n, r: (0, 0)),
                  pl.BlockSpec((CONV_OUT, NUM_CLASSES), lambda n, r: (0, 0)),
                  pl.BlockSpec((1, NUM_CLASSES), lambda n, r: (0, 0))],
        out_specs=pl.BlockSpec((None, 8, NUM_CLASSES), lambda n, r: (n, 0, 0)),
        scratch_shapes=[pltpu.VMEM((8, CONV_OUT), jnp.float32)],
        compiler_params=pltpu.CompilerParams(
            dimension_semantics=("parallel", "arbitrary"),
            vmem_limit_bytes=VMEM_LIMIT),
    )(patches, w0, w_cls, b_cls)
    return out[:, 0, :]


# ---------------------------------------------------------------- JAX glue ---
def im2col_nchw_7x7_s2_p3(x_nchw):
    """x: (N,C,H,W) -> patches (N, Ho*Wo, C*7*7), feature order (c, kh, kw)."""
    N, C, H, W = x_nchw.shape
    k, s, p = 7, 2, 3
    Ho = (H + 2 * p - k) // s + 1
    Wo = (W + 2 * p - k) // s + 1
    xp = jnp.pad(x_nchw, ((0, 0), (0, 0), (p, p), (p, p)))
    taps = [xp[:, :, kh:kh + s * Ho:s, kw:kw + s * Wo:s]
            for kh in range(k) for kw in range(k)]                # each (N,C,Ho,Wo)
    pat = jnp.stack(taps, axis=2)                                 # (N,C,49,Ho,Wo)
    pat = jnp.transpose(pat, (0, 3, 4, 1, 2))                     # (N,Ho,Wo,C,49)
    return pat.reshape(N, Ho * Wo, C * k * k), Ho, Wo


def init_params(key):
    ks = jax.random.split(key, 4)
    S, G, D, Cin = NUM_STAINS, NUM_GROUPS, GROUP_WIDTH, C_IN
    SGD, SD = S * G * D, S * D
    # capsule primary / reconstruction weights (lane-dense orientation)
    w_prim_t = jax.random.normal(ks[0], (SGD, Cin), jnp.float32) * (2.0 / Cin) ** 0.5
    w_rec = jax.random.normal(ks[1], (SD, Cin), jnp.float32) * (2.0 / SD) ** 0.5
    ssc_consts = make_ssc_constants(w_prim_t, w_rec)
    # conv0: torch weight (64, num_stains, 7, 7), no bias -> (c, kh, kw) rows
    fan_in = S * 7 * 7
    w_t = jax.random.normal(ks[2], (CONV_OUT, S, 7, 7), jnp.float32) * (2.0 / fan_in) ** 0.5
    w_conv0 = jnp.transpose(w_t, (1, 2, 3, 0)).reshape(fan_in, CONV_OUT)
    w_cls = jax.random.normal(ks[3], (CONV_OUT, NUM_CLASSES), jnp.float32) * (1.0 / CONV_OUT) ** 0.5
    b_cls = jnp.zeros((1, NUM_CLASSES), jnp.float32)
    return dict(ssc_consts=ssc_consts,
                w_conv0_bf16=w_conv0.astype(jnp.bfloat16),
                w_cls=w_cls, b_cls=b_cls)


def application_with_ssc_forward(params, x_nchw):
    """Mirrors ApplicationWithSSC.forward: returns (output, reconst)."""
    N, C, H, W = x_nchw.shape
    S = NUM_STAINS
    # --- StainStdCapsule (per-pixel capsule routing), channel-major / lane-dense ---
    x_ncp = x_nchw.reshape(N, C, H * W)                        # free reshape, no transpose
    packed = ssc_forward(x_ncp, params["ssc_consts"], routing_iter=NUM_ROUTINGS)
    normed = packed[:, :S, :].reshape(N, S, H, W)              # NCHW stain map, f32
    reconst = packed[:, S:S + C, :].reshape(N, C, H, W)        # NCHW reconstruction, f32
    # --- app module: conv0 stem + ReLU + GAP + classifier head ---
    # TODO(synk): build the im2col patches inside the kernel (halo DMA) instead
    # of materializing them in HBM; cast-before-im2col already halves the bytes.
    patches, Ho, Wo = im2col_nchw_7x7_s2_p3(normed.astype(jnp.bfloat16))
    hw = Ho * Wo
    tr = min(TR_MAX, _round_up(hw, 8))
    hw_pad = _round_up(hw, tr)
    if hw_pad != hw:
        patches = jnp.pad(patches, ((0, 0), (0, hw_pad - hw), (0, 0)))
    logits = app_forward(patches, params["w_conv0_bf16"],
                         params["w_cls"], params["b_cls"], hw_true=hw, tr=tr)
    return logits, reconst


# -------------------------------------------------------------------- main ---
if __name__ == "__main__":
    key = jax.random.PRNGKey(0)
    k_param, k_data = jax.random.split(key)
    params = init_params(k_param)

    # deterministic RGB input in NCHW (batch=2, 3x32x32): 1024 pixels/sample ->
    # SSC grid (2,1) (both v7x TCs busy), conv0 output 16x16 -> one row tile
    # per sample exercising the GAP init/accumulate/finalize path.
    x = jax.random.uniform(k_data, (2, C_IN, 32, 32), jnp.float32)

    fwd = jax.jit(functools.partial(application_with_ssc_forward, params))
    output, reconst = fwd(x)
    jax.block_until_ready((output, reconst))

    assert output.shape == (2, NUM_CLASSES)
    assert reconst.shape == (2, C_IN, 32, 32)
    assert bool(jnp.all(jnp.isfinite(output)))
    assert bool(jnp.all(jnp.isfinite(reconst)))
    print("KERNEL_OK")
</pallas_src>

<mosaic_0001>
module attributes {stable_mosaic.version = 11 : i64} {
  func.func @ssc_kernel(%arg0: i32, %arg1: i32, %arg2: memref<1x3x1024xf32, #tpu.memory_space<vmem>>, %arg3: memref<96x3xf32, #tpu.memory_space<vmem>>, %arg4: memref<12x12xf32, #tpu.memory_space<vmem>>, %arg5: memref<96x12xf32, #tpu.memory_space<vmem>>, %arg6: memref<36x96xf32, #tpu.memory_space<vmem>>, %arg7: memref<136x24xf32, #tpu.memory_space<vmem>>, %arg8: memref<1x8x1024xf32, #tpu.memory_space<vmem>>) attributes {dimension_semantics = [#tpu.dimension_semantics<parallel>, #tpu.dimension_semantics<parallel>], iteration_bounds = array<i64: 2, 1>, scalar_prefetch = 0 : i64, scratch_operands = 0 : i64, tpu.core_type = #tpu.core_type<tc>, window_params = [{transform_indices = @transform_0, window_bounds = array<i64: 1, 3, 1024>}, {pipeline_mode = #tpu.pipeline_mode<synchronous>, transform_indices = @transform_1, window_bounds = array<i64: 96, 3>}, {pipeline_mode = #tpu.pipeline_mode<synchronous>, transform_indices = @transform_2, window_bounds = array<i64: 12, 12>}, {pipeline_mode = #tpu.pipeline_mode<synchronous>, transform_indices = @transform_3, window_bounds = array<i64: 96, 12>}, {pipeline_mode = #tpu.pipeline_mode<synchronous>, transform_indices = @transform_4, window_bounds = array<i64: 36, 96>}, {pipeline_mode = #tpu.pipeline_mode<synchronous>, transform_indices = @transform_5, window_bounds = array<i64: 136, 24>}, {transform_indices = @transform_6, window_bounds = array<i64: 1, 8, 1024>}]} {
    %c0 = arith.constant 0 : index
    %c0_0 = arith.constant 0 : index
    %c0_1 = arith.constant 0 : index
    %0 = vector.load %arg2[%c0, %c0_0, %c0_1] : memref<1x3x1024xf32, #tpu.memory_space<vmem>>, vector<1x3x1024xf32>
    %1 = vector.shape_cast %0 : vector<1x3x1024xf32> to vector<3x1024xf32>
    %c0_2 = arith.constant 0 : index
    %c0_3 = arith.constant 0 : index
    %2 = vector.load %arg3[%c0_2, %c0_3] : memref<96x3xf32, #tpu.memory_space<vmem>>, vector<96x3xf32>
    %cst = arith.constant dense<0.000000e+00> : vector<96x1024xf32>
    %3 = tpu.matmul %2, %1, %cst {dimension_numbers = #tpu.dot_dimension_numbers<[1], [0], [0], [1], [0, 0, 1, 1], [], []>} : vector<96x3xf32>, vector<3x1024xf32>, vector<96x1024xf32> -> vector<96x1024xf32>
    %c0_4 = arith.constant 0 : index
    %c0_5 = arith.constant 0 : index
    %4 = vector.load %arg6[%c0_4, %c0_5] : memref<36x96xf32, #tpu.memory_space<vmem>>, vector<24x96xf32>
    %c24 = arith.constant 24 : index
    %c0_6 = arith.constant 0 : index
    %5 = vector.load %arg6[%c24, %c0_6] : memref<36x96xf32, #tpu.memory_space<vmem>>, vector<12x96xf32>
    %c0_7 = arith.constant 0 : index
    %c0_8 = arith.constant 0 : index
    %6 = vector.load %arg7[%c0_7, %c0_8] : memref<136x24xf32, #tpu.memory_space<vmem>>, vector<24x24xf32>
    %c24_9 = arith.constant 24 : index
    %c0_10 = arith.constant 0 : index
    %7 = vector.load %arg7[%c24_9, %c0_10] : memref<136x24xf32, #tpu.memory_space<vmem>>, vector<96x24xf32>
    %c120 = arith.constant 120 : index
    %c0_11 = arith.constant 0 : index
    %8 = vector.load %arg7[%c120, %c0_11] : memref<136x24xf32, #tpu.memory_space<vmem>>, vector<8x24xf32>
    %c128 = arith.constant 128 : index
    %c0_12 = arith.constant 0 : index
    %9 = vector.load %arg7[%c128, %c0_12] : memref<136x24xf32, #tpu.memory_space<vmem>>, vector<8x24xf32>
    %cst_13 = arith.constant dense<0.000000e+00> : vector<24x1024xf32>
    %10 = tpu.matmul %4, %3, %cst_13 {dimension_numbers = #tpu.dot_dimension_numbers<[1], [0], [0], [1], [0, 0, 1, 1], [], []>} : vector<24x96xf32>, vector<96x1024xf32>, vector<24x1024xf32> -> vector<24x1024xf32>
    %cst_14 = arith.constant 0.333333343 : f32
    %11 = vector.broadcast %cst_14 : f32 to vector<24x1024xf32>
    %12 = arith.mulf %10, %11 : vector<24x1024xf32>
    %13 = arith.mulf %12, %12 : vector<24x1024xf32>
    %cst_15 = arith.constant dense<0.000000e+00> : vector<24x1024xf32>
    %14 = tpu.matmul %6, %13, %cst_15 {dimension_numbers = #tpu.dot_dimension_numbers<[1], [0], [0], [1], [0, 0, 1, 1], [], []>} : vector<24x24xf32>, vector<24x1024xf32>, vector<24x1024xf32> -> vector<24x1024xf32>
    %cst_16 = arith.constant 1.000000e+00 : f32
    %15 = vector.broadcast %cst_16 : f32 to vector<24x1024xf32>
    %16 = arith.addf %15, %14 : vector<24x1024xf32>
    %17 = arith.divf %14, %16 : vector<24x1024xf32>
    %cst_17 = arith.constant 9.99999993E-9 : f32
    %18 = vector.broadcast %cst_17 : f32 to vector<24x1024xf32>
    %19 = arith.addf %14, %18 : vector<24x1024xf32>
    %20 = math.rsqrt %19 : vector<24x1024xf32>
    %21 = arith.mulf %17, %20 : vector<24x1024xf32>
    %22 = arith.mulf %21, %12 : vector<24x1024xf32>
    %cst_18 = arith.constant dense<0.000000e+00> : vector<96x1024xf32>
    %23 = tpu.matmul %7, %22, %cst_18 {dimension_numbers = #tpu.dot_dimension_numbers<[1], [0], [0], [1], [0, 0, 1, 1], [], []>} : vector<96x24xf32>, vector<24x1024xf32>, vector<96x1024xf32> -> vector<96x1024xf32>
    %24 = arith.mulf %3, %23 : vector<96x1024xf32>
    %cst_19 = arith.constant dense<0.000000e+00> : vector<12x1024xf32>
    %25 = tpu.matmul %5, %24, %cst_19 {dimension_numbers = #tpu.dot_dimension_numbers<[1], [0], [0], [1], [0, 0, 1, 1], [], []>} : vector<12x96xf32>, vector<96x1024xf32>, vector<12x1024xf32> -> vector<12x1024xf32>
    %cst_20 = arith.constant dense<0xFF800000> : vector<1024xf32>
    %26 = vector.multi_reduction <maximumf>, %25, %cst_20 [0] : vector<12x1024xf32> to vector<1024xf32>
    %27 = vector.shape_cast %26 : vector<1024xf32> to vector<1x1024xf32>
    %28 = vector.broadcast %27 : vector<1x1024xf32> to vector<12x1024xf32>
    %29 = arith.subf %25, %28 : vector<12x1024xf32>
    %30 = math.exp %29 : vector<12x1024xf32>
    %c0_21 = arith.constant 0 : index
    %c0_22 = arith.constant 0 : index
    %31 = vector.load %arg4[%c0_21, %c0_22] : memref<12x12xf32, #tpu.memory_space<vmem>>, vector<12x12xf32>
    %cst_23 = arith.constant dense<0.000000e+00> : vector<12x1024xf32>
    %32 = tpu.matmul %31, %30, %cst_23 {dimension_numbers = #tpu.dot_dimension_numbers<[1], [0], [0], [1], [0, 0, 1, 1], [], []>} : vector<12x12xf32>, vector<12x1024xf32>, vector<12x1024xf32> -> vector<12x1024xf32>
    %cst_24 = arith.constant 1.000000e-30 : f32
    %33 = vector.broadcast %cst_24 : f32 to vector<12x1024xf32>
    %34 = arith.maximumf %32, %33 : vector<12x1024xf32>
    %35 = tpu.reciprocal %34 : vector<12x1024xf32> -> vector<12x1024xf32>
    %36 = arith.mulf %30, %35 : vector<12x1024xf32>
    %c0_25 = arith.constant 0 : index
    %c0_26 = arith.constant 0 : index
    %37 = vector.load %arg5[%c0_25, %c0_26] : memref<96x12xf32, #tpu.memory_space<vmem>>, vector<96x12xf32>
    %cst_27 = arith.constant dense<0.000000e+00> : vector<96x1024xf32>
    %38 = tpu.matmul %37, %36, %cst_27 {dimension_numbers = #tpu.dot_dimension_numbers<[1], [0], [0], [1], [0, 0, 1, 1], [], []>} : vector<96x12xf32>, vector<12x1024xf32>, vector<96x1024xf32> -> vector<96x1024xf32>
    %39 = arith.mulf %38, %3 : vector<96x1024xf32>
    %cst_28 = arith.constant dense<0.000000e+00> : vector<24x1024xf32>
    %40 = tpu.matmul %4, %39, %cst_28 {dimension_numbers = #tpu.dot_dimension_numbers<[1], [0], [0], [1], [0, 0, 1, 1], [], []>} : vector<24x96xf32>, vector<96x1024xf32>, vector<24x1024xf32> -> vector<24x1024xf32>
    %41 = arith.mulf %40, %40 : vector<24x1024xf32>
    %cst_29 = arith.constant dense<0.000000e+00> : vector<24x1024xf32>
    %42 = tpu.matmul %6, %41, %cst_29 {dimension_numbers = #tpu.dot_dimension_numbers<[1], [0], [0], [1], [0, 0, 1, 1], [], []>} : vector<24x24xf32>, vector<24x1024xf32>, vector<24x1024xf32> -> vector<24x1024xf32>
    %cst_30 = arith.constant 1.000000e+00 : f32
    %43 = vector.broadcast %cst_30 : f32 to vector<24x1024xf32>
    %44 = arith.addf %43, %42 : vector<24x1024xf32>
    %45 = arith.divf %42, %44 : vector<24x1024xf32>
    %cst_31 = arith.constant 9.99999993E-9 : f32
    %46 = vector.broadcast %cst_31 : f32 to vector<24x1024xf32>
    %47 = arith.addf %42, %46 : vector<24x1024xf32>
    %48 = math.rsqrt %47 : vector<24x1024xf32>
    %49 = arith.mulf %45, %48 : vector<24x1024xf32>
    %50 = arith.mulf %49, %40 : vector<24x1024xf32>
    %cst_32 = arith.constant dense<0.000000e+00> : vector<96x1024xf32>
    %51 = tpu.matmul %7, %50, %cst_32 {dimension_numbers = #tpu.dot_dimension_numbers<[1], [0], [0], [1], [0, 0, 1, 1], [], []>} : vector<96x24xf32>, vector<24x1024xf32>, vector<96x1024xf32> -> vector<96x1024xf32>
    %52 = arith.mulf %3, %51 : vector<96x1024xf32>
    %cst_33 = arith.constant dense<0.000000e+00> : vector<12x1024xf32>
    %53 = tpu.matmul %5, %52, %cst_33 {dimension_numbers = #tpu.dot_dimension_numbers<[1], [0], [0], [1], [0, 0, 1, 1], [], []>} : vector<12x96xf32>, vector<96x1024xf32>, vector<12x1024xf32> -> vector<12x1024xf32>
    %54 = arith.addf %25, %53 : vector<12x1024xf32>
    %cst_34 = arith.constant dense<0xFF800000> : vector<1024xf32>
    %55 = vector.multi_reduction <maximumf>, %54, %cst_34 [0] : vector<12x1024xf32> to vector<1024xf32>
    %56 = vector.shape_cast %55 : vector<1024xf32> to vector<1x1024xf32>
    %57 = vector.broadcast %56 : vector<1x1024xf32> to vector<12x1024xf32>
    %58 = arith.subf %54, %57 : vector<12x1024xf32>
    %59 = math.exp %58 : vector<12x1024xf32>
    %c0_35 = arith.constant 0 : index
    %c0_36 = arith.constant 0 : index
    %60 = vector.load %arg4[%c0_35, %c0_36] : memref<12x12xf32, #tpu.memory_space<vmem>>, vector<12x12xf32>
    %cst_37 = arith.constant dense<0.000000e+00> : vector<12x1024xf32>
    %61 = tpu.matmul %60, %59, %cst_37 {dimension_numbers = #tpu.dot_dimension_numbers<[1], [0], [0], [1], [0, 0, 1, 1], [], []>} : vector<12x12xf32>, vector<12x1024xf32>, vector<12x1024xf32> -> vector<12x1024xf32>
    %cst_38 = arith.constant 1.000000e-30 : f32
    %62 = vector.broadcast %cst_38 : f32 to vector<12x1024xf32>
    %63 = arith.maximumf %61, %62 : vector<12x1024xf32>
    %64 = tpu.reciprocal %63 : vector<12x1024xf32> -> vector<12x1024xf32>
    %65 = arith.mulf %59, %64 : vector<12x1024xf32>
    %c0_39 = arith.constant 0 : index
    %c0_40 = arith.constant 0 : index
    %66 = vector.load %arg5[%c0_39, %c0_40] : memref<96x12xf32, #tpu.memory_space<vmem>>, vector<96x12xf32>
    %cst_41 = arith.constant dense<0.000000e+00> : vector<96x1024xf32>
    %67 = tpu.matmul %66, %65, %cst_41 {dimension_numbers = #tpu.dot_dimension_numbers<[1], [0], [0], [1], [0, 0, 1, 1], [], []>} : vector<96x12xf32>, vector<12x1024xf32>, vector<96x1024xf32> -> vector<96x1024xf32>
    %68 = arith.mulf %67, %3 : vector<96x1024xf32>
    %cst_42 = arith.constant dense<0.000000e+00> : vector<24x1024xf32>
    %69 = tpu.matmul %4, %68, %cst_42 {dimension_numbers = #tpu.dot_dimension_numbers<[1], [0], [0], [1], [0, 0, 1, 1], [], []>} : vector<24x96xf32>, vector<96x1024xf32>, vector<24x1024xf32> -> vector<24x1024xf32>
    %70 = arith.mulf %69, %69 : vector<24x1024xf32>
    %cst_43 = arith.constant dense<0.000000e+00> : vector<24x1024xf32>
    %71 = tpu.matmul %6, %70, %cst_43 {dimension_numbers = #tpu.dot_dimension_numbers<[1], [0], [0], [1], [0, 0, 1, 1], [], []>} : vector<24x24xf32>, vector<24x1024xf32>, vector<24x1024xf32> -> vector<24x1024xf32>
    %cst_44 = arith.constant 1.000000e+00 : f32
    %72 = vector.broadcast %cst_44 : f32 to vector<24x1024xf32>
    %73 = arith.addf %72, %71 : vector<24x1024xf32>
    %74 = arith.divf %71, %73 : vector<24x1024xf32>
    %cst_45 = arith.constant 9.99999993E-9 : f32
    %75 = vector.broadcast %cst_45 : f32 to vector<24x1024xf32>
    %76 = arith.addf %71, %75 : vector<24x1024xf32>
    %77 = math.rsqrt %76 : vector<24x1024xf32>
    %78 = arith.mulf %74, %77 : vector<24x1024xf32>
    %79 = arith.mulf %78, %69 : vector<24x1024xf32>
    %80 = arith.mulf %79, %79 : vector<24x1024xf32>
    %cst_46 = arith.constant dense<0.000000e+00> : vector<8x1024xf32>
    %81 = tpu.matmul %8, %80, %cst_46 {dimension_numbers = #tpu.dot_dimension_numbers<[1], [0], [0], [1], [0, 0, 1, 1], [], []>} : vector<8x24xf32>, vector<24x1024xf32>, vector<8x1024xf32> -> vector<8x1024xf32>
    %82 = math.sqrt %81 : vector<8x1024xf32>
    %cst_47 = arith.constant dense<0.000000e+00> : vector<8x1024xf32>
    %83 = tpu.matmul %9, %79, %cst_47 {dimension_numbers = #tpu.dot_dimension_numbers<[1], [0], [0], [1], [0, 0, 1, 1], [], []>} : vector<8x24xf32>, vector<24x1024xf32>, vector<8x1024xf32> -> vector<8x1024xf32>
    %84 = arith.addf %82, %83 : vector<8x1024xf32>
    %c0_48 = arith.constant 0 : index
    %c0_49 = arith.constant 0 : index
    %c0_50 = arith.constant 0 : index
    %85 = vector.load %arg8[%c0_48, %c0_49, %c0_50] : memref<1x8x1024xf32, #tpu.memory_space<vmem>>, vector<1x8x1024xf32>
    %86 = vector.shape_cast %85 : vector<1x8x1024xf32> to vector<8x1024xf32>
    %87 = vector.shape_cast %84 : vector<8x1024xf32> to vector<1x8x1024xf32>
    tpu.vector_store %arg8[%c0_48, %c0_49, %c0_50], %87 {strides = array<i32>} : memref<1x8x1024xf32, #tpu.memory_space<vmem>>, vector<1x8x1024xf32>,
    return
  }
  func.func @transform_0(%arg0: i32, %arg1: i32) -> (i32, i32, i32) {
    %c0_i32 = arith.constant 0 : i32
    %c0_i32_0 = arith.constant 0 : i32
    return %arg0, %c0_i32, %arg1 : i32, i32, i32
  }
  func.func @transform_1(%arg0: i32, %arg1: i32) -> (i32, i32) {
    %c0_i32 = arith.constant 0 : i32
    %c0_i32_0 = arith.constant 0 : i32
    %c0_i32_1 = arith.constant 0 : i32
    return %c0_i32, %c0_i32_0 : i32, i32
  }
  func.func @transform_2(%arg0: i32, %arg1: i32) -> (i32, i32) {
    %c0_i32 = arith.constant 0 : i32
    %c0_i32_0 = arith.constant 0 : i32
    %c0_i32_1 = arith.constant 0 : i32
    return %c0_i32, %c0_i32_0 : i32, i32
  }
  func.func @transform_3(%arg0: i32, %arg1: i32) -> (i32, i32) {
    %c0_i32 = arith.constant 0 : i32
    %c0_i32_0 = arith.constant 0 : i32
    %c0_i32_1 = arith.constant 0 : i32
    return %c0_i32, %c0_i32_0 : i32, i32
  }
  func.func @transform_4(%arg0: i32, %arg1: i32) -> (i32, i32) {
    %c0_i32 = arith.constant 0 : i32
    %c0_i32_0 = arith.constant 0 : i32
    %c0_i32_1 = arith.constant 0 : i32
    return %c0_i32, %c0_i32_0 : i32, i32
  }
  func.func @transform_5(%arg0: i32, %arg1: i32) -> (i32, i32) {
    %c0_i32 = arith.constant 0 : i32
    %c0_i32_0 = arith.constant 0 : i32
    %c0_i32_1 = arith.constant 0 : i32
    return %c0_i32, %c0_i32_0 : i32, i32
  }
  func.func @transform_6(%arg0: i32, %arg1: i32) -> (i32, i32, i32) {
    %c0_i32 = arith.constant 0 : i32
    %c0_i32_0 = arith.constant 0 : i32
    return %arg0, %c0_i32, %arg1 : i32, i32, i32
  }
}

module attributes {stable_mosaic.version = 11 : i64} {
  func.func @app_kernel(%arg0: i32, %arg1: i32, %arg2: memref<1x256x147xbf16, #tpu.memory_space<vmem>>, %arg3: memref<147x64xbf16, #tpu.memory_space<vmem>>, %arg4: memref<64x4xf32, #tpu.memory_space<vmem>>, %arg5: memref<1x4xf32, #tpu.memory_space<vmem>>, %arg6: memref<1x8x4xf32, #tpu.memory_space<vmem>>, %arg7: memref<8x64xf32, #tpu.memory_space<vmem>>) attributes {dimension_semantics = [#tpu.dimension_semantics<parallel>, #tpu.dimension_semantics<arbitrary>], iteration_bounds = array<i64: 2, 1>, scalar_prefetch = 0 : i64, scratch_operands = 1 : i64, tpu.core_type = #tpu.core_type<tc>, window_params = [{transform_indices = @transform_0, window_bounds = array<i64: 1, 256, 147>}, {pipeline_mode = #tpu.pipeline_mode<synchronous>, transform_indices = @transform_1, window_bounds = array<i64: 147, 64>}, {pipeline_mode = #tpu.pipeline_mode<synchronous>, transform_indices = @transform_2, window_bounds = array<i64: 64, 4>}, {pipeline_mode = #tpu.pipeline_mode<synchronous>, transform_indices = @transform_3, window_bounds = array<i64: 1, 4>}, {transform_indices = @transform_4, window_bounds = array<i64: 1, 8, 4>}]} {
    %c0_i32 = arith.constant 0 : i32
    %0 = arith.cmpi eq, %arg1, %c0_i32 : i32
    %1 = arith.extui %0 : i1 to i32
    %c0_i32_0 = arith.constant 0 : i32
    %2 = arith.cmpi ne, %1, %c0_i32_0 : i32
    scf.if %2 {
      %cst_13 = arith.constant 0.000000e+00 : f32
      %17 = vector.broadcast %cst_13 : f32 to vector<8x64xf32>
      %c0_14 = arith.constant 0 : index
      %c0_15 = arith.constant 0 : index
      %18 = vector.load %arg7[%c0_14, %c0_15] : memref<8x64xf32, #tpu.memory_space<vmem>>, vector<8x64xf32>
      tpu.vector_store %arg7[%c0_14, %c0_15], %17 {strides = array<i32>} : memref<8x64xf32, #tpu.memory_space<vmem>>, vector<8x64xf32>,
    } else {
    }
    %c0 = arith.constant 0 : index
    %c0_1 = arith.constant 0 : index
    %c0_2 = arith.constant 0 : index
    %3 = vector.load %arg2[%c0, %c0_1, %c0_2] : memref<1x256x147xbf16, #tpu.memory_space<vmem>>, vector<1x256x147xbf16>
    %4 = vector.shape_cast %3 : vector<1x256x147xbf16> to vector<256x147xbf16>
    %c0_3 = arith.constant 0 : index
    %c0_4 = arith.constant 0 : index
    %5 = vector.load %arg3[%c0_3, %c0_4] : memref<147x64xbf16, #tpu.memory_space<vmem>>, vector<147x64xbf16>
    %cst = arith.constant dense<0.000000e+00> : vector<256x64xf32>
    %6 = tpu.matmul %4, %5, %cst {dimension_numbers = #tpu.dot_dimension_numbers<[1], [0], [0], [1], [0, 0, 1, 1], [], []>} : vector<256x147xbf16>, vector<147x64xbf16>, vector<256x64xf32> -> vector<256x64xf32>
    %cst_5 = arith.constant 0.000000e+00 : f32
    %7 = vector.broadcast %cst_5 : f32 to vector<256x64xf32>
    %8 = arith.maximumf %6, %7 : vector<256x64xf32>
    %c0_6 = arith.constant 0 : index
    %c0_7 = arith.constant 0 : index
    %9 = vector.load %arg7[%c0_6, %c0_7] : memref<8x64xf32, #tpu.memory_space<vmem>>, vector<8x64xf32>
    %10 = vector.shape_cast %8 : vector<256x64xf32> to vector<32x8x64xf32>
    %cst_8 = arith.constant dense<0.000000e+00> : vector<8x64xf32>
    %11 = vector.multi_reduction <add>, %10, %cst_8 [0] : vector<32x8x64xf32> to vector<8x64xf32>
    %12 = arith.addf %9, %11 : vector<8x64xf32>
    %c0_9 = arith.constant 0 : index
    %c0_10 = arith.constant 0 : index
    %13 = vector.load %arg7[%c0_9, %c0_10] : memref<8x64xf32, #tpu.memory_space<vmem>>, vector<8x64xf32>
    tpu.vector_store %arg7[%c0_9, %c0_10], %12 {strides = array<i32>} : memref<8x64xf32, #tpu.memory_space<vmem>>, vector<8x64xf32>,
    %c0_i32_11 = arith.constant 0 : i32
    %14 = arith.cmpi eq, %arg1, %c0_i32_11 : i32
    %15 = arith.extui %14 : i1 to i32
    %c0_i32_12 = arith.constant 0 : i32
    %16 = arith.cmpi ne, %15, %c0_i32_12 : i32
    scf.if %16 {
      %c0_13 = arith.constant 0 : index
      %c0_14 = arith.constant 0 : index
      %17 = vector.load %arg7[%c0_13, %c0_14] : memref<8x64xf32, #tpu.memory_space<vmem>>, vector<8x64xf32>
      %cst_15 = arith.constant dense<0.000000e+00> : vector<64xf32>
      %18 = vector.multi_reduction <add>, %17, %cst_15 [0] : vector<8x64xf32> to vector<64xf32>
      %19 = vector.shape_cast %18 : vector<64xf32> to vector<1x64xf32>
      %cst_16 = arith.constant 3.906250e-03 : f32
      %20 = vector.broadcast %cst_16 : f32 to vector<1x64xf32>
      %21 = arith.mulf %19, %20 : vector<1x64xf32>
      %c0_17 = arith.constant 0 : index
      %c0_18 = arith.constant 0 : index
      %22 = vector.load %arg4[%c0_17, %c0_18] : memref<64x4xf32, #tpu.memory_space<vmem>>, vector<64x4xf32>
      %cst_19 = arith.constant dense<0.000000e+00> : vector<1x4xf32>
      %23 = tpu.matmul %21, %22, %cst_19 {dimension_numbers = #tpu.dot_dimension_numbers<[1], [0], [0], [1], [0, 0, 1, 1], [], []>} : vector<1x64xf32>, vector<64x4xf32>, vector<1x4xf32> -> vector<1x4xf32>
      %c0_20 = arith.constant 0 : index
      %c0_21 = arith.constant 0 : index
      %24 = vector.load %arg5[%c0_20, %c0_21] : memref<1x4xf32, #tpu.memory_space<vmem>>, vector<1x4xf32>
      %25 = arith.addf %23, %24 : vector<1x4xf32>
      %cst_22 = arith.constant 0.000000e+00 : f32
      %26 = vector.broadcast %cst_22 : f32 to vector<8x4xf32>
      %27 = vector.broadcast %25 : vector<1x4xf32> to vector<8x4xf32>
      %28 = arith.addf %26, %27 : vector<8x4xf32>
      %c0_23 = arith.constant 0 : index
      %c0_24 = arith.constant 0 : index
      %c0_25 = arith.constant 0 : index
      %29 = vector.load %arg6[%c0_23, %c0_24, %c0_25] : memref<1x8x4xf32, #tpu.memory_space<vmem>>, vector<1x8x4xf32>
      %30 = vector.shape_cast %29 : vector<1x8x4xf32> to vector<8x4xf32>
      %31 = vector.shape_cast %28 : vector<8x4xf32> to vector<1x8x4xf32>
      tpu.vector_store %arg6[%c0_23, %c0_24, %c0_25], %31 {strides = array<i32>} : memref<1x8x4xf32, #tpu.memory_space<vmem>>, vector<1x8x4xf32>,
    } else {
    }
    return
  }
  func.func @transform_0(%arg0: i32, %arg1: i32) -> (i32, i32, i32) {
    %c0_i32 = arith.constant 0 : i32
    %c0_i32_0 = arith.constant 0 : i32
    return %arg0, %arg1, %c0_i32 : i32, i32, i32
  }
  func.func @transform_1(%arg0: i32, %arg1: i32) -> (i32, i32) {
    %c0_i32 = arith.constant 0 : i32
    %c0_i32_0 = arith.constant 0 : i32
    %c0_i32_1 = arith.constant 0 : i32
    return %c0_i32, %c0_i32_0 : i32, i32
  }
  func.func @transform_2(%arg0: i32, %arg1: i32) -> (i32, i32) {
    %c0_i32 = arith.constant 0 : i32
    %c0_i32_0 = arith.constant 0 : i32
    %c0_i32_1 = arith.constant 0 : i32
    return %c0_i32, %c0_i32_0 : i32, i32
  }
  func.func @transform_3(%arg0: i32, %arg1: i32) -> (i32, i32) {
    %c0_i32 = arith.constant 0 : i32
    %c0_i32_0 = arith.constant 0 : i32
    %c0_i32_1 = arith.constant 0 : i32
    return %c0_i32, %c0_i32_0 : i32, i32
  }
  func.func @transform_4(%arg0: i32, %arg1: i32) -> (i32, i32, i32) {
    %c0_i32 = arith.constant 0 : i32
    %c0_i32_0 = arith.constant 0 : i32
    %c0_i32_1 = arith.constant 0 : i32
    return %arg0, %c0_i32, %c0_i32_0 : i32, i32, i32
  }
}

</mosaic_0001>

<llo_original>
// kernel: application_with_ssc_forward.2
$region0: #{application_with_ssc_forward.2}
  #allocation0 [shape = 'u32[]', space=smem, size = 0x4, offset = 0x4, fixed_abs, tag = 'smem constant byte address 0x4 - core index']
  #allocation1 [shape = 'u32[144,128]{1,0:T(1,128)}', space=vmem, size = 0x12000, scoped, tag = 'internal scratch']
  %s0 = inlined_call_operand.vmem [shape: f32[2,3,1024], index: 0, kind: input, shape index: {}]
  %s1 = inlined_call_operand.vmem [shape: f32[96,3], index: 1, kind: input, shape index: {}]
  %s2 = inlined_call_operand.vmem [shape: f32[12,12], index: 2, kind: input, shape index: {}]
  %s3 = inlined_call_operand.hbm [shape: f32[96,12], index: 3, kind: input, shape index: {}]
  %s4 = inlined_call_operand.hbm [shape: f32[36,96], index: 4, kind: input, shape index: {}]
  %s5 = inlined_call_operand.vmem [shape: f32[136,24], index: 5, kind: input, shape index: {}]
  %s6 = inlined_call_operand.vmem [shape: f32[2,8,1024], index: 6, kind: output, shape index: {}]
  %s7 = sld [smem:[#allocation0]]
  $region65: #{application_with_ssc_forward.2} parent=0
    _
  %s9 = ssub.s32 1, %s7
  %s10 = scalar_select 0, %s9, %s7
  $region1: #{application_with_ssc_forward.2} parent=0
    #allocation2 [shape = 'u8[49152]{0}', space=vmem, size = 0xc000, scoped, tag = 'input window, operand 3, single buffered']
    #allocation3 [shape = 's32[2]{0}', space=sflag, size = 0x8, scoped, tag = 'scoped memory for application_with_ssc_forward.2']
    #allocation4 [shape = 'u8[20480]{0}', space=vmem, size = 0x5000, scoped, tag = 'input window, operand 4, single buffered']
    #allocation5 [shape = 's32[1]{0}', space=sflag, size = 0x4, scoped, tag = 'scoped memory for application_with_ssc_forward.2']
    %11 = vsyncpa [#allocation3], 0
    %12 = vsyncpa [#allocation5], 0
    loop: start=0, step=1, limit=4
    $region2: #{application_with_ssc_forward.2} parent=1 // loop_pre_header
      _
    $region3: #{application_with_ssc_forward.2} parent=1 // loop_header
      %s14 = sphi 0, %s18
      %p15 = scmp.ge.s32.totalorder %s14, 4
      %s21 = sphi 0, %s33
      %s22 = sphi 0, %s29
      %s23 = sphi 0, %s21
      %s24 = sphi 0, %s22
      %s25 = sphi 0, %s23
      %s26 = sphi 0, %s24
      %s38 = sphi 0, %s40
      %s41 = sphi 0, %s38
      %s42 = sphi 0, %s41
      %s58 = sphi 0, %s42
      %s62 = sphi 0, %s62
      %s64 = sphi 0, %s62
      %s65 = sphi 0, %s64
      %s79 = sphi 0, %s65
      %s83 = sphi 0, %s83
      %s85 = sphi 0, %s83
      %s86 = sphi 0, %s85
      %s100 = sphi 0, %s86
      %s104 = sphi 0, %s104
      %s106 = sphi 0, %s104
      %s107 = sphi 0, %s106
      %s121 = sphi 0, %s107
      %s125 = sphi 0, %s125
      %s127 = sphi 0, %s125
      %s128 = sphi 0, %s127
      %s142 = sphi 0, %s128
      %s146 = sphi 0, %s146
      %s148 = sphi 0, %s146
      %s149 = sphi 0, %s148
      %s163 = sphi 0, %s149
      %s171 = sphi 0, %s173
      %s174 = sphi 0, %s171
      %s175 = sphi 0, %s174
      %s191 = sphi 0, %s175
    $region4: #{application_with_ssc_forward.2} parent=1 // loop_header_branch
      %17 = sbr.rel (%p15) target = $region8
    $region5: #{application_with_ssc_forward.2} parent=1 // loop_body
      %s19 = ssub.s32 %s14, 1
      %s20 = ssub.s32 %s14, 2
      %s27 = sadd.s32 1, %s22
      %p28 = scmp.ge.s32.totalorder %s27, 1
      %s29 = scalar_select %p28, 0, %s27
      %s30 = sadd.s32 1, %s21
      %s31 = scalar_select %p28, %s30, %s21
      %p32 = scmp.ge.s32.totalorder %s31, 2
      %s33 = scalar_select %p32, 0, %s31
      %s34 = ssub.s32 %s21, %s33
      %s35 = ssub.s32 %s22, %s29
      %s36 = sor.u32 %s34, %s35
      %p37 = scmp.eq.s32.totalorder %s36, 0
      %s39 = sadd.s32 %s38, 1
      %s40 = scalar_select %p37, %s38, %s39
      %p43 = pneg %p37
      %p44 = scmp.eq.s32.totalorder %s14, 1
      %p45 = por %p43, %p44
      %p46 = scmp.ne.s32.totalorder %s38, %s41
      %p47 = scmp.eq.s32.totalorder %s14, 0
      %p48 = por %p46, %p47
      %p49 = scmp.ne.s32.totalorder %s38, %s41
      %p50 = scmp.eq.s32.totalorder %s19, 1
      %p51 = por %p49, %p50
      %p52 = scmp.ne.s32.totalorder %s41, %s42
      %p53 = scmp.eq.s32.totalorder %s19, 0
      %p54 = por %p52, %p53
      %p55 = scmp.ne.s32.totalorder %s41, %s42
      %p56 = scmp.eq.s32.totalorder %s20, 1
      %p57 = por %p55, %p56
      %p59 = scmp.ne.s32.totalorder %s42, %s58
      %p60 = scmp.eq.s32.totalorder %s20, 0
      %p61 = por %p59, %p60
      %s63 = sadd.s32 %s62, 1
      %p66 = scmp.eq.s32.totalorder %s14, 1
      %p67 = scmp.ne.s32.totalorder %s62, %s64
      %p68 = scmp.eq.s32.totalorder %s14, 0
      %p69 = por %p67, %p68
      %p70 = scmp.ne.s32.totalorder %s62, %s64
      %p71 = scmp.eq.s32.totalorder %s19, 1
      %p72 = por %p70, %p71
      %p73 = scmp.ne.s32.totalorder %s64, %s65
      %p74 = scmp.eq.s32.totalorder %s19, 0
      %p75 = por %p73, %p74
      %p76 = scmp.ne.s32.totalorder %s64, %s65
      %p77 = scmp.eq.s32.totalorder %s20, 1
      %p78 = por %p76, %p77
      %p80 = scmp.ne.s32.totalorder %s65, %s79
      %p81 = scmp.eq.s32.totalorder %s20, 0
      %p82 = por %p80, %p81
      %s84 = sadd.s32 %s83, 1
      %p87 = scmp.eq.s32.totalorder %s14, 1
      %p88 = scmp.ne.s32.totalorder %s83, %s85
      %p89 = scmp.eq.s32.totalorder %s14, 0
      %p90 = por %p88, %p89
      %p91 = scmp.ne.s32.totalorder %s83, %s85
      %p92 = scmp.eq.s32.totalorder %s19, 1
      %p93 = por %p91, %p92
      %p94 = scmp.ne.s32.totalorder %s85, %s86
      %p95 = scmp.eq.s32.totalorder %s19, 0
      %p96 = por %p94, %p95
      %p97 = scmp.ne.s32.totalorder %s85, %s86
      %p98 = scmp.eq.s32.totalorder %s20, 1
      %p99 = por %p97, %p98
      %p101 = scmp.ne.s32.totalorder %s86, %s100
      %p102 = scmp.eq.s32.totalorder %s20, 0
      %p103 = por %p101, %p102
      %s105 = sadd.s32 %s104, 1
      %p108 = scmp.eq.s32.totalorder %s14, 1
      %p109 = scmp.ne.s32.totalorder %s104, %s106
      %p110 = scmp.eq.s32.totalorder %s14, 0
      %p111 = por %p109, %p110
      %p112 = scmp.ne.s32.totalorder %s104, %s106
      %p113 = scmp.eq.s32.totalorder %s19, 1
      %p114 = por %p112, %p113
      %p115 = scmp.ne.s32.totalorder %s106, %s107
      %p116 = scmp.eq.s32.totalorder %s19, 0
      %p117 = por %p115, %p116
      %p118 = scmp.ne.s32.totalorder %s106, %s107
      %p119 = scmp.eq.s32.totalorder %s20, 1
      %p120 = por %p118, %p119
      %p122 = scmp.ne.s32.totalorder %s107, %s121
      %p123 = scmp.eq.s32.totalorder %s20, 0
      %p124 = por %p122, %p123
      %s126 = sadd.s32 %s125, 1
      %p129 = scmp.eq.s32.totalorder %s14, 1
      %p130 = scmp.ne.s32.totalorder %s125, %s127
      %p131 = scmp.eq.s32.totalorder %s14, 0
      %p132 = por %p130, %p131
      %p133 = scmp.ne.s32.totalorder %s125, %s127
      %p134 = scmp.eq.s32.totalorder %s19, 1
      %p135 = por %p133, %p134
      %p136 = scmp.ne.s32.totalorder %s127, %s128
      %p137 = scmp.eq.s32.totalorder %s19, 0
      %p138 = por %p136, %p137
      %p139 = scmp.ne.s32.totalorder %s127, %s128
      %p140 = scmp.eq.s32.totalorder %s20, 1
      %p141 = por %p139, %p140
      %p143 = scmp.ne.s32.totalorder %s128, %s142
      %p144 = scmp.eq.s32.totalorder %s20, 0
      %p145 = por %p143, %p144
      %s147 = sadd.s32 %s146, 1
      %p150 = scmp.eq.s32.totalorder %s14, 1
      %p151 = scmp.ne.s32.totalorder %s146, %s148
      %p152 = scmp.eq.s32.totalorder %s14, 0
      %p153 = por %p151, %p152
      %p154 = scmp.ne.s32.totalorder %s146, %s148
      %p155 = scmp.eq.s32.totalorder %s19, 1
      %p156 = por %p154, %p155
      %p157 = scmp.ne.s32.totalorder %s148, %s149
      %p158 = scmp.eq.s32.totalorder %s19, 0
      %p159 = por %p157, %p158
      %p160 = scmp.ne.s32.totalorder %s148, %s149
      %p161 = scmp.eq.s32.totalorder %s20, 1
      %p162 = por %p160, %p161
      %p164 = scmp.ne.s32.totalorder %s149, %s163
      %p165 = scmp.eq.s32.totalorder %s20, 0
      %p166 = por %p164, %p165
      %s167 = ssub.s32 %s21, %s33
      %s168 = ssub.s32 %s22, %s29
      %s169 = sor.u32 %s167, %s168
      %p170 = scmp.eq.s32.totalorder %s169, 0
      %s172 = sadd.s32 %s171, 1
      %s173 = scalar_select %p170, %s171, %s172
      %p176 = pneg %p170
      %p177 = scmp.eq.s32.totalorder %s14, 1
      %p178 = por %p176, %p177
      %p179 = scmp.ne.s32.totalorder %s171, %s174
      %p180 = scmp.eq.s32.totalorder %s14, 0
      %p181 = por %p179, %p180
      %p182 = scmp.ne.s32.totalorder %s171, %s174
      %p183 = scmp.eq.s32.totalorder %s19, 1
      %p184 = por %p182, %p183
      %p185 = scmp.ne.s32.totalorder %s174, %s175
      %p186 = scmp.eq.s32.totalorder %s19, 0
      %p187 = por %p185, %p186
      %p188 = scmp.ne.s32.totalorder %s174, %s175
      %p189 = scmp.eq.s32.totalorder %s20, 1
      %p190 = por %p188, %p189
      %p192 = scmp.ne.s32.totalorder %s175, %s191
      %p193 = scmp.eq.s32.totalorder %s20, 0
      %p194 = por %p192, %p193
      %p195 = scmp.le.s32.totalorder 1, %s14
      %p196 = scmp.lt.s32.totalorder %s14, 3
      %p197 = pnand %p195, %p196
      %p198 = pneg %p197
      // Predicated region
      $region9: #{application_with_ssc_forward.2} parent=5 // pred_check
        _
      $region10: #{application_with_ssc_forward.2} parent=5 // pred_check_branch
        %200 = sbr.rel (%p197) target = $region12
      $region11: #{application_with_ssc_forward.2} parent=5 // pred_region
        %s201 = ssub.s32 %s14, 1
        // Predicated region
        $region13: #{application_with_ssc_forward.2} parent=11 // pred_check
          %p202 = pneg %p75
        $region14: #{application_with_ssc_forward.2} parent=11 // pred_check_branch
          %204 = sbr.rel (%p202) target = $region16
        $region15: #{application_with_ssc_forward.2} parent=11 // pred_region
          _
        $region16: #{application_with_ssc_forward.2} parent=11 // pred_fallthru
          _
        // Predicated region
        $region17: #{application_with_ssc_forward.2} parent=11 // pred_check
          %p205 = pneg %p96
        $region18: #{application_with_ssc_forward.2} parent=11 // pred_check_branch
          %207 = sbr.rel (%p205) target = $region20
        $region19: #{application_with_ssc_forward.2} parent=11 // pred_region
          _
        $region20: #{application_with_ssc_forward.2} parent=11 // pred_fallthru
          _
        // Predicated region
        $region21: #{application_with_ssc_forward.2} parent=11 // pred_check
          %p208 = pneg %p117
        $region22: #{application_with_ssc_forward.2} parent=11 // pred_check_branch
          %210 = sbr.rel (%p208) target = $region24
        $region23: #{application_with_ssc_forward.2} parent=11 // pred_region
          %s212 = ssub.s32 1536, 1536
          %213 = vsyncadd [#allocation3], %s212
          %s214 = sshll.u32 [#allocation2], 4
          %s215 = int_to_ptr.vmem [resolvable:$true] %s214
          %220 = dma.hbm_to_vmem [thread:$0]  %s3, 1536, %s215, [#allocation3], 128, 128, 8
        $region24: #{application_with_ssc_forward.2} parent=11 // pred_fallthru
          _
        // Predicated region
        $region25: #{application_with_ssc_forward.2} parent=11 // pred_check
          %p221 = pneg %p138
        $region26: #{application_with_ssc_forward.2} parent=11 // pred_check_branch
          %223 = sbr.rel (%p221) target = $region28
        $region27: #{application_with_ssc_forward.2} parent=11 // pred_region
          %s225 = ssub.s32 640, 640
          %226 = vsyncadd [#allocation5], %s225
          %s227 = sshll.u32 [#allocation4], 4
          %s228 = int_to_ptr.vmem [resolvable:$true] %s227
          %233 = dma.hbm_to_vmem [thread:$0]  %s4, 640, %s228, [#allocation5], 128, 128, 8
        $region28: #{application_with_ssc_forward.2} parent=11 // pred_fallthru
          _
        // Predicated region
        $region29: #{application_with_ssc_forward.2} parent=11 // pred_check
          %p234 = pneg %p159
        $region30: #{application_with_ssc_forward.2} parent=11 // pred_check_branch
          %236 = sbr.rel (%p234) target = $region32
        $region31: #{application_with_ssc_forward.2} parent=11 // pred_region
          _
        $region32: #{application_with_ssc_forward.2} parent=11 // pred_fallthru
          _
      $region12: #{application_with_ssc_forward.2} parent=5 // pred_fallthru
        _
      %p237 = scmp.lt.s32.totalorder %s14, 2
      // Predicated region
      $region33: #{application_with_ssc_forward.2} parent=5 // pred_check
        %p238 = pneg %p237
      $region34: #{application_with_ssc_forward.2} parent=5 // pred_check_branch
        %240 = sbr.rel (%p238) target = $region36
      $region35: #{application_with_ssc_forward.2} parent=5 // pred_region
        // Predicated region
        $region37: #{application_with_ssc_forward.2} parent=35 // pred_check
          %p241 = pneg %p48
        $region38: #{application_with_ssc_forward.2} parent=35 // pred_check_branch
          %243 = sbr.rel (%p241) target = $region40
        $region39: #{application_with_ssc_forward.2} parent=35 // pred_region
          %s244 = smul.u32 8, %s22
          %p245 = scmp.lt.s32.totalorder %s21, 1
          %s246 = scalar_select %p245, %s21, 1
          %p247 = scmp.lt.s32.totalorder %s244, 7
          %s248 = scalar_select %p247, %s244, 7
          %s249 = smul.addr %s246, 8
          %s250 = sadd.s32 %s248, %s249
          %s251 = smul.addr %s250, 4
          %s252 = scalar_lea.vmem %s0, %s251
          %s253 = smul.u32 8, %s22
        $region40: #{application_with_ssc_forward.2} parent=35 // pred_fallthru
          _
      $region36: #{application_with_ssc_forward.2} parent=5 // pred_fallthru
        _
      %p254 = scmp.le.s32.totalorder 1, %s14
      %p255 = scmp.lt.s32.totalorder %s14, 3
      %p256 = pnand %p254, %p255
      %p257 = pneg %p256
      // Predicated region
      $region41: #{application_with_ssc_forward.2} parent=5 // pred_check
        _
      $region42: #{application_with_ssc_forward.2} parent=5 // pred_check_branch
        %259 = sbr.rel (%p256) target = $region44
      $region43: #{application_with_ssc_forward.2} parent=5 // pred_region
        %s260 = ssub.s32 %s14, 1
        // Predicated region
        $region45: #{application_with_ssc_forward.2} parent=43 // pred_check
          %p261 = pneg %p117
        $region46: #{application_with_ssc_forward.2} parent=43 // pred_check_branch
          %263 = sbr.rel (%p261) target = $region48
        $region47: #{application_with_ssc_forward.2} parent=43 // pred_region
          %264 = dma.done [#allocation3], 1536
        $region48: #{application_with_ssc_forward.2} parent=43 // pred_fallthru
          _
        // Predicated region
        $region49: #{application_with_ssc_forward.2} parent=43 // pred_check
          %p265 = pneg %p138
        $region50: #{application_with_ssc_forward.2} parent=43 // pred_check_branch
          %267 = sbr.rel (%p265) target = $region52
        $region51: #{application_with_ssc_forward.2} parent=43 // pred_region
          %268 = dma.done [#allocation5], 640
        $region52: #{application_with_ssc_forward.2} parent=43 // pred_fallthru
          _
        %s269 = smul.u32 8, %s24
        %p270 = scmp.lt.s32.totalorder %s23, 1
        %s271 = scalar_select %p270, %s23, 1
        %p272 = scmp.lt.s32.totalorder %s269, 7
        %s273 = scalar_select %p272, %s269, 7
        %s274 = smul.addr %s271, 8
        %s275 = sadd.s32 %s273, %s274
        %s276 = smul.addr %s275, 4
        %s277 = scalar_lea.vmem %s0, %s276
        %p278 = pneg %p54
        %p279 = pneg %p51
        %p280 = pneg %p75
        %p281 = pneg %p72
        %p282 = pneg %p96
        %p283 = pneg %p93
        %p284 = pneg %p117
        %p285 = pneg %p114
        %p286 = pneg %p138
        %p287 = pneg %p135
        %p288 = pneg %p159
        %p289 = pneg %p156
        %p290 = pneg %p187
        %p291 = pneg %p184
        %s292 = smul.u32 8, %s24
        %p293 = scmp.lt.s32.totalorder %s23, 1
        %s294 = scalar_select %p293, %s23, 1
        %p295 = scmp.lt.s32.totalorder %s292, 7
        %s296 = scalar_select %p295, %s292, 7
        %s297 = smul.addr %s294, 8
        %s298 = sadd.s32 %s296, %s297
        %s299 = smul.addr %s298, 8
        %s300 = scalar_lea.vmem %s6, %s299
        %s301 = smul.u32 8, %s24
        %p302 = scmp.lt.s32.totalorder %s23, 1
        %s303 = scalar_select %p302, %s23, 1
        %p304 = scmp.lt.s32.totalorder %s301, 7
        %s305 = scalar_select %p304, %s301, 7
        %s306 = smul.addr %s303, 8
        %s307 = sadd.s32 %s305, %s306
        %s308 = smul.addr %s307, 4
        %s309 = scalar_lea.vmem %s0, %s308
        %s310 = smul.u32 8, %s24
        %s311 = smul.u32 8, %s24
        %p312 = scmp.lt.s32.totalorder %s23, 1
        %s313 = scalar_select %p312, %s23, 1
        %p314 = scmp.lt.s32.totalorder %s311, 7
        %s315 = scalar_select %p314, %s311, 7
        %s316 = smul.addr %s313, 8
        %s317 = sadd.s32 %s315, %s316
        %s318 = smul.addr %s317, 8
        %s319 = scalar_lea.vmem %s6, %s318
        %s320 = smul.u32 8, %s24
        %v321 = vld [vmem:[%s309] sm:$0x77]
        %v322 = vld [vmem:[%s309 + $0x8] sm:$0x77]
        %v323 = vld [vmem:[%s309 + $0x10] sm:$0x77]
        %v324 = vld [vmem:[%s309 + $0x18] sm:$0x77]
        %v325 = vld [vmem:[%s1] sm:$0xff]
        %v326 = vld [vmem:[%s1 + $0x8] sm:$0xff]
        %v327 = vld [vmem:[%s1 + $0x10] sm:$0xff]
        %v328 = vld [vmem:[%s1 + $0x18] sm:$0xff]
        %v329 = vld [vmem:[%s1 + $0x20] sm:$0xff]
        %v330 = vld [vmem:[%s1 + $0x28] sm:$0xff]
        %v331 = vld [vmem:[%s1 + $0x30] sm:$0xff]
        %v332 = vld [vmem:[%s1 + $0x38] sm:$0xff]
        %v333 = vld [vmem:[%s1 + $0x40] sm:$0xff]
        %v334 = vld [vmem:[%s1 + $0x48] sm:$0xff]
        %v335 = vld [vmem:[%s1 + $0x50] sm:$0xff]
        %v336 = vld [vmem:[%s1 + $0x58] sm:$0xff]
        %v341 = vcombine.high %v321, %v321
        %v342 = vcombine.high %v322, %v322
        %v343 = vcombine.high %v323, %v323
        %v344 = vcombine.high %v324, %v324
        %vm345 = vcmask 23552
        %v347 = vsel %vm345, %v325, 0
        %v350 = vsel %vm345, %v326, 0
        %v353 = vsel %vm345, %v327, 0
        %v356 = vsel %vm345, %v328, 0
        %v359 = vsel %vm345, %v329, 0
        %v362 = vsel %vm345, %v330, 0
        %v365 = vsel %vm345, %v331, 0
        %v368 = vsel %vm345, %v332, 0
        %v371 = vsel %vm345, %v333, 0
        %v374 = vsel %vm345, %v334, 0
        %v377 = vsel %vm345, %v335, 0
        %v380 = vsel %vm345, %v336, 0
        %vm382 = vcmask 1042432
        %v383 = vsel %vm382, %v321, 0
        %v385 = vsel %vm382, %v341, 0
        %v387 = vsel %vm382, %v322, 0
        %v389 = vsel %vm382, %v342, 0
        %v391 = vsel %vm382, %v323, 0
        %v393 = vsel %vm382, %v343, 0
        %v395 = vsel %vm382, %v324, 0
        %v397 = vsel %vm382, %v344, 0
        %399 = vmatprep.subr.mxu0 0.0
        %400 = vmatpush1.msra.mxu0 0.0
        %401 = vmatprep.subr.mxu0 0.0
        %402 = vmatpush1.msra.mxu0 0.0
        %403 = vmatprep.subr.mxu0 0.0
        %404 = vmatpush1.msra.mxu0 0.0
        %405 = vmatprep.subr.mxu0 0.0
        %406 = vmatpush1.msra.mxu0 0.0
        %407 = vmatprep.subr.mxu0 0.0
        %408 = vmatpush1.msra.mxu0 0.0
        %409 = vmatprep.subr.mxu0 0.0
        %410 = vmatpush1.msra.mxu0 0.0
        %411 = vmatprep.subr.mxu0 0.0
        %412 = vmatpush1.msra.mxu0 0.0
        %413 = vmatprep.subr.mxu0 0.0
        %414 = vmatpush1.msra.mxu0 0.0
        %415 = vmatprep.subr.mxu0 0.0
        %416 = vmatpush1.msra.mxu0 0.0
        %417 = vmatprep.subr.mxu0 0.0
        %418 = vmatpush1.msra.mxu0 0.0
        %419 = vmatprep.subr.mxu0 0.0
        %420 = vmatpush1.msra.mxu0 0.0
        %421 = vmatprep.subr.mxu0 0.0
        %422 = vmatpush1.msra.mxu0 0.0
        %423 = vmatprep.subr.mxu0 0.0
        %424 = vmatpush1.msra.mxu0 0.0
        %425 = vmatprep.subr.mxu0 0.0
        %426 = vmatpush1.msra.mxu0 0.0
        %427 = vmatprep.subr.mxu0 0.0
        %428 = vmatpush1.msra.mxu0 0.0
        %429 = vmatprep.subr.mxu0 %v385
        %430 = vmatpush1.msra.mxu0 %v383
        %431 = vmatprep.subr.mxu0 0.0
        %432 = vmatpush2.msra.mxu0 0.0
        %433 = vmatprep.subr.mxu0 0.0
        %434 = vmatpush2.msra.mxu0 0.0
        %435 = vmatprep.subr.mxu0 0.0
        %436 = vmatpush2.msra.mxu0 0.0
        %437 = vmatprep.subr.mxu0 0.0
        %438 = vmatpush2.msra.mxu0 0.0
        %439 = vmatprep.subr.mxu0 0.0
        %440 = vmatpush2.msra.mxu0 0.0
        %441 = vmatprep.subr.mxu0 0.0
        %442 = vmatpush2.msra.mxu0 0.0
        %443 = vmatprep.subr.mxu0 0.0
        %444 = vmatpush2.msra.mxu0 0.0
        %445 = vmatprep.subr.mxu0 0.0
        %446 = vmatpush2.msra.mxu0 0.0
        %447 = vmatprep.subr.mxu0 0.0
        %448 = vmatpush2.msra.mxu0 0.0
        %449 = vmatprep.subr.mxu0 0.0
        %450 = vmatpush2.msra.mxu0 0.0
        %451 = vmatprep.subr.mxu0 0.0
        %452 = vmatpush2.msra.mxu0 0.0
        %453 = vmatprep.subr.mxu0 0.0
        %454 = vmatpush2.msra.mxu0 0.0
        %455 = vmatprep.subr.mxu0 0.0
        %456 = vmatpush2.msra.mxu0 0.0
        %457 = vmatprep.subr.mxu0 0.0
        %458 = vmatpush2.msra.mxu0 0.0
        %459 = vmatprep.subr.mxu0 0.0
        %460 = vmatpush2.msra.mxu0 0.0
        %461 = vmatprep.subr.mxu0 0.0
        %462 = vmatpush2.msra.mxu0 0.0
        %463 = vmatprep.mubr.f32.mxu0 0.0
        %464 = vmatmul.mubr.f32.gmra.mxu0 %v347
        %v465 = vpop.f32.mrf.mxu0
        %v466 = vadd.f32 0.0, %v465
        %v467 = vpop.f32.mrf.mxu0
        %v468 = vadd.f32 0.0, %v467
        %469 = vmatprep.mubr.f32.mxu0 0.0
        %470 = vmatmul.mubr.f32.gmra.mxu0 %v350
        %v471 = vpop.f32.mrf.mxu0
        %v472 = vadd.f32 0.0, %v471
        %v473 = vpop.f32.mrf.mxu0
        %v474 = vadd.f32 0.0, %v473
        %475 = vmatprep.mubr.f32.mxu0 0.0
        %476 = vmatmul.mubr.f32.gmra.mxu0 %v353
        %v477 = vpop.f32.mrf.mxu0
        %v478 = vadd.f32 0.0, %v477
        %v479 = vpop.f32.mrf.mxu0
        %v480 = vadd.f32 0.0, %v479
        %481 = vmatprep.mubr.f32.mxu0 0.0
        %482 = vmatmul.mubr.f32.gmra.mxu0 %v356
        %v483 = vpop.f32.mrf.mxu0
        %v484 = vadd.f32 0.0, %v483
        %v485 = vpop.f32.mrf.mxu0
        %v486 = vadd.f32 0.0, %v485
        %487 = vmatprep.mubr.f32.mxu0 0.0
        %488 = vmatmul.mubr.f32.gmra.mxu0 %v359
        %v489 = vpop.f32.mrf.mxu0
        %v490 = vadd.f32 0.0, %v489
        %v491 = vpop.f32.mrf.mxu0
        %v492 = vadd.f32 0.0, %v491
        %493 = vmatprep.mubr.f32.mxu0 0.0
        %494 = vmatmul.mubr.f32.gmra.mxu0 %v362
        %v495 = vpop.f32.mrf.mxu0
        %v496 = vadd.f32 0.0, %v495
        %v497 = vpop.f32.mrf.mxu0
        %v498 = vadd.f32 0.0, %v497
        %499 = vmatprep.mubr.f32.mxu0 0.0
        %500 = vmatmul.mubr.f32.gmra.mxu0 %v365
        %v501 = vpop.f32.mrf.mxu0
        %v502 = vadd.f32 0.0, %v501
        %v503 = vpop.f32.mrf.mxu0
        %v504 = vadd.f32 0.0, %v503
        %505 = vmatprep.mubr.f32.mxu0 0.0
        %506 = vmatmul.mubr.f32.gmra.mxu0 %v368
        %v507 = vpop.f32.mrf.mxu0
        %v508 = vadd.f32 0.0, %v507
        %v509 = vpop.f32.mrf.mxu0
        %v510 = vadd.f32 0.0, %v509
        %511 = vmatprep.mubr.f32.mxu0 0.0
        %512 = vmatmul.mubr.f32.gmra.mxu0 %v371
        %v513 = vpop.f32.mrf.mxu0
        %v514 = vadd.f32 0.0, %v513
        %v515 = vpop.f32.mrf.mxu0
        %v516 = vadd.f32 0.0, %v515
        %517 = vmatprep.mubr.f32.mxu0 0.0
        %518 = vmatmul.mubr.f32.gmra.mxu0 %v374
        %v519 = vpop.f32.mrf.mxu0
        %v520 = vadd.f32 0.0, %v519
        %v521 = vpop.f32.mrf.mxu0
        %v522 = vadd.f32 0.0, %v521
        %523 = vmatprep.mubr.f32.mxu0 0.0
        %524 = vmatmul.mubr.f32.gmra.mxu0 %v377
        %v525 = vpop.f32.mrf.mxu0
        %v526 = vadd.f32 0.0, %v525
        %v527 = vpop.f32.mrf.mxu0
        %v528 = vadd.f32 0.0, %v527
        %529 = vmatprep.mubr.f32.mxu0 0.0
        %530 = vmatmul.mubr.f32.gmra.mxu0 %v380
        %v531 = vpop.f32.mrf.mxu0
        %v532 = vadd.f32 0.0, %v531
        %v533 = vpop.f32.mrf.mxu0
        %v534 = vadd.f32 0.0, %v533
        %535 = vdwg.mxu0
        %536 = vmatprep.subr.mxu0 0.0
        %537 = vmatpush1.msra.mxu0 0.0
        %538 = vmatprep.subr.mxu0 0.0
        %539 = vmatpush1.msra.mxu0 0.0
        %540 = vmatprep.subr.mxu0 0.0
        %541 = vmatpush1.msra.mxu0 0.0
        %542 = vmatprep.subr.mxu0 0.0
        %543 = vmatpush1.msra.mxu0 0.0
        %544 = vmatprep.subr.mxu0 0.0
        %545 = vmatpush1.msra.mxu0 0.0
        %546 = vmatprep.subr.mxu0 0.0
        %547 = vmatpush1.msra.mxu0 0.0
        %548 = vmatprep.subr.mxu0 0.0
        %549 = vmatpush1.msra.mxu0 0.0
        %550 = vmatprep.subr.mxu0 0.0
        %551 = vmatpush1.msra.mxu0 0.0
        %552 = vmatprep.subr.mxu0 0.0
        %553 = vmatpush1.msra.mxu0 0.0
        %554 = vmatprep.subr.mxu0 0.0
        %555 = vmatpush1.msra.mxu0 0.0
        %556 = vmatprep.subr.mxu0 0.0
        %557 = vmatpush1.msra.mxu0 0.0
        %558 = vmatprep.subr.mxu0 0.0
        %559 = vmatpush1.msra.mxu0 0.0
        %560 = vmatprep.subr.mxu0 0.0
        %561 = vmatpush1.msra.mxu0 0.0
        %562 = vmatprep.subr.mxu0 0.0
        %563 = vmatpush1.msra.mxu0 0.0
        %564 = vmatprep.subr.mxu0 0.0
        %565 = vmatpush1.msra.mxu0 0.0
        %566 = vmatprep.subr.mxu0 %v389
        %567 = vmatpush1.msra.mxu0 %v387
        %568 = vmatprep.subr.mxu0 0.0
        %569 = vmatpush2.msra.mxu0 0.0
        %570 = vmatprep.subr.mxu0 0.0
        %571 = vmatpush2.msra.mxu0 0.0
        %572 = vmatprep.subr.mxu0 0.0
        %573 = vmatpush2.msra.mxu0 0.0
        %574 = vmatprep.subr.mxu0 0.0
        %575 = vmatpush2.msra.mxu0 0.0
        %576 = vmatprep.subr.mxu0 0.0
        %577 = vmatpush2.msra.mxu0 0.0
        %578 = vmatprep.subr.mxu0 0.0
        %579 = vmatpush2.msra.mxu0 0.0
        %580 = vmatprep.subr.mxu0 0.0
        %581 = vmatpush2.msra.mxu0 0.0
        %582 = vmatprep.subr.mxu0 0.0
        %583 = vmatpush2.msra.mxu0 0.0
        %584 = vmatprep.subr.mxu0 0.0
        %585 = vmatpush2.msra.mxu0 0.0
        %586 = vmatprep.subr.mxu0 0.0
        %587 = vmatpush2.msra.mxu0 0.0
        %588 = vmatprep.subr.mxu0 0.0
        %589 = vmatpush2.msra.mxu0 0.0
        %590 = vmatprep.subr.mxu0 0.0
        %591 = vmatpush2.msra.mxu0 0.0
        %592 = vmatprep.subr.mxu0 0.0
        %593 = vmatpush2.msra.mxu0 0.0
        %594 = vmatprep.subr.mxu0 0.0
        %595 = vmatpush2.msra.mxu0 0.0
        %596 = vmatprep.subr.mxu0 0.0
        %597 = vmatpush2.msra.mxu0 0.0
        %598 = vmatprep.subr.mxu0 0.0
        %599 = vmatpush2.msra.mxu0 0.0
        %600 = vmatprep.mubr.f32.mxu0 0.0
        %601 = vmatmul.mubr.f32.gmra.mxu0 %v347
        %v602 = vpop.f32.mrf.mxu0
        %v603 = vadd.f32 0.0, %v602
        %v604 = vpop.f32.mrf.mxu0
        %v605 = vadd.f32 0.0, %v604
        %606 = vmatprep.mubr.f32.mxu0 0.0
        %607 = vmatmul.mubr.f32.gmra.mxu0 %v350
        %v608 = vpop.f32.mrf.mxu0
        %v609 = vadd.f32 0.0, %v608
        %v610 = vpop.f32.mrf.mxu0
        %v611 = vadd.f32 0.0, %v610
        %612 = vmatprep.mubr.f32.mxu0 0.0
        %613 = vmatmul.mubr.f32.gmra.mxu0 %v353
        %v614 = vpop.f32.mrf.mxu0
        %v615 = vadd.f32 0.0, %v614
        %v616 = vpop.f32.mrf.mxu0
        %v617 = vadd.f32 0.0, %v616
        %618 = vmatprep.mubr.f32.mxu0 0.0
        %619 = vmatmul.mubr.f32.gmra.mxu0 %v356
        %v620 = vpop.f32.mrf.mxu0
        %v621 = vadd.f32 0.0, %v620
        %v622 = vpop.f32.mrf.mxu0
        %v623 = vadd.f32 0.0, %v622
        %624 = vmatprep.mubr.f32.mxu0 0.0
        %625 = vmatmul.mubr.f32.gmra.mxu0 %v359
        %v626 = vpop.f32.mrf.mxu0
        %v627 = vadd.f32 0.0, %v626
        %v628 = vpop.f32.mrf.mxu0
        %v629 = vadd.f32 0.0, %v628
        %630 = vmatprep.mubr.f32.mxu0 0.0
        %631 = vmatmul.mubr.f32.gmra.mxu0 %v362
        %v632 = vpop.f32.mrf.mxu0
        %v633 = vadd.f32 0.0, %v632
        %v634 = vpop.f32.mrf.mxu0
        %v635 = vadd.f32 0.0, %v634
        %636 = vmatprep.mubr.f32.mxu0 0.0
        %637 = vmatmul.mubr.f32.gmra.mxu0 %v365
        %v638 = vpop.f32.mrf.mxu0
        %v639 = vadd.f32 0.0, %v638
        %v640 = vpop.f32.mrf.mxu0
        %v641 = vadd.f32 0.0, %v640
        %642 = vmatprep.mubr.f32.mxu0 0.0
        %643 = vmatmul.mubr.f32.gmra.mxu0 %v368
        %v644 = vpop.f32.mrf.mxu0
        %v645 = vadd.f32 0.0, %v644
        %v646 = vpop.f32.mrf.mxu0
        %v647 = vadd.f32 0.0, %v646
        %648 = vmatprep.mubr.f32.mxu0 0.0
        %649 = vmatmul.mubr.f32.gmra.mxu0 %v371
        %v650 = vpop.f32.mrf.mxu0
        %v651 = vadd.f32 0.0, %v650
        %v652 = vpop.f32.mrf.mxu0
        %v653 = vadd.f32 0.0, %v652
        %654 = vmatprep.mubr.f32.mxu0 0.0
        %655 = vmatmul.mubr.f32.gmra.mxu0 %v374
        %v656 = vpop.f32.mrf.mxu0
        %v657 = vadd.f32 0.0, %v656
        %v658 = vpop.f32.mrf.mxu0
        %v659 = vadd.f32 0.0, %v658
        %660 = vmatprep.mubr.f32.mxu0 0.0
        %661 = vmatmul.mubr.f32.gmra.mxu0 %v377
        %v662 = vpop.f32.mrf.mxu0
        %v663 = vadd.f32 0.0, %v662
        %v664 = vpop.f32.mrf.mxu0
        %v665 = vadd.f32 0.0, %v664
        %666 = vmatprep.mubr.f32.mxu0 0.0
        %667 = vmatmul.mubr.f32.gmra.mxu0 %v380
        %v668 = vpop.f32.mrf.mxu0
        %v669 = vadd.f32 0.0, %v668
        %v670 = vpop.f32.mrf.mxu0
        %v671 = vadd.f32 0.0, %v670
        %672 = vdwg.mxu0
        %673 = vmatprep.subr.mxu0 0.0
        %674 = vmatpush1.msra.mxu0 0.0
        %675 = vmatprep.subr.mxu0 0.0
        %676 = vmatpush1.msra.mxu0 0.0
        %677 = vmatprep.subr.mxu0 0.0
        %678 = vmatpush1.msra.mxu0 0.0
        %679 = vmatprep.subr.mxu0 0.0
        %680 = vmatpush1.msra.mxu0 0.0
        %681 = vmatprep.subr.mxu0 0.0
        %682 = vmatpush1.msra.mxu0 0.0
        %683 = vmatprep.subr.mxu0 0.0
        %684 = vmatpush1.msra.mxu0 0.0
        %685 = vmatprep.subr.mxu0 0.0
        %686 = vmatpush1.msra.mxu0 0.0
        %687 = vmatprep.subr.mxu0 0.0
        %688 = vmatpush1.msra.mxu0 0.0
        %689 = vmatprep.subr.mxu0 0.0
        %690 = vmatpush1.msra.mxu0 0.0
        %691 = vmatprep.subr.mxu0 0.0
        %692 = vmatpush1.msra.mxu0 0.0
        %693 = vmatprep.subr.mxu0 0.0
        %694 = vmatpush1.msra.mxu0 0.0
        %695 = vmatprep.subr.mxu0 0.0
        %696 = vmatpush1.msra.mxu0 0.0
        %697 = vmatprep.subr.mxu0 0.0
        %698 = vmatpush1.msra.mxu0 0.0
        %699 = vmatprep.subr.mxu0 0.0
        %700 = vmatpush1.msra.mxu0 0.0
        %701 = vmatprep.subr.mxu0 0.0
        %702 = vmatpush1.msra.mxu0 0.0
        %703 = vmatprep.subr.mxu0 %v393
        %704 = vmatpush1.msra.mxu0 %v391
        %705 = vmatprep.subr.mxu0 0.0
        %706 = vmatpush2.msra.mxu0 0.0
        %707 = vmatprep.subr.mxu0 0.0
        %708 = vmatpush2.msra.mxu0 0.0
        %709 = vmatprep.subr.mxu0 0.0
        %710 = vmatpush2.msra.mxu0 0.0
        %711 = vmatprep.subr.mxu0 0.0
        %712 = vmatpush2.msra.mxu0 0.0
        %713 = vmatprep.subr.mxu0 0.0
        %714 = vmatpush2.msra.mxu0 0.0
        %715 = vmatprep.subr.mxu0 0.0
        %716 = vmatpush2.msra.mxu0 0.0
        %717 = vmatprep.subr.mxu0 0.0
        %718 = vmatpush2.msra.mxu0 0.0
        %719 = vmatprep.subr.mxu0 0.0
        %720 = vmatpush2.msra.mxu0 0.0
        %721 = vmatprep.subr.mxu0 0.0
        %722 = vmatpush2.msra.mxu0 0.0
        %723 = vmatprep.subr.mxu0 0.0
        %724 = vmatpush2.msra.mxu0 0.0
        %725 = vmatprep.subr.mxu0 0.0
        %726 = vmatpush2.msra.mxu0 0.0
        %727 = vmatprep.subr.mxu0 0.0
        %728 = vmatpush2.msra.mxu0 0.0
        %729 = vmatprep.subr.mxu0 0.0
        %730 = vmatpush2.msra.mxu0 0.0
        %731 = vmatprep.subr.mxu0 0.0
        %732 = vmatpush2.msra.mxu0 0.0
        %733 = vmatprep.subr.mxu0 0.0
        %734 = vmatpush2.msra.mxu0 0.0
        %735 = vmatprep.subr.mxu0 0.0
        %736 = vmatpush2.msra.mxu0 0.0
        %737 = vmatprep.mubr.f32.mxu0 0.0
        %738 = vmatmul.mubr.f32.gmra.mxu0 %v347
        %v739 = vpop.f32.mrf.mxu0
        %v740 = vadd.f32 0.0, %v739
        %v741 = vpop.f32.mrf.mxu0
        %v742 = vadd.f32 0.0, %v741
        %743 = vmatprep.mubr.f32.mxu0 0.0
        %744 = vmatmul.mubr.f32.gmra.mxu0 %v350
        %v745 = vpop.f32.mrf.mxu0
        %v746 = vadd.f32 0.0, %v745
        %v747 = vpop.f32.mrf.mxu0
        %v748 = vadd.f32 0.0, %v747
        %749 = vmatprep.mubr.f32.mxu0 0.0
        %750 = vmatmul.mubr.f32.gmra.mxu0 %v353
        %v751 = vpop.f32.mrf.mxu0
        %v752 = vadd.f32 0.0, %v751
        %v753 = vpop.f32.mrf.mxu0
        %v754 = vadd.f32 0.0, %v753
        %755 = vmatprep.mubr.f32.mxu0 0.0
        %756 = vmatmul.mubr.f32.gmra.mxu0 %v356
        %v757 = vpop.f32.mrf.mxu0
        %v758 = vadd.f32 0.0, %v757
        %v759 = vpop.f32.mrf.mxu0
        %v760 = vadd.f32 0.0, %v759
        %761 = vmatprep.mubr.f32.mxu0 0.0
        %762 = vmatmul.mubr.f32.gmra.mxu0 %v359
        %v763 = vpop.f32.mrf.mxu0
        %v764 = vadd.f32 0.0, %v763
        %v765 = vpop.f32.mrf.mxu0
        %v766 = vadd.f32 0.0, %v765
        %767 = vmatprep.mubr.f32.mxu0 0.0
        %768 = vmatmul.mubr.f32.gmra.mxu0 %v362
        %v769 = vpop.f32.mrf.mxu0
        %v770 = vadd.f32 0.0, %v769
        %v771 = vpop.f32.mrf.mxu0
        %v772 = vadd.f32 0.0, %v771
        %773 = vmatprep.mubr.f32.mxu0 0.0
        %774 = vmatmul.mubr.f32.gmra.mxu0 %v365
        %v775 = vpop.f32.mrf.mxu0
        %v776 = vadd.f32 0.0, %v775
        %v777 = vpop.f32.mrf.mxu0
        %v778 = vadd.f32 0.0, %v777
        %779 = vmatprep.mubr.f32.mxu0 0.0
        %780 = vmatmul.mubr.f32.gmra.mxu0 %v368
        %v781 = vpop.f32.mrf.mxu0
        %v782 = vadd.f32 0.0, %v781
        %v783 = vpop.f32.mrf.mxu0
        %v784 = vadd.f32 0.0, %v783
        %785 = vmatprep.mubr.f32.mxu0 0.0
        %786 = vmatmul.mubr.f32.gmra.mxu0 %v371
        %v787 = vpop.f32.mrf.mxu0
        %v788 = vadd.f32 0.0, %v787
        %v789 = vpop.f32.mrf.mxu0
        %v790 = vadd.f32 0.0, %v789
        %791 = vmatprep.mubr.f32.mxu0 0.0
        %792 = vmatmul.mubr.f32.gmra.mxu0 %v374
        %v793 = vpop.f32.mrf.mxu0
        %v794 = vadd.f32 0.0, %v793
        %v795 = vpop.f32.mrf.mxu0
        %v796 = vadd.f32 0.0, %v795
        %797 = vmatprep.mubr.f32.mxu0 0.0
        %798 = vmatmul.mubr.f32.gmra.mxu0 %v377
        %v799 = vpop.f32.mrf.mxu0
        %v800 = vadd.f32 0.0, %v799
        %v801 = vpop.f32.mrf.mxu0
        %v802 = vadd.f32 0.0, %v801
        %803 = vmatprep.mubr.f32.mxu0 0.0
        %804 = vmatmul.mubr.f32.gmra.mxu0 %v380
        %v805 = vpop.f32.mrf.mxu0
        %v806 = vadd.f32 0.0, %v805
        %v807 = vpop.f32.mrf.mxu0
        %v808 = vadd.f32 0.0, %v807
        %809 = vdwg.mxu0
        %810 = vmatprep.subr.mxu0 0.0
        %811 = vmatpush1.msra.mxu0 0.0
        %812 = vmatprep.subr.mxu0 0.0
        %813 = vmatpush1.msra.mxu0 0.0
        %814 = vmatprep.subr.mxu0 0.0
        %815 = vmatpush1.msra.mxu0 0.0
        %816 = vmatprep.subr.mxu0 0.0
        %817 = vmatpush1.msra.mxu0 0.0
        %818 = vmatprep.subr.mxu0 0.0
        %819 = vmatpush1.msra.mxu0 0.0
        %820 = vmatprep.subr.mxu0 0.0
        %821 = vmatpush1.msra.mxu0 0.0
        %822 = vmatprep.subr.mxu0 0.0
        %823 = vmatpush1.msra.mxu0 0.0
        %824 = vmatprep.subr.mxu0 0.0
        %825 = vmatpush1.msra.mxu0 0.0
        %826 = vmatprep.subr.mxu0 0.0
        %827 = vmatpush1.msra.mxu0 0.0
        %828 = vmatprep.subr.mxu0 0.0
        %829 = vmatpush1.msra.mxu0 0.0
        %830 = vmatprep.subr.mxu0 0.0
        %831 = vmatpush1.msra.mxu0 0.0
        %832 = vmatprep.subr.mxu0 0.0
        %833 = vmatpush1.msra.mxu0 0.0
        %834 = vmatprep.subr.mxu0 0.0
        %835 = vmatpush1.msra.mxu0 0.0
        %836 = vmatprep.subr.mxu0 0.0
        %837 = vmatpush1.msra.mxu0 0.0
        %838 = vmatprep.subr.mxu0 0.0
        %839 = vmatpush1.msra.mxu0 0.0
        %840 = vmatprep.subr.mxu0 %v397
        %841 = vmatpush1.msra.mxu0 %v395
        %842 = vmatprep.subr.mxu0 0.0
        %843 = vmatpush2.msra.mxu0 0.0
        %844 = vmatprep.subr.mxu0 0.0
        %845 = vmatpush2.msra.mxu0 0.0
        %846 = vmatprep.subr.mxu0 0.0
        %847 = vmatpush2.msra.mxu0 0.0
        %848 = vmatprep.subr.mxu0 0.0
        %849 = vmatpush2.msra.mxu0 0.0
        %850 = vmatprep.subr.mxu0 0.0
        %851 = vmatpush2.msra.mxu0 0.0
        %852 = vmatprep.subr.mxu0 0.0
        %853 = vmatpush2.msra.mxu0 0.0
        %854 = vmatprep.subr.mxu0 0.0
        %855 = vmatpush2.msra.mxu0 0.0
        %856 = vmatprep.subr.mxu0 0.0
        %857 = vmatpush2.msra.mxu0 0.0
        %858 = vmatprep.subr.mxu0 0.0
        %859 = vmatpush2.msra.mxu0 0.0
        %860 = vmatprep.subr.mxu0 0.0
        %861 = vmatpush2.msra.mxu0 0.0
        %862 = vmatprep.subr.mxu0 0.0
        %863 = vmatpush2.msra.mxu0 0.0
        %864 = vmatprep.subr.mxu0 0.0
        %865 = vmatpush2.msra.mxu0 0.0
        %866 = vmatprep.subr.mxu0 0.0
        %867 = vmatpush2.msra.mxu0 0.0
        %868 = vmatprep.subr.mxu0 0.0
        %869 = vmatpush2.msra.mxu0 0.0
        %870 = vmatprep.subr.mxu0 0.0
        %871 = vmatpush2.msra.mxu0 0.0
        %872 = vmatprep.subr.mxu0 0.0
        %873 = vmatpush2.msra.mxu0 0.0
        %874 = vmatprep.mubr.f32.mxu0 0.0
        %875 = vmatmul.mubr.f32.gmra.mxu0 %v347
        %v876 = vpop.f32.mrf.mxu0
        %v877 = vadd.f32 0.0, %v876
        %v878 = vpop.f32.mrf.mxu0
        %v879 = vadd.f32 0.0, %v878
        %880 = vmatprep.mubr.f32.mxu0 0.0
        %881 = vmatmul.mubr.f32.gmra.mxu0 %v350
        %v882 = vpop.f32.mrf.mxu0
        %v883 = vadd.f32 0.0, %v882
        %v884 = vpop.f32.mrf.mxu0
        %v885 = vadd.f32 0.0, %v884
        %886 = vmatprep.mubr.f32.mxu0 0.0
        %887 = vmatmul.mubr.f32.gmra.mxu0 %v353
        %v888 = vpop.f32.mrf.mxu0
        %v889 = vadd.f32 0.0, %v888
        %v890 = vpop.f32.mrf.mxu0
        %v891 = vadd.f32 0.0, %v890
        %892 = vmatprep.mubr.f32.mxu0 0.0
        %893 = vmatmul.mubr.f32.gmra.mxu0 %v356
        %v894 = vpop.f32.mrf.mxu0
        %v895 = vadd.f32 0.0, %v894
        %v896 = vpop.f32.mrf.mxu0
        %v897 = vadd.f32 0.0, %v896
        %898 = vmatprep.mubr.f32.mxu0 0.0
        %899 = vmatmul.mubr.f32.gmra.mxu0 %v359
        %v900 = vpop.f32.mrf.mxu0
        %v901 = vadd.f32 0.0, %v900
        %v902 = vpop.f32.mrf.mxu0
        %v903 = vadd.f32 0.0, %v902
        %904 = vmatprep.mubr.f32.mxu0 0.0
        %905 = vmatmul.mubr.f32.gmra.mxu0 %v362
        %v906 = vpop.f32.mrf.mxu0
        %v907 = vadd.f32 0.0, %v906
        %v908 = vpop.f32.mrf.mxu0
        %v909 = vadd.f32 0.0, %v908
        %910 = vmatprep.mubr.f32.mxu0 0.0
        %911 = vmatmul.mubr.f32.gmra.mxu0 %v365
        %v912 = vpop.f32.mrf.mxu0
        %v913 = vadd.f32 0.0, %v912
        %v914 = vpop.f32.mrf.mxu0
        %v915 = vadd.f32 0.0, %v914
        %916 = vmatprep.mubr.f32.mxu0 0.0
        %917 = vmatmul.mubr.f32.gmra.mxu0 %v368
        %v918 = vpop.f32.mrf.mxu0
        %v919 = vadd.f32 0.0, %v918
        %v920 = vpop.f32.mrf.mxu0
        %v921 = vadd.f32 0.0, %v920
        %922 = vmatprep.mubr.f32.mxu0 0.0
        %923 = vmatmul.mubr.f32.gmra.mxu0 %v371
        %v924 = vpop.f32.mrf.mxu0
        %v925 = vadd.f32 0.0, %v924
        %v926 = vpop.f32.mrf.mxu0
        %v927 = vadd.f32 0.0, %v926
        %928 = vmatprep.mubr.f32.mxu0 0.0
        %929 = vmatmul.mubr.f32.gmra.mxu0 %v374
        %v930 = vpop.f32.mrf.mxu0
        %v931 = vadd.f32 0.0, %v930
        %v932 = vpop.f32.mrf.mxu0
        %v933 = vadd.f32 0.0, %v932
        %934 = vmatprep.mubr.f32.mxu0 0.0
        %935 = vmatmul.mubr.f32.gmra.mxu0 %v377
        %v936 = vpop.f32.mrf.mxu0
        %v937 = vadd.f32 0.0, %v936
        %v938 = vpop.f32.mrf.mxu0
        %v939 = vadd.f32 0.0, %v938
        %940 = vmatprep.mubr.f32.mxu0 0.0
        %941 = vmatmul.mubr.f32.gmra.mxu0 %v380
        %v942 = vpop.f32.mrf.mxu0
        %v943 = vadd.f32 0.0, %v942
        %v944 = vpop.f32.mrf.mxu0
        %v945 = vadd.f32 0.0, %v944
        %946 = vdwg.mxu0
        %v947 = vld [vmem:[#allocation4] sm:$0xff]
        %v948 = vld [vmem:[#allocation4 + $0x8] sm:$0xff]
        %v949 = vld [vmem:[#allocation4 + $0x10] sm:$0xff]
        %v950 = vld [vmem:[#allocation4 + $0x18] sm:$0xff]
        %v951 = vld [vmem:[#allocation4 + $0x20] sm:$0xf]
        %v952 = vld [vmem:[%s5] sm:$0xff]
        %v953 = vld [vmem:[%s5 + $0x8] sm:$0xff]
        %v954 = vld [vmem:[%s5 + $0x10] sm:$0xff]
        %v955 = vld [vmem:[%s5 + $0x18] sm:$0xff]
        %v956 = vld [vmem:[%s5 + $0x20] sm:$0xff]
        %v957 = vld [vmem:[%s5 + $0x28] sm:$0xff]
        %v958 = vld [vmem:[%s5 + $0x30] sm:$0xff]
        %v959 = vld [vmem:[%s5 + $0x38] sm:$0xff]
        %v960 = vld [vmem:[%s5 + $0x40] sm:$0xff]
        %v961 = vld [vmem:[%s5 + $0x48] sm:$0xff]
        %v962 = vld [vmem:[%s5 + $0x50] sm:$0xff]
        %v963 = vld [vmem:[%s5 + $0x58] sm:$0xff]
        %v964 = vld [vmem:[%s5 + $0x60] sm:$0xff]
        %v965 = vld [vmem:[%s5 + $0x68] sm:$0xff]
        %v966 = vld [vmem:[%s5 + $0x70] sm:$0xff]
        %v967 = vld [vmem:[%s5 + $0x78] sm:$0xff]
        %v968 = vld [vmem:[%s5 + $0x80] sm:$0xff]
        %vm969 = vcmask 785408
        %v971 = vsel %vm969, %v947, 0
        %v974 = vsel %vm969, %v948, 0
        %v977 = vsel %vm969, %v949, 0
        %979 = vmatprep.subr.mxu0 0.0
        %980 = vmatpush1.msra.mxu0 0.0
        %981 = vmatprep.subr.mxu0 0.0
        %982 = vmatpush1.msra.mxu0 0.0
        %983 = vmatprep.subr.mxu0 0.0
        %984 = vmatpush1.msra.mxu0 0.0
        %985 = vmatprep.subr.mxu0 0.0
        %986 = vmatpush1.msra.mxu0 0.0
        %987 = vmatprep.subr.mxu0 %v534
        %988 = vmatpush1.msra.mxu0 %v532
        %989 = vmatprep.subr.mxu0 %v528
        %990 = vmatpush1.msra.mxu0 %v526
        %991 = vmatprep.subr.mxu0 %v522
        %992 = vmatpush1.msra.mxu0 %v520
        %993 = vmatprep.subr.mxu0 %v516
        %994 = vmatpush1.msra.mxu0 %v514
        %995 = vmatprep.subr.mxu0 %v510
        %996 = vmatpush1.msra.mxu0 %v508
        %997 = vmatprep.subr.mxu0 %v504
        %998 = vmatpush1.msra.mxu0 %v502
        %999 = vmatprep.subr.mxu0 %v498
        %1000 = vmatpush1.msra.mxu0 %v496
        %1001 = vmatprep.subr.mxu0 %v492
        %1002 = vmatpush1.msra.mxu0 %v490
        %1003 = vmatprep.subr.mxu0 %v486
        %1004 = vmatpush1.msra.mxu0 %v484
        %1005 = vmatprep.subr.mxu0 %v480
        %1006 = vmatpush1.msra.mxu0 %v478
        %1007 = vmatprep.subr.mxu0 %v474
        %1008 = vmatpush1.msra.mxu0 %v472
        %1009 = vmatprep.subr.mxu0 %v468
        %1010 = vmatpush1.msra.mxu0 %v466
        %1011 = vmatprep.subr.mxu0 0.0
        %1012 = vmatpush2.msra.mxu0 0.0
        %1013 = vmatprep.subr.mxu0 0.0
        %1014 = vmatpush2.msra.mxu0 0.0
        %1015 = vmatprep.subr.mxu0 0.0
        %1016 = vmatpush2.msra.mxu0 0.0
        %1017 = vmatprep.subr.mxu0 0.0
        %1018 = vmatpush2.msra.mxu0 0.0
        %1019 = vmatprep.subr.mxu0 0.0
        %1020 = vmatpush2.msra.mxu0 0.0
        %1021 = vmatprep.subr.mxu0 0.0
        %1022 = vmatpush2.msra.mxu0 0.0
        %1023 = vmatprep.subr.mxu0 0.0
        %1024 = vmatpush2.msra.mxu0 0.0
        %1025 = vmatprep.subr.mxu0 0.0
        %1026 = vmatpush2.msra.mxu0 0.0
        %1027 = vmatprep.subr.mxu0 0.0
        %1028 = vmatpush2.msra.mxu0 0.0
        %1029 = vmatprep.subr.mxu0 0.0
        %1030 = vmatpush2.msra.mxu0 0.0
        %1031 = vmatprep.subr.mxu0 0.0
        %1032 = vmatpush2.msra.mxu0 0.0
        %1033 = vmatprep.subr.mxu0 0.0
        %1034 = vmatpush2.msra.mxu0 0.0
        %1035 = vmatprep.subr.mxu0 0.0
        %1036 = vmatpush2.msra.mxu0 0.0
        %1037 = vmatprep.subr.mxu0 0.0
        %1038 = vmatpush2.msra.mxu0 0.0
        %1039 = vmatprep.subr.mxu0 0.0
        %1040 = vmatpush2.msra.mxu0 0.0
        %1041 = vmatprep.subr.mxu0 0.0
        %1042 = vmatpush2.msra.mxu0 0.0
        %1043 = vmatprep.mubr.f32.mxu0 0.0
        %1044 = vmatmul.mubr.f32.gmra.mxu0 %v971
        %v1045 = vpop.f32.mrf.mxu0
        %v1046 = vadd.f32 0.0, %v1045
        %v1047 = vpop.f32.mrf.mxu0
        %v1048 = vadd.f32 0.0, %v1047
        %1049 = vmatprep.mubr.f32.mxu0 0.0
        %1050 = vmatmul.mubr.f32.gmra.mxu0 %v974
        %v1051 = vpop.f32.mrf.mxu0
        %v1052 = vadd.f32 0.0, %v1051
        %v1053 = vpop.f32.mrf.mxu0
        %v1054 = vadd.f32 0.0, %v1053
        %1055 = vmatprep.mubr.f32.mxu0 0.0
        %1056 = vmatmul.mubr.f32.gmra.mxu0 %v977
        %v1057 = vpop.f32.mrf.mxu0
        %v1058 = vadd.f32 0.0, %v1057
        %v1059 = vpop.f32.mrf.mxu0
        %v1060 = vadd.f32 0.0, %v1059
        %1061 = vdwg.mxu0
        %1062 = vmatprep.subr.mxu0 0.0
        %1063 = vmatpush1.msra.mxu0 0.0
        %1064 = vmatprep.subr.mxu0 0.0
        %1065 = vmatpush1.msra.mxu0 0.0
        %1066 = vmatprep.subr.mxu0 0.0
        %1067 = vmatpush1.msra.mxu0 0.0
        %1068 = vmatprep.subr.mxu0 0.0
        %1069 = vmatpush1.msra.mxu0 0.0
        %1070 = vmatprep.subr.mxu0 %v671
        %1071 = vmatpush1.msra.mxu0 %v669
        %1072 = vmatprep.subr.mxu0 %v665
        %1073 = vmatpush1.msra.mxu0 %v663
        %1074 = vmatprep.subr.mxu0 %v659
        %1075 = vmatpush1.msra.mxu0 %v657
        %1076 = vmatprep.subr.mxu0 %v653
        %1077 = vmatpush1.msra.mxu0 %v651
        %1078 = vmatprep.subr.mxu0 %v647
        %1079 = vmatpush1.msra.mxu0 %v645
        %1080 = vmatprep.subr.mxu0 %v641
        %1081 = vmatpush1.msra.mxu0 %v639
        %1082 = vmatprep.subr.mxu0 %v635
        %1083 = vmatpush1.msra.mxu0 %v633
        %1084 = vmatprep.subr.mxu0 %v629
        %1085 = vmatpush1.msra.mxu0 %v627
        %1086 = vmatprep.subr.mxu0 %v623
        %1087 = vmatpush1.msra.mxu0 %v621
        %1088 = vmatprep.subr.mxu0 %v617
        %1089 = vmatpush1.msra.mxu0 %v615
        %1090 = vmatprep.subr.mxu0 %v611
        %1091 = vmatpush1.msra.mxu0 %v609
        %1092 = vmatprep.subr.mxu0 %v605
        %1093 = vmatpush1.msra.mxu0 %v603
        %1094 = vmatprep.subr.mxu0 0.0
        %1095 = vmatpush2.msra.mxu0 0.0
        %1096 = vmatprep.subr.mxu0 0.0
        %1097 = vmatpush2.msra.mxu0 0.0
        %1098 = vmatprep.subr.mxu0 0.0
        %1099 = vmatpush2.msra.mxu0 0.0
        %1100 = vmatprep.subr.mxu0 0.0
        %1101 = vmatpush2.msra.mxu0 0.0
        %1102 = vmatprep.subr.mxu0 0.0
        %1103 = vmatpush2.msra.mxu0 0.0
        %1104 = vmatprep.subr.mxu0 0.0
        %1105 = vmatpush2.msra.mxu0 0.0
        %1106 = vmatprep.subr.mxu0 0.0
        %1107 = vmatpush2.msra.mxu0 0.0
        %1108 = vmatprep.subr.mxu0 0.0
        %1109 = vmatpush2.msra.mxu0 0.0
        %1110 = vmatprep.subr.mxu0 0.0
        %1111 = vmatpush2.msra.mxu0 0.0
        %1112 = vmatprep.subr.mxu0 0.0
        %1113 = vmatpush2.msra.mxu0 0.0
        %1114 = vmatprep.subr.mxu0 0.0
        %1115 = vmatpush2.msra.mxu0 0.0
        %1116 = vmatprep.subr.mxu0 0.0
        %1117 = vmatpush2.msra.mxu0 0.0
        %1118 = vmatprep.subr.mxu0 0.0
        %1119 = vmatpush2.msra.mxu0 0.0
        %1120 = vmatprep.subr.mxu0 0.0
        %1121 = vmatpush2.msra.mxu0 0.0
        %1122 = vmatprep.subr.mxu0 0.0
        %1123 = vmatpush2.msra.mxu0 0.0
        %1124 = vmatprep.subr.mxu0 0.0
        %1125 = vmatpush2.msra.mxu0 0.0
        %1126 = vmatprep.mubr.f32.mxu0 0.0
        %1127 = vmatmul.mubr.f32.gmra.mxu0 %v971
        %v1128 = vpop.f32.mrf.mxu0
        %v1129 = vadd.f32 0.0, %v1128
        %v1130 = vpop.f32.mrf.mxu0
        %v1131 = vadd.f32 0.0, %v1130
        %1132 = vmatprep.mubr.f32.mxu0 0.0
        %1133 = vmatmul.mubr.f32.gmra.mxu0 %v974
        %v1134 = vpop.f32.mrf.mxu0
        %v1135 = vadd.f32 0.0, %v1134
        %v1136 = vpop.f32.mrf.mxu0
        %v1137 = vadd.f32 0.0, %v1136
        %1138 = vmatprep.mubr.f32.mxu0 0.0
        %1139 = vmatmul.mubr.f32.gmra.mxu0 %v977
        %v1140 = vpop.f32.mrf.mxu0
        %v1141 = vadd.f32 0.0, %v1140
        %v1142 = vpop.f32.mrf.mxu0
        %v1143 = vadd.f32 0.0, %v1142
        %1144 = vdwg.mxu0
        %1145 = vmatprep.subr.mxu0 0.0
        %1146 = vmatpush1.msra.mxu0 0.0
        %1147 = vmatprep.subr.mxu0 0.0
        %1148 = vmatpush1.msra.mxu0 0.0
        %1149 = vmatprep.subr.mxu0 0.0
        %1150 = vmatpush1.msra.mxu0 0.0
        %1151 = vmatprep.subr.mxu0 0.0
        %1152 = vmatpush1.msra.mxu0 0.0
        %1153 = vmatprep.subr.mxu0 %v808
        %1154 = vmatpush1.msra.mxu0 %v806
        %1155 = vmatprep.subr.mxu0 %v802
        %1156 = vmatpush1.msra.mxu0 %v800
        %1157 = vmatprep.subr.mxu0 %v796
        %1158 = vmatpush1.msra.mxu0 %v794
        %1159 = vmatprep.subr.mxu0 %v790
        %1160 = vmatpush1.msra.mxu0 %v788
        %1161 = vmatprep.subr.mxu0 %v784
        %1162 = vmatpush1.msra.mxu0 %v782
        %1163 = vmatprep.subr.mxu0 %v778
        %1164 = vmatpush1.msra.mxu0 %v776
        %1165 = vmatprep.subr.mxu0 %v772
        %1166 = vmatpush1.msra.mxu0 %v770
        %1167 = vmatprep.subr.mxu0 %v766
        %1168 = vmatpush1.msra.mxu0 %v764
        %1169 = vmatprep.subr.mxu0 %v760
        %1170 = vmatpush1.msra.mxu0 %v758
        %1171 = vmatprep.subr.mxu0 %v754
        %1172 = vmatpush1.msra.mxu0 %v752
        %1173 = vmatprep.subr.mxu0 %v748
        %1174 = vmatpush1.msra.mxu0 %v746
        %1175 = vmatprep.subr.mxu0 %v742
        %1176 = vmatpush1.msra.mxu0 %v740
        %1177 = vmatprep.subr.mxu0 0.0
        %1178 = vmatpush2.msra.mxu0 0.0
        %1179 = vmatprep.subr.mxu0 0.0
        %1180 = vmatpush2.msra.mxu0 0.0
        %1181 = vmatprep.subr.mxu0 0.0
        %1182 = vmatpush2.msra.mxu0 0.0
        %1183 = vmatprep.subr.mxu0 0.0
        %1184 = vmatpush2.msra.mxu0 0.0
        %1185 = vmatprep.subr.mxu0 0.0
        %1186 = vmatpush2.msra.mxu0 0.0
        %1187 = vmatprep.subr.mxu0 0.0
        %1188 = vmatpush2.msra.mxu0 0.0
        %1189 = vmatprep.subr.mxu0 0.0
        %1190 = vmatpush2.msra.mxu0 0.0
        %1191 = vmatprep.subr.mxu0 0.0
        %1192 = vmatpush2.msra.mxu0 0.0
        %1193 = vmatprep.subr.mxu0 0.0
        %1194 = vmatpush2.msra.mxu0 0.0
        %1195 = vmatprep.subr.mxu0 0.0
        %1196 = vmatpush2.msra.mxu0 0.0
        %1197 = vmatprep.subr.mxu0 0.0
        %1198 = vmatpush2.msra.mxu0 0.0
        %1199 = vmatprep.subr.mxu0 0.0
        %1200 = vmatpush2.msra.mxu0 0.0
        %1201 = vmatprep.subr.mxu0 0.0
        %1202 = vmatpush2.msra.mxu0 0.0
        %1203 = vmatprep.subr.mxu0 0.0
        %1204 = vmatpush2.msra.mxu0 0.0
        %1205 = vmatprep.subr.mxu0 0.0
        %1206 = vmatpush2.msra.mxu0 0.0
        %1207 = vmatprep.subr.mxu0 0.0
        %1208 = vmatpush2.msra.mxu0 0.0
        %1209 = vmatprep.mubr.f32.mxu0 0.0
        %1210 = vmatmul.mubr.f32.gmra.mxu0 %v971
        %v1211 = vpop.f32.mrf.mxu0
        %v1212 = vadd.f32 0.0, %v1211
        %v1213 = vpop.f32.mrf.mxu0
        %v1214 = vadd.f32 0.0, %v1213
        %1215 = vmatprep.mubr.f32.mxu0 0.0
        %1216 = vmatmul.mubr.f32.gmra.mxu0 %v974
        %v1217 = vpop.f32.mrf.mxu0
        %v1218 = vadd.f32 0.0, %v1217
        %v1219 = vpop.f32.mrf.mxu0
        %v1220 = vadd.f32 0.0, %v1219
        %1221 = vmatprep.mubr.f32.mxu0 0.0
        %1222 = vmatmul.mubr.f32.gmra.mxu0 %v977
        %v1223 = vpop.f32.mrf.mxu0
        %v1224 = vadd.f32 0.0, %v1223
        %v1225 = vpop.f32.mrf.mxu0
        %v1226 = vadd.f32 0.0, %v1225
        %1227 = vdwg.mxu0
        %1228 = vmatprep.subr.mxu0 0.0
        %1229 = vmatpush1.msra.mxu0 0.0
        %1230 = vmatprep.subr.mxu0 0.0
        %1231 = vmatpush1.msra.mxu0 0.0
        %1232 = vmatprep.subr.mxu0 0.0
        %1233 = vmatpush1.msra.mxu0 0.0
        %1234 = vmatprep.subr.mxu0 0.0
        %1235 = vmatpush1.msra.mxu0 0.0
        %1236 = vmatprep.subr.mxu0 %v945
        %1237 = vmatpush1.msra.mxu0 %v943
        %1238 = vmatprep.subr.mxu0 %v939
        %1239 = vmatpush1.msra.mxu0 %v937
        %1240 = vmatprep.subr.mxu0 %v933
        %1241 = vmatpush1.msra.mxu0 %v931
        %1242 = vmatprep.subr.mxu0 %v927
        %1243 = vmatpush1.msra.mxu0 %v925
        %1244 = vmatprep.subr.mxu0 %v921
        %1245 = vmatpush1.msra.mxu0 %v919
        %1246 = vmatprep.subr.mxu0 %v915
        %1247 = vmatpush1.msra.mxu0 %v913
        %1248 = vmatprep.subr.mxu0 %v909
        %1249 = vmatpush1.msra.mxu0 %v907
        %1250 = vmatprep.subr.mxu0 %v903
        %1251 = vmatpush1.msra.mxu0 %v901
        %1252 = vmatprep.subr.mxu0 %v897
        %1253 = vmatpush1.msra.mxu0 %v895
        %1254 = vmatprep.subr.mxu0 %v891
        %1255 = vmatpush1.msra.mxu0 %v889
        %1256 = vmatprep.subr.mxu0 %v885
        %1257 = vmatpush1.msra.mxu0 %v883
        %1258 = vmatprep.subr.mxu0 %v879
        %1259 = vmatpush1.msra.mxu0 %v877
        %1260 = vmatprep.subr.mxu0 0.0
        %1261 = vmatpush2.msra.mxu0 0.0
        %1262 = vmatprep.subr.mxu0 0.0
        %1263 = vmatpush2.msra.mxu0 0.0
        %1264 = vmatprep.subr.mxu0 0.0
        %1265 = vmatpush2.msra.mxu0 0.0
        %1266 = vmatprep.subr.mxu0 0.0
        %1267 = vmatpush2.msra.mxu0 0.0
        %1268 = vmatprep.subr.mxu0 0.0
        %1269 = vmatpush2.msra.mxu0 0.0
        %1270 = vmatprep.subr.mxu0 0.0
        %1271 = vmatpush2.msra.mxu0 0.0
        %1272 = vmatprep.subr.mxu0 0.0
        %1273 = vmatpush2.msra.mxu0 0.0
        %1274 = vmatprep.subr.mxu0 0.0
        %1275 = vmatpush2.msra.mxu0 0.0
        %1276 = vmatprep.subr.mxu0 0.0
        %1277 = vmatpush2.msra.mxu0 0.0
        %1278 = vmatprep.subr.mxu0 0.0
        %1279 = vmatpush2.msra.mxu0 0.0
        %1280 = vmatprep.subr.mxu0 0.0
        %1281 = vmatpush2.msra.mxu0 0.0
        %1282 = vmatprep.subr.mxu0 0.0
        %1283 = vmatpush2.msra.mxu0 0.0
        %1284 = vmatprep.subr.mxu0 0.0
        %1285 = vmatpush2.msra.mxu0 0.0
        %1286 = vmatprep.subr.mxu0 0.0
        %1287 = vmatpush2.msra.mxu0 0.0
        %1288 = vmatprep.subr.mxu0 0.0
        %1289 = vmatpush2.msra.mxu0 0.0
        %1290 = vmatprep.subr.mxu0 0.0
        %1291 = vmatpush2.msra.mxu0 0.0
        %1292 = vmatprep.mubr.f32.mxu0 0.0
        %1293 = vmatmul.mubr.f32.gmra.mxu0 %v971
        %v1294 = vpop.f32.mrf.mxu0
        %v1295 = vadd.f32 0.0, %v1294
        %v1296 = vpop.f32.mrf.mxu0
        %v1297 = vadd.f32 0.0, %v1296
        %1298 = vmatprep.mubr.f32.mxu0 0.0
        %1299 = vmatmul.mubr.f32.gmra.mxu0 %v974
        %v1300 = vpop.f32.mrf.mxu0
        %v1301 = vadd.f32 0.0, %v1300
        %v1302 = vpop.f32.mrf.mxu0
        %v1303 = vadd.f32 0.0, %v1302
        %1304 = vmatprep.mubr.f32.mxu0 0.0
        %1305 = vmatmul.mubr.f32.gmra.mxu0 %v977
        %v1306 = vpop.f32.mrf.mxu0
        %v1307 = vadd.f32 0.0, %v1306
        %v1308 = vpop.f32.mrf.mxu0
        %v1309 = vadd.f32 0.0, %v1308
        %1310 = vdwg.mxu0
        %v1311 = vmul.f32 %v1046, 0.33333334
        %v1312 = vmul.f32 %v1048, 0.33333334
        %v1313 = vmul.f32 %v1129, 0.33333334
        %v1314 = vmul.f32 %v1131, 0.33333334
        %v1315 = vmul.f32 %v1212, 0.33333334
        %v1316 = vmul.f32 %v1214, 0.33333334
        %v1317 = vmul.f32 %v1295, 0.33333334
        %v1318 = vmul.f32 %v1297, 0.33333334
        %v1319 = vmul.f32 %v1052, 0.33333334
        %v1320 = vmul.f32 %v1054, 0.33333334
        %v1321 = vmul.f32 %v1135, 0.33333334
        %v1322 = vmul.f32 %v1137, 0.33333334
        %v1323 = vmul.f32 %v1218, 0.33333334
        %v1324 = vmul.f32 %v1220, 0.33333334
        %v1325 = vmul.f32 %v1301, 0.33333334
        %v1326 = vmul.f32 %v1303, 0.33333334
        %v1327 = vmul.f32 %v1058, 0.33333334
        %v1328 = vmul.f32 %v1060, 0.33333334
        %v1329 = vmul.f32 %v1141, 0.33333334
        %v1330 = vmul.f32 %v1143, 0.33333334
        %v1331 = vmul.f32 %v1224, 0.33333334
        %v1332 = vmul.f32 %v1226, 0.33333334
        %v1333 = vmul.f32 %v1307, 0.33333334
        %v1334 = vmul.f32 %v1309, 0.33333334
        %v1335 = vmul.f32 %v1311, %v1311
        %v1336 = vmul.f32 %v1312, %v1312
        %v1337 = vmul.f32 %v1313, %v1313
        %v1338 = vmul.f32 %v1314, %v1314
        %v1339 = vmul.f32 %v1315, %v1315
        %v1340 = vmul.f32 %v1316, %v1316
        %v1341 = vmul.f32 %v1317, %v1317
        %v1342 = vmul.f32 %v1318, %v1318
        %v1343 = vmul.f32 %v1319, %v1319
        %v1344 = vmul.f32 %v1320, %v1320
        %v1345 = vmul.f32 %v1321, %v1321
        %v1346 = vmul.f32 %v1322, %v1322
        %v1347 = vmul.f32 %v1323, %v1323
        %v1348 = vmul.f32 %v1324, %v1324
        %v1349 = vmul.f32 %v1325, %v1325
        %v1350 = vmul.f32 %v1326, %v1326
        %v1351 = vmul.f32 %v1327, %v1327
        %v1352 = vmul.f32 %v1328, %v1328
        %v1353 = vmul.f32 %v1329, %v1329
        %v1354 = vmul.f32 %v1330, %v1330
        %v1355 = vmul.f32 %v1331, %v1331
        %v1356 = vmul.f32 %v1332, %v1332
        %v1357 = vmul.f32 %v1333, %v1333
        %v1358 = vmul.f32 %v1334, %v1334
        %vm1359 = vcmask 195584
        %v1361 = vsel %vm1359, %v952, 0
        %v1364 = vsel %vm1359, %v953, 0
        %v1367 = vsel %vm1359, %v954, 0
        %1369 = vmatprep.subr.mxu0 0.0
        %1370 = vmatpush1.msra.mxu0 0.0
        %1371 = vmatprep.subr.mxu0 0.0
        %1372 = vmatpush1.msra.mxu0 0.0
        %1373 = vmatprep.subr.mxu0 0.0
        %1374 = vmatpush1.msra.mxu0 0.0
        %1375 = vmatprep.subr.mxu0 0.0
        %1376 = vmatpush1.msra.mxu0 0.0
        %1377 = vmatprep.subr.mxu0 0.0
        %1378 = vmatpush1.msra.mxu0 0.0
        %1379 = vmatprep.subr.mxu0 0.0
        %1380 = vmatpush1.msra.mxu0 0.0
        %1381 = vmatprep.subr.mxu0 0.0
        %1382 = vmatpush1.msra.mxu0 0.0
        %1383 = vmatprep.subr.mxu0 0.0
        %1384 = vmatpush1.msra.mxu0 0.0
        %1385 = vmatprep.subr.mxu0 0.0
        %1386 = vmatpush1.msra.mxu0 0.0
        %1387 = vmatprep.subr.mxu0 0.0
        %1388 = vmatpush1.msra.mxu0 0.0
        %1389 = vmatprep.subr.mxu0 0.0
        %1390 = vmatpush1.msra.mxu0 0.0
        %1391 = vmatprep.subr.mxu0 0.0
        %1392 = vmatpush1.msra.mxu0 0.0
        %1393 = vmatprep.subr.mxu0 0.0
        %1394 = vmatpush1.msra.mxu0 0.0
        %1395 = vmatprep.subr.mxu0 %v1352
        %1396 = vmatpush1.msra.mxu0 %v1351
        %1397 = vmatprep.subr.mxu0 %v1344
        %1398 = vmatpush1.msra.mxu0 %v1343
        %1399 = vmatprep.subr.mxu0 %v1336
        %1400 = vmatpush1.msra.mxu0 %v1335
        %1401 = vmatprep.subr.mxu0 0.0
        %1402 = vmatpush2.msra.mxu0 0.0
        %1403 = vmatprep.subr.mxu0 0.0
        %1404 = vmatpush2.msra.mxu0 0.0
        %1405 = vmatprep.subr.mxu0 0.0
        %1406 = vmatpush2.msra.mxu0 0.0
        %1407 = vmatprep.subr.mxu0 0.0
        %1408 = vmatpush2.msra.mxu0 0.0
        %1409 = vmatprep.subr.mxu0 0.0
        %1410 = vmatpush2.msra.mxu0 0.0
        %1411 = vmatprep.subr.mxu0 0.0
        %1412 = vmatpush2.msra.mxu0 0.0
        %1413 = vmatprep.subr.mxu0 0.0
        %1414 = vmatpush2.msra.mxu0 0.0
        %1415 = vmatprep.subr.mxu0 0.0
        %1416 = vmatpush2.msra.mxu0 0.0
        %1417 = vmatprep.subr.mxu0 0.0
        %1418 = vmatpush2.msra.mxu0 0.0
        %1419 = vmatprep.subr.mxu0 0.0
        %1420 = vmatpush2.msra.mxu0 0.0
        %1421 = vmatprep.subr.mxu0 0.0
        %1422 = vmatpush2.msra.mxu0 0.0
        %1423 = vmatprep.subr.mxu0 0.0
        %1424 = vmatpush2.msra.mxu0 0.0
        %1425 = vmatprep.subr.mxu0 0.0
        %1426 = vmatpush2.msra.mxu0 0.0
        %1427 = vmatprep.subr.mxu0 0.0
        %1428 = vmatpush2.msra.mxu0 0.0
        %1429 = vmatprep.subr.mxu0 0.0
        %1430 = vmatpush2.msra.mxu0 0.0
        %1431 = vmatprep.subr.mxu0 0.0
        %1432 = vmatpush2.msra.mxu0 0.0
        %1433 = vmatprep.mubr.f32.mxu0 0.0
        %1434 = vmatmul.mubr.f32.gmra.mxu0 %v1361
        %v1435 = vpop.f32.mrf.mxu0
        %v1436 = vadd.f32 0.0, %v1435
        %v1437 = vpop.f32.mrf.mxu0
        %v1438 = vadd.f32 0.0, %v1437
        %1439 = vmatprep.mubr.f32.mxu0 0.0
        %1440 = vmatmul.mubr.f32.gmra.mxu0 %v1364
        %v1441 = vpop.f32.mrf.mxu0
        %v1442 = vadd.f32 0.0, %v1441
        %v1443 = vpop.f32.mrf.mxu0
        %v1444 = vadd.f32 0.0, %v1443
        %1445 = vmatprep.mubr.f32.mxu0 0.0
        %1446 = vmatmul.mubr.f32.gmra.mxu0 %v1367
        %v1447 = vpop.f32.mrf.mxu0
        %v1448 = vadd.f32 0.0, %v1447
        %v1449 = vpop.f32.mrf.mxu0
        %v1450 = vadd.f32 0.0, %v1449
        %1451 = vdwg.mxu0
        %1452 = vmatprep.subr.mxu0 0.0
        %1453 = vmatpush1.msra.mxu0 0.0
        %1454 = vmatprep.subr.mxu0 0.0
        %1455 = vmatpush1.msra.mxu0 0.0
        %1456 = vmatprep.subr.mxu0 0.0
        %1457 = vmatpush1.msra.mxu0 0.0
        %1458 = vmatprep.subr.mxu0 0.0
        %1459 = vmatpush1.msra.mxu0 0.0
        %1460 = vmatprep.subr.mxu0 0.0
        %1461 = vmatpush1.msra.mxu0 0.0
        %1462 = vmatprep.subr.mxu0 0.0
        %1463 = vmatpush1.msra.mxu0 0.0
        %1464 = vmatprep.subr.mxu0 0.0
        %1465 = vmatpush1.msra.mxu0 0.0
        %1466 = vmatprep.subr.mxu0 0.0
        %1467 = vmatpush1.msra.mxu0 0.0
        %1468 = vmatprep.subr.mxu0 0.0
        %1469 = vmatpush1.msra.mxu0 0.0
        %1470 = vmatprep.subr.mxu0 0.0
        %1471 = vmatpush1.msra.mxu0 0.0
        %1472 = vmatprep.subr.mxu0 0.0
        %1473 = vmatpush1.msra.mxu0 0.0
        %1474 = vmatprep.subr.mxu0 0.0
        %1475 = vmatpush1.msra.mxu0 0.0
        %1476 = vmatprep.subr.mxu0 0.0
        %1477 = vmatpush1.msra.mxu0 0.0
        %1478 = vmatprep.subr.mxu0 %v1354
        %1479 = vmatpush1.msra.mxu0 %v1353
        %1480 = vmatprep.subr.mxu0 %v1346
        %1481 = vmatpush1.msra.mxu0 %v1345
        %1482 = vmatprep.subr.mxu0 %v1338
        %1483 = vmatpush1.msra.mxu0 %v1337
        %1484 = vmatprep.subr.mxu0 0.0
        %1485 = vmatpush2.msra.mxu0 0.0
        %1486 = vmatprep.subr.mxu0 0.0
        %1487 = vmatpush2.msra.mxu0 0.0
        %1488 = vmatprep.subr.mxu0 0.0
        %1489 = vmatpush2.msra.mxu0 0.0
        %1490 = vmatprep.subr.mxu0 0.0
        %1491 = vmatpush2.msra.mxu0 0.0
        %1492 = vmatprep.subr.mxu0 0.0
        %1493 = vmatpush2.msra.mxu0 0.0
        %1494 = vmatprep.subr.mxu0 0.0
        %1495 = vmatpush2.msra.mxu0 0.0
        %1496 = vmatprep.subr.mxu0 0.0
        %1497 = vmatpush2.msra.mxu0 0.0
        %1498 = vmatprep.subr.mxu0 0.0
        %1499 = vmatpush2.msra.mxu0 0.0
        %1500 = vmatprep.subr.mxu0 0.0
        %1501 = vmatpush2.msra.mxu0 0.0
        %1502 = vmatprep.subr.mxu0 0.0
        %1503 = vmatpush2.msra.mxu0 0.0
        %1504 = vmatprep.subr.mxu0 0.0
        %1505 = vmatpush2.msra.mxu0 0.0
        %1506 = vmatprep.subr.mxu0 0.0
        %1507 = vmatpush2.msra.mxu0 0.0
        %1508 = vmatprep.subr.mxu0 0.0
        %1509 = vmatpush2.msra.mxu0 0.0
        %1510 = vmatprep.subr.mxu0 0.0
        %1511 = vmatpush2.msra.mxu0 0.0
        %1512 = vmatprep.subr.mxu0 0.0
        %1513 = vmatpush2.msra.mxu0 0.0
        %1514 = vmatprep.subr.mxu0 0.0
        %1515 = vmatpush2.msra.mxu0 0.0
        %1516 = vmatprep.mubr.f32.mxu0 0.0
        %1517 = vmatmul.mubr.f32.gmra.mxu0 %v1361
        %v1518 = vpop.f32.mrf.mxu0
        %v1519 = vadd.f32 0.0, %v1518
        %v1520 = vpop.f32.mrf.mxu0
        %v1521 = vadd.f32 0.0, %v1520
        %1522 = vmatprep.mubr.f32.mxu0 0.0
        %1523 = vmatmul.mubr.f32.gmra.mxu0 %v1364
        %v1524 = vpop.f32.mrf.mxu0
        %v1525 = vadd.f32 0.0, %v1524
        %v1526 = vpop.f32.mrf.mxu0
        %v1527 = vadd.f32 0.0, %v1526
        %1528 = vmatprep.mubr.f32.mxu0 0.0
        %1529 = vmatmul.mubr.f32.gmra.mxu0 %v1367
        %v1530 = vpop.f32.mrf.mxu0
        %v1531 = vadd.f32 0.0, %v1530
        %v1532 = vpop.f32.mrf.mxu0
        %v1533 = vadd.f32 0.0, %v1532
        %1534 = vdwg.mxu0
        %1535 = vmatprep.subr.mxu0 0.0
        %1536 = vmatpush1.msra.mxu0 0.0
        %1537 = vmatprep.subr.mxu0 0.0
        %1538 = vmatpush1.msra.mxu0 0.0
        %1539 = vmatprep.subr.mxu0 0.0
        %1540 = vmatpush1.msra.mxu0 0.0
        %1541 = vmatprep.subr.mxu0 0.0
        %1542 = vmatpush1.msra.mxu0 0.0
        %1543 = vmatprep.subr.mxu0 0.0
        %1544 = vmatpush1.msra.mxu0 0.0
        %1545 = vmatprep.subr.mxu0 0.0
        %1546 = vmatpush1.msra.mxu0 0.0
        %1547 = vmatprep.subr.mxu0 0.0
        %1548 = vmatpush1.msra.mxu0 0.0
        %1549 = vmatprep.subr.mxu0 0.0
        %1550 = vmatpush1.msra.mxu0 0.0
        %1551 = vmatprep.subr.mxu0 0.0
        %1552 = vmatpush1.msra.mxu0 0.0
        %1553 = vmatprep.subr.mxu0 0.0
        %1554 = vmatpush1.msra.mxu0 0.0
        %1555 = vmatprep.subr.mxu0 0.0
        %1556 = vmatpush1.msra.mxu0 0.0
        %1557 = vmatprep.subr.mxu0 0.0
        %1558 = vmatpush1.msra.mxu0 0.0
        %1559 = vmatprep.subr.mxu0 0.0
        %1560 = vmatpush1.msra.mxu0 0.0
        %1561 = vmatprep.subr.mxu0 %v1356
        %1562 = vmatpush1.msra.mxu0 %v1355
        %1563 = vmatprep.subr.mxu0 %v1348
        %1564 = vmatpush1.msra.mxu0 %v1347
        %1565 = vmatprep.subr.mxu0 %v1340
        %1566 = vmatpush1.msra.mxu0 %v1339
        %1567 = vmatprep.subr.mxu0 0.0
        %1568 = vmatpush2.msra.mxu0 0.0
        %1569 = vmatprep.subr.mxu0 0.0
        %1570 = vmatpush2.msra.mxu0 0.0
        %1571 = vmatprep.subr.mxu0 0.0
        %1572 = vmatpush2.msra.mxu0 0.0
        %1573 = vmatprep.subr.mxu0 0.0
        %1574 = vmatpush2.msra.mxu0 0.0
        %1575 = vmatprep.subr.mxu0 0.0
        %1576 = vmatpush2.msra.mxu0 0.0
        %1577 = vmatprep.subr.mxu0 0.0
        %1578 = vmatpush2.msra.mxu0 0.0
        %1579 = vmatprep.subr.mxu0 0.0
        %1580 = vmatpush2.msra.mxu0 0.0
        %1581 = vmatprep.subr.mxu0 0.0
        %1582 = vmatpush2.msra.mxu0 0.0
        %1583 = vmatprep.subr.mxu0 0.0
        %1584 = vmatpush2.msra.mxu0 0.0
        %1585 = vmatprep.subr.mxu0 0.0
        %1586 = vmatpush2.msra.mxu0 0.0
        %1587 = vmatprep.subr.mxu0 0.0
        %1588 = vmatpush2.msra.mxu0 0.0
        %1589 = vmatprep.subr.mxu0 0.0
        %1590 = vmatpush2.msra.mxu0 0.0
        %1591 = vmatprep.subr.mxu0 0.0
        %1592 = vmatpush2.msra.mxu0 0.0
        %1593 = vmatprep.subr.mxu0 0.0
        %1594 = vmatpush2.msra.mxu0 0.0
        %1595 = vmatprep.subr.mxu0 0.0
        %1596 = vmatpush2.msra.mxu0 0.0
        %1597 = vmatprep.subr.mxu0 0.0
        %1598 = vmatpush2.msra.mxu0 0.0
        %1599 = vmatprep.mubr.f32.mxu0 0.0
        %1600 = vmatmul.mubr.f32.gmra.mxu0 %v1361
        %v1601 = vpop.f32.mrf.mxu0
        %v1602 = vadd.f32 0.0, %v1601
        %v1603 = vpop.f32.mrf.mxu0
        %v1604 = vadd.f32 0.0, %v1603
        %1605 = vmatprep.mubr.f32.mxu0 0.0
        %1606 = vmatmul.mubr.f32.gmra.mxu0 %v1364
        %v1607 = vpop.f32.mrf.mxu0
        %v1608 = vadd.f32 0.0, %v1607
        %v1609 = vpop.f32.mrf.mxu0
        %v1610 = vadd.f32 0.0, %v1609
        %1611 = vmatprep.mubr.f32.mxu0 0.0
        %1612 = vmatmul.mubr.f32.gmra.mxu0 %v1367
        %v1613 = vpop.f32.mrf.mxu0
        %v1614 = vadd.f32 0.0, %v1613
        %v1615 = vpop.f32.mrf.mxu0
        %v1616 = vadd.f32 0.0, %v1615
        %1617 = vdwg.mxu0
        %1618 = vmatprep.subr.mxu0 0.0
        %1619 = vmatpush1.msra.mxu0 0.0
        %1620 = vmatprep.subr.mxu0 0.0
        %1621 = vmatpush1.msra.mxu0 0.0
        %1622 = vmatprep.subr.mxu0 0.0
        %1623 = vmatpush1.msra.mxu0 0.0
        %1624 = vmatprep.subr.mxu0 0.0
        %1625 = vmatpush1.msra.mxu0 0.0
        %1626 = vmatprep.subr.mxu0 0.0
        %1627 = vmatpush1.msra.mxu0 0.0
        %1628 = vmatprep.subr.mxu0 0.0
        %1629 = vmatpush1.msra.mxu0 0.0
        %1630 = vmatprep.subr.mxu0 0.0
        %1631 = vmatpush1.msra.mxu0 0.0
        %1632 = vmatprep.subr.mxu0 0.0
        %1633 = vmatpush1.msra.mxu0 0.0
        %1634 = vmatprep.subr.mxu0 0.0
        %1635 = vmatpush1.msra.mxu0 0.0
        %1636 = vmatprep.subr.mxu0 0.0
        %1637 = vmatpush1.msra.mxu0 0.0
        %1638 = vmatprep.subr.mxu0 0.0
        %1639 = vmatpush1.msra.mxu0 0.0
        %1640 = vmatprep.subr.mxu0 0.0
        %1641 = vmatpush1.msra.mxu0 0.0
        %1642 = vmatprep.subr.mxu0 0.0
        %1643 = vmatpush1.msra.mxu0 0.0
        %1644 = vmatprep.subr.mxu0 %v1358
        %1645 = vmatpush1.msra.mxu0 %v1357
        %1646 = vmatprep.subr.mxu0 %v1350
        %1647 = vmatpush1.msra.mxu0 %v1349
        %1648 = vmatprep.subr.mxu0 %v1342
        %1649 = vmatpush1.msra.mxu0 %v1341
        %1650 = vmatprep.subr.mxu0 0.0
        %1651 = vmatpush2.msra.mxu0 0.0
        %1652 = vmatprep.subr.mxu0 0.0
        %1653 = vmatpush2.msra.mxu0 0.0
        %1654 = vmatprep.subr.mxu0 0.0
        %1655 = vmatpush2.msra.mxu0 0.0
        %1656 = vmatprep.subr.mxu0 0.0
        %1657 = vmatpush2.msra.mxu0 0.0
        %1658 = vmatprep.subr.mxu0 0.0
        %1659 = vmatpush2.msra.mxu0 0.0
        %1660 = vmatprep.subr.mxu0 0.0
        %1661 = vmatpush2.msra.mxu0 0.0
        %1662 = vmatprep.subr.mxu0 0.0
        %1663 = vmatpush2.msra.mxu0 0.0
        %1664 = vmatprep.subr.mxu0 0.0
        %1665 = vmatpush2.msra.mxu0 0.0
        %1666 = vmatprep.subr.mxu0 0.0
        %1667 = vmatpush2.msra.mxu0 0.0
        %1668 = vmatprep.subr.mxu0 0.0
        %1669 = vmatpush2.msra.mxu0 0.0
        %1670 = vmatprep.subr.mxu0 0.0
        %1671 = vmatpush2.msra.mxu0 0.0
        %1672 = vmatprep.subr.mxu0 0.0
        %1673 = vmatpush2.msra.mxu0 0.0
        %1674 = vmatprep.subr.mxu0 0.0
        %1675 = vmatpush2.msra.mxu0 0.0
        %1676 = vmatprep.subr.mxu0 0.0
        %1677 = vmatpush2.msra.mxu0 0.0
        %1678 = vmatprep.subr.mxu0 0.0
        %1679 = vmatpush2.msra.mxu0 0.0
        %1680 = vmatprep.subr.mxu0 0.0
        %1681 = vmatpush2.msra.mxu0 0.0
        %1682 = vmatprep.mubr.f32.mxu0 0.0
        %1683 = vmatmul.mubr.f32.gmra.mxu0 %v1361
        %v1684 = vpop.f32.mrf.mxu0
        %v1685 = vadd.f32 0.0, %v1684
        %v1686 = vpop.f32.mrf.mxu0
        %v1687 = vadd.f32 0.0, %v1686
        %1688 = vmatprep.mubr.f32.mxu0 0.0
        %1689 = vmatmul.mubr.f32.gmra.mxu0 %v1364
        %v1690 = vpop.f32.mrf.mxu0
        %v1691 = vadd.f32 0.0, %v1690
        %v1692 = vpop.f32.mrf.mxu0
        %v1693 = vadd.f32 0.0, %v1692
        %1694 = vmatprep.mubr.f32.mxu0 0.0
        %1695 = vmatmul.mubr.f32.gmra.mxu0 %v1367
        %v1696 = vpop.f32.mrf.mxu0
        %v1697 = vadd.f32 0.0, %v1696
        %v1698 = vpop.f32.mrf.mxu0
        %v1699 = vadd.f32 0.0, %v1698
        %1700 = vdwg.mxu0
        %v1701 = vadd.f32 %v1436, 1.0
        %v1702 = vadd.f32 %v1438, 1.0
        %v1703 = vadd.f32 %v1519, 1.0
        %v1704 = vadd.f32 %v1521, 1.0
        %v1705 = vadd.f32 %v1602, 1.0
        %v1706 = vadd.f32 %v1604, 1.0
        %v1707 = vadd.f32 %v1685, 1.0
        %v1708 = vadd.f32 %v1687, 1.0
        %v1709 = vadd.f32 %v1442, 1.0
        %v1710 = vadd.f32 %v1444, 1.0
        %v1711 = vadd.f32 %v1525, 1.0
        %v1712 = vadd.f32 %v1527, 1.0
        %v1713 = vadd.f32 %v1608, 1.0
        %v1714 = vadd.f32 %v1610, 1.0
        %v1715 = vadd.f32 %v1691, 1.0
        %v1716 = vadd.f32 %v1693, 1.0
        %v1717 = vadd.f32 %v1448, 1.0
        %v1718 = vadd.f32 %v1450, 1.0
        %v1719 = vadd.f32 %v1531, 1.0
        %v1720 = vadd.f32 %v1533, 1.0
        %v1721 = vadd.f32 %v1614, 1.0
        %v1722 = vadd.f32 %v1616, 1.0
        %v1723 = vadd.f32 %v1697, 1.0
        %v1724 = vadd.f32 %v1699, 1.0
        %v1725 = vrcp.pop %v1701
        %v1726 = vmul.f32 %v1436, %v1725
        %v1727 = vrcp.pop %v1702
        %v1728 = vmul.f32 %v1438, %v1727
        %v1729 = vrcp.pop %v1703
        %v1730 = vmul.f32 %v1519, %v1729
        %v1731 = vrcp.pop %v1704
        %v1732 = vmul.f32 %v1521, %v1731
        %v1733 = vrcp.pop %v1705
        %v1734 = vmul.f32 %v1602, %v1733
        %v1735 = vrcp.pop %v1706
        %v1736 = vmul.f32 %v1604, %v1735
        %v1737 = vrcp.pop %v1707
        %v1738 = vmul.f32 %v1685, %v1737
        %v1739 = vrcp.pop %v1708
        %v1740 = vmul.f32 %v1687, %v1739
        %v1741 = vrcp.pop %v1709
        %v1742 = vmul.f32 %v1442, %v1741
        %v1743 = vrcp.pop %v1710
        %v1744 = vmul.f32 %v1444, %v1743
        %v1745 = vrcp.pop %v1711
        %v1746 = vmul.f32 %v1525, %v1745
        %v1747 = vrcp.pop %v1712
        %v1748 = vmul.f32 %v1527, %v1747
        %v1749 = vrcp.pop %v1713
        %v1750 = vmul.f32 %v1608, %v1749
        %v1751 = vrcp.pop %v1714
        %v1752 = vmul.f32 %v1610, %v1751
        %v1753 = vrcp.pop %v1715
        %v1754 = vmul.f32 %v1691, %v1753
        %v1755 = vrcp.pop %v1716
        %v1756 = vmul.f32 %v1693, %v1755
        %v1757 = vrcp.pop %v1717
        %v1758 = vmul.f32 %v1448, %v1757
        %v1759 = vrcp.pop %v1718
        %v1760 = vmul.f32 %v1450, %v1759
        %v1761 = vrcp.pop %v1719
        %v1762 = vmul.f32 %v1531, %v1761
        %v1763 = vrcp.pop %v1720
        %v1764 = vmul.f32 %v1533, %v1763
        %v1765 = vrcp.pop %v1721
        %v1766 = vmul.f32 %v1614, %v1765
        %v1767 = vrcp.pop %v1722
        %v1768 = vmul.f32 %v1616, %v1767
        %v1769 = vrcp.pop %v1723
        %v1770 = vmul.f32 %v1697, %v1769
        %v1771 = vrcp.pop %v1724
        %v1772 = vmul.f32 %v1699, %v1771
        %v1773 = vadd.f32 %v1436, 1e-08
        %v1774 = vadd.f32 %v1438, 1e-08
        %v1775 = vadd.f32 %v1519, 1e-08
        %v1776 = vadd.f32 %v1521, 1e-08
        %v1777 = vadd.f32 %v1602, 1e-08
        %v1778 = vadd.f32 %v1604, 1e-08
        %v1779 = vadd.f32 %v1685, 1e-08
        %v1780 = vadd.f32 %v1687, 1e-08
        %v1781 = vadd.f32 %v1442, 1e-08
        %v1782 = vadd.f32 %v1444, 1e-08
        %v1783 = vadd.f32 %v1525, 1e-08
        %v1784 = vadd.f32 %v1527, 1e-08
        %v1785 = vadd.f32 %v1608, 1e-08
        %v1786 = vadd.f32 %v1610, 1e-08
        %v1787 = vadd.f32 %v1691, 1e-08
        %v1788 = vadd.f32 %v1693, 1e-08
        %v1789 = vadd.f32 %v1448, 1e-08
        %v1790 = vadd.f32 %v1450, 1e-08
        %v1791 = vadd.f32 %v1531, 1e-08
        %v1792 = vadd.f32 %v1533, 1e-08
        %v1793 = vadd.f32 %v1614, 1e-08
        %v1794 = vadd.f32 %v1616, 1e-08
        %v1795 = vadd.f32 %v1697, 1e-08
        %v1796 = vadd.f32 %v1699, 1e-08
        %v1797 = vrsqrt.pop %v1773
        %v1798 = vrsqrt.pop %v1774
        %v1799 = vrsqrt.pop %v1775
        %v1800 = vrsqrt.pop %v1776
        %v1801 = vrsqrt.pop %v1777
        %v1802 = vrsqrt.pop %v1778
        %v1803 = vrsqrt.pop %v1779
        %v1804 = vrsqrt.pop %v1780
        %v1805 = vrsqrt.pop %v1781
        %v1806 = vrsqrt.pop %v1782
        %v1807 = vrsqrt.pop %v1783
        %v1808 = vrsqrt.pop %v1784
        %v1809 = vrsqrt.pop %v1785
        %v1810 = vrsqrt.pop %v1786
        %v1811 = vrsqrt.pop %v1787
        %v1812 = vrsqrt.pop %v1788
        %v1813 = vrsqrt.pop %v1789
        %v1814 = vrsqrt.pop %v1790
        %v1815 = vrsqrt.pop %v1791
        %v1816 = vrsqrt.pop %v1792
        %v1817 = vrsqrt.pop %v1793
        %v1818 = vrsqrt.pop %v1794
        %v1819 = vrsqrt.pop %v1795
        %v1820 = vrsqrt.pop %v1796
        %v1821 = vmul.f32 %v1726, %v1797
        %v1822 = vmul.f32 %v1728, %v1798
        %v1823 = vmul.f32 %v1730, %v1799
        %v1824 = vmul.f32 %v1732, %v1800
        %v1825 = vmul.f32 %v1734, %v1801
        %v1826 = vmul.f32 %v1736, %v1802
        %v1827 = vmul.f32 %v1738, %v1803
        %v1828 = vmul.f32 %v1740, %v1804
        %v1829 = vmul.f32 %v1742, %v1805
        %v1830 = vmul.f32 %v1744, %v1806
        %v1831 = vmul.f32 %v1746, %v1807
        %v1832 = vmul.f32 %v1748, %v1808
        %v1833 = vmul.f32 %v1750, %v1809
        %v1834 = vmul.f32 %v1752, %v1810
        %v1835 = vmul.f32 %v1754, %v1811
        %v1836 = vmul.f32 %v1756, %v1812
        %v1837 = vmul.f32 %v1758, %v1813
        %v1838 = vmul.f32 %v1760, %v1814
        %v1839 = vmul.f32 %v1762, %v1815
        %v1840 = vmul.f32 %v1764, %v1816
        %v1841 = vmul.f32 %v1766, %v1817
        %v1842 = vmul.f32 %v1768, %v1818
        %v1843 = vmul.f32 %v1770, %v1819
        %v1844 = vmul.f32 %v1772, %v1820
        %v1845 = vmul.f32 %v1821, %v1311
        %v1846 = vmul.f32 %v1822, %v1312
        %v1847 = vmul.f32 %v1823, %v1313
        %v1848 = vmul.f32 %v1824, %v1314
        %v1849 = vmul.f32 %v1825, %v1315
        %v1850 = vmul.f32 %v1826, %v1316
        %v1851 = vmul.f32 %v1827, %v1317
        %v1852 = vmul.f32 %v1828, %v1318
        %v1853 = vmul.f32 %v1829, %v1319
        %v1854 = vmul.f32 %v1830, %v1320
        %v1855 = vmul.f32 %v1831, %v1321
        %v1856 = vmul.f32 %v1832, %v1322
        %v1857 = vmul.f32 %v1833, %v1323
        %v1858 = vmul.f32 %v1834, %v1324
        %v1859 = vmul.f32 %v1835, %v1325
        %v1860 = vmul.f32 %v1836, %v1326
        %v1861 = vmul.f32 %v1837, %v1327
        %v1862 = vmul.f32 %v1838, %v1328
        %v1863 = vmul.f32 %v1839, %v1329
        %v1864 = vmul.f32 %v1840, %v1330
        %v1865 = vmul.f32 %v1841, %v1331
        %v1866 = vmul.f32 %v1842, %v1332
        %v1867 = vmul.f32 %v1843, %v1333
        %v1868 = vmul.f32 %v1844, %v1334
        %v1870 = vsel %vm1359, %v955, 0
        %v1873 = vsel %vm1359, %v956, 0
        %v1876 = vsel %vm1359, %v957, 0
        %v1879 = vsel %vm1359, %v958, 0
        %v1882 = vsel %vm1359, %v959, 0
        %v1885 = vsel %vm1359, %v960, 0
        %v1888 = vsel %vm1359, %v961, 0
        %v1891 = vsel %vm1359, %v962, 0
        %v1894 = vsel %vm1359, %v963, 0
        %v1897 = vsel %vm1359, %v964, 0
        %v1900 = vsel %vm1359, %v965, 0
        %v1903 = vsel %vm1359, %v966, 0
        %1905 = vmatprep.subr.mxu0 0.0
        %1906 = vmatpush1.msra.mxu0 0.0
        %1907 = vmatprep.subr.mxu0 0.0
        %1908 = vmatpush1.msra.mxu0 0.0
        %1909 = vmatprep.subr.mxu0 0.0
        %1910 = vmatpush1.msra.mxu0 0.0
        %1911 = vmatprep.subr.mxu0 0.0
        %1912 = vmatpush1.msra.mxu0 0.0
        %1913 = vmatprep.subr.mxu0 0.0
        %1914 = vmatpush1.msra.mxu0 0.0
        %1915 = vmatprep.subr.mxu0 0.0
        %1916 = vmatpush1.msra.mxu0 0.0
        %1917 = vmatprep.subr.mxu0 0.0
        %1918 = vmatpush1.msra.mxu0 0.0
        %1919 = vmatprep.subr.mxu0 0.0
        %1920 = vmatpush1.msra.mxu0 0.0
        %1921 = vmatprep.subr.mxu0 0.0
        %1922 = vmatpush1.msra.mxu0 0.0
        %1923 = vmatprep.subr.mxu0 0.0
        %1924 = vmatpush1.msra.mxu0 0.0
        %1925 = vmatprep.subr.mxu0 0.0
        %1926 = vmatpush1.msra.mxu0 0.0
        %1927 = vmatprep.subr.mxu0 0.0
        %1928 = vmatpush1.msra.mxu0 0.0
        %1929 = vmatprep.subr.mxu0 0.0
        %1930 = vmatpush1.msra.mxu0 0.0
        %1931 = vmatprep.subr.mxu0 %v1862
        %1932 = vmatpush1.msra.mxu0 %v1861
        %1933 = vmatprep.subr.mxu0 %v1854
        %1934 = vmatpush1.msra.mxu0 %v1853
        %1935 = vmatprep.subr.mxu0 %v1846
        %1936 = vmatpush1.msra.mxu0 %v1845
        %1937 = vmatprep.subr.mxu0 0.0
        %1938 = vmatpush2.msra.mxu0 0.0
        %1939 = vmatprep.subr.mxu0 0.0
        %1940 = vmatpush2.msra.mxu0 0.0
        %1941 = vmatprep.subr.mxu0 0.0
        %1942 = vmatpush2.msra.mxu0 0.0
        %1943 = vmatprep.subr.mxu0 0.0
        %1944 = vmatpush2.msra.mxu0 0.0
        %1945 = vmatprep.subr.mxu0 0.0
        %1946 = vmatpush2.msra.mxu0 0.0
        %1947 = vmatprep.subr.mxu0 0.0
        %1948 = vmatpush2.msra.mxu0 0.0
        %1949 = vmatprep.subr.mxu0 0.0
        %1950 = vmatpush2.msra.mxu0 0.0
        %1951 = vmatprep.subr.mxu0 0.0
        %1952 = vmatpush2.msra.mxu0 0.0
        %1953 = vmatprep.subr.mxu0 0.0
        %1954 = vmatpush2.msra.mxu0 0.0
        %1955 = vmatprep.subr.mxu0 0.0
        %1956 = vmatpush2.msra.mxu0 0.0
        %1957 = vmatprep.subr.mxu0 0.0
        %1958 = vmatpush2.msra.mxu0 0.0
        %1959 = vmatprep.subr.mxu0 0.0
        %1960 = vmatpush2.msra.mxu0 0.0
        %1961 = vmatprep.subr.mxu0 0.0
        %1962 = vmatpush2.msra.mxu0 0.0
        %1963 = vmatprep.subr.mxu0 0.0
        %1964 = vmatpush2.msra.mxu0 0.0
        %1965 = vmatprep.subr.mxu0 0.0
        %1966 = vmatpush2.msra.mxu0 0.0
        %1967 = vmatprep.subr.mxu0 0.0
        %1968 = vmatpush2.msra.mxu0 0.0
        %1969 = vmatprep.mubr.f32.mxu0 0.0
        %1970 = vmatmul.mubr.f32.gmra.mxu0 %v1870
        %v1971 = vpop.f32.mrf.mxu0
        %v1972 = vadd.f32 0.0, %v1971
        %v1973 = vpop.f32.mrf.mxu0
        %v1974 = vadd.f32 0.0, %v1973
        %1975 = vmatprep.mubr.f32.mxu0 0.0
        %1976 = vmatmul.mubr.f32.gmra.mxu0 %v1873
        %v1977 = vpop.f32.mrf.mxu0
        %v1978 = vadd.f32 0.0, %v1977
        %v1979 = vpop.f32.mrf.mxu0
        %v1980 = vadd.f32 0.0, %v1979
        %1981 = vmatprep.mubr.f32.mxu0 0.0
        %1982 = vmatmul.mubr.f32.gmra.mxu0 %v1876
        %v1983 = vpop.f32.mrf.mxu0
        %v1984 = vadd.f32 0.0, %v1983
        %v1985 = vpop.f32.mrf.mxu0
        %v1986 = vadd.f32 0.0, %v1985
        %1987 = vmatprep.mubr.f32.mxu0 0.0
        %1988 = vmatmul.mubr.f32.gmra.mxu0 %v1879
        %v1989 = vpop.f32.mrf.mxu0
        %v1990 = vadd.f32 0.0, %v1989
        %v1991 = vpop.f32.mrf.mxu0
        %v1992 = vadd.f32 0.0, %v1991
        %1993 = vmatprep.mubr.f32.mxu0 0.0
        %1994 = vmatmul.mubr.f32.gmra.mxu0 %v1882
        %v1995 = vpop.f32.mrf.mxu0
        %v1996 = vadd.f32 0.0, %v1995
        %v1997 = vpop.f32.mrf.mxu0
        %v1998 = vadd.f32 0.0, %v1997
        %1999 = vmatprep.mubr.f32.mxu0 0.0
        %2000 = vmatmul.mubr.f32.gmra.mxu0 %v1885
        %v2001 = vpop.f32.mrf.mxu0
        %v2002 = vadd.f32 0.0, %v2001
        %v2003 = vpop.f32.mrf.mxu0
        %v2004 = vadd.f32 0.0, %v2003
        %2005 = vmatprep.mubr.f32.mxu0 0.0
        %2006 = vmatmul.mubr.f32.gmra.mxu0 %v1888
        %v2007 = vpop.f32.mrf.mxu0
        %v2008 = vadd.f32 0.0, %v2007
        %v2009 = vpop.f32.mrf.mxu0
        %v2010 = vadd.f32 0.0, %v2009
        %2011 = vmatprep.mubr.f32.mxu0 0.0
        %2012 = vmatmul.mubr.f32.gmra.mxu0 %v1891
        %v2013 = vpop.f32.mrf.mxu0
        %v2014 = vadd.f32 0.0, %v2013
        %v2015 = vpop.f32.mrf.mxu0
        %v2016 = vadd.f32 0.0, %v2015
        %2017 = vmatprep.mubr.f32.mxu0 0.0
        %2018 = vmatmul.mubr.f32.gmra.mxu0 %v1894
        %v2019 = vpop.f32.mrf.mxu0
        %v2020 = vadd.f32 0.0, %v2019
        %v2021 = vpop.f32.mrf.mxu0
        %v2022 = vadd.f32 0.0, %v2021
        %2023 = vmatprep.mubr.f32.mxu0 0.0
        %2024 = vmatmul.mubr.f32.gmra.mxu0 %v1897
        %v2025 = vpop.f32.mrf.mxu0
        %v2026 = vadd.f32 0.0, %v2025
        %v2027 = vpop.f32.mrf.mxu0
        %v2028 = vadd.f32 0.0, %v2027
        %2029 = vmatprep.mubr.f32.mxu0 0.0
        %2030 = vmatmul.mubr.f32.gmra.mxu0 %v1900
        %v2031 = vpop.f32.mrf.mxu0
        %v2032 = vadd.f32 0.0, %v2031
        %v2033 = vpop.f32.mrf.mxu0
        %v2034 = vadd.f32 0.0, %v2033
        %2035 = vmatprep.mubr.f32.mxu0 0.0
        %2036 = vmatmul.mubr.f32.gmra.mxu0 %v1903
        %v2037 = vpop.f32.mrf.mxu0
        %v2038 = vadd.f32 0.0, %v2037
        %v2039 = vpop.f32.mrf.mxu0
        %v2040 = vadd.f32 0.0, %v2039
        %2041 = vdwg.mxu0
        %2042 = vmatprep.subr.mxu0 0.0
        %2043 = vmatpush1.msra.mxu0 0.0
        %2044 = vmatprep.subr.mxu0 0.0
        %2045 = vmatpush1.msra.mxu0 0.0
        %2046 = vmatprep.subr.mxu0 0.0
        %2047 = vmatpush1.msra.mxu0 0.0
        %2048 = vmatprep.subr.mxu0 0.0
        %2049 = vmatpush1.msra.mxu0 0.0
        %2050 = vmatprep.subr.mxu0 0.0
        %2051 = vmatpush1.msra.mxu0 0.0
        %2052 = vmatprep.subr.mxu0 0.0
        %2053 = vmatpush1.msra.mxu0 0.0
        %2054 = vmatprep.subr.mxu0 0.0
        %2055 = vmatpush1.msra.mxu0 0.0
        %2056 = vmatprep.subr.mxu0 0.0
        %2057 = vmatpush1.msra.mxu0 0.0
        %2058 = vmatprep.subr.mxu0 0.0
        %2059 = vmatpush1.msra.mxu0 0.0
        %2060 = vmatprep.subr.mxu0 0.0
        %2061 = vmatpush1.msra.mxu0 0.0
        %2062 = vmatprep.subr.mxu0 0.0
        %2063 = vmatpush1.msra.mxu0 0.0
        %2064 = vmatprep.subr.mxu0 0.0
        %2065 = vmatpush1.msra.mxu0 0.0
        %2066 = vmatprep.subr.mxu0 0.0
        %2067 = vmatpush1.msra.mxu0 0.0
        %2068 = vmatprep.subr.mxu0 %v1864
        %2069 = vmatpush1.msra.mxu0 %v1863
        %2070 = vmatprep.subr.mxu0 %v1856
        %2071 = vmatpush1.msra.mxu0 %v1855
        %2072 = vmatprep.subr.mxu0 %v1848
        %2073 = vmatpush1.msra.mxu0 %v1847
        %2074 = vmatprep.subr.mxu0 0.0
        %2075 = vmatpush2.msra.mxu0 0.0
        %2076 = vmatprep.subr.mxu0 0.0
        %2077 = vmatpush2.msra.mxu0 0.0
        %2078 = vmatprep.subr.mxu0 0.0
        %2079 = vmatpush2.msra.mxu0 0.0
        %2080 = vmatprep.subr.mxu0 0.0
        %2081 = vmatpush2.msra.mxu0 0.0
        %2082 = vmatprep.subr.mxu0 0.0
        %2083 = vmatpush2.msra.mxu0 0.0
        %2084 = vmatprep.subr.mxu0 0.0
        %2085 = vmatpush2.msra.mxu0 0.0
        %2086 = vmatprep.subr.mxu0 0.0
        %2087 = vmatpush2.msra.mxu0 0.0
        %2088 = vmatprep.subr.mxu0 0.0
        %2089 = vmatpush2.msra.mxu0 0.0
        %2090 = vmatprep.subr.mxu0 0.0
        %2091 = vmatpush2.msra.mxu0 0.0
        %2092 = vmatprep.subr.mxu0 0.0
        %2093 = vmatpush2.msra.mxu0 0.0
        %2094 = vmatprep.subr.mxu0 0.0
        %2095 = vmatpush2.msra.mxu0 0.0
        %2096 = vmatprep.subr.mxu0 0.0
        %2097 = vmatpush2.msra.mxu0 0.0
        %2098 = vmatprep.subr.mxu0 0.0
        %2099 = vmatpush2.msra.mxu0 0.0
        %2100 = vmatprep.subr.mxu0 0.0
        %2101 = vmatpush2.msra.mxu0 0.0
        %2102 = vmatprep.subr.mxu0 0.0
        %2103 = vmatpush2.msra.mxu0 0.0
        %2104 = vmatprep.subr.mxu0 0.0
        %2105 = vmatpush2.msra.mxu0 0.0
        %2106 = vmatprep.mubr.f32.mxu0 0.0
        %2107 = vmatmul.mubr.f32.gmra.mxu0 %v1870
        %v2108 = vpop.f32.mrf.mxu0
        %v2109 = vadd.f32 0.0, %v2108
        %v2110 = vpop.f32.mrf.mxu0
        %v2111 = vadd.f32 0.0, %v2110
        %2112 = vmatprep.mubr.f32.mxu0 0.0
        %2113 = vmatmul.mubr.f32.gmra.mxu0 %v1873
        %v2114 = vpop.f32.mrf.mxu0
        %v2115 = vadd.f32 0.0, %v2114
        %v2116 = vpop.f32.mrf.mxu0
        %v2117 = vadd.f32 0.0, %v2116
        %2118 = vmatprep.mubr.f32.mxu0 0.0
        %2119 = vmatmul.mubr.f32.gmra.mxu0 %v1876
        %v2120 = vpop.f32.mrf.mxu0
        %v2121 = vadd.f32 0.0, %v2120
        %v2122 = vpop.f32.mrf.mxu0
        %v2123 = vadd.f32 0.0, %v2122
        %2124 = vmatprep.mubr.f32.mxu0 0.0
        %2125 = vmatmul.mubr.f32.gmra.mxu0 %v1879
        %v2126 = vpop.f32.mrf.mxu0
        %v2127 = vadd.f32 0.0, %v2126
        %v2128 = vpop.f32.mrf.mxu0
        %v2129 = vadd.f32 0.0, %v2128
        %2130 = vmatprep.mubr.f32.mxu0 0.0
        %2131 = vmatmul.mubr.f32.gmra.mxu0 %v1882
        %v2132 = vpop.f32.mrf.mxu0
        %v2133 = vadd.f32 0.0, %v2132
        %v2134 = vpop.f32.mrf.mxu0
        %v2135 = vadd.f32 0.0, %v2134
        %2136 = vmatprep.mubr.f32.mxu0 0.0
        %2137 = vmatmul.mubr.f32.gmra.mxu0 %v1885
        %v2138 = vpop.f32.mrf.mxu0
        %v2139 = vadd.f32 0.0, %v2138
        %v2140 = vpop.f32.mrf.mxu0
        %v2141 = vadd.f32 0.0, %v2140
        %2142 = vmatprep.mubr.f32.mxu0 0.0
        %2143 = vmatmul.mubr.f32.gmra.mxu0 %v1888
        %v2144 = vpop.f32.mrf.mxu0
        %v2145 = vadd.f32 0.0, %v2144
        %v2146 = vpop.f32.mrf.mxu0
        %v2147 = vadd.f32 0.0, %v2146
        %2148 = vmatprep.mubr.f32.mxu0 0.0
        %2149 = vmatmul.mubr.f32.gmra.mxu0 %v1891
        %v2150 = vpop.f32.mrf.mxu0
        %v2151 = vadd.f32 0.0, %v2150
        %v2152 = vpop.f32.mrf.mxu0
        %v2153 = vadd.f32 0.0, %v2152
        %2154 = vmatprep.mubr.f32.mxu0 0.0
        %2155 = vmatmul.mubr.f32.gmra.mxu0 %v1894
        %v2156 = vpop.f32.mrf.mxu0
        %v2157 = vadd.f32 0.0, %v2156
        %v2158 = vpop.f32.mrf.mxu0
        %v2159 = vadd.f32 0.0, %v2158
        %2160 = vmatprep.mubr.f32.mxu0 0.0
        %2161 = vmatmul.mubr.f32.gmra.mxu0 %v1897
        %v2162 = vpop.f32.mrf.mxu0
        %v2163 = vadd.f32 0.0, %v2162
        %v2164 = vpop.f32.mrf.mxu0
        %v2165 = vadd.f32 0.0, %v2164
        %2166 = vmatprep.mubr.f32.mxu0 0.0
        %2167 = vmatmul.mubr.f32.gmra.mxu0 %v1900
        %v2168 = vpop.f32.mrf.mxu0
        %v2169 = vadd.f32 0.0, %v2168
        %v2170 = vpop.f32.mrf.mxu0
        %v2171 = vadd.f32 0.0, %v2170
        %2172 = vmatprep.mubr.f32.mxu0 0.0
        %2173 = vmatmul.mubr.f32.gmra.mxu0 %v1903
        %v2174 = vpop.f32.mrf.mxu0
        %v2175 = vadd.f32 0.0, %v2174
        %v2176 = vpop.f32.mrf.mxu0
        %v2177 = vadd.f32 0.0, %v2176
        %2178 = vdwg.mxu0
        %2179 = vmatprep.subr.mxu0 0.0
        %2180 = vmatpush1.msra.mxu0 0.0
        %2181 = vmatprep.subr.mxu0 0.0
        %2182 = vmatpush1.msra.mxu0 0.0
        %2183 = vmatprep.subr.mxu0 0.0
        %2184 = vmatpush1.msra.mxu0 0.0
        %2185 = vmatprep.subr.mxu0 0.0
        %2186 = vmatpush1.msra.mxu0 0.0
        %2187 = vmatprep.subr.mxu0 0.0
        %2188 = vmatpush1.msra.mxu0 0.0
        %2189 = vmatprep.subr.mxu0 0.0
        %2190 = vmatpush1.msra.mxu0 0.0
        %2191 = vmatprep.subr.mxu0 0.0
        %2192 = vmatpush1.msra.mxu0 0.0
        %2193 = vmatprep.subr.mxu0 0.0
        %2194 = vmatpush1.msra.mxu0 0.0
        %2195 = vmatprep.subr.mxu0 0.0
        %2196 = vmatpush1.msra.mxu0 0.0
        %2197 = vmatprep.subr.mxu0 0.0
        %2198 = vmatpush1.msra.mxu0 0.0
        %2199 = vmatprep.subr.mxu0 0.0
        %2200 = vmatpush1.msra.mxu0 0.0
        %2201 = vmatprep.subr.mxu0 0.0
        %2202 = vmatpush1.msra.mxu0 0.0
        %2203 = vmatprep.subr.mxu0 0.0
        %2204 = vmatpush1.msra.mxu0 0.0
        %2205 = vmatprep.subr.mxu0 %v1866
        %2206 = vmatpush1.msra.mxu0 %v1865
        %2207 = vmatprep.subr.mxu0 %v1858
        %2208 = vmatpush1.msra.mxu0 %v1857
        %2209 = vmatprep.subr.mxu0 %v1850
        %2210 = vmatpush1.msra.mxu0 %v1849
        %2211 = vmatprep.subr.mxu0 0.0
        %2212 = vmatpush2.msra.mxu0 0.0
        %2213 = vmatprep.subr.mxu0 0.0
        %2214 = vmatpush2.msra.mxu0 0.0
        %2215 = vmatprep.subr.mxu0 0.0
        %2216 = vmatpush2.msra.mxu0 0.0
        %2217 = vmatprep.subr.mxu0 0.0
        %2218 = vmatpush2.msra.mxu0 0.0
        %2219 = vmatprep.subr.mxu0 0.0
        %2220 = vmatpush2.msra.mxu0 0.0
        %2221 = vmatprep.subr.mxu0 0.0
        %2222 = vmatpush2.msra.mxu0 0.0
        %2223 = vmatprep.subr.mxu0 0.0
        %2224 = vmatpush2.msra.mxu0 0.0
        %2225 = vmatprep.subr.mxu0 0.0
        %2226 = vmatpush2.msra.mxu0 0.0
        %2227 = vmatprep.subr.mxu0 0.0
        %2228 = vmatpush2.msra.mxu0 0.0
        %2229 = vmatprep.subr.mxu0 0.0
        %2230 = vmatpush2.msra.mxu0 0.0
        %2231 = vmatprep.subr.mxu0 0.0
        %2232 = vmatpush2.msra.mxu0 0.0
        %2233 = vmatprep.subr.mxu0 0.0
        %2234 = vmatpush2.msra.mxu0 0.0
        %2235 = vmatprep.subr.mxu0 0.0
        %2236 = vmatpush2.msra.mxu0 0.0
        %2237 = vmatprep.subr.mxu0 0.0
        %2238 = vmatpush2.msra.mxu0 0.0
        %2239 = vmatprep.subr.mxu0 0.0
        %2240 = vmatpush2.msra.mxu0 0.0
        %2241 = vmatprep.subr.mxu0 0.0
        %2242 = vmatpush2.msra.mxu0 0.0
        %2243 = vmatprep.mubr.f32.mxu0 0.0
        %2244 = vmatmul.mubr.f32.gmra.mxu0 %v1870
        %v2245 = vpop.f32.mrf.mxu0
        %v2246 = vadd.f32 0.0, %v2245
        %v2247 = vpop.f32.mrf.mxu0
        %v2248 = vadd.f32 0.0, %v2247
        %2249 = vmatprep.mubr.f32.mxu0 0.0
        %2250 = vmatmul.mubr.f32.gmra.mxu0 %v1873
        %v2251 = vpop.f32.mrf.mxu0
        %v2252 = vadd.f32 0.0, %v2251
        %v2253 = vpop.f32.mrf.mxu0
        %v2254 = vadd.f32 0.0, %v2253
        %2255 = vmatprep.mubr.f32.mxu0 0.0
        %2256 = vmatmul.mubr.f32.gmra.mxu0 %v1876
        %v2257 = vpop.f32.mrf.mxu0
        %v2258 = vadd.f32 0.0, %v2257
        %v2259 = vpop.f32.mrf.mxu0
        %v2260 = vadd.f32 0.0, %v2259
        %2261 = vmatprep.mubr.f32.mxu0 0.0
        %2262 = vmatmul.mubr.f32.gmra.mxu0 %v1879
        %v2263 = vpop.f32.mrf.mxu0
        %v2264 = vadd.f32 0.0, %v2263
        %v2265 = vpop.f32.mrf.mxu0
        %v2266 = vadd.f32 0.0, %v2265
        %2267 = vmatprep.mubr.f32.mxu0 0.0
        %2268 = vmatmul.mubr.f32.gmra.mxu0 %v1882
        %v2269 = vpop.f32.mrf.mxu0
        %v2270 = vadd.f32 0.0, %v2269
        %v2271 = vpop.f32.mrf.mxu0
        %v2272 = vadd.f32 0.0, %v2271
        %2273 = vmatprep.mubr.f32.mxu0 0.0
        %2274 = vmatmul.mubr.f32.gmra.mxu0 %v1885
        %v2275 = vpop.f32.mrf.mxu0
        %v2276 = vadd.f32 0.0, %v2275
        %v2277 = vpop.f32.mrf.mxu0
        %v2278 = vadd.f32 0.0, %v2277
        %2279 = vmatprep.mubr.f32.mxu0 0.0
        %2280 = vmatmul.mubr.f32.gmra.mxu0 %v1888
        %v2281 = vpop.f32.mrf.mxu0
        %v2282 = vadd.f32 0.0, %v2281
        %v2283 = vpop.f32.mrf.mxu0
        %v2284 = vadd.f32 0.0, %v2283
        %2285 = vmatprep.mubr.f32.mxu0 0.0
        %2286 = vmatmul.mubr.f32.gmra.mxu0 %v1891
        %v2287 = vpop.f32.mrf.mxu0
        %v2288 = vadd.f32 0.0, %v2287
        %v2289 = vpop.f32.mrf.mxu0
        %v2290 = vadd.f32 0.0, %v2289
        %2291 = vmatprep.mubr.f32.mxu0 0.0
        %2292 = vmatmul.mubr.f32.gmra.mxu0 %v1894
        %v2293 = vpop.f32.mrf.mxu0
        %v2294 = vadd.f32 0.0, %v2293
        %v2295 = vpop.f32.mrf.mxu0
        %v2296 = vadd.f32 0.0, %v2295
        %2297 = vmatprep.mubr.f32.mxu0 0.0
        %2298 = vmatmul.mubr.f32.gmra.mxu0 %v1897
        %v2299 = vpop.f32.mrf.mxu0
        %v2300 = vadd.f32 0.0, %v2299
        %v2301 = vpop.f32.mrf.mxu0
        %v2302 = vadd.f32 0.0, %v2301
        %2303 = vmatprep.mubr.f32.mxu0 0.0
        %2304 = vmatmul.mubr.f32.gmra.mxu0 %v1900
        %v2305 = vpop.f32.mrf.mxu0
        %v2306 = vadd.f32 0.0, %v2305
        %v2307 = vpop.f32.mrf.mxu0
        %v2308 = vadd.f32 0.0, %v2307
        %2309 = vmatprep.mubr.f32.mxu0 0.0
        %2310 = vmatmul.mubr.f32.gmra.mxu0 %v1903
        %v2311 = vpop.f32.mrf.mxu0
        %v2312 = vadd.f32 0.0, %v2311
        %v2313 = vpop.f32.mrf.mxu0
        %v2314 = vadd.f32 0.0, %v2313
        %2315 = vdwg.mxu0
        %2316 = vmatprep.subr.mxu0 0.0
        %2317 = vmatpush1.msra.mxu0 0.0
        %2318 = vmatprep.subr.mxu0 0.0
        %2319 = vmatpush1.msra.mxu0 0.0
        %2320 = vmatprep.subr.mxu0 0.0
        %2321 = vmatpush1.msra.mxu0 0.0
        %2322 = vmatprep.subr.mxu0 0.0
        %2323 = vmatpush1.msra.mxu0 0.0
        %2324 = vmatprep.subr.mxu0 0.0
        %2325 = vmatpush1.msra.mxu0 0.0
        %2326 = vmatprep.subr.mxu0 0.0
        %2327 = vmatpush1.msra.mxu0 0.0
        %2328 = vmatprep.subr.mxu0 0.0
        %2329 = vmatpush1.msra.mxu0 0.0
        %2330 = vmatprep.subr.mxu0 0.0
        %2331 = vmatpush1.msra.mxu0 0.0
        %2332 = vmatprep.subr.mxu0 0.0
        %2333 = vmatpush1.msra.mxu0 0.0
        %2334 = vmatprep.subr.mxu0 0.0
        %2335 = vmatpush1.msra.mxu0 0.0
        %2336 = vmatprep.subr.mxu0 0.0
        %2337 = vmatpush1.msra.mxu0 0.0
        %2338 = vmatprep.subr.mxu0 0.0
        %2339 = vmatpush1.msra.mxu0 0.0
        %2340 = vmatprep.subr.mxu0 0.0
        %2341 = vmatpush1.msra.mxu0 0.0
        %2342 = vmatprep.subr.mxu0 %v1868
        %2343 = vmatpush1.msra.mxu0 %v1867
        %2344 = vmatprep.subr.mxu0 %v1860
        %2345 = vmatpush1.msra.mxu0 %v1859
        %2346 = vmatprep.subr.mxu0 %v1852
        %2347 = vmatpush1.msra.mxu0 %v1851
        %2348 = vmatprep.subr.mxu0 0.0
        %2349 = vmatpush2.msra.mxu0 0.0
        %2350 = vmatprep.subr.mxu0 0.0
        %2351 = vmatpush2.msra.mxu0 0.0
        %2352 = vmatprep.subr.mxu0 0.0
        %2353 = vmatpush2.msra.mxu0 0.0
        %2354 = vmatprep.subr.mxu0 0.0
        %2355 = vmatpush2.msra.mxu0 0.0
        %2356 = vmatprep.subr.mxu0 0.0
        %2357 = vmatpush2.msra.mxu0 0.0
        %2358 = vmatprep.subr.mxu0 0.0
        %2359 = vmatpush2.msra.mxu0 0.0
        %2360 = vmatprep.subr.mxu0 0.0
        %2361 = vmatpush2.msra.mxu0 0.0
        %2362 = vmatprep.subr.mxu0 0.0
        %2363 = vmatpush2.msra.mxu0 0.0
        %2364 = vmatprep.subr.mxu0 0.0
        %2365 = vmatpush2.msra.mxu0 0.0
        %2366 = vmatprep.subr.mxu0 0.0
        %2367 = vmatpush2.msra.mxu0 0.0
        %2368 = vmatprep.subr.mxu0 0.0
        %2369 = vmatpush2.msra.mxu0 0.0
        %2370 = vmatprep.subr.mxu0 0.0
        %2371 = vmatpush2.msra.mxu0 0.0
        %2372 = vmatprep.subr.mxu0 0.0
        %2373 = vmatpush2.msra.mxu0 0.0
        %2374 = vmatprep.subr.mxu0 0.0
        %2375 = vmatpush2.msra.mxu0 0.0
        %2376 = vmatprep.subr.mxu0 0.0
        %2377 = vmatpush2.msra.mxu0 0.0
        %2378 = vmatprep.subr.mxu0 0.0
        %2379 = vmatpush2.msra.mxu0 0.0
        %2380 = vmatprep.mubr.f32.mxu0 0.0
        %2381 = vmatmul.mubr.f32.gmra.mxu0 %v1870
        %v2382 = vpop.f32.mrf.mxu0
        %v2383 = vadd.f32 0.0, %v2382
        %v2384 = vpop.f32.mrf.mxu0
        %v2385 = vadd.f32 0.0, %v2384
        %2386 = vmatprep.mubr.f32.mxu0 0.0
        %2387 = vmatmul.mubr.f32.gmra.mxu0 %v1873
        %v2388 = vpop.f32.mrf.mxu0
        %v2389 = vadd.f32 0.0, %v2388
        %v2390 = vpop.f32.mrf.mxu0
        %v2391 = vadd.f32 0.0, %v2390
        %2392 = vmatprep.mubr.f32.mxu0 0.0
        %2393 = vmatmul.mubr.f32.gmra.mxu0 %v1876
        %v2394 = vpop.f32.mrf.mxu0
        %v2395 = vadd.f32 0.0, %v2394
        %v2396 = vpop.f32.mrf.mxu0
        %v2397 = vadd.f32 0.0, %v2396
        %2398 = vmatprep.mubr.f32.mxu0 0.0
        %2399 = vmatmul.mubr.f32.gmra.mxu0 %v1879
        %v2400 = vpop.f32.mrf.mxu0
        %v2401 = vadd.f32 0.0, %v2400
        %v2402 = vpop.f32.mrf.mxu0
        %v2403 = vadd.f32 0.0, %v2402
        %2404 = vmatprep.mubr.f32.mxu0 0.0
        %2405 = vmatmul.mubr.f32.gmra.mxu0 %v1882
        %v2406 = vpop.f32.mrf.mxu0
        %v2407 = vadd.f32 0.0, %v2406
        %v2408 = vpop.f32.mrf.mxu0
        %v2409 = vadd.f32 0.0, %v2408
        %2410 = vmatprep.mubr.f32.mxu0 0.0
        %2411 = vmatmul.mubr.f32.gmra.mxu0 %v1885
        %v2412 = vpop.f32.mrf.mxu0
        %v2413 = vadd.f32 0.0, %v2412
        %v2414 = vpop.f32.mrf.mxu0
        %v2415 = vadd.f32 0.0, %v2414
        %2416 = vmatprep.mubr.f32.mxu0 0.0
        %2417 = vmatmul.mubr.f32.gmra.mxu0 %v1888
        %v2418 = vpop.f32.mrf.mxu0
        %v2419 = vadd.f32 0.0, %v2418
        %v2420 = vpop.f32.mrf.mxu0
        %v2421 = vadd.f32 0.0, %v2420
        %2422 = vmatprep.mubr.f32.mxu0 0.0
        %2423 = vmatmul.mubr.f32.gmra.mxu0 %v1891
        %v2424 = vpop.f32.mrf.mxu0
        %v2425 = vadd.f32 0.0, %v2424
        %v2426 = vpop.f32.mrf.mxu0
        %v2427 = vadd.f32 0.0, %v2426
        %2428 = vmatprep.mubr.f32.mxu0 0.0
        %2429 = vmatmul.mubr.f32.gmra.mxu0 %v1894
        %v2430 = vpop.f32.mrf.mxu0
        %v2431 = vadd.f32 0.0, %v2430
        %v2432 = vpop.f32.mrf.mxu0
        %v2433 = vadd.f32 0.0, %v2432
        %2434 = vmatprep.mubr.f32.mxu0 0.0
        %2435 = vmatmul.mubr.f32.gmra.mxu0 %v1897
        %v2436 = vpop.f32.mrf.mxu0
        %v2437 = vadd.f32 0.0, %v2436
        %v2438 = vpop.f32.mrf.mxu0
        %v2439 = vadd.f32 0.0, %v2438
        %2440 = vmatprep.mubr.f32.mxu0 0.0
        %2441 = vmatmul.mubr.f32.gmra.mxu0 %v1900
        %v2442 = vpop.f32.mrf.mxu0
        %v2443 = vadd.f32 0.0, %v2442
        %v2444 = vpop.f32.mrf.mxu0
        %v2445 = vadd.f32 0.0, %v2444
        %2446 = vmatprep.mubr.f32.mxu0 0.0
        %2447 = vmatmul.mubr.f32.gmra.mxu0 %v1903
        %v2448 = vpop.f32.mrf.mxu0
        %v2449 = vadd.f32 0.0, %v2448
        %v2450 = vpop.f32.mrf.mxu0
        %v2451 = vadd.f32 0.0, %v2450
        %2452 = vdwg.mxu0
        %v2453 = vmul.f32 %v466, %v1972
        %v2454 = vmul.f32 %v468, %v1974
        %v2455 = vmul.f32 %v603, %v2109
        %v2456 = vmul.f32 %v605, %v2111
        %v2457 = vmul.f32 %v740, %v2246
        %v2458 = vmul.f32 %v742, %v2248
        %v2459 = vmul.f32 %v877, %v2383
        %v2460 = vmul.f32 %v879, %v2385
        %v2461 = vmul.f32 %v472, %v1978
        %v2462 = vmul.f32 %v474, %v1980
        %v2463 = vmul.f32 %v609, %v2115
        %v2464 = vmul.f32 %v611, %v2117
        %v2465 = vmul.f32 %v746, %v2252
        %v2466 = vmul.f32 %v748, %v2254
        %v2467 = vmul.f32 %v883, %v2389
        %v2468 = vmul.f32 %v885, %v2391
        %v2469 = vmul.f32 %v478, %v1984
        %v2470 = vmul.f32 %v480, %v1986
        %v2471 = vmul.f32 %v615, %v2121
        %v2472 = vmul.f32 %v617, %v2123
        %v2473 = vmul.f32 %v752, %v2258
        %v2474 = vmul.f32 %v754, %v2260
        %v2475 = vmul.f32 %v889, %v2395
        %v2476 = vmul.f32 %v891, %v2397
        %v2477 = vmul.f32 %v484, %v1990
        %v2478 = vmul.f32 %v486, %v1992
        %v2479 = vmul.f32 %v621, %v2127
        %v2480 = vmul.f32 %v623, %v2129
        %v2481 = vmul.f32 %v758, %v2264
        %v2482 = vmul.f32 %v760, %v2266
        %v2483 = vmul.f32 %v895, %v2401
        %v2484 = vmul.f32 %v897, %v2403
        %v2485 = vmul.f32 %v490, %v1996
        %v2486 = vmul.f32 %v492, %v1998
        %v2487 = vmul.f32 %v627, %v2133
        %v2488 = vmul.f32 %v629, %v2135
        %v2489 = vmul.f32 %v764, %v2270
        %v2490 = vmul.f32 %v766, %v2272
        %v2491 = vmul.f32 %v901, %v2407
        %v2492 = vmul.f32 %v903, %v2409
        %v2493 = vmul.f32 %v496, %v2002
        %v2494 = vmul.f32 %v498, %v2004
        %v2495 = vmul.f32 %v633, %v2139
        %v2496 = vmul.f32 %v635, %v2141
        %v2497 = vmul.f32 %v770, %v2276
        %v2498 = vmul.f32 %v772, %v2278
        %v2499 = vmul.f32 %v907, %v2413
        %v2500 = vmul.f32 %v909, %v2415
        %v2501 = vmul.f32 %v502, %v2008
        %v2502 = vmul.f32 %v504, %v2010
        %v2503 = vmul.f32 %v639, %v2145
        %v2504 = vmul.f32 %v641, %v2147
        %v2505 = vmul.f32 %v776, %v2282
        %v2506 = vmul.f32 %v778, %v2284
        %v2507 = vmul.f32 %v913, %v2419
        %v2508 = vmul.f32 %v915, %v2421
        %v2509 = vmul.f32 %v508, %v2014
        %v2510 = vmul.f32 %v510, %v2016
        %v2511 = vmul.f32 %v645, %v2151
        %v2512 = vmul.f32 %v647, %v2153
        %v2513 = vmul.f32 %v782, %v2288
        %v2514 = vmul.f32 %v784, %v2290
        %v2515 = vmul.f32 %v919, %v2425
        %v2516 = vmul.f32 %v921, %v2427
        %v2517 = vmul.f32 %v514, %v2020
        %v2518 = vmul.f32 %v516, %v2022
        %v2519 = vmul.f32 %v651, %v2157
        %v2520 = vmul.f32 %v653, %v2159
        %v2521 = vmul.f32 %v788, %v2294
        %v2522 = vmul.f32 %v790, %v2296
        %v2523 = vmul.f32 %v925, %v2431
        %v2524 = vmul.f32 %v927, %v2433
        %v2525 = vmul.f32 %v520, %v2026
        %v2526 = vmul.f32 %v522, %v2028
        %v2527 = vmul.f32 %v657, %v2163
        %v2528 = vmul.f32 %v659, %v2165
        %v2529 = vmul.f32 %v794, %v2300
        %v2530 = vmul.f32 %v796, %v2302
        %v2531 = vmul.f32 %v931, %v2437
        %v2532 = vmul.f32 %v933, %v2439
        %v2533 = vmul.f32 %v526, %v2032
        %v2534 = vmul.f32 %v528, %v2034
        %v2535 = vmul.f32 %v663, %v2169
        %v2536 = vmul.f32 %v665, %v2171
        %v2537 = vmul.f32 %v800, %v2306
        %v2538 = vmul.f32 %v802, %v2308
        %v2539 = vmul.f32 %v937, %v2443
        %v2540 = vmul.f32 %v939, %v2445
        %v2541 = vmul.f32 %v532, %v2038
        %v2542 = vmul.f32 %v534, %v2040
        %v2543 = vmul.f32 %v669, %v2175
        %v2544 = vmul.f32 %v671, %v2177
        %v2545 = vmul.f32 %v806, %v2312
        %v2546 = vmul.f32 %v808, %v2314
        %v2547 = vmul.f32 %v943, %v2449
        %v2548 = vmul.f32 %v945, %v2451
        %v2550 = vsel %vm969, %v950, 0
        %v2553 = vsel %vm969, %v951, 0
        %2555 = vmatprep.subr.mxu0 0.0
        %2556 = vmatpush1.msra.mxu0 0.0
        %2557 = vmatprep.subr.mxu0 0.0
        %2558 = vmatpush1.msra.mxu0 0.0
        %2559 = vmatprep.subr.mxu0 0.0
        %2560 = vmatpush1.msra.mxu0 0.0
        %2561 = vmatprep.subr.mxu0 0.0
        %2562 = vmatpush1.msra.mxu0 0.0
        %2563 = vmatprep.subr.mxu0 %v2542
        %2564 = vmatpush1.msra.mxu0 %v2541
        %2565 = vmatprep.subr.mxu0 %v2534
        %2566 = vmatpush1.msra.mxu0 %v2533
        %2567 = vmatprep.subr.mxu0 %v2526
        %2568 = vmatpush1.msra.mxu0 %v2525
        %2569 = vmatprep.subr.mxu0 %v2518
        %2570 = vmatpush1.msra.mxu0 %v2517
        %2571 = vmatprep.subr.mxu0 %v2510
        %2572 = vmatpush1.msra.mxu0 %v2509
        %2573 = vmatprep.subr.mxu0 %v2502
        %2574 = vmatpush1.msra.mxu0 %v2501
        %2575 = vmatprep.subr.mxu0 %v2494
        %2576 = vmatpush1.msra.mxu0 %v2493
        %2577 = vmatprep.subr.mxu0 %v2486
        %2578 = vmatpush1.msra.mxu0 %v2485
        %2579 = vmatprep.subr.mxu0 %v2478
        %2580 = vmatpush1.msra.mxu0 %v2477
        %2581 = vmatprep.subr.mxu0 %v2470
        %2582 = vmatpush1.msra.mxu0 %v2469
        %2583 = vmatprep.subr.mxu0 %v2462
        %2584 = vmatpush1.msra.mxu0 %v2461
        %2585 = vmatprep.subr.mxu0 %v2454
        %2586 = vmatpush1.msra.mxu0 %v2453
        %2587 = vmatprep.subr.mxu0 0.0
        %2588 = vmatpush2.msra.mxu0 0.0
        %2589 = vmatprep.subr.mxu0 0.0
        %2590 = vmatpush2.msra.mxu0 0.0
        %2591 = vmatprep.subr.mxu0 0.0
        %2592 = vmatpush2.msra.mxu0 0.0
        %2593 = vmatprep.subr.mxu0 0.0
        %2594 = vmatpush2.msra.mxu0 0.0
        %2595 = vmatprep.subr.mxu0 0.0
        %2596 = vmatpush2.msra.mxu0 0.0
        %2597 = vmatprep.subr.mxu0 0.0
        %2598 = vmatpush2.msra.mxu0 0.0
        %2599 = vmatprep.subr.mxu0 0.0
        %2600 = vmatpush2.msra.mxu0 0.0
        %2601 = vmatprep.subr.mxu0 0.0
        %2602 = vmatpush2.msra.mxu0 0.0
        %2603 = vmatprep.subr.mxu0 0.0
        %2604 = vmatpush2.msra.mxu0 0.0
        %2605 = vmatprep.subr.mxu0 0.0
        %2606 = vmatpush2.msra.mxu0 0.0
        %2607 = vmatprep.subr.mxu0 0.0
        %2608 = vmatpush2.msra.mxu0 0.0
        %2609 = vmatprep.subr.mxu0 0.0
        %2610 = vmatpush2.msra.mxu0 0.0
        %2611 = vmatprep.subr.mxu0 0.0
        %2612 = vmatpush2.msra.mxu0 0.0
        %2613 = vmatprep.subr.mxu0 0.0
        %2614 = vmatpush2.msra.mxu0 0.0
        %2615 = vmatprep.subr.mxu0 0.0
        %2616 = vmatpush2.msra.mxu0 0.0
        %2617 = vmatprep.subr.mxu0 0.0
        %2618 = vmatpush2.msra.mxu0 0.0
        %2619 = vmatprep.mubr.f32.mxu0 0.0
        %2620 = vmatmul.mubr.f32.gmra.mxu0 %v2550
        %v2621 = vpop.f32.mrf.mxu0
        %v2622 = vadd.f32 0.0, %v2621
        %v2623 = vpop.f32.mrf.mxu0
        %v2624 = vadd.f32 0.0, %v2623
        %2625 = vmatprep.mubr.f32.mxu0 0.0
        %2626 = vmatmul.mubr.f32.gmra.mxu0 %v2553
        %v2627 = vpop.f32.mrf.mxu0
        %v2628 = vadd.f32 0.0, %v2627
        %v2629 = vpop.f32.mrf.mxu0
        %v2630 = vadd.f32 0.0, %v2629
        %2631 = vdwg.mxu0
        %2632 = vmatprep.subr.mxu0 0.0
        %2633 = vmatpush1.msra.mxu0 0.0
        %2634 = vmatprep.subr.mxu0 0.0
        %2635 = vmatpush1.msra.mxu0 0.0
        %2636 = vmatprep.subr.mxu0 0.0
        %2637 = vmatpush1.msra.mxu0 0.0
        %2638 = vmatprep.subr.mxu0 0.0
        %2639 = vmatpush1.msra.mxu0 0.0
        %2640 = vmatprep.subr.mxu0 %v2544
        %2641 = vmatpush1.msra.mxu0 %v2543
        %2642 = vmatprep.subr.mxu0 %v2536
        %2643 = vmatpush1.msra.mxu0 %v2535
        %2644 = vmatprep.subr.mxu0 %v2528
        %2645 = vmatpush1.msra.mxu0 %v2527
        %2646 = vmatprep.subr.mxu0 %v2520
        %2647 = vmatpush1.msra.mxu0 %v2519
        %2648 = vmatprep.subr.mxu0 %v2512
        %2649 = vmatpush1.msra.mxu0 %v2511
        %2650 = vmatprep.subr.mxu0 %v2504
        %2651 = vmatpush1.msra.mxu0 %v2503
        %2652 = vmatprep.subr.mxu0 %v2496
        %2653 = vmatpush1.msra.mxu0 %v2495
        %2654 = vmatprep.subr.mxu0 %v2488
        %2655 = vmatpush1.msra.mxu0 %v2487
        %2656 = vmatprep.subr.mxu0 %v2480
        %2657 = vmatpush1.msra.mxu0 %v2479
        %2658 = vmatprep.subr.mxu0 %v2472
        %2659 = vmatpush1.msra.mxu0 %v2471
        %2660 = vmatprep.subr.mxu0 %v2464
        %2661 = vmatpush1.msra.mxu0 %v2463
        %2662 = vmatprep.subr.mxu0 %v2456
        %2663 = vmatpush1.msra.mxu0 %v2455
        %2664 = vmatprep.subr.mxu0 0.0
        %2665 = vmatpush2.msra.mxu0 0.0
        %2666 = vmatprep.subr.mxu0 0.0
        %2667 = vmatpush2.msra.mxu0 0.0
        %2668 = vmatprep.subr.mxu0 0.0
        %2669 = vmatpush2.msra.mxu0 0.0
        %2670 = vmatprep.subr.mxu0 0.0
        %2671 = vmatpush2.msra.mxu0 0.0
        %2672 = vmatprep.subr.mxu0 0.0
        %2673 = vmatpush2.msra.mxu0 0.0
        %2674 = vmatprep.subr.mxu0 0.0
        %2675 = vmatpush2.msra.mxu0 0.0
        %2676 = vmatprep.subr.mxu0 0.0
        %2677 = vmatpush2.msra.mxu0 0.0
        %2678 = vmatprep.subr.mxu0 0.0
        %2679 = vmatpush2.msra.mxu0 0.0
        %2680 = vmatprep.subr.mxu0 0.0
        %2681 = vmatpush2.msra.mxu0 0.0
        %2682 = vmatprep.subr.mxu0 0.0
        %2683 = vmatpush2.msra.mxu0 0.0
        %2684 = vmatprep.subr.mxu0 0.0
        %2685 = vmatpush2.msra.mxu0 0.0
        %2686 = vmatprep.subr.mxu0 0.0
        %2687 = vmatpush2.msra.mxu0 0.0
        %2688 = vmatprep.subr.mxu0 0.0
        %2689 = vmatpush2.msra.mxu0 0.0
        %2690 = vmatprep.subr.mxu0 0.0
        %2691 = vmatpush2.msra.mxu0 0.0
        %2692 = vmatprep.subr.mxu0 0.0
        %2693 = vmatpush2.msra.mxu0 0.0
        %2694 = vmatprep.subr.mxu0 0.0
        %2695 = vmatpush2.msra.mxu0 0.0
        %2696 = vmatprep.mubr.f32.mxu0 0.0
        %2697 = vmatmul.mubr.f32.gmra.mxu0 %v2550
        %v2698 = vpop.f32.mrf.mxu0
        %v2699 = vadd.f32 0.0, %v2698
        %v2700 = vpop.f32.mrf.mxu0
        %v2701 = vadd.f32 0.0, %v2700
        %2702 = vmatprep.mubr.f32.mxu0 0.0
        %2703 = vmatmul.mubr.f32.gmra.mxu0 %v2553
        %v2704 = vpop.f32.mrf.mxu0
        %v2705 = vadd.f32 0.0, %v2704
        %v2706 = vpop.f32.mrf.mxu0
        %v2707 = vadd.f32 0.0, %v2706
        %2708 = vdwg.mxu0
        %2709 = vmatprep.subr.mxu0 0.0
        %2710 = vmatpush1.msra.mxu0 0.0
        %2711 = vmatprep.subr.mxu0 0.0
        %2712 = vmatpush1.msra.mxu0 0.0
        %2713 = vmatprep.subr.mxu0 0.0
        %2714 = vmatpush1.msra.mxu0 0.0
        %2715 = vmatprep.subr.mxu0 0.0
        %2716 = vmatpush1.msra.mxu0 0.0
        %2717 = vmatprep.subr.mxu0 %v2546
        %2718 = vmatpush1.msra.mxu0 %v2545
        %2719 = vmatprep.subr.mxu0 %v2538
        %2720 = vmatpush1.msra.mxu0 %v2537
        %2721 = vmatprep.subr.mxu0 %v2530
        %2722 = vmatpush1.msra.mxu0 %v2529
        %2723 = vmatprep.subr.mxu0 %v2522
        %2724 = vmatpush1.msra.mxu0 %v2521
        %2725 = vmatprep.subr.mxu0 %v2514
        %2726 = vmatpush1.msra.mxu0 %v2513
        %2727 = vmatprep.subr.mxu0 %v2506
        %2728 = vmatpush1.msra.mxu0 %v2505
        %2729 = vmatprep.subr.mxu0 %v2498
        %2730 = vmatpush1.msra.mxu0 %v2497
        %2731 = vmatprep.subr.mxu0 %v2490
        %2732 = vmatpush1.msra.mxu0 %v2489
        %2733 = vmatprep.subr.mxu0 %v2482
        %2734 = vmatpush1.msra.mxu0 %v2481
        %2735 = vmatprep.subr.mxu0 %v2474
        %2736 = vmatpush1.msra.mxu0 %v2473
        %2737 = vmatprep.subr.mxu0 %v2466
        %2738 = vmatpush1.msra.mxu0 %v2465
        %2739 = vmatprep.subr.mxu0 %v2458
        %2740 = vmatpush1.msra.mxu0 %v2457
        %2741 = vmatprep.subr.mxu0 0.0
        %2742 = vmatpush2.msra.mxu0 0.0
        %2743 = vmatprep.subr.mxu0 0.0
        %2744 = vmatpush2.msra.mxu0 0.0
        %2745 = vmatprep.subr.mxu0 0.0
        %2746 = vmatpush2.msra.mxu0 0.0
        %2747 = vmatprep.subr.mxu0 0.0
        %2748 = vmatpush2.msra.mxu0 0.0
        %2749 = vmatprep.subr.mxu0 0.0
        %2750 = vmatpush2.msra.mxu0 0.0
        %2751 = vmatprep.subr.mxu0 0.0
        %2752 = vmatpush2.msra.mxu0 0.0
        %2753 = vmatprep.subr.mxu0 0.0
        %2754 = vmatpush2.msra.mxu0 0.0
        %2755 = vmatprep.subr.mxu0 0.0
        %2756 = vmatpush2.msra.mxu0 0.0
        %2757 = vmatprep.subr.mxu0 0.0
        %2758 = vmatpush2.msra.mxu0 0.0
        %2759 = vmatprep.subr.mxu0 0.0
        %2760 = vmatpush2.msra.mxu0 0.0
        %2761 = vmatprep.subr.mxu0 0.0
        %2762 = vmatpush2.msra.mxu0 0.0
        %2763 = vmatprep.subr.mxu0 0.0
        %2764 = vmatpush2.msra.mxu0 0.0
        %2765 = vmatprep.subr.mxu0 0.0
        %2766 = vmatpush2.msra.mxu0 0.0
        %2767 = vmatprep.subr.mxu0 0.0
        %2768 = vmatpush2.msra.mxu0 0.0
        %2769 = vmatprep.subr.mxu0 0.0
        %2770 = vmatpush2.msra.mxu0 0.0
        %2771 = vmatprep.subr.mxu0 0.0
        %2772 = vmatpush2.msra.mxu0 0.0
        %2773 = vmatprep.mubr.f32.mxu0 0.0
        %2774 = vmatmul.mubr.f32.gmra.mxu0 %v2550
        %v2775 = vpop.f32.mrf.mxu0
        %v2776 = vadd.f32 0.0, %v2775
        %v2777 = vpop.f32.mrf.mxu0
        %v2778 = vadd.f32 0.0, %v2777
        %2779 = vmatprep.mubr.f32.mxu0 0.0
        %2780 = vmatmul.mubr.f32.gmra.mxu0 %v2553
        %v2781 = vpop.f32.mrf.mxu0
        %v2782 = vadd.f32 0.0, %v2781
        %v2783 = vpop.f32.mrf.mxu0
        %v2784 = vadd.f32 0.0, %v2783
        %2785 = vdwg.mxu0
        %2786 = vmatprep.subr.mxu0 0.0
        %2787 = vmatpush1.msra.mxu0 0.0
        %2788 = vmatprep.subr.mxu0 0.0
        %2789 = vmatpush1.msra.mxu0 0.0
        %2790 = vmatprep.subr.mxu0 0.0
        %2791 = vmatpush1.msra.mxu0 0.0
        %2792 = vmatprep.subr.mxu0 0.0
        %2793 = vmatpush1.msra.mxu0 0.0
        %2794 = vmatprep.subr.mxu0 %v2548
        %2795 = vmatpush1.msra.mxu0 %v2547
        %2796 = vmatprep.subr.mxu0 %v2540
        %2797 = vmatpush1.msra.mxu0 %v2539
        %2798 = vmatprep.subr.mxu0 %v2532
        %2799 = vmatpush1.msra.mxu0 %v2531
        %2800 = vmatprep.subr.mxu0 %v2524
        %2801 = vmatpush1.msra.mxu0 %v2523
        %2802 = vmatprep.subr.mxu0 %v2516
        %2803 = vmatpush1.msra.mxu0 %v2515
        %2804 = vmatprep.subr.mxu0 %v2508
        %2805 = vmatpush1.msra.mxu0 %v2507
        %2806 = vmatprep.subr.mxu0 %v2500
        %2807 = vmatpush1.msra.mxu0 %v2499
        %2808 = vmatprep.subr.mxu0 %v2492
        %2809 = vmatpush1.msra.mxu0 %v2491
        %2810 = vmatprep.subr.mxu0 %v2484
        %2811 = vmatpush1.msra.mxu0 %v2483
        %2812 = vmatprep.subr.mxu0 %v2476
        %2813 = vmatpush1.msra.mxu0 %v2475
        %2814 = vmatprep.subr.mxu0 %v2468
        %2815 = vmatpush1.msra.mxu0 %v2467
        %2816 = vmatprep.subr.mxu0 %v2460
        %2817 = vmatpush1.msra.mxu0 %v2459
        %2818 = vmatprep.subr.mxu0 0.0
        %2819 = vmatpush2.msra.mxu0 0.0
        %2820 = vmatprep.subr.mxu0 0.0
        %2821 = vmatpush2.msra.mxu0 0.0
        %2822 = vmatprep.subr.mxu0 0.0
        %2823 = vmatpush2.msra.mxu0 0.0
        %2824 = vmatprep.subr.mxu0 0.0
        %2825 = vmatpush2.msra.mxu0 0.0
        %2826 = vmatprep.subr.mxu0 0.0
        %2827 = vmatpush2.msra.mxu0 0.0
        %2828 = vmatprep.subr.mxu0 0.0
        %2829 = vmatpush2.msra.mxu0 0.0
        %2830 = vmatprep.subr.mxu0 0.0
        %2831 = vmatpush2.msra.mxu0 0.0
        %2832 = vmatprep.subr.mxu0 0.0
        %2833 = vmatpush2.msra.mxu0 0.0
        %2834 = vmatprep.subr.mxu0 0.0
        %2835 = vmatpush2.msra.mxu0 0.0
        %2836 = vmatprep.subr.mxu0 0.0
        %2837 = vmatpush2.msra.mxu0 0.0
        %2838 = vmatprep.subr.mxu0 0.0
        %2839 = vmatpush2.msra.mxu0 0.0
        %2840 = vmatprep.subr.mxu0 0.0
        %2841 = vmatpush2.msra.mxu0 0.0
        %2842 = vmatprep.subr.mxu0 0.0
        %2843 = vmatpush2.msra.mxu0 0.0
        %2844 = vmatprep.subr.mxu0 0.0
        %2845 = vmatpush2.msra.mxu0 0.0
        %2846 = vmatprep.subr.mxu0 0.0
        %2847 = vmatpush2.msra.mxu0 0.0
        %2848 = vmatprep.subr.mxu0 0.0
        %2849 = vmatpush2.msra.mxu0 0.0
        %2850 = vmatprep.mubr.f32.mxu0 0.0
        %2851 = vmatmul.mubr.f32.gmra.mxu0 %v2550
        %v2852 = vpop.f32.mrf.mxu0
        %v2853 = vadd.f32 0.0, %v2852
        %v2854 = vpop.f32.mrf.mxu0
        %v2855 = vadd.f32 0.0, %v2854
        %2856 = vmatprep.mubr.f32.mxu0 0.0
        %2857 = vmatmul.mubr.f32.gmra.mxu0 %v2553
        %v2858 = vpop.f32.mrf.mxu0
        %v2859 = vadd.f32 0.0, %v2858
        %v2860 = vpop.f32.mrf.mxu0
        %v2861 = vadd.f32 0.0, %v2860
        %2862 = vdwg.mxu0
        %vm2863 = vcmask 1043456
        %v2864 = vsel %vm2863, %v2628, -inf
        %v2865 = vmax.f32 %v2622, %v2864
        %v2866 = vrot.slane %v2865, 4
        %v2867 = vmax.f32 %v2865, %v2866
        %v2868 = vrot.slane %v2867, 2
        %v2869 = vmax.f32 %v2867, %v2868
        %v2870 = vrot.slane %v2869, 1
        %v2871 = vmax.f32 %v2869, %v2870
        %v2872 = vsel %vm2863, %v2630, -inf
        %v2873 = vmax.f32 %v2624, %v2872
        %v2874 = vrot.slane %v2873, 4
        %v2875 = vmax.f32 %v2873, %v2874
        %v2876 = vrot.slane %v2875, 2
        %v2877 = vmax.f32 %v2875, %v2876
        %v2878 = vrot.slane %v2877, 1
        %v2879 = vmax.f32 %v2877, %v2878
        %v2880 = vsel %vm2863, %v2705, -inf
        %v2881 = vmax.f32 %v2699, %v2880
        %v2882 = vrot.slane %v2881, 4
        %v2883 = vmax.f32 %v2881, %v2882
        %v2884 = vrot.slane %v2883, 2
        %v2885 = vmax.f32 %v2883, %v2884
        %v2886 = vrot.slane %v2885, 1
        %v2887 = vmax.f32 %v2885, %v2886
        %v2888 = vsel %vm2863, %v2707, -inf
        %v2889 = vmax.f32 %v2701, %v2888
        %v2890 = vrot.slane %v2889, 4
        %v2891 = vmax.f32 %v2889, %v2890
        %v2892 = vrot.slane %v2891, 2
        %v2893 = vmax.f32 %v2891, %v2892
        %v2894 = vrot.slane %v2893, 1
        %v2895 = vmax.f32 %v2893, %v2894
        %v2896 = vsel %vm2863, %v2782, -inf
        %v2897 = vmax.f32 %v2776, %v2896
        %v2898 = vrot.slane %v2897, 4
        %v2899 = vmax.f32 %v2897, %v2898
        %v2900 = vrot.slane %v2899, 2
        %v2901 = vmax.f32 %v2899, %v2900
        %v2902 = vrot.slane %v2901, 1
        %v2903 = vmax.f32 %v2901, %v2902
        %v2904 = vsel %vm2863, %v2784, -inf
        %v2905 = vmax.f32 %v2778, %v2904
        %v2906 = vrot.slane %v2905, 4
        %v2907 = vmax.f32 %v2905, %v2906
        %v2908 = vrot.slane %v2907, 2
        %v2909 = vmax.f32 %v2907, %v2908
        %v2910 = vrot.slane %v2909, 1
        %v2911 = vmax.f32 %v2909, %v2910
        %v2912 = vsel %vm2863, %v2859, -inf
        %v2913 = vmax.f32 %v2853, %v2912
        %v2914 = vrot.slane %v2913, 4
        %v2915 = vmax.f32 %v2913, %v2914
        %v2916 = vrot.slane %v2915, 2
        %v2917 = vmax.f32 %v2915, %v2916
        %v2918 = vrot.slane %v2917, 1
        %v2919 = vmax.f32 %v2917, %v2918
        %v2920 = vsel %vm2863, %v2861, -inf
        %v2921 = vmax.f32 %v2855, %v2920
        %v2922 = vrot.slane %v2921, 4
        %v2923 = vmax.f32 %v2921, %v2922
        %v2924 = vrot.slane %v2923, 2
        %v2925 = vmax.f32 %v2923, %v2924
        %v2926 = vrot.slane %v2925, 1
        %v2927 = vmax.f32 %v2925, %v2926
        %v2928 = vsub.f32 %v2622, %v2871
        %v2929 = vsub.f32 %v2624, %v2879
        %v2930 = vsub.f32 %v2699, %v2887
        %v2931 = vsub.f32 %v2701, %v2895
        %v2932 = vsub.f32 %v2776, %v2903
        %v2933 = vsub.f32 %v2778, %v2911
        %v2934 = vsub.f32 %v2853, %v2919
        %v2935 = vsub.f32 %v2855, %v2927
        %v2936 = vsub.f32 %v2628, %v2871
        %v2937 = vsub.f32 %v2630, %v2879
        %v2938 = vsub.f32 %v2705, %v2887
        %v2939 = vsub.f32 %v2707, %v2895
        %v2940 = vsub.f32 %v2782, %v2903
        %v2941 = vsub.f32 %v2784, %v2911
        %v2942 = vsub.f32 %v2859, %v2919
        %v2943 = vsub.f32 %v2861, %v2927
        %v2944 = vmul.f32 %v2928, 1.442695
        %v2945 = vpow.pop %v2944
        %v2946 = vmul.f32 %v2929, 1.442695
        %v2947 = vpow.pop %v2946
        %v2948 = vmul.f32 %v2930, 1.442695
        %v2949 = vpow.pop %v2948
        %v2950 = vmul.f32 %v2931, 1.442695
        %v2951 = vpow.pop %v2950
        %v2952 = vmul.f32 %v2932, 1.442695
        %v2953 = vpow.pop %v2952
        %v2954 = vmul.f32 %v2933, 1.442695
        %v2955 = vpow.pop %v2954
        %v2956 = vmul.f32 %v2934, 1.442695
        %v2957 = vpow.pop %v2956
        %v2958 = vmul.f32 %v2935, 1.442695
        %v2959 = vpow.pop %v2958
        %v2960 = vmul.f32 %v2936, 1.442695
        %v2961 = vpow.pop %v2960
        %v2962 = vmul.f32 %v2937, 1.442695
        %v2963 = vpow.pop %v2962
        %v2964 = vmul.f32 %v2938, 1.442695
        %v2965 = vpow.pop %v2964
        %v2966 = vmul.f32 %v2939, 1.442695
        %v2967 = vpow.pop %v2966
        %v2968 = vmul.f32 %v2940, 1.442695
        %v2969 = vpow.pop %v2968
        %v2970 = vmul.f32 %v2941, 1.442695
        %v2971 = vpow.pop %v2970
        %v2972 = vmul.f32 %v2942, 1.442695
        %v2973 = vpow.pop %v2972
        %v2974 = vmul.f32 %v2943, 1.442695
        %v2975 = vpow.pop %v2974
        %v2976 = vld [vmem:[%s2] sm:$0xff]
        %v2977 = vld [vmem:[%s2 + $0x8] sm:$0xf]
        %vm2978 = vcmask 97280
        %v2980 = vsel %vm2978, %v2976, 0
        %v2983 = vsel %vm2978, %v2977, 0
        %v2986 = vsel %vm2863, %v2961, 0
        %v2989 = vsel %vm2863, %v2963, 0
        %v2992 = vsel %vm2863, %v2965, 0
        %v2995 = vsel %vm2863, %v2967, 0
        %v2998 = vsel %vm2863, %v2969, 0
        %v3001 = vsel %vm2863, %v2971, 0
        %v3004 = vsel %vm2863, %v2973, 0
        %v3007 = vsel %vm2863, %v2975, 0
        %3009 = vmatprep.subr.mxu0 0.0
        %3010 = vmatpush1.msra.mxu0 0.0
        %3011 = vmatprep.subr.mxu0 0.0
        %3012 = vmatpush1.msra.mxu0 0.0
        %3013 = vmatprep.subr.mxu0 0.0
        %3014 = vmatpush1.msra.mxu0 0.0
        %3015 = vmatprep.subr.mxu0 0.0
        %3016 = vmatpush1.msra.mxu0 0.0
        %3017 = vmatprep.subr.mxu0 0.0
        %3018 = vmatpush1.msra.mxu0 0.0
        %3019 = vmatprep.subr.mxu0 0.0
        %3020 = vmatpush1.msra.mxu0 0.0
        %3021 = vmatprep.subr.mxu0 0.0
        %3022 = vmatpush1.msra.mxu0 0.0
        %3023 = vmatprep.subr.mxu0 0.0
        %3024 = vmatpush1.msra.mxu0 0.0
        %3025 = vmatprep.subr.mxu0 0.0
        %3026 = vmatpush1.msra.mxu0 0.0
        %3027 = vmatprep.subr.mxu0 0.0
        %3028 = vmatpush1.msra.mxu0 0.0
        %3029 = vmatprep.subr.mxu0 0.0
        %3030 = vmatpush1.msra.mxu0 0.0
        %3031 = vmatprep.subr.mxu0 0.0
        %3032 = vmatpush1.msra.mxu0 0.0
        %3033 = vmatprep.subr.mxu0 0.0
        %3034 = vmatpush1.msra.mxu0 0.0
        %3035 = vmatprep.subr.mxu0 0.0
        %3036 = vmatpush1.msra.mxu0 0.0
        %3037 = vmatprep.subr.mxu0 %v2989
        %3038 = vmatpush1.msra.mxu0 %v2986
        %3039 = vmatprep.subr.mxu0 %v2947
        %3040 = vmatpush1.msra.mxu0 %v2945
        %3041 = vmatprep.subr.mxu0 0.0
        %3042 = vmatpush2.msra.mxu0 0.0
        %3043 = vmatprep.subr.mxu0 0.0
        %3044 = vmatpush2.msra.mxu0 0.0
        %3045 = vmatprep.subr.mxu0 0.0
        %3046 = vmatpush2.msra.mxu0 0.0
        %3047 = vmatprep.subr.mxu0 0.0
        %3048 = vmatpush2.msra.mxu0 0.0
        %3049 = vmatprep.subr.mxu0 0.0
        %3050 = vmatpush2.msra.mxu0 0.0
        %3051 = vmatprep.subr.mxu0 0.0
        %3052 = vmatpush2.msra.mxu0 0.0
        %3053 = vmatprep.subr.mxu0 0.0
        %3054 = vmatpush2.msra.mxu0 0.0
        %3055 = vmatprep.subr.mxu0 0.0
        %3056 = vmatpush2.msra.mxu0 0.0
        %3057 = vmatprep.subr.mxu0 0.0
        %3058 = vmatpush2.msra.mxu0 0.0
        %3059 = vmatprep.subr.mxu0 0.0
        %3060 = vmatpush2.msra.mxu0 0.0
        %3061 = vmatprep.subr.mxu0 0.0
        %3062 = vmatpush2.msra.mxu0 0.0
        %3063 = vmatprep.subr.mxu0 0.0
        %3064 = vmatpush2.msra.mxu0 0.0
        %3065 = vmatprep.subr.mxu0 0.0
        %3066 = vmatpush2.msra.mxu0 0.0
        %3067 = vmatprep.subr.mxu0 0.0
        %3068 = vmatpush2.msra.mxu0 0.0
        %3069 = vmatprep.subr.mxu0 0.0
        %3070 = vmatpush2.msra.mxu0 0.0
        %3071 = vmatprep.subr.mxu0 0.0
        %3072 = vmatpush2.msra.mxu0 0.0
        %3073 = vmatprep.mubr.f32.mxu0 0.0
        %3074 = vmatmul.mubr.f32.gmra.mxu0 %v2980
        %v3075 = vpop.f32.mrf.mxu0
        %v3076 = vadd.f32 0.0, %v3075
        %v3077 = vpop.f32.mrf.mxu0
        %v3078 = vadd.f32 0.0, %v3077
        %3079 = vmatprep.mubr.f32.mxu0 0.0
        %3080 = vmatmul.mubr.f32.gmra.mxu0 %v2983
        %v3081 = vpop.f32.mrf.mxu0
        %v3082 = vadd.f32 0.0, %v3081
        %v3083 = vpop.f32.mrf.mxu0
        %v3084 = vadd.f32 0.0, %v3083
        %3085 = vdwg.mxu0
        %3086 = vmatprep.subr.mxu0 0.0
        %3087 = vmatpush1.msra.mxu0 0.0
        %3088 = vmatprep.subr.mxu0 0.0
        %3089 = vmatpush1.msra.mxu0 0.0
        %3090 = vmatprep.subr.mxu0 0.0
        %3091 = vmatpush1.msra.mxu0 0.0
        %3092 = vmatprep.subr.mxu0 0.0
        %3093 = vmatpush1.msra.mxu0 0.0
        %3094 = vmatprep.subr.mxu0 0.0
        %3095 = vmatpush1.msra.mxu0 0.0
        %3096 = vmatprep.subr.mxu0 0.0
        %3097 = vmatpush1.msra.mxu0 0.0
        %3098 = vmatprep.subr.mxu0 0.0
        %3099 = vmatpush1.msra.mxu0 0.0
        %3100 = vmatprep.subr.mxu0 0.0
        %3101 = vmatpush1.msra.mxu0 0.0
        %3102 = vmatprep.subr.mxu0 0.0
        %3103 = vmatpush1.msra.mxu0 0.0
        %3104 = vmatprep.subr.mxu0 0.0
        %3105 = vmatpush1.msra.mxu0 0.0
        %3106 = vmatprep.subr.mxu0 0.0
        %3107 = vmatpush1.msra.mxu0 0.0
        %3108 = vmatprep.subr.mxu0 0.0
        %3109 = vmatpush1.msra.mxu0 0.0
        %3110 = vmatprep.subr.mxu0 0.0
        %3111 = vmatpush1.msra.mxu0 0.0
        %3112 = vmatprep.subr.mxu0 0.0
        %3113 = vmatpush1.msra.mxu0 0.0
        %3114 = vmatprep.subr.mxu0 %v2995
        %3115 = vmatpush1.msra.mxu0 %v2992
        %3116 = vmatprep.subr.mxu0 %v2951
        %3117 = vmatpush1.msra.mxu0 %v2949
        %3118 = vmatprep.subr.mxu0 0.0
        %3119 = vmatpush2.msra.mxu0 0.0
        %3120 = vmatprep.subr.mxu0 0.0
        %3121 = vmatpush2.msra.mxu0 0.0
        %3122 = vmatprep.subr.mxu0 0.0
        %3123 = vmatpush2.msra.mxu0 0.0
        %3124 = vmatprep.subr.mxu0 0.0
        %3125 = vmatpush2.msra.mxu0 0.0
        %3126 = vmatprep.subr.mxu0 0.0
        %3127 = vmatpush2.msra.mxu0 0.0
        %3128 = vmatprep.subr.mxu0 0.0
        %3129 = vmatpush2.msra.mxu0 0.0
        %3130 = vmatprep.subr.mxu0 0.0
        %3131 = vmatpush2.msra.mxu0 0.0
        %3132 = vmatprep.subr.mxu0 0.0
        %3133 = vmatpush2.msra.mxu0 0.0
        %3134 = vmatprep.subr.mxu0 0.0
        %3135 = vmatpush2.msra.mxu0 0.0
        %3136 = vmatprep.subr.mxu0 0.0
        %3137 = vmatpush2.msra.mxu0 0.0
        %3138 = vmatprep.subr.mxu0 0.0
        %3139 = vmatpush2.msra.mxu0 0.0
        %3140 = vmatprep.subr.mxu0 0.0
        %3141 = vmatpush2.msra.mxu0 0.0
        %3142 = vmatprep.subr.mxu0 0.0
        %3143 = vmatpush2.msra.mxu0 0.0
        %3144 = vmatprep.subr.mxu0 0.0
        %3145 = vmatpush2.msra.mxu0 0.0
        %3146 = vmatprep.subr.mxu0 0.0
        %3147 = vmatpush2.msra.mxu0 0.0
        %3148 = vmatprep.subr.mxu0 0.0
        %3149 = vmatpush2.msra.mxu0 0.0
        %3150 = vmatprep.mubr.f32.mxu0 0.0
        %3151 = vmatmul.mubr.f32.gmra.mxu0 %v2980
        %v3152 = vpop.f32.mrf.mxu0
        %v3153 = vadd.f32 0.0, %v3152
        %v3154 = vpop.f32.mrf.mxu0
        %v3155 = vadd.f32 0.0, %v3154
        %3156 = vmatprep.mubr.f32.mxu0 0.0
        %3157 = vmatmul.mubr.f32.gmra.mxu0 %v2983
        %v3158 = vpop.f32.mrf.mxu0
        %v3159 = vadd.f32 0.0, %v3158
        %v3160 = vpop.f32.mrf.mxu0
        %v3161 = vadd.f32 0.0, %v3160
        %3162 = vdwg.mxu0
        %3163 = vmatprep.subr.mxu0 0.0
        %3164 = vmatpush1.msra.mxu0 0.0
        %3165 = vmatprep.subr.mxu0 0.0
        %3166 = vmatpush1.msra.mxu0 0.0
        %3167 = vmatprep.subr.mxu0 0.0
        %3168 = vmatpush1.msra.mxu0 0.0
        %3169 = vmatprep.subr.mxu0 0.0
        %3170 = vmatpush1.msra.mxu0 0.0
        %3171 = vmatprep.subr.mxu0 0.0
        %3172 = vmatpush1.msra.mxu0 0.0
        %3173 = vmatprep.subr.mxu0 0.0
        %3174 = vmatpush1.msra.mxu0 0.0
        %3175 = vmatprep.subr.mxu0 0.0
        %3176 = vmatpush1.msra.mxu0 0.0
        %3177 = vmatprep.subr.mxu0 0.0
        %3178 = vmatpush1.msra.mxu0 0.0
        %3179 = vmatprep.subr.mxu0 0.0
        %3180 = vmatpush1.msra.mxu0 0.0
        %3181 = vmatprep.subr.mxu0 0.0
        %3182 = vmatpush1.msra.mxu0 0.0
        %3183 = vmatprep.subr.mxu0 0.0
        %3184 = vmatpush1.msra.mxu0 0.0
        %3185 = vmatprep.subr.mxu0 0.0
        %3186 = vmatpush1.msra.mxu0 0.0
        %3187 = vmatprep.subr.mxu0 0.0
        %3188 = vmatpush1.msra.mxu0 0.0
        %3189 = vmatprep.subr.mxu0 0.0
        %3190 = vmatpush1.msra.mxu0 0.0
        %3191 = vmatprep.subr.mxu0 %v3001
        %3192 = vmatpush1.msra.mxu0 %v2998
        %3193 = vmatprep.subr.mxu0 %v2955
        %3194 = vmatpush1.msra.mxu0 %v2953
        %3195 = vmatprep.subr.mxu0 0.0
        %3196 = vmatpush2.msra.mxu0 0.0
        %3197 = vmatprep.subr.mxu0 0.0
        %3198 = vmatpush2.msra.mxu0 0.0
        %3199 = vmatprep.subr.mxu0 0.0
        %3200 = vmatpush2.msra.mxu0 0.0
        %3201 = vmatprep.subr.mxu0 0.0
        %3202 = vmatpush2.msra.mxu0 0.0
        %3203 = vmatprep.subr.mxu0 0.0
        %3204 = vmatpush2.msra.mxu0 0.0
        %3205 = vmatprep.subr.mxu0 0.0
        %3206 = vmatpush2.msra.mxu0 0.0
        %3207 = vmatprep.subr.mxu0 0.0
        %3208 = vmatpush2.msra.mxu0 0.0
        %3209 = vmatprep.subr.mxu0 0.0
        %3210 = vmatpush2.msra.mxu0 0.0
        %3211 = vmatprep.subr.mxu0 0.0
        %3212 = vmatpush2.msra.mxu0 0.0
        %3213 = vmatprep.subr.mxu0 0.0
        %3214 = vmatpush2.msra.mxu0 0.0
        %3215 = vmatprep.subr.mxu0 0.0
        %3216 = vmatpush2.msra.mxu0 0.0
        %3217 = vmatprep.subr.mxu0 0.0
        %3218 = vmatpush2.msra.mxu0 0.0
        %3219 = vmatprep.subr.mxu0 0.0
        %3220 = vmatpush2.msra.mxu0 0.0
        %3221 = vmatprep.subr.mxu0 0.0
        %3222 = vmatpush2.msra.mxu0 0.0
        %3223 = vmatprep.subr.mxu0 0.0
        %3224 = vmatpush2.msra.mxu0 0.0
        %3225 = vmatprep.subr.mxu0 0.0
        %3226 = vmatpush2.msra.mxu0 0.0
        %3227 = vmatprep.mubr.f32.mxu0 0.0
        %3228 = vmatmul.mubr.f32.gmra.mxu0 %v2980
        %v3229 = vpop.f32.mrf.mxu0
        %v3230 = vadd.f32 0.0, %v3229
        %v3231 = vpop.f32.mrf.mxu0
        %v3232 = vadd.f32 0.0, %v3231
        %3233 = vmatprep.mubr.f32.mxu0 0.0
        %3234 = vmatmul.mubr.f32.gmra.mxu0 %v2983
        %v3235 = vpop.f32.mrf.mxu0
        %v3236 = vadd.f32 0.0, %v3235
        %v3237 = vpop.f32.mrf.mxu0
        %v3238 = vadd.f32 0.0, %v3237
        %3239 = vdwg.mxu0
        %3240 = vmatprep.subr.mxu0 0.0
        %3241 = vmatpush1.msra.mxu0 0.0
        %3242 = vmatprep.subr.mxu0 0.0
        %3243 = vmatpush1.msra.mxu0 0.0
        %3244 = vmatprep.subr.mxu0 0.0
        %3245 = vmatpush1.msra.mxu0 0.0
        %3246 = vmatprep.subr.mxu0 0.0
        %3247 = vmatpush1.msra.mxu0 0.0
        %3248 = vmatprep.subr.mxu0 0.0
        %3249 = vmatpush1.msra.mxu0 0.0
        %3250 = vmatprep.subr.mxu0 0.0
        %3251 = vmatpush1.msra.mxu0 0.0
        %3252 = vmatprep.subr.mxu0 0.0
        %3253 = vmatpush1.msra.mxu0 0.0
        %3254 = vmatprep.subr.mxu0 0.0
        %3255 = vmatpush1.msra.mxu0 0.0
        %3256 = vmatprep.subr.mxu0 0.0
        %3257 = vmatpush1.msra.mxu0 0.0
        %3258 = vmatprep.subr.mxu0 0.0
        %3259 = vmatpush1.msra.mxu0 0.0
        %3260 = vmatprep.subr.mxu0 0.0
        %3261 = vmatpush1.msra.mxu0 0.0
        %3262 = vmatprep.subr.mxu0 0.0
        %3263 = vmatpush1.msra.mxu0 0.0
        %3264 = vmatprep.subr.mxu0 0.0
        %3265 = vmatpush1.msra.mxu0 0.0
        %3266 = vmatprep.subr.mxu0 0.0
        %3267 = vmatpush1.msra.mxu0 0.0
        %3268 = vmatprep.subr.mxu0 %v3007
        %3269 = vmatpush1.msra.mxu0 %v3004
        %3270 = vmatprep.subr.mxu0 %v2959
        %3271 = vmatpush1.msra.mxu0 %v2957
        %3272 = vmatprep.subr.mxu0 0.0
        %3273 = vmatpush2.msra.mxu0 0.0
        %3274 = vmatprep.subr.mxu0 0.0
        %3275 = vmatpush2.msra.mxu0 0.0
        %3276 = vmatprep.subr.mxu0 0.0
        %3277 = vmatpush2.msra.mxu0 0.0
        %3278 = vmatprep.subr.mxu0 0.0
        %3279 = vmatpush2.msra.mxu0 0.0
        %3280 = vmatprep.subr.mxu0 0.0
        %3281 = vmatpush2.msra.mxu0 0.0
        %3282 = vmatprep.subr.mxu0 0.0
        %3283 = vmatpush2.msra.mxu0 0.0
        %3284 = vmatprep.subr.mxu0 0.0
        %3285 = vmatpush2.msra.mxu0 0.0
        %3286 = vmatprep.subr.mxu0 0.0
        %3287 = vmatpush2.msra.mxu0 0.0
        %3288 = vmatprep.subr.mxu0 0.0
        %3289 = vmatpush2.msra.mxu0 0.0
        %3290 = vmatprep.subr.mxu0 0.0
        %3291 = vmatpush2.msra.mxu0 0.0
        %3292 = vmatprep.subr.mxu0 0.0
        %3293 = vmatpush2.msra.mxu0 0.0
        %3294 = vmatprep.subr.mxu0 0.0
        %3295 = vmatpush2.msra.mxu0 0.0
        %3296 = vmatprep.subr.mxu0 0.0
        %3297 = vmatpush2.msra.mxu0 0.0
        %3298 = vmatprep.subr.mxu0 0.0
        %3299 = vmatpush2.msra.mxu0 0.0
        %3300 = vmatprep.subr.mxu0 0.0
        %3301 = vmatpush2.msra.mxu0 0.0
        %3302 = vmatprep.subr.mxu0 0.0
        %3303 = vmatpush2.msra.mxu0 0.0
        %3304 = vmatprep.mubr.f32.mxu0 0.0
        %3305 = vmatmul.mubr.f32.gmra.mxu0 %v2980
        %v3306 = vpop.f32.mrf.mxu0
        %v3307 = vadd.f32 0.0, %v3306
        %v3308 = vpop.f32.mrf.mxu0
        %v3309 = vadd.f32 0.0, %v3308
        %3310 = vmatprep.mubr.f32.mxu0 0.0
        %3311 = vmatmul.mubr.f32.gmra.mxu0 %v2983
        %v3312 = vpop.f32.mrf.mxu0
        %v3313 = vadd.f32 0.0, %v3312
        %v3314 = vpop.f32.mrf.mxu0
        %v3315 = vadd.f32 0.0, %v3314
        %3316 = vdwg.mxu0
        %v3317 = vmax.f32 %v3076, 1e-30
        %v3318 = vmax.f32 %v3078, 1e-30
        %v3319 = vmax.f32 %v3153, 1e-30
        %v3320 = vmax.f32 %v3155, 1e-30
        %v3321 = vmax.f32 %v3230, 1e-30
        %v3322 = vmax.f32 %v3232, 1e-30
        %v3323 = vmax.f32 %v3307, 1e-30
        %v3324 = vmax.f32 %v3309, 1e-30
        %v3325 = vmax.f32 %v3082, 1e-30
        %v3326 = vmax.f32 %v3084, 1e-30
        %v3327 = vmax.f32 %v3159, 1e-30
        %v3328 = vmax.f32 %v3161, 1e-30
        %v3329 = vmax.f32 %v3236, 1e-30
        %v3330 = vmax.f32 %v3238, 1e-30
        %v3331 = vmax.f32 %v3313, 1e-30
        %v3332 = vmax.f32 %v3315, 1e-30
        %v3333 = vrcp.pop %v3317
        %v3334 = vrcp.pop %v3318
        %v3335 = vrcp.pop %v3319
        %v3336 = vrcp.pop %v3320
        %v3337 = vrcp.pop %v3321
        %v3338 = vrcp.pop %v3322
        %v3339 = vrcp.pop %v3323
        %v3340 = vrcp.pop %v3324
        %v3341 = vrcp.pop %v3325
        %v3342 = vrcp.pop %v3326
        %v3343 = vrcp.pop %v3327
        %v3344 = vrcp.pop %v3328
        %v3345 = vrcp.pop %v3329
        %v3346 = vrcp.pop %v3330
        %v3347 = vrcp.pop %v3331
        %v3348 = vrcp.pop %v3332
        %v3349 = vmul.f32 %v2945, %v3333
        %v3350 = vmul.f32 %v2947, %v3334
        %v3351 = vmul.f32 %v2949, %v3335
        %v3352 = vmul.f32 %v2951, %v3336
        %v3353 = vmul.f32 %v2953, %v3337
        %v3354 = vmul.f32 %v2955, %v3338
        %v3355 = vmul.f32 %v2957, %v3339
        %v3356 = vmul.f32 %v2959, %v3340
        %v3357 = vmul.f32 %v2961, %v3341
        %v3358 = vmul.f32 %v2963, %v3342
        %v3359 = vmul.f32 %v2965, %v3343
        %v3360 = vmul.f32 %v2967, %v3344
        %v3361 = vmul.f32 %v2969, %v3345
        %v3362 = vmul.f32 %v2971, %v3346
        %v3363 = vmul.f32 %v2973, %v3347
        %v3364 = vmul.f32 %v2975, %v3348
        %v3365 = vld [vmem:[#allocation2] sm:$0xff]
        %v3366 = vld [vmem:[#allocation2 + $0x8] sm:$0xff]
        %v3367 = vld [vmem:[#allocation2 + $0x10] sm:$0xff]
        %v3368 = vld [vmem:[#allocation2 + $0x18] sm:$0xff]
        %v3369 = vld [vmem:[#allocation2 + $0x20] sm:$0xff]
        %v3370 = vld [vmem:[#allocation2 + $0x28] sm:$0xff]
        %v3371 = vld [vmem:[#allocation2 + $0x30] sm:$0xff]
        %v3372 = vld [vmem:[#allocation2 + $0x38] sm:$0xff]
        %v3373 = vld [vmem:[#allocation2 + $0x40] sm:$0xff]
        %v3374 = vld [vmem:[#allocation2 + $0x48] sm:$0xff]
        %v3375 = vld [vmem:[#allocation2 + $0x50] sm:$0xff]
        %v3376 = vld [vmem:[#allocation2 + $0x58] sm:$0xff]
        %v3378 = vsel %vm2978, %v3365, 0
        %v3381 = vsel %vm2978, %v3366, 0
        %v3384 = vsel %vm2978, %v3367, 0
        %v3387 = vsel %vm2978, %v3368, 0
        %v3390 = vsel %vm2978, %v3369, 0
        %v3393 = vsel %vm2978, %v3370, 0
        %v3396 = vsel %vm2978, %v3371, 0
        %v3399 = vsel %vm2978, %v3372, 0
        %v3402 = vsel %vm2978, %v3373, 0
        %v3405 = vsel %vm2978, %v3374, 0
        %v3408 = vsel %vm2978, %v3375, 0
        %v3411 = vsel %vm2978, %v3376, 0
        %v3414 = vsel %vm2863, %v3357, 0
        %v3417 = vsel %vm2863, %v3358, 0
        %v3420 = vsel %vm2863, %v3359, 0
        %v3423 = vsel %vm2863, %v3360, 0
        %v3426 = vsel %vm2863, %v3361, 0
        %v3429 = vsel %vm2863, %v3362, 0
        %v3432 = vsel %vm2863, %v3363, 0
        %v3435 = vsel %vm2863, %v3364, 0
        %3437 = vmatprep.subr.mxu0 0.0
        %3438 = vmatpush1.msra.mxu0 0.0
        %3439 = vmatprep.subr.mxu0 0.0
        %3440 = vmatpush1.msra.mxu0 0.0
        %3441 = vmatprep.subr.mxu0 0.0
        %3442 = vmatpush1.msra.mxu0 0.0
        %3443 = vmatprep.subr.mxu0 0.0
        %3444 = vmatpush1.msra.mxu0 0.0
        %3445 = vmatprep.subr.mxu0 0.0
        %3446 = vmatpush1.msra.mxu0 0.0
        %3447 = vmatprep.subr.mxu0 0.0
        %3448 = vmatpush1.msra.mxu0 0.0
        %3449 = vmatprep.subr.mxu0 0.0
        %3450 = vmatpush1.msra.mxu0 0.0
        %3451 = vmatprep.subr.mxu0 0.0
        %3452 = vmatpush1.msra.mxu0 0.0
        %3453 = vmatprep.subr.mxu0 0.0
        %3454 = vmatpush1.msra.mxu0 0.0
        %3455 = vmatprep.subr.mxu0 0.0
        %3456 = vmatpush1.msra.mxu0 0.0
        %3457 = vmatprep.subr.mxu0 0.0
        %3458 = vmatpush1.msra.mxu0 0.0
        %3459 = vmatprep.subr.mxu0 0.0
        %3460 = vmatpush1.msra.mxu0 0.0
        %3461 = vmatprep.subr.mxu0 0.0
        %3462 = vmatpush1.msra.mxu0 0.0
        %3463 = vmatprep.subr.mxu0 0.0
        %3464 = vmatpush1.msra.mxu0 0.0
        %3465 = vmatprep.subr.mxu0 %v3417
        %3466 = vmatpush1.msra.mxu0 %v3414
        %3467 = vmatprep.subr.mxu0 %v3350
        %3468 = vmatpush1.msra.mxu0 %v3349
        %3469 = vmatprep.subr.mxu0 0.0
        %3470 = vmatpush2.msra.mxu0 0.0
        %3471 = vmatprep.subr.mxu0 0.0
        %3472 = vmatpush2.msra.mxu0 0.0
        %3473 = vmatprep.subr.mxu0 0.0
        %3474 = vmatpush2.msra.mxu0 0.0
        %3475 = vmatprep.subr.mxu0 0.0
        %3476 = vmatpush2.msra.mxu0 0.0
        %3477 = vmatprep.subr.mxu0 0.0
        %3478 = vmatpush2.msra.mxu0 0.0
        %3479 = vmatprep.subr.mxu0 0.0
        %3480 = vmatpush2.msra.mxu0 0.0
        %3481 = vmatprep.subr.mxu0 0.0
        %3482 = vmatpush2.msra.mxu0 0.0
        %3483 = vmatprep.subr.mxu0 0.0
        %3484 = vmatpush2.msra.mxu0 0.0
        %3485 = vmatprep.subr.mxu0 0.0
        %3486 = vmatpush2.msra.mxu0 0.0
        %3487 = vmatprep.subr.mxu0 0.0
        %3488 = vmatpush2.msra.mxu0 0.0
        %3489 = vmatprep.subr.mxu0 0.0
        %3490 = vmatpush2.msra.mxu0 0.0
        %3491 = vmatprep.subr.mxu0 0.0
        %3492 = vmatpush2.msra.mxu0 0.0
        %3493 = vmatprep.subr.mxu0 0.0
        %3494 = vmatpush2.msra.mxu0 0.0
        %3495 = vmatprep.subr.mxu0 0.0
        %3496 = vmatpush2.msra.mxu0 0.0
        %3497 = vmatprep.subr.mxu0 0.0
        %3498 = vmatpush2.msra.mxu0 0.0
        %3499 = vmatprep.subr.mxu0 0.0
        %3500 = vmatpush2.msra.mxu0 0.0
        %3501 = vmatprep.mubr.f32.mxu0 0.0
        %3502 = vmatmul.mubr.f32.gmra.mxu0 %v3378
        %v3503 = vpop.f32.mrf.mxu0
        %v3504 = vadd.f32 0.0, %v3503
        %v3505 = vpop.f32.mrf.mxu0
        %v3506 = vadd.f32 0.0, %v3505
        %3507 = vmatprep.mubr.f32.mxu0 0.0
        %3508 = vmatmul.mubr.f32.gmra.mxu0 %v3381
        %v3509 = vpop.f32.mrf.mxu0
        %v3510 = vadd.f32 0.0, %v3509
        %v3511 = vpop.f32.mrf.mxu0
        %v3512 = vadd.f32 0.0, %v3511
        %3513 = vmatprep.mubr.f32.mxu0 0.0
        %3514 = vmatmul.mubr.f32.gmra.mxu0 %v3384
        %v3515 = vpop.f32.mrf.mxu0
        %v3516 = vadd.f32 0.0, %v3515
        %v3517 = vpop.f32.mrf.mxu0
        %v3518 = vadd.f32 0.0, %v3517
        %3519 = vmatprep.mubr.f32.mxu0 0.0
        %3520 = vmatmul.mubr.f32.gmra.mxu0 %v3387
        %v3521 = vpop.f32.mrf.mxu0
        %v3522 = vadd.f32 0.0, %v3521
        %v3523 = vpop.f32.mrf.mxu0
        %v3524 = vadd.f32 0.0, %v3523
        %3525 = vmatprep.mubr.f32.mxu0 0.0
        %3526 = vmatmul.mubr.f32.gmra.mxu0 %v3390
        %v3527 = vpop.f32.mrf.mxu0
        %v3528 = vadd.f32 0.0, %v3527
        %v3529 = vpop.f32.mrf.mxu0
        %v3530 = vadd.f32 0.0, %v3529
        %3531 = vmatprep.mubr.f32.mxu0 0.0
        %3532 = vmatmul.mubr.f32.gmra.mxu0 %v3393
        %v3533 = vpop.f32.mrf.mxu0
        %v3534 = vadd.f32 0.0, %v3533
        %v3535 = vpop.f32.mrf.mxu0
        %v3536 = vadd.f32 0.0, %v3535
        %3537 = vmatprep.mubr.f32.mxu0 0.0
        %3538 = vmatmul.mubr.f32.gmra.mxu0 %v3396
        %v3539 = vpop.f32.mrf.mxu0
        %v3540 = vadd.f32 0.0, %v3539
        %v3541 = vpop.f32.mrf.mxu0
        %v3542 = vadd.f32 0.0, %v3541
        %3543 = vmatprep.mubr.f32.mxu0 0.0
        %3544 = vmatmul.mubr.f32.gmra.mxu0 %v3399
        %v3545 = vpop.f32.mrf.mxu0
        %v3546 = vadd.f32 0.0, %v3545
        %v3547 = vpop.f32.mrf.mxu0
        %v3548 = vadd.f32 0.0, %v3547
        %3549 = vmatprep.mubr.f32.mxu0 0.0
        %3550 = vmatmul.mubr.f32.gmra.mxu0 %v3402
        %v3551 = vpop.f32.mrf.mxu0
        %v3552 = vadd.f32 0.0, %v3551
        %v3553 = vpop.f32.mrf.mxu0
        %v3554 = vadd.f32 0.0, %v3553
        %3555 = vmatprep.mubr.f32.mxu0 0.0
        %3556 = vmatmul.mubr.f32.gmra.mxu0 %v3405
        %v3557 = vpop.f32.mrf.mxu0
        %v3558 = vadd.f32 0.0, %v3557
        %v3559 = vpop.f32.mrf.mxu0
        %v3560 = vadd.f32 0.0, %v3559
        %3561 = vmatprep.mubr.f32.mxu0 0.0
        %3562 = vmatmul.mubr.f32.gmra.mxu0 %v3408
        %v3563 = vpop.f32.mrf.mxu0
        %v3564 = vadd.f32 0.0, %v3563
        %v3565 = vpop.f32.mrf.mxu0
        %v3566 = vadd.f32 0.0, %v3565
        %3567 = vmatprep.mubr.f32.mxu0 0.0
        %3568 = vmatmul.mubr.f32.gmra.mxu0 %v3411
        %v3569 = vpop.f32.mrf.mxu0
        %v3570 = vadd.f32 0.0, %v3569
        %v3571 = vpop.f32.mrf.mxu0
        %v3572 = vadd.f32 0.0, %v3571
        %3573 = vdwg.mxu0
        %3574 = vmatprep.subr.mxu0 0.0
        %3575 = vmatpush1.msra.mxu0 0.0
        %3576 = vmatprep.subr.mxu0 0.0
        %3577 = vmatpush1.msra.mxu0 0.0
        %3578 = vmatprep.subr.mxu0 0.0
        %3579 = vmatpush1.msra.mxu0 0.0
        %3580 = vmatprep.subr.mxu0 0.0
        %3581 = vmatpush1.msra.mxu0 0.0
        %3582 = vmatprep.subr.mxu0 0.0
        %3583 = vmatpush1.msra.mxu0 0.0
        %3584 = vmatprep.subr.mxu0 0.0
        %3585 = vmatpush1.msra.mxu0 0.0
        %3586 = vmatprep.subr.mxu0 0.0
        %3587 = vmatpush1.msra.mxu0 0.0
        %3588 = vmatprep.subr.mxu0 0.0
        %3589 = vmatpush1.msra.mxu0 0.0
        %3590 = vmatprep.subr.mxu0 0.0
        %3591 = vmatpush1.msra.mxu0 0.0
        %3592 = vmatprep.subr.mxu0 0.0
        %3593 = vmatpush1.msra.mxu0 0.0
        %3594 = vmatprep.subr.mxu0 0.0
        %3595 = vmatpush1.msra.mxu0 0.0
        %3596 = vmatprep.subr.mxu0 0.0
        %3597 = vmatpush1.msra.mxu0 0.0
        %3598 = vmatprep.subr.mxu0 0.0
        %3599 = vmatpush1.msra.mxu0 0.0
        %3600 = vmatprep.subr.mxu0 0.0
        %3601 = vmatpush1.msra.mxu0 0.0
        %3602 = vmatprep.subr.mxu0 %v3423
        %3603 = vmatpush1.msra.mxu0 %v3420
        %3604 = vmatprep.subr.mxu0 %v3352
        %3605 = vmatpush1.msra.mxu0 %v3351
        %3606 = vmatprep.subr.mxu0 0.0
        %3607 = vmatpush2.msra.mxu0 0.0
        %3608 = vmatprep.subr.mxu0 0.0
        %3609 = vmatpush2.msra.mxu0 0.0
        %3610 = vmatprep.subr.mxu0 0.0
        %3611 = vmatpush2.msra.mxu0 0.0
        %3612 = vmatprep.subr.mxu0 0.0
        %3613 = vmatpush2.msra.mxu0 0.0
        %3614 = vmatprep.subr.mxu0 0.0
        %3615 = vmatpush2.msra.mxu0 0.0
        %3616 = vmatprep.subr.mxu0 0.0
        %3617 = vmatpush2.msra.mxu0 0.0
        %3618 = vmatprep.subr.mxu0 0.0
        %3619 = vmatpush2.msra.mxu0 0.0
        %3620 = vmatprep.subr.mxu0 0.0
        %3621 = vmatpush2.msra.mxu0 0.0
        %3622 = vmatprep.subr.mxu0 0.0
        %3623 = vmatpush2.msra.mxu0 0.0
        %3624 = vmatprep.subr.mxu0 0.0
        %3625 = vmatpush2.msra.mxu0 0.0
        %3626 = vmatprep.subr.mxu0 0.0
        %3627 = vmatpush2.msra.mxu0 0.0
        %3628 = vmatprep.subr.mxu0 0.0
        %3629 = vmatpush2.msra.mxu0 0.0
        %3630 = vmatprep.subr.mxu0 0.0
        %3631 = vmatpush2.msra.mxu0 0.0
        %3632 = vmatprep.subr.mxu0 0.0
        %3633 = vmatpush2.msra.mxu0 0.0
        %3634 = vmatprep.subr.mxu0 0.0
        %3635 = vmatpush2.msra.mxu0 0.0
        %3636 = vmatprep.subr.mxu0 0.0
        %3637 = vmatpush2.msra.mxu0 0.0
        %3638 = vmatprep.mubr.f32.mxu0 0.0
        %3639 = vmatmul.mubr.f32.gmra.mxu0 %v3378
        %v3640 = vpop.f32.mrf.mxu0
        %v3641 = vadd.f32 0.0, %v3640
        %v3642 = vpop.f32.mrf.mxu0
        %v3643 = vadd.f32 0.0, %v3642
        %3644 = vmatprep.mubr.f32.mxu0 0.0
        %3645 = vmatmul.mubr.f32.gmra.mxu0 %v3381
        %v3646 = vpop.f32.mrf.mxu0
        %v3647 = vadd.f32 0.0, %v3646
        %v3648 = vpop.f32.mrf.mxu0
        %v3649 = vadd.f32 0.0, %v3648
        %3650 = vmatprep.mubr.f32.mxu0 0.0
        %3651 = vmatmul.mubr.f32.gmra.mxu0 %v3384
        %v3652 = vpop.f32.mrf.mxu0
        %v3653 = vadd.f32 0.0, %v3652
        %v3654 = vpop.f32.mrf.mxu0
        %v3655 = vadd.f32 0.0, %v3654
        %3656 = vmatprep.mubr.f32.mxu0 0.0
        %3657 = vmatmul.mubr.f32.gmra.mxu0 %v3387
        %v3658 = vpop.f32.mrf.mxu0
        %v3659 = vadd.f32 0.0, %v3658
        %v3660 = vpop.f32.mrf.mxu0
        %v3661 = vadd.f32 0.0, %v3660
        %3662 = vmatprep.mubr.f32.mxu0 0.0
        %3663 = vmatmul.mubr.f32.gmra.mxu0 %v3390
        %v3664 = vpop.f32.mrf.mxu0
        %v3665 = vadd.f32 0.0, %v3664
        %v3666 = vpop.f32.mrf.mxu0
        %v3667 = vadd.f32 0.0, %v3666
        %3668 = vmatprep.mubr.f32.mxu0 0.0
        %3669 = vmatmul.mubr.f32.gmra.mxu0 %v3393
        %v3670 = vpop.f32.mrf.mxu0
        %v3671 = vadd.f32 0.0, %v3670
        %v3672 = vpop.f32.mrf.mxu0
        %v3673 = vadd.f32 0.0, %v3672
        %3674 = vmatprep.mubr.f32.mxu0 0.0
        %3675 = vmatmul.mubr.f32.gmra.mxu0 %v3396
        %v3676 = vpop.f32.mrf.mxu0
        %v3677 = vadd.f32 0.0, %v3676
        %v3678 = vpop.f32.mrf.mxu0
        %v3679 = vadd.f32 0.0, %v3678
        %3680 = vmatprep.mubr.f32.mxu0 0.0
        %3681 = vmatmul.mubr.f32.gmra.mxu0 %v3399
        %v3682 = vpop.f32.mrf.mxu0
        %v3683 = vadd.f32 0.0, %v3682
        %v3684 = vpop.f32.mrf.mxu0
        %v3685 = vadd.f32 0.0, %v3684
        %3686 = vmatprep.mubr.f32.mxu0 0.0
        %3687 = vmatmul.mubr.f32.gmra.mxu0 %v3402
        %v3688 = vpop.f32.mrf.mxu0
        %v3689 = vadd.f32 0.0, %v3688
        %v3690 = vpop.f32.mrf.mxu0
        %v3691 = vadd.f32 0.0, %v3690
        %3692 = vmatprep.mubr.f32.mxu0 0.0
        %3693 = vmatmul.mubr.f32.gmra.mxu0 %v3405
        %v3694 = vpop.f32.mrf.mxu0
        %v3695 = vadd.f32 0.0, %v3694
        %v3696 = vpop.f32.mrf.mxu0
        %v3697 = vadd.f32 0.0, %v3696
        %3698 = vmatprep.mubr.f32.mxu0 0.0
        %3699 = vmatmul.mubr.f32.gmra.mxu0 %v3408
        %v3700 = vpop.f32.mrf.mxu0
        %v3701 = vadd.f32 0.0, %v3700
        %v3702 = vpop.f32.mrf.mxu0
        %v3703 = vadd.f32 0.0, %v3702
        %3704 = vmatprep.mubr.f32.mxu0 0.0
        %3705 = vmatmul.mubr.f32.gmra.mxu0 %v3411
        %v3706 = vpop.f32.mrf.mxu0
        %v3707 = vadd.f32 0.0, %v3706
        %v3708 = vpop.f32.mrf.mxu0
        %v3709 = vadd.f32 0.0, %v3708
        %3710 = vdwg.mxu0
        %3711 = vmatprep.subr.mxu0 0.0
        %3712 = vmatpush1.msra.mxu0 0.0
        %3713 = vmatprep.subr.mxu0 0.0
        %3714 = vmatpush1.msra.mxu0 0.0
        %3715 = vmatprep.subr.mxu0 0.0
        %3716 = vmatpush1.msra.mxu0 0.0
        %3717 = vmatprep.subr.mxu0 0.0
        %3718 = vmatpush1.msra.mxu0 0.0
        %3719 = vmatprep.subr.mxu0 0.0
        %3720 = vmatpush1.msra.mxu0 0.0
        %3721 = vmatprep.subr.mxu0 0.0
        %3722 = vmatpush1.msra.mxu0 0.0
        %3723 = vmatprep.subr.mxu0 0.0
        %3724 = vmatpush1.msra.mxu0 0.0
        %3725 = vmatprep.subr.mxu0 0.0
        %3726 = vmatpush1.msra.mxu0 0.0
        %3727 = vmatprep.subr.mxu0 0.0
        %3728 = vmatpush1.msra.mxu0 0.0
        %3729 = vmatprep.subr.mxu0 0.0
        %3730 = vmatpush1.msra.mxu0 0.0
        %3731 = vmatprep.subr.mxu0 0.0
        %3732 = vmatpush1.msra.mxu0 0.0
        %3733 = vmatprep.subr.mxu0 0.0
        %3734 = vmatpush1.msra.mxu0 0.0
        %3735 = vmatprep.subr.mxu0 0.0
        %3736 = vmatpush1.msra.mxu0 0.0
        %3737 = vmatprep.subr.mxu0 0.0
        %3738 = vmatpush1.msra.mxu0 0.0
        %3739 = vmatprep.subr.mxu0 %v3429
        %3740 = vmatpush1.msra.mxu0 %v3426
        %3741 = vmatprep.subr.mxu0 %v3354
        %3742 = vmatpush1.msra.mxu0 %v3353
        %3743 = vmatprep.subr.mxu0 0.0
        %3744 = vmatpush2.msra.mxu0 0.0
        %3745 = vmatprep.subr.mxu0 0.0
        %3746 = vmatpush2.msra.mxu0 0.0
        %3747 = vmatprep.subr.mxu0 0.0
        %3748 = vmatpush2.msra.mxu0 0.0
        %3749 = vmatprep.subr.mxu0 0.0
        %3750 = vmatpush2.msra.mxu0 0.0
        %3751 = vmatprep.subr.mxu0 0.0
        %3752 = vmatpush2.msra.mxu0 0.0
        %3753 = vmatprep.subr.mxu0 0.0
        %3754 = vmatpush2.msra.mxu0 0.0
        %3755 = vmatprep.subr.mxu0 0.0
        %3756 = vmatpush2.msra.mxu0 0.0
        %3757 = vmatprep.subr.mxu0 0.0
        %3758 = vmatpush2.msra.mxu0 0.0
        %3759 = vmatprep.subr.mxu0 0.0
        %3760 = vmatpush2.msra.mxu0 0.0
        %3761 = vmatprep.subr.mxu0 0.0
        %3762 = vmatpush2.msra.mxu0 0.0
        %3763 = vmatprep.subr.mxu0 0.0
        %3764 = vmatpush2.msra.mxu0 0.0
        %3765 = vmatprep.subr.mxu0 0.0
        %3766 = vmatpush2.msra.mxu0 0.0
        %3767 = vmatprep.subr.mxu0 0.0
        %3768 = vmatpush2.msra.mxu0 0.0
        %3769 = vmatprep.subr.mxu0 0.0
        %3770 = vmatpush2.msra.mxu0 0.0
        %3771 = vmatprep.subr.mxu0 0.0
        %3772 = vmatpush2.msra.mxu0 0.0
        %3773 = vmatprep.subr.mxu0 0.0
        %3774 = vmatpush2.msra.mxu0 0.0
        %3775 = vmatprep.mubr.f32.mxu0 0.0
        %3776 = vmatmul.mubr.f32.gmra.mxu0 %v3378
        %v3777 = vpop.f32.mrf.mxu0
        %v3778 = vadd.f32 0.0, %v3777
        %v3779 = vpop.f32.mrf.mxu0
        %v3780 = vadd.f32 0.0, %v3779
        %3781 = vmatprep.mubr.f32.mxu0 0.0
        %3782 = vmatmul.mubr.f32.gmra.mxu0 %v3381
        %v3783 = vpop.f32.mrf.mxu0
        %v3784 = vadd.f32 0.0, %v3783
        %v3785 = vpop.f32.mrf.mxu0
        %v3786 = vadd.f32 0.0, %v3785
        %3787 = vmatprep.mubr.f32.mxu0 0.0
        %3788 = vmatmul.mubr.f32.gmra.mxu0 %v3384
        %v3789 = vpop.f32.mrf.mxu0
        %v3790 = vadd.f32 0.0, %v3789
        %v3791 = vpop.f32.mrf.mxu0
        %v3792 = vadd.f32 0.0, %v3791
        %3793 = vmatprep.mubr.f32.mxu0 0.0
        %3794 = vmatmul.mubr.f32.gmra.mxu0 %v3387
        %v3795 = vpop.f32.mrf.mxu0
        %v3796 = vadd.f32 0.0, %v3795
        %v3797 = vpop.f32.mrf.mxu0
        %v3798 = vadd.f32 0.0, %v3797
        %3799 = vmatprep.mubr.f32.mxu0 0.0
        %3800 = vmatmul.mubr.f32.gmra.mxu0 %v3390
        %v3801 = vpop.f32.mrf.mxu0
        %v3802 = vadd.f32 0.0, %v3801
        %v3803 = vpop.f32.mrf.mxu0
        %v3804 = vadd.f32 0.0, %v3803
        %3805 = vmatprep.mubr.f32.mxu0 0.0
        %3806 = vmatmul.mubr.f32.gmra.mxu0 %v3393
        %v3807 = vpop.f32.mrf.mxu0
        %v3808 = vadd.f32 0.0, %v3807
        %v3809 = vpop.f32.mrf.mxu0
        %v3810 = vadd.f32 0.0, %v3809
        %3811 = vmatprep.mubr.f32.mxu0 0.0
        %3812 = vmatmul.mubr.f32.gmra.mxu0 %v3396
        %v3813 = vpop.f32.mrf.mxu0
        %v3814 = vadd.f32 0.0, %v3813
        %v3815 = vpop.f32.mrf.mxu0
        %v3816 = vadd.f32 0.0, %v3815
        %3817 = vmatprep.mubr.f32.mxu0 0.0
        %3818 = vmatmul.mubr.f32.gmra.mxu0 %v3399
        %v3819 = vpop.f32.mrf.mxu0
        %v3820 = vadd.f32 0.0, %v3819
        %v3821 = vpop.f32.mrf.mxu0
        %v3822 = vadd.f32 0.0, %v3821
        %3823 = vmatprep.mubr.f32.mxu0 0.0
        %3824 = vmatmul.mubr.f32.gmra.mxu0 %v3402
        %v3825 = vpop.f32.mrf.mxu0
        %v3826 = vadd.f32 0.0, %v3825
        %v3827 = vpop.f32.mrf.mxu0
        %v3828 = vadd.f32 0.0, %v3827
        %3829 = vmatprep.mubr.f32.mxu0 0.0
        %3830 = vmatmul.mubr.f32.gmra.mxu0 %v3405
        %v3831 = vpop.f32.mrf.mxu0
        %v3832 = vadd.f32 0.0, %v3831
        %v3833 = vpop.f32.mrf.mxu0
        %v3834 = vadd.f32 0.0, %v3833
        %3835 = vmatprep.mubr.f32.mxu0 0.0
        %3836 = vmatmul.mubr.f32.gmra.mxu0 %v3408
        %v3837 = vpop.f32.mrf.mxu0
        %v3838 = vadd.f32 0.0, %v3837
        %v3839 = vpop.f32.mrf.mxu0
        %v3840 = vadd.f32 0.0, %v3839
        %3841 = vmatprep.mubr.f32.mxu0 0.0
        %3842 = vmatmul.mubr.f32.gmra.mxu0 %v3411
        %v3843 = vpop.f32.mrf.mxu0
        %v3844 = vadd.f32 0.0, %v3843
        %v3845 = vpop.f32.mrf.mxu0
        %v3846 = vadd.f32 0.0, %v3845
        %3847 = vdwg.mxu0
        %3848 = vmatprep.subr.mxu0 0.0
        %3849 = vmatpush1.msra.mxu0 0.0
        %3850 = vmatprep.subr.mxu0 0.0
        %3851 = vmatpush1.msra.mxu0 0.0
        %3852 = vmatprep.subr.mxu0 0.0
        %3853 = vmatpush1.msra.mxu0 0.0
        %3854 = vmatprep.subr.mxu0 0.0
        %3855 = vmatpush1.msra.mxu0 0.0
        %3856 = vmatprep.subr.mxu0 0.0
        %3857 = vmatpush1.msra.mxu0 0.0
        %3858 = vmatprep.subr.mxu0 0.0
        %3859 = vmatpush1.msra.mxu0 0.0
        %3860 = vmatprep.subr.mxu0 0.0
        %3861 = vmatpush1.msra.mxu0 0.0
        %3862 = vmatprep.subr.mxu0 0.0
        %3863 = vmatpush1.msra.mxu0 0.0
        %3864 = vmatprep.subr.mxu0 0.0
        %3865 = vmatpush1.msra.mxu0 0.0
        %3866 = vmatprep.subr.mxu0 0.0
        %3867 = vmatpush1.msra.mxu0 0.0
        %3868 = vmatprep.subr.mxu0 0.0
        %3869 = vmatpush1.msra.mxu0 0.0
        %3870 = vmatprep.subr.mxu0 0.0
        %3871 = vmatpush1.msra.mxu0 0.0
        %3872 = vmatprep.subr.mxu0 0.0
        %3873 = vmatpush1.msra.mxu0 0.0
        %3874 = vmatprep.subr.mxu0 0.0
        %3875 = vmatpush1.msra.mxu0 0.0
        %3876 = vmatprep.subr.mxu0 %v3435
        %3877 = vmatpush1.msra.mxu0 %v3432
        %3878 = vmatprep.subr.mxu0 %v3356
        %3879 = vmatpush1.msra.mxu0 %v3355
        %3880 = vmatprep.subr.mxu0 0.0
        %3881 = vmatpush2.msra.mxu0 0.0
        %3882 = vmatprep.subr.mxu0 0.0
        %3883 = vmatpush2.msra.mxu0 0.0
        %3884 = vmatprep.subr.mxu0 0.0
        %3885 = vmatpush2.msra.mxu0 0.0
        %3886 = vmatprep.subr.mxu0 0.0
        %3887 = vmatpush2.msra.mxu0 0.0
        %3888 = vmatprep.subr.mxu0 0.0
        %3889 = vmatpush2.msra.mxu0 0.0
        %3890 = vmatprep.subr.mxu0 0.0
        %3891 = vmatpush2.msra.mxu0 0.0
        %3892 = vmatprep.subr.mxu0 0.0
        %3893 = vmatpush2.msra.mxu0 0.0
        %3894 = vmatprep.subr.mxu0 0.0
        %3895 = vmatpush2.msra.mxu0 0.0
        %3896 = vmatprep.subr.mxu0 0.0
        %3897 = vmatpush2.msra.mxu0 0.0
        %3898 = vmatprep.subr.mxu0 0.0
        %3899 = vmatpush2.msra.mxu0 0.0
        %3900 = vmatprep.subr.mxu0 0.0
        %3901 = vmatpush2.msra.mxu0 0.0
        %3902 = vmatprep.subr.mxu0 0.0
        %3903 = vmatpush2.msra.mxu0 0.0
        %3904 = vmatprep.subr.mxu0 0.0
        %3905 = vmatpush2.msra.mxu0 0.0
        %3906 = vmatprep.subr.mxu0 0.0
        %3907 = vmatpush2.msra.mxu0 0.0
        %3908 = vmatprep.subr.mxu0 0.0
        %3909 = vmatpush2.msra.mxu0 0.0
        %3910 = vmatprep.subr.mxu0 0.0
        %3911 = vmatpush2.msra.mxu0 0.0
        %3912 = vmatprep.mubr.f32.mxu0 0.0
        %3913 = vmatmul.mubr.f32.gmra.mxu0 %v3378
        %v3914 = vpop.f32.mrf.mxu0
        %v3915 = vadd.f32 0.0, %v3914
        %v3916 = vpop.f32.mrf.mxu0
        %v3917 = vadd.f32 0.0, %v3916
        %3918 = vmatprep.mubr.f32.mxu0 0.0
        %3919 = vmatmul.mubr.f32.gmra.mxu0 %v3381
        %v3920 = vpop.f32.mrf.mxu0
        %v3921 = vadd.f32 0.0, %v3920
        %v3922 = vpop.f32.mrf.mxu0
        %v3923 = vadd.f32 0.0, %v3922
        %3924 = vmatprep.mubr.f32.mxu0 0.0
        %3925 = vmatmul.mubr.f32.gmra.mxu0 %v3384
        %v3926 = vpop.f32.mrf.mxu0
        %v3927 = vadd.f32 0.0, %v3926
        %v3928 = vpop.f32.mrf.mxu0
        %v3929 = vadd.f32 0.0, %v3928
        %3930 = vmatprep.mubr.f32.mxu0 0.0
        %3931 = vmatmul.mubr.f32.gmra.mxu0 %v3387
        %v3932 = vpop.f32.mrf.mxu0
        %v3933 = vadd.f32 0.0, %v3932
        %v3934 = vpop.f32.mrf.mxu0
        %v3935 = vadd.f32 0.0, %v3934
        %3936 = vmatprep.mubr.f32.mxu0 0.0
        %3937 = vmatmul.mubr.f32.gmra.mxu0 %v3390
        %v3938 = vpop.f32.mrf.mxu0
        %v3939 = vadd.f32 0.0, %v3938
        %v3940 = vpop.f32.mrf.mxu0
        %v3941 = vadd.f32 0.0, %v3940
        %3942 = vmatprep.mubr.f32.mxu0 0.0
        %3943 = vmatmul.mubr.f32.gmra.mxu0 %v3393
        %v3944 = vpop.f32.mrf.mxu0
        %v3945 = vadd.f32 0.0, %v3944
        %v3946 = vpop.f32.mrf.mxu0
        %v3947 = vadd.f32 0.0, %v3946
        %3948 = vmatprep.mubr.f32.mxu0 0.0
        %3949 = vmatmul.mubr.f32.gmra.mxu0 %v3396
        %v3950 = vpop.f32.mrf.mxu0
        %v3951 = vadd.f32 0.0, %v3950
        %v3952 = vpop.f32.mrf.mxu0
        %v3953 = vadd.f32 0.0, %v3952
        %3954 = vmatprep.mubr.f32.mxu0 0.0
        %3955 = vmatmul.mubr.f32.gmra.mxu0 %v3399
        %v3956 = vpop.f32.mrf.mxu0
        %v3957 = vadd.f32 0.0, %v3956
        %v3958 = vpop.f32.mrf.mxu0
        %v3959 = vadd.f32 0.0, %v3958
        %3960 = vmatprep.mubr.f32.mxu0 0.0
        %3961 = vmatmul.mubr.f32.gmra.mxu0 %v3402
        %v3962 = vpop.f32.mrf.mxu0
        %v3963 = vadd.f32 0.0, %v3962
        %v3964 = vpop.f32.mrf.mxu0
        %v3965 = vadd.f32 0.0, %v3964
        %3966 = vmatprep.mubr.f32.mxu0 0.0
        %3967 = vmatmul.mubr.f32.gmra.mxu0 %v3405
        %v3968 = vpop.f32.mrf.mxu0
        %v3969 = vadd.f32 0.0, %v3968
        %v3970 = vpop.f32.mrf.mxu0
        %v3971 = vadd.f32 0.0, %v3970
        %3972 = vmatprep.mubr.f32.mxu0 0.0
        %3973 = vmatmul.mubr.f32.gmra.mxu0 %v3408
        %v3974 = vpop.f32.mrf.mxu0
        %v3975 = vadd.f32 0.0, %v3974
        %v3976 = vpop.f32.mrf.mxu0
        %v3977 = vadd.f32 0.0, %v3976
        %3978 = vmatprep.mubr.f32.mxu0 0.0
        %3979 = vmatmul.mubr.f32.gmra.mxu0 %v3411
        %v3980 = vpop.f32.mrf.mxu0
        %v3981 = vadd.f32 0.0, %v3980
        %v3982 = vpop.f32.mrf.mxu0
        %v3983 = vadd.f32 0.0, %v3982
        %3984 = vdwg.mxu0
        %v3985 = vmul.f32 %v3504, %v466
        %v3986 = vmul.f32 %v3506, %v468
        %v3987 = vmul.f32 %v3641, %v603
        %v3988 = vmul.f32 %v3643, %v605
        %v3989 = vmul.f32 %v3778, %v740
        %v3990 = vmul.f32 %v3780, %v742
        %v3991 = vmul.f32 %v3915, %v877
        %v3992 = vmul.f32 %v3917, %v879
        %v3993 = vmul.f32 %v3510, %v472
        %v3994 = vmul.f32 %v3512, %v474
        %v3995 = vmul.f32 %v3647, %v609
        %v3996 = vmul.f32 %v3649, %v611
        %v3997 = vmul.f32 %v3784, %v746
        %v3998 = vmul.f32 %v3786, %v748
        %v3999 = vmul.f32 %v3921, %v883
        %v4000 = vmul.f32 %v3923, %v885
        %v4001 = vmul.f32 %v3516, %v478
        %v4002 = vmul.f32 %v3518, %v480
        %v4003 = vmul.f32 %v3653, %v615
        %v4004 = vmul.f32 %v3655, %v617
        %v4005 = vmul.f32 %v3790, %v752
        %v4006 = vmul.f32 %v3792, %v754
        %v4007 = vmul.f32 %v3927, %v889
        %v4008 = vmul.f32 %v3929, %v891
        %v4009 = vmul.f32 %v3522, %v484
        %v4010 = vmul.f32 %v3524, %v486
        %v4011 = vmul.f32 %v3659, %v621
        %v4012 = vmul.f32 %v3661, %v623
        %v4013 = vmul.f32 %v3796, %v758
        %v4014 = vmul.f32 %v3798, %v760
        %v4015 = vmul.f32 %v3933, %v895
        %v4016 = vmul.f32 %v3935, %v897
        %v4017 = vmul.f32 %v3528, %v490
        %v4018 = vmul.f32 %v3530, %v492
        %v4019 = vmul.f32 %v3665, %v627
        %v4020 = vmul.f32 %v3667, %v629
        %v4021 = vmul.f32 %v3802, %v764
        %v4022 = vmul.f32 %v3804, %v766
        %v4023 = vmul.f32 %v3939, %v901
        %v4024 = vmul.f32 %v3941, %v903
        %v4025 = vmul.f32 %v3534, %v496
        %v4026 = vmul.f32 %v3536, %v498
        %v4027 = vmul.f32 %v3671, %v633
        %v4028 = vmul.f32 %v3673, %v635
        %v4029 = vmul.f32 %v3808, %v770
        %v4030 = vmul.f32 %v3810, %v772
        %v4031 = vmul.f32 %v3945, %v907
        %v4032 = vmul.f32 %v3947, %v909
        %v4033 = vmul.f32 %v3540, %v502
        %v4034 = vmul.f32 %v3542, %v504
        %v4035 = vmul.f32 %v3677, %v639
        %v4036 = vmul.f32 %v3679, %v641
        %v4037 = vmul.f32 %v3814, %v776
        %v4038 = vmul.f32 %v3816, %v778
        %v4039 = vmul.f32 %v3951, %v913
        %v4040 = vmul.f32 %v3953, %v915
        %v4041 = vmul.f32 %v3546, %v508
        %v4042 = vmul.f32 %v3548, %v510
        %v4043 = vmul.f32 %v3683, %v645
        %v4044 = vmul.f32 %v3685, %v647
        %v4045 = vmul.f32 %v3820, %v782
        %v4046 = vmul.f32 %v3822, %v784
        %v4047 = vmul.f32 %v3957, %v919
        %v4048 = vmul.f32 %v3959, %v921
        %v4049 = vmul.f32 %v3552, %v514
        %v4050 = vmul.f32 %v3554, %v516
        %v4051 = vmul.f32 %v3689, %v651
        %v4052 = vmul.f32 %v3691, %v653
        %v4053 = vmul.f32 %v3826, %v788
        %v4054 = vmul.f32 %v3828, %v790
        %v4055 = vmul.f32 %v3963, %v925
        %v4056 = vmul.f32 %v3965, %v927
        %v4057 = vmul.f32 %v3558, %v520
        %v4058 = vmul.f32 %v3560, %v522
        %v4059 = vmul.f32 %v3695, %v657
        %v4060 = vmul.f32 %v3697, %v659
        %v4061 = vmul.f32 %v3832, %v794
        %v4062 = vmul.f32 %v3834, %v796
        %v4063 = vmul.f32 %v3969, %v931
        %v4064 = vmul.f32 %v3971, %v933
        %v4065 = vmul.f32 %v3564, %v526
        %v4066 = vmul.f32 %v3566, %v528
        %v4067 = vmul.f32 %v3701, %v663
        %v4068 = vmul.f32 %v3703, %v665
        %v4069 = vmul.f32 %v3838, %v800
        %v4070 = vmul.f32 %v3840, %v802
        %v4071 = vmul.f32 %v3975, %v937
        %v4072 = vmul.f32 %v3977, %v939
        %v4073 = vmul.f32 %v3570, %v532
        %v4074 = vmul.f32 %v3572, %v534
        %v4075 = vmul.f32 %v3707, %v669
        %v4076 = vmul.f32 %v3709, %v671
        %v4077 = vmul.f32 %v3844, %v806
        %v4078 = vmul.f32 %v3846, %v808
        %v4079 = vmul.f32 %v3981, %v943
        %v4080 = vmul.f32 %v3983, %v945
        %4081 = vmatprep.subr.mxu0 0.0
        %4082 = vmatpush1.msra.mxu0 0.0
        %4083 = vmatprep.subr.mxu0 0.0
        %4084 = vmatpush1.msra.mxu0 0.0
        %4085 = vmatprep.subr.mxu0 0.0
        %4086 = vmatpush1.msra.mxu0 0.0
        %4087 = vmatprep.subr.mxu0 0.0
        %4088 = vmatpush1.msra.mxu0 0.0
        %4089 = vmatprep.subr.mxu0 %v4074
        %4090 = vmatpush1.msra.mxu0 %v4073
        %4091 = vmatprep.subr.mxu0 %v4066
        %4092 = vmatpush1.msra.mxu0 %v4065
        %4093 = vmatprep.subr.mxu0 %v4058
        %4094 = vmatpush1.msra.mxu0 %v4057
        %4095 = vmatprep.subr.mxu0 %v4050
        %4096 = vmatpush1.msra.mxu0 %v4049
        %4097 = vmatprep.subr.mxu0 %v4042
        %4098 = vmatpush1.msra.mxu0 %v4041
        %4099 = vmatprep.subr.mxu0 %v4034
        %4100 = vmatpush1.msra.mxu0 %v4033
        %4101 = vmatprep.subr.mxu0 %v4026
        %4102 = vmatpush1.msra.mxu0 %v4025
        %4103 = vmatprep.subr.mxu0 %v4018
        %4104 = vmatpush1.msra.mxu0 %v4017
        %4105 = vmatprep.subr.mxu0 %v4010
        %4106 = vmatpush1.msra.mxu0 %v4009
        %4107 = vmatprep.subr.mxu0 %v4002
        %4108 = vmatpush1.msra.mxu0 %v4001
        %4109 = vmatprep.subr.mxu0 %v3994
        %4110 = vmatpush1.msra.mxu0 %v3993
        %4111 = vmatprep.subr.mxu0 %v3986
        %4112 = vmatpush1.msra.mxu0 %v3985
        %4113 = vmatprep.subr.mxu0 0.0
        %4114 = vmatpush2.msra.mxu0 0.0
        %4115 = vmatprep.subr.mxu0 0.0
        %4116 = vmatpush2.msra.mxu0 0.0
        %4117 = vmatprep.subr.mxu0 0.0
        %4118 = vmatpush2.msra.mxu0 0.0
        %4119 = vmatprep.subr.mxu0 0.0
        %4120 = vmatpush2.msra.mxu0 0.0
        %4121 = vmatprep.subr.mxu0 0.0
        %4122 = vmatpush2.msra.mxu0 0.0
        %4123 = vmatprep.subr.mxu0 0.0
        %4124 = vmatpush2.msra.mxu0 0.0
        %4125 = vmatprep.subr.mxu0 0.0
        %4126 = vmatpush2.msra.mxu0 0.0
        %4127 = vmatprep.subr.mxu0 0.0
        %4128 = vmatpush2.msra.mxu0 0.0
        %4129 = vmatprep.subr.mxu0 0.0
        %4130 = vmatpush2.msra.mxu0 0.0
        %4131 = vmatprep.subr.mxu0 0.0
        %4132 = vmatpush2.msra.mxu0 0.0
        %4133 = vmatprep.subr.mxu0 0.0
        %4134 = vmatpush2.msra.mxu0 0.0
        %4135 = vmatprep.subr.mxu0 0.0
        %4136 = vmatpush2.msra.mxu0 0.0
        %4137 = vmatprep.subr.mxu0 0.0
        %4138 = vmatpush2.msra.mxu0 0.0
        %4139 = vmatprep.subr.mxu0 0.0
        %4140 = vmatpush2.msra.mxu0 0.0
        %4141 = vmatprep.subr.mxu0 0.0
        %4142 = vmatpush2.msra.mxu0 0.0
        %4143 = vmatprep.subr.mxu0 0.0
        %4144 = vmatpush2.msra.mxu0 0.0
        %4145 = vmatprep.mubr.f32.mxu0 0.0
        %4146 = vmatmul.mubr.f32.gmra.mxu0 %v971
        %v4147 = vpop.f32.mrf.mxu0
        %v4148 = vadd.f32 0.0, %v4147
        %v4149 = vpop.f32.mrf.mxu0
        %v4150 = vadd.f32 0.0, %v4149
        %4151 = vmatprep.mubr.f32.mxu0 0.0
        %4152 = vmatmul.mubr.f32.gmra.mxu0 %v974
        %v4153 = vpop.f32.mrf.mxu0
        %v4154 = vadd.f32 0.0, %v4153
        %v4155 = vpop.f32.mrf.mxu0
        %v4156 = vadd.f32 0.0, %v4155
        %4157 = vmatprep.mubr.f32.mxu0 0.0
        %4158 = vmatmul.mubr.f32.gmra.mxu0 %v977
        %v4159 = vpop.f32.mrf.mxu0
        %v4160 = vadd.f32 0.0, %v4159
        %v4161 = vpop.f32.mrf.mxu0
        %v4162 = vadd.f32 0.0, %v4161
        %4163 = vdwg.mxu0
        %4164 = vmatprep.subr.mxu0 0.0
        %4165 = vmatpush1.msra.mxu0 0.0
        %4166 = vmatprep.subr.mxu0 0.0
        %4167 = vmatpush1.msra.mxu0 0.0
        %4168 = vmatprep.subr.mxu0 0.0
        %4169 = vmatpush1.msra.mxu0 0.0
        %4170 = vmatprep.subr.mxu0 0.0
        %4171 = vmatpush1.msra.mxu0 0.0
        %4172 = vmatprep.subr.mxu0 %v4076
        %4173 = vmatpush1.msra.mxu0 %v4075
        %4174 = vmatprep.subr.mxu0 %v4068
        %4175 = vmatpush1.msra.mxu0 %v4067
        %4176 = vmatprep.subr.mxu0 %v4060
        %4177 = vmatpush1.msra.mxu0 %v4059
        %4178 = vmatprep.subr.mxu0 %v4052
        %4179 = vmatpush1.msra.mxu0 %v4051
        %4180 = vmatprep.subr.mxu0 %v4044
        %4181 = vmatpush1.msra.mxu0 %v4043
        %4182 = vmatprep.subr.mxu0 %v4036
        %4183 = vmatpush1.msra.mxu0 %v4035
        %4184 = vmatprep.subr.mxu0 %v4028
        %4185 = vmatpush1.msra.mxu0 %v4027
        %4186 = vmatprep.subr.mxu0 %v4020
        %4187 = vmatpush1.msra.mxu0 %v4019
        %4188 = vmatprep.subr.mxu0 %v4012
        %4189 = vmatpush1.msra.mxu0 %v4011
        %4190 = vmatprep.subr.mxu0 %v4004
        %4191 = vmatpush1.msra.mxu0 %v4003
        %4192 = vmatprep.subr.mxu0 %v3996
        %4193 = vmatpush1.msra.mxu0 %v3995
        %4194 = vmatprep.subr.mxu0 %v3988
        %4195 = vmatpush1.msra.mxu0 %v3987
        %4196 = vmatprep.subr.mxu0 0.0
        %4197 = vmatpush2.msra.mxu0 0.0
        %4198 = vmatprep.subr.mxu0 0.0
        %4199 = vmatpush2.msra.mxu0 0.0
        %4200 = vmatprep.subr.mxu0 0.0
        %4201 = vmatpush2.msra.mxu0 0.0
        %4202 = vmatprep.subr.mxu0 0.0
        %4203 = vmatpush2.msra.mxu0 0.0
        %4204 = vmatprep.subr.mxu0 0.0
        %4205 = vmatpush2.msra.mxu0 0.0
        %4206 = vmatprep.subr.mxu0 0.0
        %4207 = vmatpush2.msra.mxu0 0.0
        %4208 = vmatprep.subr.mxu0 0.0
        %4209 = vmatpush2.msra.mxu0 0.0
        %4210 = vmatprep.subr.mxu0 0.0
        %4211 = vmatpush2.msra.mxu0 0.0
        %4212 = vmatprep.subr.mxu0 0.0
        %4213 = vmatpush2.msra.mxu0 0.0
        %4214 = vmatprep.subr.mxu0 0.0
        %4215 = vmatpush2.msra.mxu0 0.0
        %4216 = vmatprep.subr.mxu0 0.0
        %4217 = vmatpush2.msra.mxu0 0.0
        %4218 = vmatprep.subr.mxu0 0.0
        %4219 = vmatpush2.msra.mxu0 0.0
        %4220 = vmatprep.subr.mxu0 0.0
        %4221 = vmatpush2.msra.mxu0 0.0
        %4222 = vmatprep.subr.mxu0 0.0
        %4223 = vmatpush2.msra.mxu0 0.0
        %4224 = vmatprep.subr.mxu0 0.0
        %4225 = vmatpush2.msra.mxu0 0.0
        %4226 = vmatprep.subr.mxu0 0.0
        %4227 = vmatpush2.msra.mxu0 0.0
        %4228 = vmatprep.mubr.f32.mxu0 0.0
        %4229 = vmatmul.mubr.f32.gmra.mxu0 %v971
        %v4230 = vpop.f32.mrf.mxu0
        %v4231 = vadd.f32 0.0, %v4230
        %v4232 = vpop.f32.mrf.mxu0
        %v4233 = vadd.f32 0.0, %v4232
        %4234 = vmatprep.mubr.f32.mxu0 0.0
        %4235 = vmatmul.mubr.f32.gmra.mxu0 %v974
        %v4236 = vpop.f32.mrf.mxu0
        %v4237 = vadd.f32 0.0, %v4236
        %v4238 = vpop.f32.mrf.mxu0
        %v4239 = vadd.f32 0.0, %v4238
        %4240 = vmatprep.mubr.f32.mxu0 0.0
        %4241 = vmatmul.mubr.f32.gmra.mxu0 %v977
        %v4242 = vpop.f32.mrf.mxu0
        %v4243 = vadd.f32 0.0, %v4242
        %v4244 = vpop.f32.mrf.mxu0
        %v4245 = vadd.f32 0.0, %v4244
        %4246 = vdwg.mxu0
        %4247 = vmatprep.subr.mxu0 0.0
        %4248 = vmatpush1.msra.mxu0 0.0
        %4249 = vmatprep.subr.mxu0 0.0
        %4250 = vmatpush1.msra.mxu0 0.0
        %4251 = vmatprep.subr.mxu0 0.0
        %4252 = vmatpush1.msra.mxu0 0.0
        %4253 = vmatprep.subr.mxu0 0.0
        %4254 = vmatpush1.msra.mxu0 0.0
        %4255 = vmatprep.subr.mxu0 %v4078
        %4256 = vmatpush1.msra.mxu0 %v4077
        %4257 = vmatprep.subr.mxu0 %v4070
        %4258 = vmatpush1.msra.mxu0 %v4069
        %4259 = vmatprep.subr.mxu0 %v4062
        %4260 = vmatpush1.msra.mxu0 %v4061
        %4261 = vmatprep.subr.mxu0 %v4054
        %4262 = vmatpush1.msra.mxu0 %v4053
        %4263 = vmatprep.subr.mxu0 %v4046
        %4264 = vmatpush1.msra.mxu0 %v4045
        %4265 = vmatprep.subr.mxu0 %v4038
        %4266 = vmatpush1.msra.mxu0 %v4037
        %4267 = vmatprep.subr.mxu0 %v4030
        %4268 = vmatpush1.msra.mxu0 %v4029
        %4269 = vmatprep.subr.mxu0 %v4022
        %4270 = vmatpush1.msra.mxu0 %v4021
        %4271 = vmatprep.subr.mxu0 %v4014
        %4272 = vmatpush1.msra.mxu0 %v4013
        %4273 = vmatprep.subr.mxu0 %v4006
        %4274 = vmatpush1.msra.mxu0 %v4005
        %4275 = vmatprep.subr.mxu0 %v3998
        %4276 = vmatpush1.msra.mxu0 %v3997
        %4277 = vmatprep.subr.mxu0 %v3990
        %4278 = vmatpush1.msra.mxu0 %v3989
        %4279 = vmatprep.subr.mxu0 0.0
        %4280 = vmatpush2.msra.mxu0 0.0
        %4281 = vmatprep.subr.mxu0 0.0
        %4282 = vmatpush2.msra.mxu0 0.0
        %4283 = vmatprep.subr.mxu0 0.0
        %4284 = vmatpush2.msra.mxu0 0.0
        %4285 = vmatprep.subr.mxu0 0.0
        %4286 = vmatpush2.msra.mxu0 0.0
        %4287 = vmatprep.subr.mxu0 0.0
        %4288 = vmatpush2.msra.mxu0 0.0
        %4289 = vmatprep.subr.mxu0 0.0
        %4290 = vmatpush2.msra.mxu0 0.0
        %4291 = vmatprep.subr.mxu0 0.0
        %4292 = vmatpush2.msra.mxu0 0.0
        %4293 = vmatprep.subr.mxu0 0.0
        %4294 = vmatpush2.msra.mxu0 0.0
        %4295 = vmatprep.subr.mxu0 0.0
        %4296 = vmatpush2.msra.mxu0 0.0
        %4297 = vmatprep.subr.mxu0 0.0
        %4298 = vmatpush2.msra.mxu0 0.0
        %4299 = vmatprep.subr.mxu0 0.0
        %4300 = vmatpush2.msra.mxu0 0.0
        %4301 = vmatprep.subr.mxu0 0.0
        %4302 = vmatpush2.msra.mxu0 0.0
        %4303 = vmatprep.subr.mxu0 0.0
        %4304 = vmatpush2.msra.mxu0 0.0
        %4305 = vmatprep.subr.mxu0 0.0
        %4306 = vmatpush2.msra.mxu0 0.0
        %4307 = vmatprep.subr.mxu0 0.0
        %4308 = vmatpush2.msra.mxu0 0.0
        %4309 = vmatprep.subr.mxu0 0.0
        %4310 = vmatpush2.msra.mxu0 0.0
        %4311 = vmatprep.mubr.f32.mxu0 0.0
        %4312 = vmatmul.mubr.f32.gmra.mxu0 %v971
        %v4313 = vpop.f32.mrf.mxu0
        %v4314 = vadd.f32 0.0, %v4313
        %v4315 = vpop.f32.mrf.mxu0
        %v4316 = vadd.f32 0.0, %v4315
        %4317 = vmatprep.mubr.f32.mxu0 0.0
        %4318 = vmatmul.mubr.f32.gmra.mxu0 %v974
        %v4319 = vpop.f32.mrf.mxu0
        %v4320 = vadd.f32 0.0, %v4319
        %v4321 = vpop.f32.mrf.mxu0
        %v4322 = vadd.f32 0.0, %v4321
        %4323 = vmatprep.mubr.f32.mxu0 0.0
        %4324 = vmatmul.mubr.f32.gmra.mxu0 %v977
        %v4325 = vpop.f32.mrf.mxu0
        %v4326 = vadd.f32 0.0, %v4325
        %v4327 = vpop.f32.mrf.mxu0
        %v4328 = vadd.f32 0.0, %v4327
        %4329 = vdwg.mxu0
        %4330 = vmatprep.subr.mxu0 0.0
        %4331 = vmatpush1.msra.mxu0 0.0
        %4332 = vmatprep.subr.mxu0 0.0
        %4333 = vmatpush1.msra.mxu0 0.0
        %4334 = vmatprep.subr.mxu0 0.0
        %4335 = vmatpush1.msra.mxu0 0.0
        %4336 = vmatprep.subr.mxu0 0.0
        %4337 = vmatpush1.msra.mxu0 0.0
        %4338 = vmatprep.subr.mxu0 %v4080
        %4339 = vmatpush1.msra.mxu0 %v4079
        %4340 = vmatprep.subr.mxu0 %v4072
        %4341 = vmatpush1.msra.mxu0 %v4071
        %4342 = vmatprep.subr.mxu0 %v4064
        %4343 = vmatpush1.msra.mxu0 %v4063
        %4344 = vmatprep.subr.mxu0 %v4056
        %4345 = vmatpush1.msra.mxu0 %v4055
        %4346 = vmatprep.subr.mxu0 %v4048
        %4347 = vmatpush1.msra.mxu0 %v4047
        %4348 = vmatprep.subr.mxu0 %v4040
        %4349 = vmatpush1.msra.mxu0 %v4039
        %4350 = vmatprep.subr.mxu0 %v4032
        %4351 = vmatpush1.msra.mxu0 %v4031
        %4352 = vmatprep.subr.mxu0 %v4024
        %4353 = vmatpush1.msra.mxu0 %v4023
        %4354 = vmatprep.subr.mxu0 %v4016
        %4355 = vmatpush1.msra.mxu0 %v4015
        %4356 = vmatprep.subr.mxu0 %v4008
        %4357 = vmatpush1.msra.mxu0 %v4007
        %4358 = vmatprep.subr.mxu0 %v4000
        %4359 = vmatpush1.msra.mxu0 %v3999
        %4360 = vmatprep.subr.mxu0 %v3992
        %4361 = vmatpush1.msra.mxu0 %v3991
        %4362 = vmatprep.subr.mxu0 0.0
        %4363 = vmatpush2.msra.mxu0 0.0
        %4364 = vmatprep.subr.mxu0 0.0
        %4365 = vmatpush2.msra.mxu0 0.0
        %4366 = vmatprep.subr.mxu0 0.0
        %4367 = vmatpush2.msra.mxu0 0.0
        %4368 = vmatprep.subr.mxu0 0.0
        %4369 = vmatpush2.msra.mxu0 0.0
        %4370 = vmatprep.subr.mxu0 0.0
        %4371 = vmatpush2.msra.mxu0 0.0
        %4372 = vmatprep.subr.mxu0 0.0
        %4373 = vmatpush2.msra.mxu0 0.0
        %4374 = vmatprep.subr.mxu0 0.0
        %4375 = vmatpush2.msra.mxu0 0.0
        %4376 = vmatprep.subr.mxu0 0.0
        %4377 = vmatpush2.msra.mxu0 0.0
        %4378 = vmatprep.subr.mxu0 0.0
        %4379 = vmatpush2.msra.mxu0 0.0
        %4380 = vmatprep.subr.mxu0 0.0
        %4381 = vmatpush2.msra.mxu0 0.0
        %4382 = vmatprep.subr.mxu0 0.0
        %4383 = vmatpush2.msra.mxu0 0.0
        %4384 = vmatprep.subr.mxu0 0.0
        %4385 = vmatpush2.msra.mxu0 0.0
        %4386 = vmatprep.subr.mxu0 0.0
        %4387 = vmatpush2.msra.mxu0 0.0
        %4388 = vmatprep.subr.mxu0 0.0
        %4389 = vmatpush2.msra.mxu0 0.0
        %4390 = vmatprep.subr.mxu0 0.0
        %4391 = vmatpush2.msra.mxu0 0.0
        %4392 = vmatprep.subr.mxu0 0.0
        %4393 = vmatpush2.msra.mxu0 0.0
        %4394 = vmatprep.mubr.f32.mxu0 0.0
        %4395 = vmatmul.mubr.f32.gmra.mxu0 %v971
        %v4396 = vpop.f32.mrf.mxu0
        %v4397 = vadd.f32 0.0, %v4396
        %v4398 = vpop.f32.mrf.mxu0
        %v4399 = vadd.f32 0.0, %v4398
        %4400 = vmatprep.mubr.f32.mxu0 0.0
        %4401 = vmatmul.mubr.f32.gmra.mxu0 %v974
        %v4402 = vpop.f32.mrf.mxu0
        %v4403 = vadd.f32 0.0, %v4402
        %v4404 = vpop.f32.mrf.mxu0
        %v4405 = vadd.f32 0.0, %v4404
        %4406 = vmatprep.mubr.f32.mxu0 0.0
        %4407 = vmatmul.mubr.f32.gmra.mxu0 %v977
        %v4408 = vpop.f32.mrf.mxu0
        %v4409 = vadd.f32 0.0, %v4408
        %v4410 = vpop.f32.mrf.mxu0
        %v4411 = vadd.f32 0.0, %v4410
        %4412 = vdwg.mxu0
        %v4413 = vmul.f32 %v4148, %v4148
        %v4414 = vmul.f32 %v4150, %v4150
        %v4415 = vmul.f32 %v4231, %v4231
        %v4416 = vmul.f32 %v4233, %v4233
        %v4417 = vmul.f32 %v4314, %v4314
        %v4418 = vmul.f32 %v4316, %v4316
        %v4419 = vmul.f32 %v4397, %v4397
        %v4420 = vmul.f32 %v4399, %v4399
        %v4421 = vmul.f32 %v4154, %v4154
        %v4422 = vmul.f32 %v4156, %v4156
        %v4423 = vmul.f32 %v4237, %v4237
        %v4424 = vmul.f32 %v4239, %v4239
        %v4425 = vmul.f32 %v4320, %v4320
        %v4426 = vmul.f32 %v4322, %v4322
        %v4427 = vmul.f32 %v4403, %v4403
        %v4428 = vmul.f32 %v4405, %v4405
        %v4429 = vmul.f32 %v4160, %v4160
        %v4430 = vmul.f32 %v4162, %v4162
        %v4431 = vmul.f32 %v4243, %v4243
        %v4432 = vmul.f32 %v4245, %v4245
        %v4433 = vmul.f32 %v4326, %v4326
        %v4434 = vmul.f32 %v4328, %v4328
        %v4435 = vmul.f32 %v4409, %v4409
        %v4436 = vmul.f32 %v4411, %v4411
        %4437 = vmatprep.subr.mxu0 0.0
        %4438 = vmatpush1.msra.mxu0 0.0
        %4439 = vmatprep.subr.mxu0 0.0
        %4440 = vmatpush1.msra.mxu0 0.0
        %4441 = vmatprep.subr.mxu0 0.0
        %4442 = vmatpush1.msra.mxu0 0.0
        %4443 = vmatprep.subr.mxu0 0.0
        %4444 = vmatpush1.msra.mxu0 0.0
        %4445 = vmatprep.subr.mxu0 0.0
        %4446 = vmatpush1.msra.mxu0 0.0
        %4447 = vmatprep.subr.mxu0 0.0
        %4448 = vmatpush1.msra.mxu0 0.0
        %4449 = vmatprep.subr.mxu0 0.0
        %4450 = vmatpush1.msra.mxu0 0.0
        %4451 = vmatprep.subr.mxu0 0.0
        %4452 = vmatpush1.msra.mxu0 0.0
        %4453 = vmatprep.subr.mxu0 0.0
        %4454 = vmatpush1.msra.mxu0 0.0
        %4455 = vmatprep.subr.mxu0 0.0
        %4456 = vmatpush1.msra.mxu0 0.0
        %4457 = vmatprep.subr.mxu0 0.0
        %4458 = vmatpush1.msra.mxu0 0.0
        %4459 = vmatprep.subr.mxu0 0.0
        %4460 = vmatpush1.msra.mxu0 0.0
        %4461 = vmatprep.subr.mxu0 0.0
        %4462 = vmatpush1.msra.mxu0 0.0
        %4463 = vmatprep.subr.mxu0 %v4430
        %4464 = vmatpush1.msra.mxu0 %v4429
        %4465 = vmatprep.subr.mxu0 %v4422
        %4466 = vmatpush1.msra.mxu0 %v4421
        %4467 = vmatprep.subr.mxu0 %v4414
        %4468 = vmatpush1.msra.mxu0 %v4413
        %4469 = vmatprep.subr.mxu0 0.0
        %4470 = vmatpush2.msra.mxu0 0.0
        %4471 = vmatprep.subr.mxu0 0.0
        %4472 = vmatpush2.msra.mxu0 0.0
        %4473 = vmatprep.subr.mxu0 0.0
        %4474 = vmatpush2.msra.mxu0 0.0
        %4475 = vmatprep.subr.mxu0 0.0
        %4476 = vmatpush2.msra.mxu0 0.0
        %4477 = vmatprep.subr.mxu0 0.0
        %4478 = vmatpush2.msra.mxu0 0.0
        %4479 = vmatprep.subr.mxu0 0.0
        %4480 = vmatpush2.msra.mxu0 0.0
        %4481 = vmatprep.subr.mxu0 0.0
        %4482 = vmatpush2.msra.mxu0 0.0
        %4483 = vmatprep.subr.mxu0 0.0
        %4484 = vmatpush2.msra.mxu0 0.0
        %4485 = vmatprep.subr.mxu0 0.0
        %4486 = vmatpush2.msra.mxu0 0.0
        %4487 = vmatprep.subr.mxu0 0.0
        %4488 = vmatpush2.msra.mxu0 0.0
        %4489 = vmatprep.subr.mxu0 0.0
        %4490 = vmatpush2.msra.mxu0 0.0
        %4491 = vmatprep.subr.mxu0 0.0
        %4492 = vmatpush2.msra.mxu0 0.0
        %4493 = vmatprep.subr.mxu0 0.0
        %4494 = vmatpush2.msra.mxu0 0.0
        %4495 = vmatprep.subr.mxu0 0.0
        %4496 = vmatpush2.msra.mxu0 0.0
        %4497 = vmatprep.subr.mxu0 0.0
        %4498 = vmatpush2.msra.mxu0 0.0
        %4499 = vmatprep.subr.mxu0 0.0
        %4500 = vmatpush2.msra.mxu0 0.0
        %4501 = vmatprep.mubr.f32.mxu0 0.0
        %4502 = vmatmul.mubr.f32.gmra.mxu0 %v1361
        %v4503 = vpop.f32.mrf.mxu0
        %v4504 = vadd.f32 0.0, %v4503
        %v4505 = vpop.f32.mrf.mxu0
        %v4506 = vadd.f32 0.0, %v4505
        %4507 = vmatprep.mubr.f32.mxu0 0.0
        %4508 = vmatmul.mubr.f32.gmra.mxu0 %v1364
        %v4509 = vpop.f32.mrf.mxu0
        %v4510 = vadd.f32 0.0, %v4509
        %v4511 = vpop.f32.mrf.mxu0
        %v4512 = vadd.f32 0.0, %v4511
        %4513 = vmatprep.mubr.f32.mxu0 0.0
        %4514 = vmatmul.mubr.f32.gmra.mxu0 %v1367
        %v4515 = vpop.f32.mrf.mxu0
        %v4516 = vadd.f32 0.0, %v4515
        %v4517 = vpop.f32.mrf.mxu0
        %v4518 = vadd.f32 0.0, %v4517
        %4519 = vdwg.mxu0
        %4520 = vmatprep.subr.mxu0 0.0
        %4521 = vmatpush1.msra.mxu0 0.0
        %4522 = vmatprep.subr.mxu0 0.0
        %4523 = vmatpush1.msra.mxu0 0.0
        %4524 = vmatprep.subr.mxu0 0.0
        %4525 = vmatpush1.msra.mxu0 0.0
        %4526 = vmatprep.subr.mxu0 0.0
        %4527 = vmatpush1.msra.mxu0 0.0
        %4528 = vmatprep.subr.mxu0 0.0
        %4529 = vmatpush1.msra.mxu0 0.0
        %4530 = vmatprep.subr.mxu0 0.0
        %4531 = vmatpush1.msra.mxu0 0.0
        %4532 = vmatprep.subr.mxu0 0.0
        %4533 = vmatpush1.msra.mxu0 0.0
        %4534 = vmatprep.subr.mxu0 0.0
        %4535 = vmatpush1.msra.mxu0 0.0
        %4536 = vmatprep.subr.mxu0 0.0
        %4537 = vmatpush1.msra.mxu0 0.0
        %4538 = vmatprep.subr.mxu0 0.0
        %4539 = vmatpush1.msra.mxu0 0.0
        %4540 = vmatprep.subr.mxu0 0.0
        %4541 = vmatpush1.msra.mxu0 0.0
        %4542 = vmatprep.subr.mxu0 0.0
        %4543 = vmatpush1.msra.mxu0 0.0
        %4544 = vmatprep.subr.mxu0 0.0
        %4545 = vmatpush1.msra.mxu0 0.0
        %4546 = vmatprep.subr.mxu0 %v4432
        %4547 = vmatpush1.msra.mxu0 %v4431
        %4548 = vmatprep.subr.mxu0 %v4424
        %4549 = vmatpush1.msra.mxu0 %v4423
        %4550 = vmatprep.subr.mxu0 %v4416
        %4551 = vmatpush1.msra.mxu0 %v4415
        %4552 = vmatprep.subr.mxu0 0.0
        %4553 = vmatpush2.msra.mxu0 0.0
        %4554 = vmatprep.subr.mxu0 0.0
        %4555 = vmatpush2.msra.mxu0 0.0
        %4556 = vmatprep.subr.mxu0 0.0
        %4557 = vmatpush2.msra.mxu0 0.0
        %4558 = vmatprep.subr.mxu0 0.0
        %4559 = vmatpush2.msra.mxu0 0.0
        %4560 = vmatprep.subr.mxu0 0.0
        %4561 = vmatpush2.msra.mxu0 0.0
        %4562 = vmatprep.subr.mxu0 0.0
        %4563 = vmatpush2.msra.mxu0 0.0
        %4564 = vmatprep.subr.mxu0 0.0
        %4565 = vmatpush2.msra.mxu0 0.0
        %4566 = vmatprep.subr.mxu0 0.0
        %4567 = vmatpush2.msra.mxu0 0.0
        %4568 = vmatprep.subr.mxu0 0.0
        %4569 = vmatpush2.msra.mxu0 0.0
        %4570 = vmatprep.subr.mxu0 0.0
        %4571 = vmatpush2.msra.mxu0 0.0
        %4572 = vmatprep.subr.mxu0 0.0
        %4573 = vmatpush2.msra.mxu0 0.0
        %4574 = vmatprep.subr.mxu0 0.0
        %4575 = vmatpush2.msra.mxu0 0.0
        %4576 = vmatprep.subr.mxu0 0.0
        %4577 = vmatpush2.msra.mxu0 0.0
        %4578 = vmatprep.subr.mxu0 0.0
        %4579 = vmatpush2.msra.mxu0 0.0
        %4580 = vmatprep.subr.mxu0 0.0
        %4581 = vmatpush2.msra.mxu0 0.0
        %4582 = vmatprep.subr.mxu0 0.0
        %4583 = vmatpush2.msra.mxu0 0.0
        %4584 = vmatprep.mubr.f32.mxu0 0.0
        %4585 = vmatmul.mubr.f32.gmra.mxu0 %v1361
        %v4586 = vpop.f32.mrf.mxu0
        %v4587 = vadd.f32 0.0, %v4586
        %v4588 = vpop.f32.mrf.mxu0
        %v4589 = vadd.f32 0.0, %v4588
        %4590 = vmatprep.mubr.f32.mxu0 0.0
        %4591 = vmatmul.mubr.f32.gmra.mxu0 %v1364
        %v4592 = vpop.f32.mrf.mxu0
        %v4593 = vadd.f32 0.0, %v4592
        %v4594 = vpop.f32.mrf.mxu0
        %v4595 = vadd.f32 0.0, %v4594
        %4596 = vmatprep.mubr.f32.mxu0 0.0
        %4597 = vmatmul.mubr.f32.gmra.mxu0 %v1367
        %v4598 = vpop.f32.mrf.mxu0
        %v4599 = vadd.f32 0.0, %v4598
        %v4600 = vpop.f32.mrf.mxu0
        %v4601 = vadd.f32 0.0, %v4600
        %4602 = vdwg.mxu0
        %4603 = vmatprep.subr.mxu0 0.0
        %4604 = vmatpush1.msra.mxu0 0.0
        %4605 = vmatprep.subr.mxu0 0.0
        %4606 = vmatpush1.msra.mxu0 0.0
        %4607 = vmatprep.subr.mxu0 0.0
        %4608 = vmatpush1.msra.mxu0 0.0
        %4609 = vmatprep.subr.mxu0 0.0
        %4610 = vmatpush1.msra.mxu0 0.0
        %4611 = vmatprep.subr.mxu0 0.0
        %4612 = vmatpush1.msra.mxu0 0.0
        %4613 = vmatprep.subr.mxu0 0.0
        %4614 = vmatpush1.msra.mxu0 0.0
        %4615 = vmatprep.subr.mxu0 0.0
        %4616 = vmatpush1.msra.mxu0 0.0
        %4617 = vmatprep.subr.mxu0 0.0
        %4618 = vmatpush1.msra.mxu0 0.0
        %4619 = vmatprep.subr.mxu0 0.0
        %4620 = vmatpush1.msra.mxu0 0.0
        %4621 = vmatprep.subr.mxu0 0.0
        %4622 = vmatpush1.msra.mxu0 0.0
        %4623 = vmatprep.subr.mxu0 0.0
        %4624 = vmatpush1.msra.mxu0 0.0
        %4625 = vmatprep.subr.mxu0 0.0
        %4626 = vmatpush1.msra.mxu0 0.0
        %4627 = vmatprep.subr.mxu0 0.0
        %4628 = vmatpush1.msra.mxu0 0.0
        %4629 = vmatprep.subr.mxu0 %v4434
        %4630 = vmatpush1.msra.mxu0 %v4433
        %4631 = vmatprep.subr.mxu0 %v4426
        %4632 = vmatpush1.msra.mxu0 %v4425
        %4633 = vmatprep.subr.mxu0 %v4418
        %4634 = vmatpush1.msra.mxu0 %v4417
        %4635 = vmatprep.subr.mxu0 0.0
        %4636 = vmatpush2.msra.mxu0 0.0
        %4637 = vmatprep.subr.mxu0 0.0
        %4638 = vmatpush2.msra.mxu0 0.0
        %4639 = vmatprep.subr.mxu0 0.0
        %4640 = vmatpush2.msra.mxu0 0.0
        %4641 = vmatprep.subr.mxu0 0.0
        %4642 = vmatpush2.msra.mxu0 0.0
        %4643 = vmatprep.subr.mxu0 0.0
        %4644 = vmatpush2.msra.mxu0 0.0
        %4645 = vmatprep.subr.mxu0 0.0
        %4646 = vmatpush2.msra.mxu0 0.0
        %4647 = vmatprep.subr.mxu0 0.0
        %4648 = vmatpush2.msra.mxu0 0.0
        %4649 = vmatprep.subr.mxu0 0.0
        %4650 = vmatpush2.msra.mxu0 0.0
        %4651 = vmatprep.subr.mxu0 0.0
        %4652 = vmatpush2.msra.mxu0 0.0
        %4653 = vmatprep.subr.mxu0 0.0
        %4654 = vmatpush2.msra.mxu0 0.0
        %4655 = vmatprep.subr.mxu0 0.0
        %4656 = vmatpush2.msra.mxu0 0.0
        %4657 = vmatprep.subr.mxu0 0.0
        %4658 = vmatpush2.msra.mxu0 0.0
        %4659 = vmatprep.subr.mxu0 0.0
        %4660 = vmatpush2.msra.mxu0 0.0
        %4661 = vmatprep.subr.mxu0 0.0
        %4662 = vmatpush2.msra.mxu0 0.0
        %4663 = vmatprep.subr.mxu0 0.0
        %4664 = vmatpush2.msra.mxu0 0.0
        %4665 = vmatprep.subr.mxu0 0.0
        %4666 = vmatpush2.msra.mxu0 0.0
        %4667 = vmatprep.mubr.f32.mxu0 0.0
        %4668 = vmatmul.mubr.f32.gmra.mxu0 %v1361
        %v4669 = vpop.f32.mrf.mxu0
        %v4670 = vadd.f32 0.0, %v4669
        %v4671 = vpop.f32.mrf.mxu0
        %v4672 = vadd.f32 0.0, %v4671
        %4673 = vmatprep.mubr.f32.mxu0 0.0
        %4674 = vmatmul.mubr.f32.gmra.mxu0 %v1364
        %v4675 = vpop.f32.mrf.mxu0
        %v4676 = vadd.f32 0.0, %v4675
        %v4677 = vpop.f32.mrf.mxu0
        %v4678 = vadd.f32 0.0, %v4677
        %4679 = vmatprep.mubr.f32.mxu0 0.0
        %4680 = vmatmul.mubr.f32.gmra.mxu0 %v1367
        %v4681 = vpop.f32.mrf.mxu0
        %v4682 = vadd.f32 0.0, %v4681
        %v4683 = vpop.f32.mrf.mxu0
        %v4684 = vadd.f32 0.0, %v4683
        %4685 = vdwg.mxu0
        %4686 = vmatprep.subr.mxu0 0.0
        %4687 = vmatpush1.msra.mxu0 0.0
        %4688 = vmatprep.subr.mxu0 0.0
        %4689 = vmatpush1.msra.mxu0 0.0
        %4690 = vmatprep.subr.mxu0 0.0
        %4691 = vmatpush1.msra.mxu0 0.0
        %4692 = vmatprep.subr.mxu0 0.0
        %4693 = vmatpush1.msra.mxu0 0.0
        %4694 = vmatprep.subr.mxu0 0.0
        %4695 = vmatpush1.msra.mxu0 0.0
        %4696 = vmatprep.subr.mxu0 0.0
        %4697 = vmatpush1.msra.mxu0 0.0
        %4698 = vmatprep.subr.mxu0 0.0
        %4699 = vmatpush1.msra.mxu0 0.0
        %4700 = vmatprep.subr.mxu0 0.0
        %4701 = vmatpush1.msra.mxu0 0.0
        %4702 = vmatprep.subr.mxu0 0.0
        %4703 = vmatpush1.msra.mxu0 0.0
        %4704 = vmatprep.subr.mxu0 0.0
        %4705 = vmatpush1.msra.mxu0 0.0
        %4706 = vmatprep.subr.mxu0 0.0
        %4707 = vmatpush1.msra.mxu0 0.0
        %4708 = vmatprep.subr.mxu0 0.0
        %4709 = vmatpush1.msra.mxu0 0.0
        %4710 = vmatprep.subr.mxu0 0.0
        %4711 = vmatpush1.msra.mxu0 0.0
        %4712 = vmatprep.subr.mxu0 %v4436
        %4713 = vmatpush1.msra.mxu0 %v4435
        %4714 = vmatprep.subr.mxu0 %v4428
        %4715 = vmatpush1.msra.mxu0 %v4427
        %4716 = vmatprep.subr.mxu0 %v4420
        %4717 = vmatpush1.msra.mxu0 %v4419
        %4718 = vmatprep.subr.mxu0 0.0
        %4719 = vmatpush2.msra.mxu0 0.0
        %4720 = vmatprep.subr.mxu0 0.0
        %4721 = vmatpush2.msra.mxu0 0.0
        %4722 = vmatprep.subr.mxu0 0.0
        %4723 = vmatpush2.msra.mxu0 0.0
        %4724 = vmatprep.subr.mxu0 0.0
        %4725 = vmatpush2.msra.mxu0 0.0
        %4726 = vmatprep.subr.mxu0 0.0
        %4727 = vmatpush2.msra.mxu0 0.0
        %4728 = vmatprep.subr.mxu0 0.0
        %4729 = vmatpush2.msra.mxu0 0.0
        %4730 = vmatprep.subr.mxu0 0.0
        %4731 = vmatpush2.msra.mxu0 0.0
        %4732 = vmatprep.subr.mxu0 0.0
        %4733 = vmatpush2.msra.mxu0 0.0
        %4734 = vmatprep.subr.mxu0 0.0
        %4735 = vmatpush2.msra.mxu0 0.0
        %4736 = vmatprep.subr.mxu0 0.0
        %4737 = vmatpush2.msra.mxu0 0.0
        %4738 = vmatprep.subr.mxu0 0.0
        %4739 = vmatpush2.msra.mxu0 0.0
        %4740 = vmatprep.subr.mxu0 0.0
        %4741 = vmatpush2.msra.mxu0 0.0
        %4742 = vmatprep.subr.mxu0 0.0
        %4743 = vmatpush2.msra.mxu0 0.0
        %4744 = vmatprep.subr.mxu0 0.0
        %4745 = vmatpush2.msra.mxu0 0.0
        %4746 = vmatprep.subr.mxu0 0.0
        %4747 = vmatpush2.msra.mxu0 0.0
        %4748 = vmatprep.subr.mxu0 0.0
        %4749 = vmatpush2.msra.mxu0 0.0
        %4750 = vmatprep.mubr.f32.mxu0 0.0
        %4751 = vmatmul.mubr.f32.gmra.mxu0 %v1361
        %v4752 = vpop.f32.mrf.mxu0
        %v4753 = vadd.f32 0.0, %v4752
        %v4754 = vpop.f32.mrf.mxu0
        %v4755 = vadd.f32 0.0, %v4754
        %4756 = vmatprep.mubr.f32.mxu0 0.0
        %4757 = vmatmul.mubr.f32.gmra.mxu0 %v1364
        %v4758 = vpop.f32.mrf.mxu0
        %v4759 = vadd.f32 0.0, %v4758
        %v4760 = vpop.f32.mrf.mxu0
        %v4761 = vadd.f32 0.0, %v4760
        %4762 = vmatprep.mubr.f32.mxu0 0.0
        %4763 = vmatmul.mubr.f32.gmra.mxu0 %v1367
        %v4764 = vpop.f32.mrf.mxu0
        %v4765 = vadd.f32 0.0, %v4764
        %v4766 = vpop.f32.mrf.mxu0
        %v4767 = vadd.f32 0.0, %v4766
        %4768 = vdwg.mxu0
        %v4769 = vadd.f32 %v4504, 1.0
        %v4770 = vadd.f32 %v4506, 1.0
        %v4771 = vadd.f32 %v4587, 1.0
        %v4772 = vadd.f32 %v4589, 1.0
        %v4773 = vadd.f32 %v4670, 1.0
        %v4774 = vadd.f32 %v4672, 1.0
        %v4775 = vadd.f32 %v4753, 1.0
        %v4776 = vadd.f32 %v4755, 1.0
        %v4777 = vadd.f32 %v4510, 1.0
        %v4778 = vadd.f32 %v4512, 1.0
        %v4779 = vadd.f32 %v4593, 1.0
        %v4780 = vadd.f32 %v4595, 1.0
        %v4781 = vadd.f32 %v4676, 1.0
        %v4782 = vadd.f32 %v4678, 1.0
        %v4783 = vadd.f32 %v4759, 1.0
        %v4784 = vadd.f32 %v4761, 1.0
        %v4785 = vadd.f32 %v4516, 1.0
        %v4786 = vadd.f32 %v4518, 1.0
        %v4787 = vadd.f32 %v4599, 1.0
        %v4788 = vadd.f32 %v4601, 1.0
        %v4789 = vadd.f32 %v4682, 1.0
        %v4790 = vadd.f32 %v4684, 1.0
        %v4791 = vadd.f32 %v4765, 1.0
        %v4792 = vadd.f32 %v4767, 1.0
        %v4793 = vrcp.pop %v4769
        %v4794 = vmul.f32 %v4504, %v4793
        %v4795 = vrcp.pop %v4770
        %v4796 = vmul.f32 %v4506, %v4795
        %v4797 = vrcp.pop %v4771
        %v4798 = vmul.f32 %v4587, %v4797
        %v4799 = vrcp.pop %v4772
        %v4800 = vmul.f32 %v4589, %v4799
        %v4801 = vrcp.pop %v4773
        %v4802 = vmul.f32 %v4670, %v4801
        %v4803 = vrcp.pop %v4774
        %v4804 = vmul.f32 %v4672, %v4803
        %v4805 = vrcp.pop %v4775
        %v4806 = vmul.f32 %v4753, %v4805
        %v4807 = vrcp.pop %v4776
        %v4808 = vmul.f32 %v4755, %v4807
        %v4809 = vrcp.pop %v4777
        %v4810 = vmul.f32 %v4510, %v4809
        %v4811 = vrcp.pop %v4778
        %v4812 = vmul.f32 %v4512, %v4811
        %v4813 = vrcp.pop %v4779
        %v4814 = vmul.f32 %v4593, %v4813
        %v4815 = vrcp.pop %v4780
        %v4816 = vmul.f32 %v4595, %v4815
        %v4817 = vrcp.pop %v4781
        %v4818 = vmul.f32 %v4676, %v4817
        %v4819 = vrcp.pop %v4782
        %v4820 = vmul.f32 %v4678, %v4819
        %v4821 = vrcp.pop %v4783
        %v4822 = vmul.f32 %v4759, %v4821
        %v4823 = vrcp.pop %v4784
        %v4824 = vmul.f32 %v4761, %v4823
        %v4825 = vrcp.pop %v4785
        %v4826 = vmul.f32 %v4516, %v4825
        %v4827 = vrcp.pop %v4786
        %v4828 = vmul.f32 %v4518, %v4827
        %v4829 = vrcp.pop %v4787
        %v4830 = vmul.f32 %v4599, %v4829
        %v4831 = vrcp.pop %v4788
        %v4832 = vmul.f32 %v4601, %v4831
        %v4833 = vrcp.pop %v4789
        %v4834 = vmul.f32 %v4682, %v4833
        %v4835 = vrcp.pop %v4790
        %v4836 = vmul.f32 %v4684, %v4835
        %v4837 = vrcp.pop %v4791
        %v4838 = vmul.f32 %v4765, %v4837
        %v4839 = vrcp.pop %v4792
        %v4840 = vmul.f32 %v4767, %v4839
        %v4841 = vadd.f32 %v4504, 1e-08
        %v4842 = vadd.f32 %v4506, 1e-08
        %v4843 = vadd.f32 %v4587, 1e-08
        %v4844 = vadd.f32 %v4589, 1e-08
        %v4845 = vadd.f32 %v4670, 1e-08
        %v4846 = vadd.f32 %v4672, 1e-08
        %v4847 = vadd.f32 %v4753, 1e-08
        %v4848 = vadd.f32 %v4755, 1e-08
        %v4849 = vadd.f32 %v4510, 1e-08
        %v4850 = vadd.f32 %v4512, 1e-08
        %v4851 = vadd.f32 %v4593, 1e-08
        %v4852 = vadd.f32 %v4595, 1e-08
        %v4853 = vadd.f32 %v4676, 1e-08
        %v4854 = vadd.f32 %v4678, 1e-08
        %v4855 = vadd.f32 %v4759, 1e-08
        %v4856 = vadd.f32 %v4761, 1e-08
        %v4857 = vadd.f32 %v4516, 1e-08
        %v4858 = vadd.f32 %v4518, 1e-08
        %v4859 = vadd.f32 %v4599, 1e-08
        %v4860 = vadd.f32 %v4601, 1e-08
        %v4861 = vadd.f32 %v4682, 1e-08
        %v4862 = vadd.f32 %v4684, 1e-08
        %v4863 = vadd.f32 %v4765, 1e-08
        %v4864 = vadd.f32 %v4767, 1e-08
        %v4865 = vrsqrt.pop %v4841
        %v4866 = vrsqrt.pop %v4842
        %v4867 = vrsqrt.pop %v4843
        %v4868 = vrsqrt.pop %v4844
        %v4869 = vrsqrt.pop %v4845
        %v4870 = vrsqrt.pop %v4846
        %v4871 = vrsqrt.pop %v4847
        %v4872 = vrsqrt.pop %v4848
        %v4873 = vrsqrt.pop %v4849
        %v4874 = vrsqrt.pop %v4850
        %v4875 = vrsqrt.pop %v4851
        %v4876 = vrsqrt.pop %v4852
        %v4877 = vrsqrt.pop %v4853
        %v4878 = vrsqrt.pop %v4854
        %v4879 = vrsqrt.pop %v4855
        %v4880 = vrsqrt.pop %v4856
        %v4881 = vrsqrt.pop %v4857
        %v4882 = vrsqrt.pop %v4858
        %v4883 = vrsqrt.pop %v4859
        %v4884 = vrsqrt.pop %v4860
        %v4885 = vrsqrt.pop %v4861
        %v4886 = vrsqrt.pop %v4862
        %v4887 = vrsqrt.pop %v4863
        %v4888 = vrsqrt.pop %v4864
        %v4889 = vmul.f32 %v4794, %v4865
        %v4890 = vmul.f32 %v4796, %v4866
        %v4891 = vmul.f32 %v4798, %v4867
        %v4892 = vmul.f32 %v4800, %v4868
        %v4893 = vmul.f32 %v4802, %v4869
        %v4894 = vmul.f32 %v4804, %v4870
        %v4895 = vmul.f32 %v4806, %v4871
        %v4896 = vmul.f32 %v4808, %v4872
        %v4897 = vmul.f32 %v4810, %v4873
        %v4898 = vmul.f32 %v4812, %v4874
        %v4899 = vmul.f32 %v4814, %v4875
        %v4900 = vmul.f32 %v4816, %v4876
        %v4901 = vmul.f32 %v4818, %v4877
        %v4902 = vmul.f32 %v4820, %v4878
        %v4903 = vmul.f32 %v4822, %v4879
        %v4904 = vmul.f32 %v4824, %v4880
        %v4905 = vmul.f32 %v4826, %v4881
        %v4906 = vmul.f32 %v4828, %v4882
        %v4907 = vmul.f32 %v4830, %v4883
        %v4908 = vmul.f32 %v4832, %v4884
        %v4909 = vmul.f32 %v4834, %v4885
        %v4910 = vmul.f32 %v4836, %v4886
        %v4911 = vmul.f32 %v4838, %v4887
        %v4912 = vmul.f32 %v4840, %v4888
        %v4913 = vmul.f32 %v4889, %v4148
        %v4914 = vmul.f32 %v4890, %v4150
        %v4915 = vmul.f32 %v4891, %v4231
        %v4916 = vmul.f32 %v4892, %v4233
        %v4917 = vmul.f32 %v4893, %v4314
        %v4918 = vmul.f32 %v4894, %v4316
        %v4919 = vmul.f32 %v4895, %v4397
        %v4920 = vmul.f32 %v4896, %v4399
        %v4921 = vmul.f32 %v4897, %v4154
        %v4922 = vmul.f32 %v4898, %v4156
        %v4923 = vmul.f32 %v4899, %v4237
        %v4924 = vmul.f32 %v4900, %v4239
        %v4925 = vmul.f32 %v4901, %v4320
        %v4926 = vmul.f32 %v4902, %v4322
        %v4927 = vmul.f32 %v4903, %v4403
        %v4928 = vmul.f32 %v4904, %v4405
        %v4929 = vmul.f32 %v4905, %v4160
        %v4930 = vmul.f32 %v4906, %v4162
        %v4931 = vmul.f32 %v4907, %v4243
        %v4932 = vmul.f32 %v4908, %v4245
        %v4933 = vmul.f32 %v4909, %v4326
        %v4934 = vmul.f32 %v4910, %v4328
        %v4935 = vmul.f32 %v4911, %v4409
        %v4936 = vmul.f32 %v4912, %v4411
        %4937 = vmatprep.subr.mxu0 0.0
        %4938 = vmatpush1.msra.mxu0 0.0
        %4939 = vmatprep.subr.mxu0 0.0
        %4940 = vmatpush1.msra.mxu0 0.0
        %4941 = vmatprep.subr.mxu0 0.0
        %4942 = vmatpush1.msra.mxu0 0.0
        %4943 = vmatprep.subr.mxu0 0.0
        %4944 = vmatpush1.msra.mxu0 0.0
        %4945 = vmatprep.subr.mxu0 0.0
        %4946 = vmatpush1.msra.mxu0 0.0
        %4947 = vmatprep.subr.mxu0 0.0
        %4948 = vmatpush1.msra.mxu0 0.0
        %4949 = vmatprep.subr.mxu0 0.0
        %4950 = vmatpush1.msra.mxu0 0.0
        %4951 = vmatprep.subr.mxu0 0.0
        %4952 = vmatpush1.msra.mxu0 0.0
        %4953 = vmatprep.subr.mxu0 0.0
        %4954 = vmatpush1.msra.mxu0 0.0
        %4955 = vmatprep.subr.mxu0 0.0
        %4956 = vmatpush1.msra.mxu0 0.0
        %4957 = vmatprep.subr.mxu0 0.0
        %4958 = vmatpush1.msra.mxu0 0.0
        %4959 = vmatprep.subr.mxu0 0.0
        %4960 = vmatpush1.msra.mxu0 0.0
        %4961 = vmatprep.subr.mxu0 0.0
        %4962 = vmatpush1.msra.mxu0 0.0
        %4963 = vmatprep.subr.mxu0 %v4930
        %4964 = vmatpush1.msra.mxu0 %v4929
        %4965 = vmatprep.subr.mxu0 %v4922
        %4966 = vmatpush1.msra.mxu0 %v4921
        %4967 = vmatprep.subr.mxu0 %v4914
        %4968 = vmatpush1.msra.mxu0 %v4913
        %4969 = vmatprep.subr.mxu0 0.0
        %4970 = vmatpush2.msra.mxu0 0.0
        %4971 = vmatprep.subr.mxu0 0.0
        %4972 = vmatpush2.msra.mxu0 0.0
        %4973 = vmatprep.subr.mxu0 0.0
        %4974 = vmatpush2.msra.mxu0 0.0
        %4975 = vmatprep.subr.mxu0 0.0
        %4976 = vmatpush2.msra.mxu0 0.0
        %4977 = vmatprep.subr.mxu0 0.0
        %4978 = vmatpush2.msra.mxu0 0.0
        %4979 = vmatprep.subr.mxu0 0.0
        %4980 = vmatpush2.msra.mxu0 0.0
        %4981 = vmatprep.subr.mxu0 0.0
        %4982 = vmatpush2.msra.mxu0 0.0
        %4983 = vmatprep.subr.mxu0 0.0
        %4984 = vmatpush2.msra.mxu0 0.0
        %4985 = vmatprep.subr.mxu0 0.0
        %4986 = vmatpush2.msra.mxu0 0.0
        %4987 = vmatprep.subr.mxu0 0.0
        %4988 = vmatpush2.msra.mxu0 0.0
        %4989 = vmatprep.subr.mxu0 0.0
        %4990 = vmatpush2.msra.mxu0 0.0
        %4991 = vmatprep.subr.mxu0 0.0
        %4992 = vmatpush2.msra.mxu0 0.0
        %4993 = vmatprep.subr.mxu0 0.0
        %4994 = vmatpush2.msra.mxu0 0.0
        %4995 = vmatprep.subr.mxu0 0.0
        %4996 = vmatpush2.msra.mxu0 0.0
        %4997 = vmatprep.subr.mxu0 0.0
        %4998 = vmatpush2.msra.mxu0 0.0
        %4999 = vmatprep.subr.mxu0 0.0
        %5000 = vmatpush2.msra.mxu0 0.0
        %5001 = vmatprep.mubr.f32.mxu0 0.0
        %5002 = vmatmul.mubr.f32.gmra.mxu0 %v1870
        %v5003 = vpop.f32.mrf.mxu0
        %v5004 = vadd.f32 0.0, %v5003
        %v5005 = vpop.f32.mrf.mxu0
        %v5006 = vadd.f32 0.0, %v5005
        %5007 = vmatprep.mubr.f32.mxu0 0.0
        %5008 = vmatmul.mubr.f32.gmra.mxu0 %v1873
        %v5009 = vpop.f32.mrf.mxu0
        %v5010 = vadd.f32 0.0, %v5009
        %v5011 = vpop.f32.mrf.mxu0
        %v5012 = vadd.f32 0.0, %v5011
        %5013 = vmatprep.mubr.f32.mxu0 0.0
        %5014 = vmatmul.mubr.f32.gmra.mxu0 %v1876
        %v5015 = vpop.f32.mrf.mxu0
        %v5016 = vadd.f32 0.0, %v5015
        %v5017 = vpop.f32.mrf.mxu0
        %v5018 = vadd.f32 0.0, %v5017
        %5019 = vmatprep.mubr.f32.mxu0 0.0
        %5020 = vmatmul.mubr.f32.gmra.mxu0 %v1879
        %v5021 = vpop.f32.mrf.mxu0
        %v5022 = vadd.f32 0.0, %v5021
        %v5023 = vpop.f32.mrf.mxu0
        %v5024 = vadd.f32 0.0, %v5023
        %5025 = vmatprep.mubr.f32.mxu0 0.0
        %5026 = vmatmul.mubr.f32.gmra.mxu0 %v1882
        %v5027 = vpop.f32.mrf.mxu0
        %v5028 = vadd.f32 0.0, %v5027
        %v5029 = vpop.f32.mrf.mxu0
        %v5030 = vadd.f32 0.0, %v5029
        %5031 = vmatprep.mubr.f32.mxu0 0.0
        %5032 = vmatmul.mubr.f32.gmra.mxu0 %v1885
        %v5033 = vpop.f32.mrf.mxu0
        %v5034 = vadd.f32 0.0, %v5033
        %v5035 = vpop.f32.mrf.mxu0
        %v5036 = vadd.f32 0.0, %v5035
        %5037 = vmatprep.mubr.f32.mxu0 0.0
        %5038 = vmatmul.mubr.f32.gmra.mxu0 %v1888
        %v5039 = vpop.f32.mrf.mxu0
        %v5040 = vadd.f32 0.0, %v5039
        %v5041 = vpop.f32.mrf.mxu0
        %v5042 = vadd.f32 0.0, %v5041
        %5043 = vmatprep.mubr.f32.mxu0 0.0
        %5044 = vmatmul.mubr.f32.gmra.mxu0 %v1891
        %v5045 = vpop.f32.mrf.mxu0
        %v5046 = vadd.f32 0.0, %v5045
        %v5047 = vpop.f32.mrf.mxu0
        %v5048 = vadd.f32 0.0, %v5047
        %5049 = vmatprep.mubr.f32.mxu0 0.0
        %5050 = vmatmul.mubr.f32.gmra.mxu0 %v1894
        %v5051 = vpop.f32.mrf.mxu0
        %v5052 = vadd.f32 0.0, %v5051
        %v5053 = vpop.f32.mrf.mxu0
        %v5054 = vadd.f32 0.0, %v5053
        %5055 = vmatprep.mubr.f32.mxu0 0.0
        %5056 = vmatmul.mubr.f32.gmra.mxu0 %v1897
        %v5057 = vpop.f32.mrf.mxu0
        %v5058 = vadd.f32 0.0, %v5057
        %v5059 = vpop.f32.mrf.mxu0
        %v5060 = vadd.f32 0.0, %v5059
        %5061 = vmatprep.mubr.f32.mxu0 0.0
        %5062 = vmatmul.mubr.f32.gmra.mxu0 %v1900
        %v5063 = vpop.f32.mrf.mxu0
        %v5064 = vadd.f32 0.0, %v5063
        %v5065 = vpop.f32.mrf.mxu0
        %v5066 = vadd.f32 0.0, %v5065
        %5067 = vmatprep.mubr.f32.mxu0 0.0
        %5068 = vmatmul.mubr.f32.gmra.mxu0 %v1903
        %v5069 = vpop.f32.mrf.mxu0
        %v5070 = vadd.f32 0.0, %v5069
        %v5071 = vpop.f32.mrf.mxu0
        %v5072 = vadd.f32 0.0, %v5071
        %5073 = vdwg.mxu0
        %5074 = vmatprep.subr.mxu0 0.0
        %5075 = vmatpush1.msra.mxu0 0.0
        %5076 = vmatprep.subr.mxu0 0.0
        %5077 = vmatpush1.msra.mxu0 0.0
        %5078 = vmatprep.subr.mxu0 0.0
        %5079 = vmatpush1.msra.mxu0 0.0
        %5080 = vmatprep.subr.mxu0 0.0
        %5081 = vmatpush1.msra.mxu0 0.0
        %5082 = vmatprep.subr.mxu0 0.0
        %5083 = vmatpush1.msra.mxu0 0.0
        %5084 = vmatprep.subr.mxu0 0.0
        %5085 = vmatpush1.msra.mxu0 0.0
        %5086 = vmatprep.subr.mxu0 0.0
        %5087 = vmatpush1.msra.mxu0 0.0
        %5088 = vmatprep.subr.mxu0 0.0
        %5089 = vmatpush1.msra.mxu0 0.0
        %5090 = vmatprep.subr.mxu0 0.0
        %5091 = vmatpush1.msra.mxu0 0.0
        %5092 = vmatprep.subr.mxu0 0.0
        %5093 = vmatpush1.msra.mxu0 0.0
        %5094 = vmatprep.subr.mxu0 0.0
        %5095 = vmatpush1.msra.mxu0 0.0
        %5096 = vmatprep.subr.mxu0 0.0
        %5097 = vmatpush1.msra.mxu0 0.0
        %5098 = vmatprep.subr.mxu0 0.0
        %5099 = vmatpush1.msra.mxu0 0.0
        %5100 = vmatprep.subr.mxu0 %v4932
        %5101 = vmatpush1.msra.mxu0 %v4931
        %5102 = vmatprep.subr.mxu0 %v4924
        %5103 = vmatpush1.msra.mxu0 %v4923
        %5104 = vmatprep.subr.mxu0 %v4916
        %5105 = vmatpush1.msra.mxu0 %v4915
        %5106 = vmatprep.subr.mxu0 0.0
        %5107 = vmatpush2.msra.mxu0 0.0
        %5108 = vmatprep.subr.mxu0 0.0
        %5109 = vmatpush2.msra.mxu0 0.0
        %5110 = vmatprep.subr.mxu0 0.0
        %5111 = vmatpush2.msra.mxu0 0.0
        %5112 = vmatprep.subr.mxu0 0.0
        %5113 = vmatpush2.msra.mxu0 0.0
        %5114 = vmatprep.subr.mxu0 0.0
        %5115 = vmatpush2.msra.mxu0 0.0
        %5116 = vmatprep.subr.mxu0 0.0
        %5117 = vmatpush2.msra.mxu0 0.0
        %5118 = vmatprep.subr.mxu0 0.0
        %5119 = vmatpush2.msra.mxu0 0.0
        %5120 = vmatprep.subr.mxu0 0.0
        %5121 = vmatpush2.msra.mxu0 0.0
        %5122 = vmatprep.subr.mxu0 0.0
        %5123 = vmatpush2.msra.mxu0 0.0
        %5124 = vmatprep.subr.mxu0 0.0
        %5125 = vmatpush2.msra.mxu0 0.0
        %5126 = vmatprep.subr.mxu0 0.0
        %5127 = vmatpush2.msra.mxu0 0.0
        %5128 = vmatprep.subr.mxu0 0.0
        %5129 = vmatpush2.msra.mxu0 0.0
        %5130 = vmatprep.subr.mxu0 0.0
        %5131 = vmatpush2.msra.mxu0 0.0
        %5132 = vmatprep.subr.mxu0 0.0
        %5133 = vmatpush2.msra.mxu0 0.0
        %5134 = vmatprep.subr.mxu0 0.0
        %5135 = vmatpush2.msra.mxu0 0.0
        %5136 = vmatprep.subr.mxu0 0.0
        %5137 = vmatpush2.msra.mxu0 0.0
        %5138 = vmatprep.mubr.f32.mxu0 0.0
        %5139 = vmatmul.mubr.f32.gmra.mxu0 %v1870
        %v5140 = vpop.f32.mrf.mxu0
        %v5141 = vadd.f32 0.0, %v5140
        %v5142 = vpop.f32.mrf.mxu0
        %v5143 = vadd.f32 0.0, %v5142
        %5144 = vmatprep.mubr.f32.mxu0 0.0
        %5145 = vmatmul.mubr.f32.gmra.mxu0 %v1873
        %v5146 = vpop.f32.mrf.mxu0
        %v5147 = vadd.f32 0.0, %v5146
        %v5148 = vpop.f32.mrf.mxu0
        %v5149 = vadd.f32 0.0, %v5148
        %5150 = vmatprep.mubr.f32.mxu0 0.0
        %5151 = vmatmul.mubr.f32.gmra.mxu0 %v1876
        %v5152 = vpop.f32.mrf.mxu0
        %v5153 = vadd.f32 0.0, %v5152
        %v5154 = vpop.f32.mrf.mxu0
        %v5155 = vadd.f32 0.0, %v5154
        %5156 = vmatprep.mubr.f32.mxu0 0.0
        %5157 = vmatmul.mubr.f32.gmra.mxu0 %v1879
        %v5158 = vpop.f32.mrf.mxu0
        %v5159 = vadd.f32 0.0, %v5158
        %v5160 = vpop.f32.mrf.mxu0
        %v5161 = vadd.f32 0.0, %v5160
        %5162 = vmatprep.mubr.f32.mxu0 0.0
        %5163 = vmatmul.mubr.f32.gmra.mxu0 %v1882
        %v5164 = vpop.f32.mrf.mxu0
        %v5165 = vadd.f32 0.0, %v5164
        %v5166 = vpop.f32.mrf.mxu0
        %v5167 = vadd.f32 0.0, %v5166
        %5168 = vmatprep.mubr.f32.mxu0 0.0
        %5169 = vmatmul.mubr.f32.gmra.mxu0 %v1885
        %v5170 = vpop.f32.mrf.mxu0
        %v5171 = vadd.f32 0.0, %v5170
        %v5172 = vpop.f32.mrf.mxu0
        %v5173 = vadd.f32 0.0, %v5172
        %5174 = vmatprep.mubr.f32.mxu0 0.0
        %5175 = vmatmul.mubr.f32.gmra.mxu0 %v1888
        %v5176 = vpop.f32.mrf.mxu0
        %v5177 = vadd.f32 0.0, %v5176
        %v5178 = vpop.f32.mrf.mxu0
        %v5179 = vadd.f32 0.0, %v5178
        %5180 = vmatprep.mubr.f32.mxu0 0.0
        %5181 = vmatmul.mubr.f32.gmra.mxu0 %v1891
        %v5182 = vpop.f32.mrf.mxu0
        %v5183 = vadd.f32 0.0, %v5182
        %v5184 = vpop.f32.mrf.mxu0
        %v5185 = vadd.f32 0.0, %v5184
        %5186 = vmatprep.mubr.f32.mxu0 0.0
        %5187 = vmatmul.mubr.f32.gmra.mxu0 %v1894
        %v5188 = vpop.f32.mrf.mxu0
        %v5189 = vadd.f32 0.0, %v5188
        %v5190 = vpop.f32.mrf.mxu0
        %v5191 = vadd.f32 0.0, %v5190
        %5192 = vmatprep.mubr.f32.mxu0 0.0
        %5193 = vmatmul.mubr.f32.gmra.mxu0 %v1897
        %v5194 = vpop.f32.mrf.mxu0
        %v5195 = vadd.f32 0.0, %v5194
        %v5196 = vpop.f32.mrf.mxu0
        %v5197 = vadd.f32 0.0, %v5196
        %5198 = vmatprep.mubr.f32.mxu0 0.0
        %5199 = vmatmul.mubr.f32.gmra.mxu0 %v1900
        %v5200 = vpop.f32.mrf.mxu0
        %v5201 = vadd.f32 0.0, %v5200
        %v5202 = vpop.f32.mrf.mxu0
        %v5203 = vadd.f32 0.0, %v5202
        %5204 = vmatprep.mubr.f32.mxu0 0.0
        %5205 = vmatmul.mubr.f32.gmra.mxu0 %v1903
        %v5206 = vpop.f32.mrf.mxu0
        %v5207 = vadd.f32 0.0, %v5206
        %v5208 = vpop.f32.mrf.mxu0
        %v5209 = vadd.f32 0.0, %v5208
        %5210 = vdwg.mxu0
        %5211 = vmatprep.subr.mxu0 0.0
        %5212 = vmatpush1.msra.mxu0 0.0
        %5213 = vmatprep.subr.mxu0 0.0
        %5214 = vmatpush1.msra.mxu0 0.0
        %5215 = vmatprep.subr.mxu0 0.0
        %5216 = vmatpush1.msra.mxu0 0.0
        %5217 = vmatprep.subr.mxu0 0.0
        %5218 = vmatpush1.msra.mxu0 0.0
        %5219 = vmatprep.subr.mxu0 0.0
        %5220 = vmatpush1.msra.mxu0 0.0
        %5221 = vmatprep.subr.mxu0 0.0
        %5222 = vmatpush1.msra.mxu0 0.0
        %5223 = vmatprep.subr.mxu0 0.0
        %5224 = vmatpush1.msra.mxu0 0.0
        %5225 = vmatprep.subr.mxu0 0.0
        %5226 = vmatpush1.msra.mxu0 0.0
        %5227 = vmatprep.subr.mxu0 0.0
        %5228 = vmatpush1.msra.mxu0 0.0
        %5229 = vmatprep.subr.mxu0 0.0
        %5230 = vmatpush1.msra.mxu0 0.0
        %5231 = vmatprep.subr.mxu0 0.0
        %5232 = vmatpush1.msra.mxu0 0.0
        %5233 = vmatprep.subr.mxu0 0.0
        %5234 = vmatpush1.msra.mxu0 0.0
        %5235 = vmatprep.subr.mxu0 0.0
        %5236 = vmatpush1.msra.mxu0 0.0
        %5237 = vmatprep.subr.mxu0 %v4934
        %5238 = vmatpush1.msra.mxu0 %v4933
        %5239 = vmatprep.subr.mxu0 %v4926
        %5240 = vmatpush1.msra.mxu0 %v4925
        %5241 = vmatprep.subr.mxu0 %v4918
        %5242 = vmatpush1.msra.mxu0 %v4917
        %5243 = vmatprep.subr.mxu0 0.0
        %5244 = vmatpush2.msra.mxu0 0.0
        %5245 = vmatprep.subr.mxu0 0.0
        %5246 = vmatpush2.msra.mxu0 0.0
        %5247 = vmatprep.subr.mxu0 0.0
        %5248 = vmatpush2.msra.mxu0 0.0
        %5249 = vmatprep.subr.mxu0 0.0
        %5250 = vmatpush2.msra.mxu0 0.0
        %5251 = vmatprep.subr.mxu0 0.0
        %5252 = vmatpush2.msra.mxu0 0.0
        %5253 = vmatprep.subr.mxu0 0.0
        %5254 = vmatpush2.msra.mxu0 0.0
        %5255 = vmatprep.subr.mxu0 0.0
        %5256 = vmatpush2.msra.mxu0 0.0
        %5257 = vmatprep.subr.mxu0 0.0
        %5258 = vmatpush2.msra.mxu0 0.0
        %5259 = vmatprep.subr.mxu0 0.0
        %5260 = vmatpush2.msra.mxu0 0.0
        %5261 = vmatprep.subr.mxu0 0.0
        %5262 = vmatpush2.msra.mxu0 0.0
        %5263 = vmatprep.subr.mxu0 0.0
        %5264 = vmatpush2.msra.mxu0 0.0
        %5265 = vmatprep.subr.mxu0 0.0
        %5266 = vmatpush2.msra.mxu0 0.0
        %5267 = vmatprep.subr.mxu0 0.0
        %5268 = vmatpush2.msra.mxu0 0.0
        %5269 = vmatprep.subr.mxu0 0.0
        %5270 = vmatpush2.msra.mxu0 0.0
        %5271 = vmatprep.subr.mxu0 0.0
        %5272 = vmatpush2.msra.mxu0 0.0
        %5273 = vmatprep.subr.mxu0 0.0
        %5274 = vmatpush2.msra.mxu0 0.0
        %5275 = vmatprep.mubr.f32.mxu0 0.0
        %5276 = vmatmul.mubr.f32.gmra.mxu0 %v1870
        %v5277 = vpop.f32.mrf.mxu0
        %v5278 = vadd.f32 0.0, %v5277
        %v5279 = vpop.f32.mrf.mxu0
        %v5280 = vadd.f32 0.0, %v5279
        %5281 = vmatprep.mubr.f32.mxu0 0.0
        %5282 = vmatmul.mubr.f32.gmra.mxu0 %v1873
        %v5283 = vpop.f32.mrf.mxu0
        %v5284 = vadd.f32 0.0, %v5283
        %v5285 = vpop.f32.mrf.mxu0
        %v5286 = vadd.f32 0.0, %v5285
        %5287 = vmatprep.mubr.f32.mxu0 0.0
        %5288 = vmatmul.mubr.f32.gmra.mxu0 %v1876
        %v5289 = vpop.f32.mrf.mxu0
        %v5290 = vadd.f32 0.0, %v5289
        %v5291 = vpop.f32.mrf.mxu0
        %v5292 = vadd.f32 0.0, %v5291
        %5293 = vmatprep.mubr.f32.mxu0 0.0
        %5294 = vmatmul.mubr.f32.gmra.mxu0 %v1879
        %v5295 = vpop.f32.mrf.mxu0
        %v5296 = vadd.f32 0.0, %v5295
        %v5297 = vpop.f32.mrf.mxu0
        %v5298 = vadd.f32 0.0, %v5297
        %5299 = vmatprep.mubr.f32.mxu0 0.0
        %5300 = vmatmul.mubr.f32.gmra.mxu0 %v1882
        %v5301 = vpop.f32.mrf.mxu0
        %v5302 = vadd.f32 0.0, %v5301
        %v5303 = vpop.f32.mrf.mxu0
        %v5304 = vadd.f32 0.0, %v5303
        %5305 = vmatprep.mubr.f32.mxu0 0.0
        %5306 = vmatmul.mubr.f32.gmra.mxu0 %v1885
        %v5307 = vpop.f32.mrf.mxu0
        %v5308 = vadd.f32 0.0, %v5307
        %v5309 = vpop.f32.mrf.mxu0
        %v5310 = vadd.f32 0.0, %v5309
        %5311 = vmatprep.mubr.f32.mxu0 0.0
        %5312 = vmatmul.mubr.f32.gmra.mxu0 %v1888
        %v5313 = vpop.f32.mrf.mxu0
        %v5314 = vadd.f32 0.0, %v5313
        %v5315 = vpop.f32.mrf.mxu0
        %v5316 = vadd.f32 0.0, %v5315
        %5317 = vmatprep.mubr.f32.mxu0 0.0
        %5318 = vmatmul.mubr.f32.gmra.mxu0 %v1891
        %v5319 = vpop.f32.mrf.mxu0
        %v5320 = vadd.f32 0.0, %v5319
        %v5321 = vpop.f32.mrf.mxu0
        %v5322 = vadd.f32 0.0, %v5321
        %5323 = vmatprep.mubr.f32.mxu0 0.0
        %5324 = vmatmul.mubr.f32.gmra.mxu0 %v1894
        %v5325 = vpop.f32.mrf.mxu0
        %v5326 = vadd.f32 0.0, %v5325
        %v5327 = vpop.f32.mrf.mxu0
        %v5328 = vadd.f32 0.0, %v5327
        %5329 = vmatprep.mubr.f32.mxu0 0.0
        %5330 = vmatmul.mubr.f32.gmra.mxu0 %v1897
        %v5331 = vpop.f32.mrf.mxu0
        %v5332 = vadd.f32 0.0, %v5331
        %v5333 = vpop.f32.mrf.mxu0
        %v5334 = vadd.f32 0.0, %v5333
        %5335 = vmatprep.mubr.f32.mxu0 0.0
        %5336 = vmatmul.mubr.f32.gmra.mxu0 %v1900
        %v5337 = vpop.f32.mrf.mxu0
        %v5338 = vadd.f32 0.0, %v5337
        %v5339 = vpop.f32.mrf.mxu0
        %v5340 = vadd.f32 0.0, %v5339
        %5341 = vmatprep.mubr.f32.mxu0 0.0
        %5342 = vmatmul.mubr.f32.gmra.mxu0 %v1903
        %v5343 = vpop.f32.mrf.mxu0
        %v5344 = vadd.f32 0.0, %v5343
        %v5345 = vpop.f32.mrf.mxu0
        %v5346 = vadd.f32 0.0, %v5345
        %5347 = vdwg.mxu0
        %5348 = vmatprep.subr.mxu0 0.0
        %5349 = vmatpush1.msra.mxu0 0.0
        %5350 = vmatprep.subr.mxu0 0.0
        %5351 = vmatpush1.msra.mxu0 0.0
        %5352 = vmatprep.subr.mxu0 0.0
        %5353 = vmatpush1.msra.mxu0 0.0
        %5354 = vmatprep.subr.mxu0 0.0
        %5355 = vmatpush1.msra.mxu0 0.0
        %5356 = vmatprep.subr.mxu0 0.0
        %5357 = vmatpush1.msra.mxu0 0.0
        %5358 = vmatprep.subr.mxu0 0.0
        %5359 = vmatpush1.msra.mxu0 0.0
        %5360 = vmatprep.subr.mxu0 0.0
        %5361 = vmatpush1.msra.mxu0 0.0
        %5362 = vmatprep.subr.mxu0 0.0
        %5363 = vmatpush1.msra.mxu0 0.0
        %5364 = vmatprep.subr.mxu0 0.0
        %5365 = vmatpush1.msra.mxu0 0.0
        %5366 = vmatprep.subr.mxu0 0.0
        %5367 = vmatpush1.msra.mxu0 0.0
        %5368 = vmatprep.subr.mxu0 0.0
        %5369 = vmatpush1.msra.mxu0 0.0
        %5370 = vmatprep.subr.mxu0 0.0
        %5371 = vmatpush1.msra.mxu0 0.0
        %5372 = vmatprep.subr.mxu0 0.0
        %5373 = vmatpush1.msra.mxu0 0.0
        %5374 = vmatprep.subr.mxu0 %v4936
        %5375 = vmatpush1.msra.mxu0 %v4935
        %5376 = vmatprep.subr.mxu0 %v4928
        %5377 = vmatpush1.msra.mxu0 %v4927
        %5378 = vmatprep.subr.mxu0 %v4920
        %5379 = vmatpush1.msra.mxu0 %v4919
        %5380 = vmatprep.subr.mxu0 0.0
        %5381 = vmatpush2.msra.mxu0 0.0
        %5382 = vmatprep.subr.mxu0 0.0
        %5383 = vmatpush2.msra.mxu0 0.0
        %5384 = vmatprep.subr.mxu0 0.0
        %5385 = vmatpush2.msra.mxu0 0.0
        %5386 = vmatprep.subr.mxu0 0.0
        %5387 = vmatpush2.msra.mxu0 0.0
        %5388 = vmatprep.subr.mxu0 0.0
        %5389 = vmatpush2.msra.mxu0 0.0
        %5390 = vmatprep.subr.mxu0 0.0
        %5391 = vmatpush2.msra.mxu0 0.0
        %5392 = vmatprep.subr.mxu0 0.0
        %5393 = vmatpush2.msra.mxu0 0.0
        %5394 = vmatprep.subr.mxu0 0.0
        %5395 = vmatpush2.msra.mxu0 0.0
        %5396 = vmatprep.subr.mxu0 0.0
        %5397 = vmatpush2.msra.mxu0 0.0
        %5398 = vmatprep.subr.mxu0 0.0
        %5399 = vmatpush2.msra.mxu0 0.0
        %5400 = vmatprep.subr.mxu0 0.0
        %5401 = vmatpush2.msra.mxu0 0.0
        %5402 = vmatprep.subr.mxu0 0.0
        %5403 = vmatpush2.msra.mxu0 0.0
        %5404 = vmatprep.subr.mxu0 0.0
        %5405 = vmatpush2.msra.mxu0 0.0
        %5406 = vmatprep.subr.mxu0 0.0
        %5407 = vmatpush2.msra.mxu0 0.0
        %5408 = vmatprep.subr.mxu0 0.0
        %5409 = vmatpush2.msra.mxu0 0.0
        %5410 = vmatprep.subr.mxu0 0.0
        %5411 = vmatpush2.msra.mxu0 0.0
        %5412 = vmatprep.mubr.f32.mxu0 0.0
        %5413 = vmatmul.mubr.f32.gmra.mxu0 %v1870
        %v5414 = vpop.f32.mrf.mxu0
        %v5415 = vadd.f32 0.0, %v5414
        %v5416 = vpop.f32.mrf.mxu0
        %v5417 = vadd.f32 0.0, %v5416
        %5418 = vmatprep.mubr.f32.mxu0 0.0
        %5419 = vmatmul.mubr.f32.gmra.mxu0 %v1873
        %v5420 = vpop.f32.mrf.mxu0
        %v5421 = vadd.f32 0.0, %v5420
        %v5422 = vpop.f32.mrf.mxu0
        %v5423 = vadd.f32 0.0, %v5422
        %5424 = vmatprep.mubr.f32.mxu0 0.0
        %5425 = vmatmul.mubr.f32.gmra.mxu0 %v1876
        %v5426 = vpop.f32.mrf.mxu0
        %v5427 = vadd.f32 0.0, %v5426
        %v5428 = vpop.f32.mrf.mxu0
        %v5429 = vadd.f32 0.0, %v5428
        %5430 = vmatprep.mubr.f32.mxu0 0.0
        %5431 = vmatmul.mubr.f32.gmra.mxu0 %v1879
        %v5432 = vpop.f32.mrf.mxu0
        %v5433 = vadd.f32 0.0, %v5432
        %v5434 = vpop.f32.mrf.mxu0
        %v5435 = vadd.f32 0.0, %v5434
        %5436 = vmatprep.mubr.f32.mxu0 0.0
        %5437 = vmatmul.mubr.f32.gmra.mxu0 %v1882
        %v5438 = vpop.f32.mrf.mxu0
        %v5439 = vadd.f32 0.0, %v5438
        %v5440 = vpop.f32.mrf.mxu0
        %v5441 = vadd.f32 0.0, %v5440
        %5442 = vmatprep.mubr.f32.mxu0 0.0
        %5443 = vmatmul.mubr.f32.gmra.mxu0 %v1885
        %v5444 = vpop.f32.mrf.mxu0
        %v5445 = vadd.f32 0.0, %v5444
        %v5446 = vpop.f32.mrf.mxu0
        %v5447 = vadd.f32 0.0, %v5446
        %5448 = vmatprep.mubr.f32.mxu0 0.0
        %5449 = vmatmul.mubr.f32.gmra.mxu0 %v1888
        %v5450 = vpop.f32.mrf.mxu0
        %v5451 = vadd.f32 0.0, %v5450
        %v5452 = vpop.f32.mrf.mxu0
        %v5453 = vadd.f32 0.0, %v5452
        %5454 = vmatprep.mubr.f32.mxu0 0.0
        %5455 = vmatmul.mubr.f32.gmra.mxu0 %v1891
        %v5456 = vpop.f32.mrf.mxu0
        %v5457 = vadd.f32 0.0, %v5456
        %v5458 = vpop.f32.mrf.mxu0
        %v5459 = vadd.f32 0.0, %v5458
        %5460 = vmatprep.mubr.f32.mxu0 0.0
        %5461 = vmatmul.mubr.f32.gmra.mxu0 %v1894
        %v5462 = vpop.f32.mrf.mxu0
        %v5463 = vadd.f32 0.0, %v5462
        %v5464 = vpop.f32.mrf.mxu0
        %v5465 = vadd.f32 0.0, %v5464
        %5466 = vmatprep.mubr.f32.mxu0 0.0
        %5467 = vmatmul.mubr.f32.gmra.mxu0 %v1897
        %v5468 = vpop.f32.mrf.mxu0
        %v5469 = vadd.f32 0.0, %v5468
        %v5470 = vpop.f32.mrf.mxu0
        %v5471 = vadd.f32 0.0, %v5470
        %5472 = vmatprep.mubr.f32.mxu0 0.0
        %5473 = vmatmul.mubr.f32.gmra.mxu0 %v1900
        %v5474 = vpop.f32.mrf.mxu0
        %v5475 = vadd.f32 0.0, %v5474
        %v5476 = vpop.f32.mrf.mxu0
        %v5477 = vadd.f32 0.0, %v5476
        %5478 = vmatprep.mubr.f32.mxu0 0.0
        %5479 = vmatmul.mubr.f32.gmra.mxu0 %v1903
        %v5480 = vpop.f32.mrf.mxu0
        %v5481 = vadd.f32 0.0, %v5480
        %v5482 = vpop.f32.mrf.mxu0
        %v5483 = vadd.f32 0.0, %v5482
        %5484 = vdwg.mxu0
        %v5485 = vmul.f32 %v466, %v5004
        %v5486 = vmul.f32 %v468, %v5006
        %v5487 = vmul.f32 %v603, %v5141
        %v5488 = vmul.f32 %v605, %v5143
        %v5489 = vmul.f32 %v740, %v5278
        %v5490 = vmul.f32 %v742, %v5280
        %v5491 = vmul.f32 %v877, %v5415
        %v5492 = vmul.f32 %v879, %v5417
        %v5493 = vmul.f32 %v472, %v5010
        %v5494 = vmul.f32 %v474, %v5012
        %v5495 = vmul.f32 %v609, %v5147
        %v5496 = vmul.f32 %v611, %v5149
        %v5497 = vmul.f32 %v746, %v5284
        %v5498 = vmul.f32 %v748, %v5286
        %v5499 = vmul.f32 %v883, %v5421
        %v5500 = vmul.f32 %v885, %v5423
        %v5501 = vmul.f32 %v478, %v5016
        %v5502 = vmul.f32 %v480, %v5018
        %v5503 = vmul.f32 %v615, %v5153
        %v5504 = vmul.f32 %v617, %v5155
        %v5505 = vmul.f32 %v752, %v5290
        %v5506 = vmul.f32 %v754, %v5292
        %v5507 = vmul.f32 %v889, %v5427
        %v5508 = vmul.f32 %v891, %v5429
        %v5509 = vmul.f32 %v484, %v5022
        %v5510 = vmul.f32 %v486, %v5024
        %v5511 = vmul.f32 %v621, %v5159
        %v5512 = vmul.f32 %v623, %v5161
        %v5513 = vmul.f32 %v758, %v5296
        %v5514 = vmul.f32 %v760, %v5298
        %v5515 = vmul.f32 %v895, %v5433
        %v5516 = vmul.f32 %v897, %v5435
        %v5517 = vmul.f32 %v490, %v5028
        %v5518 = vmul.f32 %v492, %v5030
        %v5519 = vmul.f32 %v627, %v5165
        %v5520 = vmul.f32 %v629, %v5167
        %v5521 = vmul.f32 %v764, %v5302
        %v5522 = vmul.f32 %v766, %v5304
        %v5523 = vmul.f32 %v901, %v5439
        %v5524 = vmul.f32 %v903, %v5441
        %v5525 = vmul.f32 %v496, %v5034
        %v5526 = vmul.f32 %v498, %v5036
        %v5527 = vmul.f32 %v633, %v5171
        %v5528 = vmul.f32 %v635, %v5173
        %v5529 = vmul.f32 %v770, %v5308
        %v5530 = vmul.f32 %v772, %v5310
        %v5531 = vmul.f32 %v907, %v5445
        %v5532 = vmul.f32 %v909, %v5447
        %v5533 = vmul.f32 %v502, %v5040
        %v5534 = vmul.f32 %v504, %v5042
        %v5535 = vmul.f32 %v639, %v5177
        %v5536 = vmul.f32 %v641, %v5179
        %v5537 = vmul.f32 %v776, %v5314
        %v5538 = vmul.f32 %v778, %v5316
        %v5539 = vmul.f32 %v913, %v5451
        %v5540 = vmul.f32 %v915, %v5453
        %v5541 = vmul.f32 %v508, %v5046
        %v5542 = vmul.f32 %v510, %v5048
        %v5543 = vmul.f32 %v645, %v5183
        %v5544 = vmul.f32 %v647, %v5185
        %v5545 = vmul.f32 %v782, %v5320
        %v5546 = vmul.f32 %v784, %v5322
        %v5547 = vmul.f32 %v919, %v5457
        %v5548 = vmul.f32 %v921, %v5459
        %v5549 = vmul.f32 %v514, %v5052
        %v5550 = vmul.f32 %v516, %v5054
        %v5551 = vmul.f32 %v651, %v5189
        %v5552 = vmul.f32 %v653, %v5191
        %v5553 = vmul.f32 %v788, %v5326
        %v5554 = vmul.f32 %v790, %v5328
        %v5555 = vmul.f32 %v925, %v5463
        %v5556 = vmul.f32 %v927, %v5465
        %v5557 = vmul.f32 %v520, %v5058
        %v5558 = vmul.f32 %v522, %v5060
        %v5559 = vmul.f32 %v657, %v5195
        %v5560 = vmul.f32 %v659, %v5197
        %v5561 = vmul.f32 %v794, %v5332
        %v5562 = vmul.f32 %v796, %v5334
        %v5563 = vmul.f32 %v931, %v5469
        %v5564 = vmul.f32 %v933, %v5471
        %v5565 = vmul.f32 %v526, %v5064
        %v5566 = vmul.f32 %v528, %v5066
        %v5567 = vmul.f32 %v663, %v5201
        %v5568 = vmul.f32 %v665, %v5203
        %v5569 = vmul.f32 %v800, %v5338
        %v5570 = vmul.f32 %v802, %v5340
        %v5571 = vmul.f32 %v937, %v5475
        %v5572 = vmul.f32 %v939, %v5477
        %v5573 = vmul.f32 %v532, %v5070
        %v5574 = vmul.f32 %v534, %v5072
        %v5575 = vmul.f32 %v669, %v5207
        %v5576 = vmul.f32 %v671, %v5209
        %v5577 = vmul.f32 %v806, %v5344
        %v5578 = vmul.f32 %v808, %v5346
        %v5579 = vmul.f32 %v943, %v5481
        %v5580 = vmul.f32 %v945, %v5483
        %5581 = vmatprep.subr.mxu0 0.0
        %5582 = vmatpush1.msra.mxu0 0.0
        %5583 = vmatprep.subr.mxu0 0.0
        %5584 = vmatpush1.msra.mxu0 0.0
        %5585 = vmatprep.subr.mxu0 0.0
        %5586 = vmatpush1.msra.mxu0 0.0
        %5587 = vmatprep.subr.mxu0 0.0
        %5588 = vmatpush1.msra.mxu0 0.0
        %5589 = vmatprep.subr.mxu0 %v5574
        %5590 = vmatpush1.msra.mxu0 %v5573
        %5591 = vmatprep.subr.mxu0 %v5566
        %5592 = vmatpush1.msra.mxu0 %v5565
        %5593 = vmatprep.subr.mxu0 %v5558
        %5594 = vmatpush1.msra.mxu0 %v5557
        %5595 = vmatprep.subr.mxu0 %v5550
        %5596 = vmatpush1.msra.mxu0 %v5549
        %5597 = vmatprep.subr.mxu0 %v5542
        %5598 = vmatpush1.msra.mxu0 %v5541
        %5599 = vmatprep.subr.mxu0 %v5534
        %5600 = vmatpush1.msra.mxu0 %v5533
        %5601 = vmatprep.subr.mxu0 %v5526
        %5602 = vmatpush1.msra.mxu0 %v5525
        %5603 = vmatprep.subr.mxu0 %v5518
        %5604 = vmatpush1.msra.mxu0 %v5517
        %5605 = vmatprep.subr.mxu0 %v5510
        %5606 = vmatpush1.msra.mxu0 %v5509
        %5607 = vmatprep.subr.mxu0 %v5502
        %5608 = vmatpush1.msra.mxu0 %v5501
        %5609 = vmatprep.subr.mxu0 %v5494
        %5610 = vmatpush1.msra.mxu0 %v5493
        %5611 = vmatprep.subr.mxu0 %v5486
        %5612 = vmatpush1.msra.mxu0 %v5485
        %5613 = vmatprep.subr.mxu0 0.0
        %5614 = vmatpush2.msra.mxu0 0.0
        %5615 = vmatprep.subr.mxu0 0.0
        %5616 = vmatpush2.msra.mxu0 0.0
        %5617 = vmatprep.subr.mxu0 0.0
        %5618 = vmatpush2.msra.mxu0 0.0
        %5619 = vmatprep.subr.mxu0 0.0
        %5620 = vmatpush2.msra.mxu0 0.0
        %5621 = vmatprep.subr.mxu0 0.0
        %5622 = vmatpush2.msra.mxu0 0.0
        %5623 = vmatprep.subr.mxu0 0.0
        %5624 = vmatpush2.msra.mxu0 0.0
        %5625 = vmatprep.subr.mxu0 0.0
        %5626 = vmatpush2.msra.mxu0 0.0
        %5627 = vmatprep.subr.mxu0 0.0
        %5628 = vmatpush2.msra.mxu0 0.0
        %5629 = vmatprep.subr.mxu0 0.0
        %5630 = vmatpush2.msra.mxu0 0.0
        %5631 = vmatprep.subr.mxu0 0.0
        %5632 = vmatpush2.msra.mxu0 0.0
        %5633 = vmatprep.subr.mxu0 0.0
        %5634 = vmatpush2.msra.mxu0 0.0
        %5635 = vmatprep.subr.mxu0 0.0
        %5636 = vmatpush2.msra.mxu0 0.0
        %5637 = vmatprep.subr.mxu0 0.0
        %5638 = vmatpush2.msra.mxu0 0.0
        %5639 = vmatprep.subr.mxu0 0.0
        %5640 = vmatpush2.msra.mxu0 0.0
        %5641 = vmatprep.subr.mxu0 0.0
        %5642 = vmatpush2.msra.mxu0 0.0
        %5643 = vmatprep.subr.mxu0 0.0
        %5644 = vmatpush2.msra.mxu0 0.0
        %5645 = vmatprep.mubr.f32.mxu0 0.0
        %5646 = vmatmul.mubr.f32.gmra.mxu0 %v2550
        %v5647 = vpop.f32.mrf.mxu0
        %v5648 = vadd.f32 0.0, %v5647
        %v5649 = vpop.f32.mrf.mxu0
        %v5650 = vadd.f32 0.0, %v5649
        %5651 = vmatprep.mubr.f32.mxu0 0.0
        %5652 = vmatmul.mubr.f32.gmra.mxu0 %v2553
        %v5653 = vpop.f32.mrf.mxu0
        %v5654 = vadd.f32 0.0, %v5653
        %v5655 = vpop.f32.mrf.mxu0
        %v5656 = vadd.f32 0.0, %v5655
        %5657 = vdwg.mxu0
        %5658 = vmatprep.subr.mxu0 0.0
        %5659 = vmatpush1.msra.mxu0 0.0
        %5660 = vmatprep.subr.mxu0 0.0
        %5661 = vmatpush1.msra.mxu0 0.0
        %5662 = vmatprep.subr.mxu0 0.0
        %5663 = vmatpush1.msra.mxu0 0.0
        %5664 = vmatprep.subr.mxu0 0.0
        %5665 = vmatpush1.msra.mxu0 0.0
        %5666 = vmatprep.subr.mxu0 %v5576
        %5667 = vmatpush1.msra.mxu0 %v5575
        %5668 = vmatprep.subr.mxu0 %v5568
        %5669 = vmatpush1.msra.mxu0 %v5567
        %5670 = vmatprep.subr.mxu0 %v5560
        %5671 = vmatpush1.msra.mxu0 %v5559
        %5672 = vmatprep.subr.mxu0 %v5552
        %5673 = vmatpush1.msra.mxu0 %v5551
        %5674 = vmatprep.subr.mxu0 %v5544
        %5675 = vmatpush1.msra.mxu0 %v5543
        %5676 = vmatprep.subr.mxu0 %v5536
        %5677 = vmatpush1.msra.mxu0 %v5535
        %5678 = vmatprep.subr.mxu0 %v5528
        %5679 = vmatpush1.msra.mxu0 %v5527
        %5680 = vmatprep.subr.mxu0 %v5520
        %5681 = vmatpush1.msra.mxu0 %v5519
        %5682 = vmatprep.subr.mxu0 %v5512
        %5683 = vmatpush1.msra.mxu0 %v5511
        %5684 = vmatprep.subr.mxu0 %v5504
        %5685 = vmatpush1.msra.mxu0 %v5503
        %5686 = vmatprep.subr.mxu0 %v5496
        %5687 = vmatpush1.msra.mxu0 %v5495
        %5688 = vmatprep.subr.mxu0 %v5488
        %5689 = vmatpush1.msra.mxu0 %v5487
        %5690 = vmatprep.subr.mxu0 0.0
        %5691 = vmatpush2.msra.mxu0 0.0
        %5692 = vmatprep.subr.mxu0 0.0
        %5693 = vmatpush2.msra.mxu0 0.0
        %5694 = vmatprep.subr.mxu0 0.0
        %5695 = vmatpush2.msra.mxu0 0.0
        %5696 = vmatprep.subr.mxu0 0.0
        %5697 = vmatpush2.msra.mxu0 0.0
        %5698 = vmatprep.subr.mxu0 0.0
        %5699 = vmatpush2.msra.mxu0 0.0
        %5700 = vmatprep.subr.mxu0 0.0
        %5701 = vmatpush2.msra.mxu0 0.0
        %5702 = vmatprep.subr.mxu0 0.0
        %5703 = vmatpush2.msra.mxu0 0.0
        %5704 = vmatprep.subr.mxu0 0.0
        %5705 = vmatpush2.msra.mxu0 0.0
        %5706 = vmatprep.subr.mxu0 0.0
        %5707 = vmatpush2.msra.mxu0 0.0
        %5708 = vmatprep.subr.mxu0 0.0
        %5709 = vmatpush2.msra.mxu0 0.0
        %5710 = vmatprep.subr.mxu0 0.0
        %5711 = vmatpush2.msra.mxu0 0.0
        %5712 = vmatprep.subr.mxu0 0.0
        %5713 = vmatpush2.msra.mxu0 0.0
        %5714 = vmatprep.subr.mxu0 0.0
        %5715 = vmatpush2.msra.mxu0 0.0
        %5716 = vmatprep.subr.mxu0 0.0
        %5717 = vmatpush2.msra.mxu0 0.0
        %5718 = vmatprep.subr.mxu0 0.0
        %5719 = vmatpush2.msra.mxu0 0.0
        %5720 = vmatprep.subr.mxu0 0.0
        %5721 = vmatpush2.msra.mxu0 0.0
        %5722 = vmatprep.mubr.f32.mxu0 0.0
        %5723 = vmatmul.mubr.f32.gmra.mxu0 %v2550
        %v5724 = vpop.f32.mrf.mxu0
        %v5725 = vadd.f32 0.0, %v5724
        %v5726 = vpop.f32.mrf.mxu0
        %v5727 = vadd.f32 0.0, %v5726
        %5728 = vmatprep.mubr.f32.mxu0 0.0
        %5729 = vmatmul.mubr.f32.gmra.mxu0 %v2553
        %v5730 = vpop.f32.mrf.mxu0
        %v5731 = vadd.f32 0.0, %v5730
        %v5732 = vpop.f32.mrf.mxu0
        %v5733 = vadd.f32 0.0, %v5732
        %5734 = vdwg.mxu0
        %5735 = vmatprep.subr.mxu0 0.0
        %5736 = vmatpush1.msra.mxu0 0.0
        %5737 = vmatprep.subr.mxu0 0.0
        %5738 = vmatpush1.msra.mxu0 0.0
        %5739 = vmatprep.subr.mxu0 0.0
        %5740 = vmatpush1.msra.mxu0 0.0
        %5741 = vmatprep.subr.mxu0 0.0
        %5742 = vmatpush1.msra.mxu0 0.0
        %5743 = vmatprep.subr.mxu0 %v5578
        %5744 = vmatpush1.msra.mxu0 %v5577
        %5745 = vmatprep.subr.mxu0 %v5570
        %5746 = vmatpush1.msra.mxu0 %v5569
        %5747 = vmatprep.subr.mxu0 %v5562
        %5748 = vmatpush1.msra.mxu0 %v5561
        %5749 = vmatprep.subr.mxu0 %v5554
        %5750 = vmatpush1.msra.mxu0 %v5553
        %5751 = vmatprep.subr.mxu0 %v5546
        %5752 = vmatpush1.msra.mxu0 %v5545
        %5753 = vmatprep.subr.mxu0 %v5538
        %5754 = vmatpush1.msra.mxu0 %v5537
        %5755 = vmatprep.subr.mxu0 %v5530
        %5756 = vmatpush1.msra.mxu0 %v5529
        %5757 = vmatprep.subr.mxu0 %v5522
        %5758 = vmatpush1.msra.mxu0 %v5521
        %5759 = vmatprep.subr.mxu0 %v5514
        %5760 = vmatpush1.msra.mxu0 %v5513
        %5761 = vmatprep.subr.mxu0 %v5506
        %5762 = vmatpush1.msra.mxu0 %v5505
        %5763 = vmatprep.subr.mxu0 %v5498
        %5764 = vmatpush1.msra.mxu0 %v5497
        %5765 = vmatprep.subr.mxu0 %v5490
        %5766 = vmatpush1.msra.mxu0 %v5489
        %5767 = vmatprep.subr.mxu0 0.0
        %5768 = vmatpush2.msra.mxu0 0.0
        %5769 = vmatprep.subr.mxu0 0.0
        %5770 = vmatpush2.msra.mxu0 0.0
        %5771 = vmatprep.subr.mxu0 0.0
        %5772 = vmatpush2.msra.mxu0 0.0
        %5773 = vmatprep.subr.mxu0 0.0
        %5774 = vmatpush2.msra.mxu0 0.0
        %5775 = vmatprep.subr.mxu0 0.0
        %5776 = vmatpush2.msra.mxu0 0.0
        %5777 = vmatprep.subr.mxu0 0.0
        %5778 = vmatpush2.msra.mxu0 0.0
        %5779 = vmatprep.subr.mxu0 0.0
        %5780 = vmatpush2.msra.mxu0 0.0
        %5781 = vmatprep.subr.mxu0 0.0
        %5782 = vmatpush2.msra.mxu0 0.0
        %5783 = vmatprep.subr.mxu0 0.0
        %5784 = vmatpush2.msra.mxu0 0.0
        %5785 = vmatprep.subr.mxu0 0.0
        %5786 = vmatpush2.msra.mxu0 0.0
        %5787 = vmatprep.subr.mxu0 0.0
        %5788 = vmatpush2.msra.mxu0 0.0
        %5789 = vmatprep.subr.mxu0 0.0
        %5790 = vmatpush2.msra.mxu0 0.0
        %5791 = vmatprep.subr.mxu0 0.0
        %5792 = vmatpush2.msra.mxu0 0.0
        %5793 = vmatprep.subr.mxu0 0.0
        %5794 = vmatpush2.msra.mxu0 0.0
        %5795 = vmatprep.subr.mxu0 0.0
        %5796 = vmatpush2.msra.mxu0 0.0
        %5797 = vmatprep.subr.mxu0 0.0
        %5798 = vmatpush2.msra.mxu0 0.0
        %5799 = vmatprep.mubr.f32.mxu0 0.0
        %5800 = vmatmul.mubr.f32.gmra.mxu0 %v2550
        %v5801 = vpop.f32.mrf.mxu0
        %v5802 = vadd.f32 0.0, %v5801
        %v5803 = vpop.f32.mrf.mxu0
        %v5804 = vadd.f32 0.0, %v5803
        %5805 = vmatprep.mubr.f32.mxu0 0.0
        %5806 = vmatmul.mubr.f32.gmra.mxu0 %v2553
        %v5807 = vpop.f32.mrf.mxu0
        %v5808 = vadd.f32 0.0, %v5807
        %v5809 = vpop.f32.mrf.mxu0
        %v5810 = vadd.f32 0.0, %v5809
        %5811 = vdwg.mxu0
        %5812 = vmatprep.subr.mxu0 0.0
        %5813 = vmatpush1.msra.mxu0 0.0
        %5814 = vmatprep.subr.mxu0 0.0
        %5815 = vmatpush1.msra.mxu0 0.0
        %5816 = vmatprep.subr.mxu0 0.0
        %5817 = vmatpush1.msra.mxu0 0.0
        %5818 = vmatprep.subr.mxu0 0.0
        %5819 = vmatpush1.msra.mxu0 0.0
        %5820 = vmatprep.subr.mxu0 %v5580
        %5821 = vmatpush1.msra.mxu0 %v5579
        %5822 = vmatprep.subr.mxu0 %v5572
        %5823 = vmatpush1.msra.mxu0 %v5571
        %5824 = vmatprep.subr.mxu0 %v5564
        %5825 = vmatpush1.msra.mxu0 %v5563
        %5826 = vmatprep.subr.mxu0 %v5556
        %5827 = vmatpush1.msra.mxu0 %v5555
        %5828 = vmatprep.subr.mxu0 %v5548
        %5829 = vmatpush1.msra.mxu0 %v5547
        %5830 = vmatprep.subr.mxu0 %v5540
        %5831 = vmatpush1.msra.mxu0 %v5539
        %5832 = vmatprep.subr.mxu0 %v5532
        %5833 = vmatpush1.msra.mxu0 %v5531
        %5834 = vmatprep.subr.mxu0 %v5524
        %5835 = vmatpush1.msra.mxu0 %v5523
        %5836 = vmatprep.subr.mxu0 %v5516
        %5837 = vmatpush1.msra.mxu0 %v5515
        %5838 = vmatprep.subr.mxu0 %v5508
        %5839 = vmatpush1.msra.mxu0 %v5507
        %5840 = vmatprep.subr.mxu0 %v5500
        %5841 = vmatpush1.msra.mxu0 %v5499
        %5842 = vmatprep.subr.mxu0 %v5492
        %5843 = vmatpush1.msra.mxu0 %v5491
        %5844 = vmatprep.subr.mxu0 0.0
        %5845 = vmatpush2.msra.mxu0 0.0
        %5846 = vmatprep.subr.mxu0 0.0
        %5847 = vmatpush2.msra.mxu0 0.0
        %5848 = vmatprep.subr.mxu0 0.0
        %5849 = vmatpush2.msra.mxu0 0.0
        %5850 = vmatprep.subr.mxu0 0.0
        %5851 = vmatpush2.msra.mxu0 0.0
        %5852 = vmatprep.subr.mxu0 0.0
        %5853 = vmatpush2.msra.mxu0 0.0
        %5854 = vmatprep.subr.mxu0 0.0
        %5855 = vmatpush2.msra.mxu0 0.0
        %5856 = vmatprep.subr.mxu0 0.0
        %5857 = vmatpush2.msra.mxu0 0.0
        %5858 = vmatprep.subr.mxu0 0.0
        %5859 = vmatpush2.msra.mxu0 0.0
        %5860 = vmatprep.subr.mxu0 0.0
        %5861 = vmatpush2.msra.mxu0 0.0
        %5862 = vmatprep.subr.mxu0 0.0
        %5863 = vmatpush2.msra.mxu0 0.0
        %5864 = vmatprep.subr.mxu0 0.0
        %5865 = vmatpush2.msra.mxu0 0.0
        %5866 = vmatprep.subr.mxu0 0.0
        %5867 = vmatpush2.msra.mxu0 0.0
        %5868 = vmatprep.subr.mxu0 0.0
        %5869 = vmatpush2.msra.mxu0 0.0
        %5870 = vmatprep.subr.mxu0 0.0
        %5871 = vmatpush2.msra.mxu0 0.0
        %5872 = vmatprep.subr.mxu0 0.0
        %5873 = vmatpush2.msra.mxu0 0.0
        %5874 = vmatprep.subr.mxu0 0.0
        %5875 = vmatpush2.msra.mxu0 0.0
        %5876 = vmatprep.mubr.f32.mxu0 0.0
        %5877 = vmatmul.mubr.f32.gmra.mxu0 %v2550
        %v5878 = vpop.f32.mrf.mxu0
        %v5879 = vadd.f32 0.0, %v5878
        %v5880 = vpop.f32.mrf.mxu0
        %v5881 = vadd.f32 0.0, %v5880
        %5882 = vmatprep.mubr.f32.mxu0 0.0
        %5883 = vmatmul.mubr.f32.gmra.mxu0 %v2553
        %v5884 = vpop.f32.mrf.mxu0
        %v5885 = vadd.f32 0.0, %v5884
        %v5886 = vpop.f32.mrf.mxu0
        %v5887 = vadd.f32 0.0, %v5886
        %5888 = vdwg.mxu0
        %v5889 = vadd.f32 %v2622, %v5648
        %v5890 = vadd.f32 %v2624, %v5650
        %v5891 = vadd.f32 %v2699, %v5725
        %v5892 = vadd.f32 %v2701, %v5727
        %v5893 = vadd.f32 %v2776, %v5802
        %v5894 = vadd.f32 %v2778, %v5804
        %v5895 = vadd.f32 %v2853, %v5879
        %v5896 = vadd.f32 %v2855, %v5881
        %v5897 = vadd.f32 %v2628, %v5654
        %v5898 = vadd.f32 %v2630, %v5656
        %v5899 = vadd.f32 %v2705, %v5731
        %v5900 = vadd.f32 %v2707, %v5733
        %v5901 = vadd.f32 %v2782, %v5808
        %v5902 = vadd.f32 %v2784, %v5810
        %v5903 = vadd.f32 %v2859, %v5885
        %v5904 = vadd.f32 %v2861, %v5887
        %v5905 = vsel %vm2863, %v5897, -inf
        %v5906 = vmax.f32 %v5889, %v5905
        %v5907 = vrot.slane %v5906, 4
        %v5908 = vmax.f32 %v5906, %v5907
        %v5909 = vrot.slane %v5908, 2
        %v5910 = vmax.f32 %v5908, %v5909
        %v5911 = vrot.slane %v5910, 1
        %v5912 = vmax.f32 %v5910, %v5911
        %v5913 = vsel %vm2863, %v5898, -inf
        %v5914 = vmax.f32 %v5890, %v5913
        %v5915 = vrot.slane %v5914, 4
        %v5916 = vmax.f32 %v5914, %v5915
        %v5917 = vrot.slane %v5916, 2
        %v5918 = vmax.f32 %v5916, %v5917
        %v5919 = vrot.slane %v5918, 1
        %v5920 = vmax.f32 %v5918, %v5919
        %v5921 = vsel %vm2863, %v5899, -inf
        %v5922 = vmax.f32 %v5891, %v5921
        %v5923 = vrot.slane %v5922, 4
        %v5924 = vmax.f32 %v5922, %v5923
        %v5925 = vrot.slane %v5924, 2
        %v5926 = vmax.f32 %v5924, %v5925
        %v5927 = vrot.slane %v5926, 1
        %v5928 = vmax.f32 %v5926, %v5927
        %v5929 = vsel %vm2863, %v5900, -inf
        %v5930 = vmax.f32 %v5892, %v5929
        %v5931 = vrot.slane %v5930, 4
        %v5932 = vmax.f32 %v5930, %v5931
        %v5933 = vrot.slane %v5932, 2
        %v5934 = vmax.f32 %v5932, %v5933
        %v5935 = vrot.slane %v5934, 1
        %v5936 = vmax.f32 %v5934, %v5935
        %v5937 = vsel %vm2863, %v5901, -inf
        %v5938 = vmax.f32 %v5893, %v5937
        %v5939 = vrot.slane %v5938, 4
        %v5940 = vmax.f32 %v5938, %v5939
        %v5941 = vrot.slane %v5940, 2
        %v5942 = vmax.f32 %v5940, %v5941
        %v5943 = vrot.slane %v5942, 1
        %v5944 = vmax.f32 %v5942, %v5943
        %v5945 = vsel %vm2863, %v5902, -inf
        %v5946 = vmax.f32 %v5894, %v5945
        %v5947 = vrot.slane %v5946, 4
        %v5948 = vmax.f32 %v5946, %v5947
        %v5949 = vrot.slane %v5948, 2
        %v5950 = vmax.f32 %v5948, %v5949
        %v5951 = vrot.slane %v5950, 1
        %v5952 = vmax.f32 %v5950, %v5951
        %v5953 = vsel %vm2863, %v5903, -inf
        %v5954 = vmax.f32 %v5895, %v5953
        %v5955 = vrot.slane %v5954, 4
        %v5956 = vmax.f32 %v5954, %v5955
        %v5957 = vrot.slane %v5956, 2
        %v5958 = vmax.f32 %v5956, %v5957
        %v5959 = vrot.slane %v5958, 1
        %v5960 = vmax.f32 %v5958, %v5959
        %v5961 = vsel %vm2863, %v5904, -inf
        %v5962 = vmax.f32 %v5896, %v5961
        %v5963 = vrot.slane %v5962, 4
        %v5964 = vmax.f32 %v5962, %v5963
        %v5965 = vrot.slane %v5964, 2
        %v5966 = vmax.f32 %v5964, %v5965
        %v5967 = vrot.slane %v5966, 1
        %v5968 = vmax.f32 %v5966, %v5967
        %v5969 = vsub.f32 %v5889, %v5912
        %v5970 = vsub.f32 %v5890, %v5920
        %v5971 = vsub.f32 %v5891, %v5928
        %v5972 = vsub.f32 %v5892, %v5936
        %v5973 = vsub.f32 %v5893, %v5944
        %v5974 = vsub.f32 %v5894, %v5952
        %v5975 = vsub.f32 %v5895, %v5960
        %v5976 = vsub.f32 %v5896, %v5968
        %v5977 = vsub.f32 %v5897, %v5912
        %v5978 = vsub.f32 %v5898, %v5920
        %v5979 = vsub.f32 %v5899, %v5928
        %v5980 = vsub.f32 %v5900, %v5936
        %v5981 = vsub.f32 %v5901, %v5944
        %v5982 = vsub.f32 %v5902, %v5952
        %v5983 = vsub.f32 %v5903, %v5960
        %v5984 = vsub.f32 %v5904, %v5968
        %v5985 = vmul.f32 %v5969, 1.442695
        %v5986 = vpow.pop %v5985
        %v5987 = vmul.f32 %v5970, 1.442695
        %v5988 = vpow.pop %v5987
        %v5989 = vmul.f32 %v5971, 1.442695
        %v5990 = vpow.pop %v5989
        %v5991 = vmul.f32 %v5972, 1.442695
        %v5992 = vpow.pop %v5991
        %v5993 = vmul.f32 %v5973, 1.442695
        %v5994 = vpow.pop %v5993
        %v5995 = vmul.f32 %v5974, 1.442695
        %v5996 = vpow.pop %v5995
        %v5997 = vmul.f32 %v5975, 1.442695
        %v5998 = vpow.pop %v5997
        %v5999 = vmul.f32 %v5976, 1.442695
        %v6000 = vpow.pop %v5999
        %v6001 = vmul.f32 %v5977, 1.442695
        %v6002 = vpow.pop %v6001
        %v6003 = vmul.f32 %v5978, 1.442695
        %v6004 = vpow.pop %v6003
        %v6005 = vmul.f32 %v5979, 1.442695
        %v6006 = vpow.pop %v6005
        %v6007 = vmul.f32 %v5980, 1.442695
        %v6008 = vpow.pop %v6007
        %v6009 = vmul.f32 %v5981, 1.442695
        %v6010 = vpow.pop %v6009
        %v6011 = vmul.f32 %v5982, 1.442695
        %v6012 = vpow.pop %v6011
        %v6013 = vmul.f32 %v5983, 1.442695
        %v6014 = vpow.pop %v6013
        %v6015 = vmul.f32 %v5984, 1.442695
        %v6016 = vpow.pop %v6015
        %v6018 = vsel %vm2863, %v6002, 0
        %v6021 = vsel %vm2863, %v6004, 0
        %v6024 = vsel %vm2863, %v6006, 0
        %v6027 = vsel %vm2863, %v6008, 0
        %v6030 = vsel %vm2863, %v6010, 0
        %v6033 = vsel %vm2863, %v6012, 0
        %v6036 = vsel %vm2863, %v6014, 0
        %v6039 = vsel %vm2863, %v6016, 0
        %6041 = vmatprep.subr.mxu0 0.0
        %6042 = vmatpush1.msra.mxu0 0.0
        %6043 = vmatprep.subr.mxu0 0.0
        %6044 = vmatpush1.msra.mxu0 0.0
        %6045 = vmatprep.subr.mxu0 0.0
        %6046 = vmatpush1.msra.mxu0 0.0
        %6047 = vmatprep.subr.mxu0 0.0
        %6048 = vmatpush1.msra.mxu0 0.0
        %6049 = vmatprep.subr.mxu0 0.0
        %6050 = vmatpush1.msra.mxu0 0.0
        %6051 = vmatprep.subr.mxu0 0.0
        %6052 = vmatpush1.msra.mxu0 0.0
        %6053 = vmatprep.subr.mxu0 0.0
        %6054 = vmatpush1.msra.mxu0 0.0
        %6055 = vmatprep.subr.mxu0 0.0
        %6056 = vmatpush1.msra.mxu0 0.0
        %6057 = vmatprep.subr.mxu0 0.0
        %6058 = vmatpush1.msra.mxu0 0.0
        %6059 = vmatprep.subr.mxu0 0.0
        %6060 = vmatpush1.msra.mxu0 0.0
        %6061 = vmatprep.subr.mxu0 0.0
        %6062 = vmatpush1.msra.mxu0 0.0
        %6063 = vmatprep.subr.mxu0 0.0
        %6064 = vmatpush1.msra.mxu0 0.0
        %6065 = vmatprep.subr.mxu0 0.0
        %6066 = vmatpush1.msra.mxu0 0.0
        %6067 = vmatprep.subr.mxu0 0.0
        %6068 = vmatpush1.msra.mxu0 0.0
        %6069 = vmatprep.subr.mxu0 %v6021
        %6070 = vmatpush1.msra.mxu0 %v6018
        %6071 = vmatprep.subr.mxu0 %v5988
        %6072 = vmatpush1.msra.mxu0 %v5986
        %6073 = vmatprep.subr.mxu0 0.0
        %6074 = vmatpush2.msra.mxu0 0.0
        %6075 = vmatprep.subr.mxu0 0.0
        %6076 = vmatpush2.msra.mxu0 0.0
        %6077 = vmatprep.subr.mxu0 0.0
        %6078 = vmatpush2.msra.mxu0 0.0
        %6079 = vmatprep.subr.mxu0 0.0
        %6080 = vmatpush2.msra.mxu0 0.0
        %6081 = vmatprep.subr.mxu0 0.0
        %6082 = vmatpush2.msra.mxu0 0.0
        %6083 = vmatprep.subr.mxu0 0.0
        %6084 = vmatpush2.msra.mxu0 0.0
        %6085 = vmatprep.subr.mxu0 0.0
        %6086 = vmatpush2.msra.mxu0 0.0
        %6087 = vmatprep.subr.mxu0 0.0
        %6088 = vmatpush2.msra.mxu0 0.0
        %6089 = vmatprep.subr.mxu0 0.0
        %6090 = vmatpush2.msra.mxu0 0.0
        %6091 = vmatprep.subr.mxu0 0.0
        %6092 = vmatpush2.msra.mxu0 0.0
        %6093 = vmatprep.subr.mxu0 0.0
        %6094 = vmatpush2.msra.mxu0 0.0
        %6095 = vmatprep.subr.mxu0 0.0
        %6096 = vmatpush2.msra.mxu0 0.0
        %6097 = vmatprep.subr.mxu0 0.0
        %6098 = vmatpush2.msra.mxu0 0.0
        %6099 = vmatprep.subr.mxu0 0.0
        %6100 = vmatpush2.msra.mxu0 0.0
        %6101 = vmatprep.subr.mxu0 0.0
        %6102 = vmatpush2.msra.mxu0 0.0
        %6103 = vmatprep.subr.mxu0 0.0
        %6104 = vmatpush2.msra.mxu0 0.0
        %6105 = vmatprep.mubr.f32.mxu0 0.0
        %6106 = vmatmul.mubr.f32.gmra.mxu0 %v2980
        %v6107 = vpop.f32.mrf.mxu0
        %v6108 = vadd.f32 0.0, %v6107
        %v6109 = vpop.f32.mrf.mxu0
        %v6110 = vadd.f32 0.0, %v6109
        %6111 = vmatprep.mubr.f32.mxu0 0.0
        %6112 = vmatmul.mubr.f32.gmra.mxu0 %v2983
        %v6113 = vpop.f32.mrf.mxu0
        %v6114 = vadd.f32 0.0, %v6113
        %v6115 = vpop.f32.mrf.mxu0
        %v6116 = vadd.f32 0.0, %v6115
        %6117 = vdwg.mxu0
        %6118 = vmatprep.subr.mxu0 0.0
        %6119 = vmatpush1.msra.mxu0 0.0
        %6120 = vmatprep.subr.mxu0 0.0
        %6121 = vmatpush1.msra.mxu0 0.0
        %6122 = vmatprep.subr.mxu0 0.0
        %6123 = vmatpush1.msra.mxu0 0.0
        %6124 = vmatprep.subr.mxu0 0.0
        %6125 = vmatpush1.msra.mxu0 0.0
        %6126 = vmatprep.subr.mxu0 0.0
        %6127 = vmatpush1.msra.mxu0 0.0
        %6128 = vmatprep.subr.mxu0 0.0
        %6129 = vmatpush1.msra.mxu0 0.0
        %6130 = vmatprep.subr.mxu0 0.0
        %6131 = vmatpush1.msra.mxu0 0.0
        %6132 = vmatprep.subr.mxu0 0.0
        %6133 = vmatpush1.msra.mxu0 0.0
        %6134 = vmatprep.subr.mxu0 0.0
        %6135 = vmatpush1.msra.mxu0 0.0
        %6136 = vmatprep.subr.mxu0 0.0
        %6137 = vmatpush1.msra.mxu0 0.0
        %6138 = vmatprep.subr.mxu0 0.0
        %6139 = vmatpush1.msra.mxu0 0.0
        %6140 = vmatprep.subr.mxu0 0.0
        %6141 = vmatpush1.msra.mxu0 0.0
        %6142 = vmatprep.subr.mxu0 0.0
        %6143 = vmatpush1.msra.mxu0 0.0
        %6144 = vmatprep.subr.mxu0 0.0
        %6145 = vmatpush1.msra.mxu0 0.0
        %6146 = vmatprep.subr.mxu0 %v6027
        %6147 = vmatpush1.msra.mxu0 %v6024
        %6148 = vmatprep.subr.mxu0 %v5992
        %6149 = vmatpush1.msra.mxu0 %v5990
        %6150 = vmatprep.subr.mxu0 0.0
        %6151 = vmatpush2.msra.mxu0 0.0
        %6152 = vmatprep.subr.mxu0 0.0
        %6153 = vmatpush2.msra.mxu0 0.0
        %6154 = vmatprep.subr.mxu0 0.0
        %6155 = vmatpush2.msra.mxu0 0.0
        %6156 = vmatprep.subr.mxu0 0.0
        %6157 = vmatpush2.msra.mxu0 0.0
        %6158 = vmatprep.subr.mxu0 0.0
        %6159 = vmatpush2.msra.mxu0 0.0
        %6160 = vmatprep.subr.mxu0 0.0
        %6161 = vmatpush2.msra.mxu0 0.0
        %6162 = vmatprep.subr.mxu0 0.0
        %6163 = vmatpush2.msra.mxu0 0.0
        %6164 = vmatprep.subr.mxu0 0.0
        %6165 = vmatpush2.msra.mxu0 0.0
        %6166 = vmatprep.subr.mxu0 0.0
        %6167 = vmatpush2.msra.mxu0 0.0
        %6168 = vmatprep.subr.mxu0 0.0
        %6169 = vmatpush2.msra.mxu0 0.0
        %6170 = vmatprep.subr.mxu0 0.0
        %6171 = vmatpush2.msra.mxu0 0.0
        %6172 = vmatprep.subr.mxu0 0.0
        %6173 = vmatpush2.msra.mxu0 0.0
        %6174 = vmatprep.subr.mxu0 0.0
        %6175 = vmatpush2.msra.mxu0 0.0
        %6176 = vmatprep.subr.mxu0 0.0
        %6177 = vmatpush2.msra.mxu0 0.0
        %6178 = vmatprep.subr.mxu0 0.0
        %6179 = vmatpush2.msra.mxu0 0.0
        %6180 = vmatprep.subr.mxu0 0.0
        %6181 = vmatpush2.msra.mxu0 0.0
        %6182 = vmatprep.mubr.f32.mxu0 0.0
        %6183 = vmatmul.mubr.f32.gmra.mxu0 %v2980
        %v6184 = vpop.f32.mrf.mxu0
        %v6185 = vadd.f32 0.0, %v6184
        %v6186 = vpop.f32.mrf.mxu0
        %v6187 = vadd.f32 0.0, %v6186
        %6188 = vmatprep.mubr.f32.mxu0 0.0
        %6189 = vmatmul.mubr.f32.gmra.mxu0 %v2983
        %v6190 = vpop.f32.mrf.mxu0
        %v6191 = vadd.f32 0.0, %v6190
        %v6192 = vpop.f32.mrf.mxu0
        %v6193 = vadd.f32 0.0, %v6192
        %6194 = vdwg.mxu0
        %6195 = vmatprep.subr.mxu0 0.0
        %6196 = vmatpush1.msra.mxu0 0.0
        %6197 = vmatprep.subr.mxu0 0.0
        %6198 = vmatpush1.msra.mxu0 0.0
        %6199 = vmatprep.subr.mxu0 0.0
        %6200 = vmatpush1.msra.mxu0 0.0
        %6201 = vmatprep.subr.mxu0 0.0
        %6202 = vmatpush1.msra.mxu0 0.0
        %6203 = vmatprep.subr.mxu0 0.0
        %6204 = vmatpush1.msra.mxu0 0.0
        %6205 = vmatprep.subr.mxu0 0.0
        %6206 = vmatpush1.msra.mxu0 0.0
        %6207 = vmatprep.subr.mxu0 0.0
        %6208 = vmatpush1.msra.mxu0 0.0
        %6209 = vmatprep.subr.mxu0 0.0
        %6210 = vmatpush1.msra.mxu0 0.0
        %6211 = vmatprep.subr.mxu0 0.0
        %6212 = vmatpush1.msra.mxu0 0.0
        %6213 = vmatprep.subr.mxu0 0.0
        %6214 = vmatpush1.msra.mxu0 0.0
        %6215 = vmatprep.subr.mxu0 0.0
        %6216 = vmatpush1.msra.mxu0 0.0
        %6217 = vmatprep.subr.mxu0 0.0
        %6218 = vmatpush1.msra.mxu0 0.0
        %6219 = vmatprep.subr.mxu0 0.0
        %6220 = vmatpush1.msra.mxu0 0.0
        %6221 = vmatprep.subr.mxu0 0.0
        %6222 = vmatpush1.msra.mxu0 0.0
        %6223 = vmatprep.subr.mxu0 %v6033
        %6224 = vmatpush1.msra.mxu0 %v6030
        %6225 = vmatprep.subr.mxu0 %v5996
        %6226 = vmatpush1.msra.mxu0 %v5994
        %6227 = vmatprep.subr.mxu0 0.0
        %6228 = vmatpush2.msra.mxu0 0.0
        %6229 = vmatprep.subr.mxu0 0.0
        %6230 = vmatpush2.msra.mxu0 0.0
        %6231 = vmatprep.subr.mxu0 0.0
        %6232 = vmatpush2.msra.mxu0 0.0
        %6233 = vmatprep.subr.mxu0 0.0
        %6234 = vmatpush2.msra.mxu0 0.0
        %6235 = vmatprep.subr.mxu0 0.0
        %6236 = vmatpush2.msra.mxu0 0.0
        %6237 = vmatprep.subr.mxu0 0.0
        %6238 = vmatpush2.msra.mxu0 0.0
        %6239 = vmatprep.subr.mxu0 0.0
        %6240 = vmatpush2.msra.mxu0 0.0
        %6241 = vmatprep.subr.mxu0 0.0
        %6242 = vmatpush2.msra.mxu0 0.0
        %6243 = vmatprep.subr.mxu0 0.0
        %6244 = vmatpush2.msra.mxu0 0.0
        %6245 = vmatprep.subr.mxu0 0.0
        %6246 = vmatpush2.msra.mxu0 0.0
        %6247 = vmatprep.subr.mxu0 0.0
        %6248 = vmatpush2.msra.mxu0 0.0
        %6249 = vmatprep.subr.mxu0 0.0
        %6250 = vmatpush2.msra.mxu0 0.0
        %6251 = vmatprep.subr.mxu0 0.0
        %6252 = vmatpush2.msra.mxu0 0.0
        %6253 = vmatprep.subr.mxu0 0.0
        %6254 = vmatpush2.msra.mxu0 0.0
        %6255 = vmatprep.subr.mxu0 0.0
        %6256 = vmatpush2.msra.mxu0 0.0
        %6257 = vmatprep.subr.mxu0 0.0
        %6258 = vmatpush2.msra.mxu0 0.0
        %6259 = vmatprep.mubr.f32.mxu0 0.0
        %6260 = vmatmul.mubr.f32.gmra.mxu0 %v2980
        %v6261 = vpop.f32.mrf.mxu0
        %v6262 = vadd.f32 0.0, %v6261
        %v6263 = vpop.f32.mrf.mxu0
        %v6264 = vadd.f32 0.0, %v6263
        %6265 = vmatprep.mubr.f32.mxu0 0.0
        %6266 = vmatmul.mubr.f32.gmra.mxu0 %v2983
        %v6267 = vpop.f32.mrf.mxu0
        %v6268 = vadd.f32 0.0, %v6267
        %v6269 = vpop.f32.mrf.mxu0
        %v6270 = vadd.f32 0.0, %v6269
        %6271 = vdwg.mxu0
        %6272 = vmatprep.subr.mxu0 0.0
        %6273 = vmatpush1.msra.mxu0 0.0
        %6274 = vmatprep.subr.mxu0 0.0
        %6275 = vmatpush1.msra.mxu0 0.0
        %6276 = vmatprep.subr.mxu0 0.0
        %6277 = vmatpush1.msra.mxu0 0.0
        %6278 = vmatprep.subr.mxu0 0.0
        %6279 = vmatpush1.msra.mxu0 0.0
        %6280 = vmatprep.subr.mxu0 0.0
        %6281 = vmatpush1.msra.mxu0 0.0
        %6282 = vmatprep.subr.mxu0 0.0
        %6283 = vmatpush1.msra.mxu0 0.0
        %6284 = vmatprep.subr.mxu0 0.0
        %6285 = vmatpush1.msra.mxu0 0.0
        %6286 = vmatprep.subr.mxu0 0.0
        %6287 = vmatpush1.msra.mxu0 0.0
        %6288 = vmatprep.subr.mxu0 0.0
        %6289 = vmatpush1.msra.mxu0 0.0
        %6290 = vmatprep.subr.mxu0 0.0
        %6291 = vmatpush1.msra.mxu0 0.0
        %6292 = vmatprep.subr.mxu0 0.0
        %6293 = vmatpush1.msra.mxu0 0.0
        %6294 = vmatprep.subr.mxu0 0.0
        %6295 = vmatpush1.msra.mxu0 0.0
        %6296 = vmatprep.subr.mxu0 0.0
        %6297 = vmatpush1.msra.mxu0 0.0
        %6298 = vmatprep.subr.mxu0 0.0
        %6299 = vmatpush1.msra.mxu0 0.0
        %6300 = vmatprep.subr.mxu0 %v6039
        %6301 = vmatpush1.msra.mxu0 %v6036
        %6302 = vmatprep.subr.mxu0 %v6000
        %6303 = vmatpush1.msra.mxu0 %v5998
        %6304 = vmatprep.subr.mxu0 0.0
        %6305 = vmatpush2.msra.mxu0 0.0
        %6306 = vmatprep.subr.mxu0 0.0
        %6307 = vmatpush2.msra.mxu0 0.0
        %6308 = vmatprep.subr.mxu0 0.0
        %6309 = vmatpush2.msra.mxu0 0.0
        %6310 = vmatprep.subr.mxu0 0.0
        %6311 = vmatpush2.msra.mxu0 0.0
        %6312 = vmatprep.subr.mxu0 0.0
        %6313 = vmatpush2.msra.mxu0 0.0
        %6314 = vmatprep.subr.mxu0 0.0
        %6315 = vmatpush2.msra.mxu0 0.0
        %6316 = vmatprep.subr.mxu0 0.0
        %6317 = vmatpush2.msra.mxu0 0.0
        %6318 = vmatprep.subr.mxu0 0.0
        %6319 = vmatpush2.msra.mxu0 0.0
        %6320 = vmatprep.subr.mxu0 0.0
        %6321 = vmatpush2.msra.mxu0 0.0
        %6322 = vmatprep.subr.mxu0 0.0
        %6323 = vmatpush2.msra.mxu0 0.0
        %6324 = vmatprep.subr.mxu0 0.0
        %6325 = vmatpush2.msra.mxu0 0.0
        %6326 = vmatprep.subr.mxu0 0.0
        %6327 = vmatpush2.msra.mxu0 0.0
        %6328 = vmatprep.subr.mxu0 0.0
        %6329 = vmatpush2.msra.mxu0 0.0
        %6330 = vmatprep.subr.mxu0 0.0
        %6331 = vmatpush2.msra.mxu0 0.0
        %6332 = vmatprep.subr.mxu0 0.0
        %6333 = vmatpush2.msra.mxu0 0.0
        %6334 = vmatprep.subr.mxu0 0.0
        %6335 = vmatpush2.msra.mxu0 0.0
        %6336 = vmatprep.mubr.f32.mxu0 0.0
        %6337 = vmatmul.mubr.f32.gmra.mxu0 %v2980
        %v6338 = vpop.f32.mrf.mxu0
        %v6339 = vadd.f32 0.0, %v6338
        %v6340 = vpop.f32.mrf.mxu0
        %v6341 = vadd.f32 0.0, %v6340
        %6342 = vmatprep.mubr.f32.mxu0 0.0
        %6343 = vmatmul.mubr.f32.gmra.mxu0 %v2983
        %v6344 = vpop.f32.mrf.mxu0
        %v6345 = vadd.f32 0.0, %v6344
        %v6346 = vpop.f32.mrf.mxu0
        %v6347 = vadd.f32 0.0, %v6346
        %6348 = vdwg.mxu0
        %v6349 = vmax.f32 %v6108, 1e-30
        %v6350 = vmax.f32 %v6110, 1e-30
        %v6351 = vmax.f32 %v6185, 1e-30
        %v6352 = vmax.f32 %v6187, 1e-30
        %v6353 = vmax.f32 %v6262, 1e-30
        %v6354 = vmax.f32 %v6264, 1e-30
        %v6355 = vmax.f32 %v6339, 1e-30
        %v6356 = vmax.f32 %v6341, 1e-30
        %v6357 = vmax.f32 %v6114, 1e-30
        %v6358 = vmax.f32 %v6116, 1e-30
        %v6359 = vmax.f32 %v6191, 1e-30
        %v6360 = vmax.f32 %v6193, 1e-30
        %v6361 = vmax.f32 %v6268, 1e-30
        %v6362 = vmax.f32 %v6270, 1e-30
        %v6363 = vmax.f32 %v6345, 1e-30
        %v6364 = vmax.f32 %v6347, 1e-30
        %v6365 = vrcp.pop %v6349
        %v6366 = vrcp.pop %v6350
        %v6367 = vrcp.pop %v6351
        %v6368 = vrcp.pop %v6352
        %v6369 = vrcp.pop %v6353
        %v6370 = vrcp.pop %v6354
        %v6371 = vrcp.pop %v6355
        %v6372 = vrcp.pop %v6356
        %v6373 = vrcp.pop %v6357
        %v6374 = vrcp.pop %v6358
        %v6375 = vrcp.pop %v6359
        %v6376 = vrcp.pop %v6360
        %v6377 = vrcp.pop %v6361
        %v6378 = vrcp.pop %v6362
        %v6379 = vrcp.pop %v6363
        %v6380 = vrcp.pop %v6364
        %v6381 = vmul.f32 %v5986, %v6365
        %v6382 = vmul.f32 %v5988, %v6366
        %v6383 = vmul.f32 %v5990, %v6367
        %v6384 = vmul.f32 %v5992, %v6368
        %v6385 = vmul.f32 %v5994, %v6369
        %v6386 = vmul.f32 %v5996, %v6370
        %v6387 = vmul.f32 %v5998, %v6371
        %v6388 = vmul.f32 %v6000, %v6372
        %v6389 = vmul.f32 %v6002, %v6373
        %v6390 = vmul.f32 %v6004, %v6374
        %v6391 = vmul.f32 %v6006, %v6375
        %v6392 = vmul.f32 %v6008, %v6376
        %v6393 = vmul.f32 %v6010, %v6377
        %v6394 = vmul.f32 %v6012, %v6378
        %v6395 = vmul.f32 %v6014, %v6379
        %v6396 = vmul.f32 %v6016, %v6380
        %v6398 = vsel %vm2863, %v6389, 0
        %v6401 = vsel %vm2863, %v6390, 0
        %v6404 = vsel %vm2863, %v6391, 0
        %v6407 = vsel %vm2863, %v6392, 0
        %v6410 = vsel %vm2863, %v6393, 0
        %v6413 = vsel %vm2863, %v6394, 0
        %v6416 = vsel %vm2863, %v6395, 0
        %v6419 = vsel %vm2863, %v6396, 0
        %6421 = vmatprep.subr.mxu0 0.0
        %6422 = vmatpush1.msra.mxu0 0.0
        %6423 = vmatprep.subr.mxu0 0.0
        %6424 = vmatpush1.msra.mxu0 0.0
        %6425 = vmatprep.subr.mxu0 0.0
        %6426 = vmatpush1.msra.mxu0 0.0
        %6427 = vmatprep.subr.mxu0 0.0
        %6428 = vmatpush1.msra.mxu0 0.0
        %6429 = vmatprep.subr.mxu0 0.0
        %6430 = vmatpush1.msra.mxu0 0.0
        %6431 = vmatprep.subr.mxu0 0.0
        %6432 = vmatpush1.msra.mxu0 0.0
        %6433 = vmatprep.subr.mxu0 0.0
        %6434 = vmatpush1.msra.mxu0 0.0
        %6435 = vmatprep.subr.mxu0 0.0
        %6436 = vmatpush1.msra.mxu0 0.0
        %6437 = vmatprep.subr.mxu0 0.0
        %6438 = vmatpush1.msra.mxu0 0.0
        %6439 = vmatprep.subr.mxu0 0.0
        %6440 = vmatpush1.msra.mxu0 0.0
        %6441 = vmatprep.subr.mxu0 0.0
        %6442 = vmatpush1.msra.mxu0 0.0
        %6443 = vmatprep.subr.mxu0 0.0
        %6444 = vmatpush1.msra.mxu0 0.0
        %6445 = vmatprep.subr.mxu0 0.0
        %6446 = vmatpush1.msra.mxu0 0.0
        %6447 = vmatprep.subr.mxu0 0.0
        %6448 = vmatpush1.msra.mxu0 0.0
        %6449 = vmatprep.subr.mxu0 %v6401
        %6450 = vmatpush1.msra.mxu0 %v6398
        %6451 = vmatprep.subr.mxu0 %v6382
        %6452 = vmatpush1.msra.mxu0 %v6381
        %6453 = vmatprep.subr.mxu0 0.0
        %6454 = vmatpush2.msra.mxu0 0.0
        %6455 = vmatprep.subr.mxu0 0.0
        %6456 = vmatpush2.msra.mxu0 0.0
        %6457 = vmatprep.subr.mxu0 0.0
        %6458 = vmatpush2.msra.mxu0 0.0
        %6459 = vmatprep.subr.mxu0 0.0
        %6460 = vmatpush2.msra.mxu0 0.0
        %6461 = vmatprep.subr.mxu0 0.0
        %6462 = vmatpush2.msra.mxu0 0.0
        %6463 = vmatprep.subr.mxu0 0.0
        %6464 = vmatpush2.msra.mxu0 0.0
        %6465 = vmatprep.subr.mxu0 0.0
        %6466 = vmatpush2.msra.mxu0 0.0
        %6467 = vmatprep.subr.mxu0 0.0
        %6468 = vmatpush2.msra.mxu0 0.0
        %6469 = vmatprep.subr.mxu0 0.0
        %6470 = vmatpush2.msra.mxu0 0.0
        %6471 = vmatprep.subr.mxu0 0.0
        %6472 = vmatpush2.msra.mxu0 0.0
        %6473 = vmatprep.subr.mxu0 0.0
        %6474 = vmatpush2.msra.mxu0 0.0
        %6475 = vmatprep.subr.mxu0 0.0
        %6476 = vmatpush2.msra.mxu0 0.0
        %6477 = vmatprep.subr.mxu0 0.0
        %6478 = vmatpush2.msra.mxu0 0.0
        %6479 = vmatprep.subr.mxu0 0.0
        %6480 = vmatpush2.msra.mxu0 0.0
        %6481 = vmatprep.subr.mxu0 0.0
        %6482 = vmatpush2.msra.mxu0 0.0
        %6483 = vmatprep.subr.mxu0 0.0
        %6484 = vmatpush2.msra.mxu0 0.0
        %6485 = vmatprep.mubr.f32.mxu0 0.0
        %6486 = vmatmul.mubr.f32.gmra.mxu0 %v3378
        %v6487 = vpop.f32.mrf.mxu0
        %v6488 = vadd.f32 0.0, %v6487
        %v6489 = vpop.f32.mrf.mxu0
        %v6490 = vadd.f32 0.0, %v6489
        %6491 = vmatprep.mubr.f32.mxu0 0.0
        %6492 = vmatmul.mubr.f32.gmra.mxu0 %v3381
        %v6493 = vpop.f32.mrf.mxu0
        %v6494 = vadd.f32 0.0, %v6493
        %v6495 = vpop.f32.mrf.mxu0
        %v6496 = vadd.f32 0.0, %v6495
        %6497 = vmatprep.mubr.f32.mxu0 0.0
        %6498 = vmatmul.mubr.f32.gmra.mxu0 %v3384
        %v6499 = vpop.f32.mrf.mxu0
        %v6500 = vadd.f32 0.0, %v6499
        %v6501 = vpop.f32.mrf.mxu0
        %v6502 = vadd.f32 0.0, %v6501
        %6503 = vmatprep.mubr.f32.mxu0 0.0
        %6504 = vmatmul.mubr.f32.gmra.mxu0 %v3387
        %v6505 = vpop.f32.mrf.mxu0
        %v6506 = vadd.f32 0.0, %v6505
        %v6507 = vpop.f32.mrf.mxu0
        %v6508 = vadd.f32 0.0, %v6507
        %6509 = vmatprep.mubr.f32.mxu0 0.0
        %6510 = vmatmul.mubr.f32.gmra.mxu0 %v3390
        %v6511 = vpop.f32.mrf.mxu0
        %v6512 = vadd.f32 0.0, %v6511
        %v6513 = vpop.f32.mrf.mxu0
        %v6514 = vadd.f32 0.0, %v6513
        %6515 = vmatprep.mubr.f32.mxu0 0.0
        %6516 = vmatmul.mubr.f32.gmra.mxu0 %v3393
        %v6517 = vpop.f32.mrf.mxu0
        %v6518 = vadd.f32 0.0, %v6517
        %v6519 = vpop.f32.mrf.mxu0
        %v6520 = vadd.f32 0.0, %v6519
        %6521 = vmatprep.mubr.f32.mxu0 0.0
        %6522 = vmatmul.mubr.f32.gmra.mxu0 %v3396
        %v6523 = vpop.f32.mrf.mxu0
        %v6524 = vadd.f32 0.0, %v6523
        %v6525 = vpop.f32.mrf.mxu0
        %v6526 = vadd.f32 0.0, %v6525
        %6527 = vmatprep.mubr.f32.mxu0 0.0
        %6528 = vmatmul.mubr.f32.gmra.mxu0 %v3399
        %v6529 = vpop.f32.mrf.mxu0
        %v6530 = vadd.f32 0.0, %v6529
        %v6531 = vpop.f32.mrf.mxu0
        %v6532 = vadd.f32 0.0, %v6531
        %6533 = vmatprep.mubr.f32.mxu0 0.0
        %6534 = vmatmul.mubr.f32.gmra.mxu0 %v3402
        %v6535 = vpop.f32.mrf.mxu0
        %v6536 = vadd.f32 0.0, %v6535
        %v6537 = vpop.f32.mrf.mxu0
        %v6538 = vadd.f32 0.0, %v6537
        %6539 = vmatprep.mubr.f32.mxu0 0.0
        %6540 = vmatmul.mubr.f32.gmra.mxu0 %v3405
        %v6541 = vpop.f32.mrf.mxu0
        %v6542 = vadd.f32 0.0, %v6541
        %v6543 = vpop.f32.mrf.mxu0
        %v6544 = vadd.f32 0.0, %v6543
        %6545 = vmatprep.mubr.f32.mxu0 0.0
        %6546 = vmatmul.mubr.f32.gmra.mxu0 %v3408
        %v6547 = vpop.f32.mrf.mxu0
        %v6548 = vadd.f32 0.0, %v6547
        %v6549 = vpop.f32.mrf.mxu0
        %v6550 = vadd.f32 0.0, %v6549
        %6551 = vmatprep.mubr.f32.mxu0 0.0
        %6552 = vmatmul.mubr.f32.gmra.mxu0 %v3411
        %v6553 = vpop.f32.mrf.mxu0
        %v6554 = vadd.f32 0.0, %v6553
        %v6555 = vpop.f32.mrf.mxu0
        %v6556 = vadd.f32 0.0, %v6555
        %6557 = vdwg.mxu0
        %6558 = vmatprep.subr.mxu0 0.0
        %6559 = vmatpush1.msra.mxu0 0.0
        %6560 = vmatprep.subr.mxu0 0.0
        %6561 = vmatpush1.msra.mxu0 0.0
        %6562 = vmatprep.subr.mxu0 0.0
        %6563 = vmatpush1.msra.mxu0 0.0
        %6564 = vmatprep.subr.mxu0 0.0
        %6565 = vmatpush1.msra.mxu0 0.0
        %6566 = vmatprep.subr.mxu0 0.0
        %6567 = vmatpush1.msra.mxu0 0.0
        %6568 = vmatprep.subr.mxu0 0.0
        %6569 = vmatpush1.msra.mxu0 0.0
        %6570 = vmatprep.subr.mxu0 0.0
        %6571 = vmatpush1.msra.mxu0 0.0
        %6572 = vmatprep.subr.mxu0 0.0
        %6573 = vmatpush1.msra.mxu0 0.0
        %6574 = vmatprep.subr.mxu0 0.0
        %6575 = vmatpush1.msra.mxu0 0.0
        %6576 = vmatprep.subr.mxu0 0.0
        %6577 = vmatpush1.msra.mxu0 0.0
        %6578 = vmatprep.subr.mxu0 0.0
        %6579 = vmatpush1.msra.mxu0 0.0
        %6580 = vmatprep.subr.mxu0 0.0
        %6581 = vmatpush1.msra.mxu0 0.0
        %6582 = vmatprep.subr.mxu0 0.0
        %6583 = vmatpush1.msra.mxu0 0.0
        %6584 = vmatprep.subr.mxu0 0.0
        %6585 = vmatpush1.msra.mxu0 0.0
        %6586 = vmatprep.subr.mxu0 %v6407
        %6587 = vmatpush1.msra.mxu0 %v6404
        %6588 = vmatprep.subr.mxu0 %v6384
        %6589 = vmatpush1.msra.mxu0 %v6383
        %6590 = vmatprep.subr.mxu0 0.0
        %6591 = vmatpush2.msra.mxu0 0.0
        %6592 = vmatprep.subr.mxu0 0.0
        %6593 = vmatpush2.msra.mxu0 0.0
        %6594 = vmatprep.subr.mxu0 0.0
        %6595 = vmatpush2.msra.mxu0 0.0
        %6596 = vmatprep.subr.mxu0 0.0
        %6597 = vmatpush2.msra.mxu0 0.0
        %6598 = vmatprep.subr.mxu0 0.0
        %6599 = vmatpush2.msra.mxu0 0.0
        %6600 = vmatprep.subr.mxu0 0.0
        %6601 = vmatpush2.msra.mxu0 0.0
        %6602 = vmatprep.subr.mxu0 0.0
        %6603 = vmatpush2.msra.mxu0 0.0
        %6604 = vmatprep.subr.mxu0 0.0
        %6605 = vmatpush2.msra.mxu0 0.0
        %6606 = vmatprep.subr.mxu0 0.0
        %6607 = vmatpush2.msra.mxu0 0.0
        %6608 = vmatprep.subr.mxu0 0.0
        %6609 = vmatpush2.msra.mxu0 0.0
        %6610 = vmatprep.subr.mxu0 0.0
        %6611 = vmatpush2.msra.mxu0 0.0
        %6612 = vmatprep.subr.mxu0 0.0
        %6613 = vmatpush2.msra.mxu0 0.0
        %6614 = vmatprep.subr.mxu0 0.0
        %6615 = vmatpush2.msra.mxu0 0.0
        %6616 = vmatprep.subr.mxu0 0.0
        %6617 = vmatpush2.msra.mxu0 0.0
        %6618 = vmatprep.subr.mxu0 0.0
        %6619 = vmatpush2.msra.mxu0 0.0
        %6620 = vmatprep.subr.mxu0 0.0
        %6621 = vmatpush2.msra.mxu0 0.0
        %6622 = vmatprep.mubr.f32.mxu0 0.0
        %6623 = vmatmul.mubr.f32.gmra.mxu0 %v3378
        %v6624 = vpop.f32.mrf.mxu0
        %v6625 = vadd.f32 0.0, %v6624
        %v6626 = vpop.f32.mrf.mxu0
        %v6627 = vadd.f32 0.0, %v6626
        %6628 = vmatprep.mubr.f32.mxu0 0.0
        %6629 = vmatmul.mubr.f32.gmra.mxu0 %v3381
        %v6630 = vpop.f32.mrf.mxu0
        %v6631 = vadd.f32 0.0, %v6630
        %v6632 = vpop.f32.mrf.mxu0
        %v6633 = vadd.f32 0.0, %v6632
        %6634 = vmatprep.mubr.f32.mxu0 0.0
        %6635 = vmatmul.mubr.f32.gmra.mxu0 %v3384
        %v6636 = vpop.f32.mrf.mxu0
        %v6637 = vadd.f32 0.0, %v6636
        %v6638 = vpop.f32.mrf.mxu0
        %v6639 = vadd.f32 0.0, %v6638
        %6640 = vmatprep.mubr.f32.mxu0 0.0
        %6641 = vmatmul.mubr.f32.gmra.mxu0 %v3387
        %v6642 = vpop.f32.mrf.mxu0
        %v6643 = vadd.f32 0.0, %v6642
        %v6644 = vpop.f32.mrf.mxu0
        %v6645 = vadd.f32 0.0, %v6644
        %6646 = vmatprep.mubr.f32.mxu0 0.0
        %6647 = vmatmul.mubr.f32.gmra.mxu0 %v3390
        %v6648 = vpop.f32.mrf.mxu0
        %v6649 = vadd.f32 0.0, %v6648
        %v6650 = vpop.f32.mrf.mxu0
        %v6651 = vadd.f32 0.0, %v6650
        %6652 = vmatprep.mubr.f32.mxu0 0.0
        %6653 = vmatmul.mubr.f32.gmra.mxu0 %v3393
        %v6654 = vpop.f32.mrf.mxu0
        %v6655 = vadd.f32 0.0, %v6654
        %v6656 = vpop.f32.mrf.mxu0
        %v6657 = vadd.f32 0.0, %v6656
        %6658 = vmatprep.mubr.f32.mxu0 0.0
        %6659 = vmatmul.mubr.f32.gmra.mxu0 %v3396
        %v6660 = vpop.f32.mrf.mxu0
        %v6661 = vadd.f32 0.0, %v6660
        %v6662 = vpop.f32.mrf.mxu0
        %v6663 = vadd.f32 0.0, %v6662
        %6664 = vmatprep.mubr.f32.mxu0 0.0
        %6665 = vmatmul.mubr.f32.gmra.mxu0 %v3399
        %v6666 = vpop.f32.mrf.mxu0
        %v6667 = vadd.f32 0.0, %v6666
        %v6668 = vpop.f32.mrf.mxu0
        %v6669 = vadd.f32 0.0, %v6668
        %6670 = vmatprep.mubr.f32.mxu0 0.0
        %6671 = vmatmul.mubr.f32.gmra.mxu0 %v3402
        %v6672 = vpop.f32.mrf.mxu0
        %v6673 = vadd.f32 0.0, %v6672
        %v6674 = vpop.f32.mrf.mxu0
        %v6675 = vadd.f32 0.0, %v6674
        %6676 = vmatprep.mubr.f32.mxu0 0.0
        %6677 = vmatmul.mubr.f32.gmra.mxu0 %v3405
        %v6678 = vpop.f32.mrf.mxu0
        %v6679 = vadd.f32 0.0, %v6678
        %v6680 = vpop.f32.mrf.mxu0
        %v6681 = vadd.f32 0.0, %v6680
        %6682 = vmatprep.mubr.f32.mxu0 0.0
        %6683 = vmatmul.mubr.f32.gmra.mxu0 %v3408
        %v6684 = vpop.f32.mrf.mxu0
        %v6685 = vadd.f32 0.0, %v6684
        %v6686 = vpop.f32.mrf.mxu0
        %v6687 = vadd.f32 0.0, %v6686
        %6688 = vmatprep.mubr.f32.mxu0 0.0
        %6689 = vmatmul.mubr.f32.gmra.mxu0 %v3411
        %v6690 = vpop.f32.mrf.mxu0
        %v6691 = vadd.f32 0.0, %v6690
        %v6692 = vpop.f32.mrf.mxu0
        %v6693 = vadd.f32 0.0, %v6692
        %6694 = vdwg.mxu0
        %6695 = vmatprep.subr.mxu0 0.0
        %6696 = vmatpush1.msra.mxu0 0.0
        %6697 = vmatprep.subr.mxu0 0.0
        %6698 = vmatpush1.msra.mxu0 0.0
        %6699 = vmatprep.subr.mxu0 0.0
        %6700 = vmatpush1.msra.mxu0 0.0
        %6701 = vmatprep.subr.mxu0 0.0
        %6702 = vmatpush1.msra.mxu0 0.0
        %6703 = vmatprep.subr.mxu0 0.0
        %6704 = vmatpush1.msra.mxu0 0.0
        %6705 = vmatprep.subr.mxu0 0.0
        %6706 = vmatpush1.msra.mxu0 0.0
        %6707 = vmatprep.subr.mxu0 0.0
        %6708 = vmatpush1.msra.mxu0 0.0
        %6709 = vmatprep.subr.mxu0 0.0
        %6710 = vmatpush1.msra.mxu0 0.0
        %6711 = vmatprep.subr.mxu0 0.0
        %6712 = vmatpush1.msra.mxu0 0.0
        %6713 = vmatprep.subr.mxu0 0.0
        %6714 = vmatpush1.msra.mxu0 0.0
        %6715 = vmatprep.subr.mxu0 0.0
        %6716 = vmatpush1.msra.mxu0 0.0
        %6717 = vmatprep.subr.mxu0 0.0
        %6718 = vmatpush1.msra.mxu0 0.0
        %6719 = vmatprep.subr.mxu0 0.0
        %6720 = vmatpush1.msra.mxu0 0.0
        %6721 = vmatprep.subr.mxu0 0.0
        %6722 = vmatpush1.msra.mxu0 0.0
        %6723 = vmatprep.subr.mxu0 %v6413
        %6724 = vmatpush1.msra.mxu0 %v6410
        %6725 = vmatprep.subr.mxu0 %v6386
        %6726 = vmatpush1.msra.mxu0 %v6385
        %6727 = vmatprep.subr.mxu0 0.0
        %6728 = vmatpush2.msra.mxu0 0.0
        %6729 = vmatprep.subr.mxu0 0.0
        %6730 = vmatpush2.msra.mxu0 0.0
        %6731 = vmatprep.subr.mxu0 0.0
        %6732 = vmatpush2.msra.mxu0 0.0
        %6733 = vmatprep.subr.mxu0 0.0
        %6734 = vmatpush2.msra.mxu0 0.0
        %6735 = vmatprep.subr.mxu0 0.0
        %6736 = vmatpush2.msra.mxu0 0.0
        %6737 = vmatprep.subr.mxu0 0.0
        %6738 = vmatpush2.msra.mxu0 0.0
        %6739 = vmatprep.subr.mxu0 0.0
        %6740 = vmatpush2.msra.mxu0 0.0
        %6741 = vmatprep.subr.mxu0 0.0
        %6742 = vmatpush2.msra.mxu0 0.0
        %6743 = vmatprep.subr.mxu0 0.0
        %6744 = vmatpush2.msra.mxu0 0.0
        %6745 = vmatprep.subr.mxu0 0.0
        %6746 = vmatpush2.msra.mxu0 0.0
        %6747 = vmatprep.subr.mxu0 0.0
        %6748 = vmatpush2.msra.mxu0 0.0
        %6749 = vmatprep.subr.mxu0 0.0
        %6750 = vmatpush2.msra.mxu0 0.0
        %6751 = vmatprep.subr.mxu0 0.0
        %6752 = vmatpush2.msra.mxu0 0.0
        %6753 = vmatprep.subr.mxu0 0.0
        %6754 = vmatpush2.msra.mxu0 0.0
        %6755 = vmatprep.subr.mxu0 0.0
        %6756 = vmatpush2.msra.mxu0 0.0
        %6757 = vmatprep.subr.mxu0 0.0
        %6758 = vmatpush2.msra.mxu0 0.0
        %6759 = vmatprep.mubr.f32.mxu0 0.0
        %6760 = vmatmul.mubr.f32.gmra.mxu0 %v3378
        %v6761 = vpop.f32.mrf.mxu0
        %v6762 = vadd.f32 0.0, %v6761
        %v6763 = vpop.f32.mrf.mxu0
        %v6764 = vadd.f32 0.0, %v6763
        %6765 = vmatprep.mubr.f32.mxu0 0.0
        %6766 = vmatmul.mubr.f32.gmra.mxu0 %v3381
        %v6767 = vpop.f32.mrf.mxu0
        %v6768 = vadd.f32 0.0, %v6767
        %v6769 = vpop.f32.mrf.mxu0
        %v6770 = vadd.f32 0.0, %v6769
        %6771 = vmatprep.mubr.f32.mxu0 0.0
        %6772 = vmatmul.mubr.f32.gmra.mxu0 %v3384
        %v6773 = vpop.f32.mrf.mxu0
        %v6774 = vadd.f32 0.0, %v6773
        %v6775 = vpop.f32.mrf.mxu0
        %v6776 = vadd.f32 0.0, %v6775
        %6777 = vmatprep.mubr.f32.mxu0 0.0
        %6778 = vmatmul.mubr.f32.gmra.mxu0 %v3387
        %v6779 = vpop.f32.mrf.mxu0
        %v6780 = vadd.f32 0.0, %v6779
        %v6781 = vpop.f32.mrf.mxu0
        %v6782 = vadd.f32 0.0, %v6781
        %6783 = vmatprep.mubr.f32.mxu0 0.0
        %6784 = vmatmul.mubr.f32.gmra.mxu0 %v3390
        %v6785 = vpop.f32.mrf.mxu0
        %v6786 = vadd.f32 0.0, %v6785
        %v6787 = vpop.f32.mrf.mxu0
        %v6788 = vadd.f32 0.0, %v6787
        %6789 = vmatprep.mubr.f32.mxu0 0.0
        %6790 = vmatmul.mubr.f32.gmra.mxu0 %v3393
        %v6791 = vpop.f32.mrf.mxu0
        %v6792 = vadd.f32 0.0, %v6791
        %v6793 = vpop.f32.mrf.mxu0
        %v6794 = vadd.f32 0.0, %v6793
        %6795 = vmatprep.mubr.f32.mxu0 0.0
        %6796 = vmatmul.mubr.f32.gmra.mxu0 %v3396
        %v6797 = vpop.f32.mrf.mxu0
        %v6798 = vadd.f32 0.0, %v6797
        %v6799 = vpop.f32.mrf.mxu0
        %v6800 = vadd.f32 0.0, %v6799
        %6801 = vmatprep.mubr.f32.mxu0 0.0
        %6802 = vmatmul.mubr.f32.gmra.mxu0 %v3399
        %v6803 = vpop.f32.mrf.mxu0
        %v6804 = vadd.f32 0.0, %v6803
        %v6805 = vpop.f32.mrf.mxu0
        %v6806 = vadd.f32 0.0, %v6805
        %6807 = vmatprep.mubr.f32.mxu0 0.0
        %6808 = vmatmul.mubr.f32.gmra.mxu0 %v3402
        %v6809 = vpop.f32.mrf.mxu0
        %v6810 = vadd.f32 0.0, %v6809
        %v6811 = vpop.f32.mrf.mxu0
        %v6812 = vadd.f32 0.0, %v6811
        %6813 = vmatprep.mubr.f32.mxu0 0.0
        %6814 = vmatmul.mubr.f32.gmra.mxu0 %v3405
        %v6815 = vpop.f32.mrf.mxu0
        %v6816 = vadd.f32 0.0, %v6815
        %v6817 = vpop.f32.mrf.mxu0
        %v6818 = vadd.f32 0.0, %v6817
        %6819 = vmatprep.mubr.f32.mxu0 0.0
        %6820 = vmatmul.mubr.f32.gmra.mxu0 %v3408
        %v6821 = vpop.f32.mrf.mxu0
        %v6822 = vadd.f32 0.0, %v6821
        %v6823 = vpop.f32.mrf.mxu0
        %v6824 = vadd.f32 0.0, %v6823
        %6825 = vmatprep.mubr.f32.mxu0 0.0
        %6826 = vmatmul.mubr.f32.gmra.mxu0 %v3411
        %v6827 = vpop.f32.mrf.mxu0
        %v6828 = vadd.f32 0.0, %v6827
        %v6829 = vpop.f32.mrf.mxu0
        %v6830 = vadd.f32 0.0, %v6829
        %6831 = vdwg.mxu0
        %6832 = vmatprep.subr.mxu0 0.0
        %6833 = vmatpush1.msra.mxu0 0.0
        %6834 = vmatprep.subr.mxu0 0.0
        %6835 = vmatpush1.msra.mxu0 0.0
        %6836 = vmatprep.subr.mxu0 0.0
        %6837 = vmatpush1.msra.mxu0 0.0
        %6838 = vmatprep.subr.mxu0 0.0
        %6839 = vmatpush1.msra.mxu0 0.0
        %6840 = vmatprep.subr.mxu0 0.0
        %6841 = vmatpush1.msra.mxu0 0.0
        %6842 = vmatprep.subr.mxu0 0.0
        %6843 = vmatpush1.msra.mxu0 0.0
        %6844 = vmatprep.subr.mxu0 0.0
        %6845 = vmatpush1.msra.mxu0 0.0
        %6846 = vmatprep.subr.mxu0 0.0
        %6847 = vmatpush1.msra.mxu0 0.0
        %6848 = vmatprep.subr.mxu0 0.0
        %6849 = vmatpush1.msra.mxu0 0.0
        %6850 = vmatprep.subr.mxu0 0.0
        %6851 = vmatpush1.msra.mxu0 0.0
        %6852 = vmatprep.subr.mxu0 0.0
        %6853 = vmatpush1.msra.mxu0 0.0
        %6854 = vmatprep.subr.mxu0 0.0
        %6855 = vmatpush1.msra.mxu0 0.0
        %6856 = vmatprep.subr.mxu0 0.0
        %6857 = vmatpush1.msra.mxu0 0.0
        %6858 = vmatprep.subr.mxu0 0.0
        %6859 = vmatpush1.msra.mxu0 0.0
        %6860 = vmatprep.subr.mxu0 %v6419
        %6861 = vmatpush1.msra.mxu0 %v6416
        %6862 = vmatprep.subr.mxu0 %v6388
        %6863 = vmatpush1.msra.mxu0 %v6387
        %6864 = vmatprep.subr.mxu0 0.0
        %6865 = vmatpush2.msra.mxu0 0.0
        %6866 = vmatprep.subr.mxu0 0.0
        %6867 = vmatpush2.msra.mxu0 0.0
        %6868 = vmatprep.subr.mxu0 0.0
        %6869 = vmatpush2.msra.mxu0 0.0
        %6870 = vmatprep.subr.mxu0 0.0
        %6871 = vmatpush2.msra.mxu0 0.0
        %6872 = vmatprep.subr.mxu0 0.0
        %6873 = vmatpush2.msra.mxu0 0.0
        %6874 = vmatprep.subr.mxu0 0.0
        %6875 = vmatpush2.msra.mxu0 0.0
        %6876 = vmatprep.subr.mxu0 0.0
        %6877 = vmatpush2.msra.mxu0 0.0
        %6878 = vmatprep.subr.mxu0 0.0
        %6879 = vmatpush2.msra.mxu0 0.0
        %6880 = vmatprep.subr.mxu0 0.0
        %6881 = vmatpush2.msra.mxu0 0.0
        %6882 = vmatprep.subr.mxu0 0.0
        %6883 = vmatpush2.msra.mxu0 0.0
        %6884 = vmatprep.subr.mxu0 0.0
        %6885 = vmatpush2.msra.mxu0 0.0
        %6886 = vmatprep.subr.mxu0 0.0
        %6887 = vmatpush2.msra.mxu0 0.0
        %6888 = vmatprep.subr.mxu0 0.0
        %6889 = vmatpush2.msra.mxu0 0.0
        %6890 = vmatprep.subr.mxu0 0.0
        %6891 = vmatpush2.msra.mxu0 0.0
        %6892 = vmatprep.subr.mxu0 0.0
        %6893 = vmatpush2.msra.mxu0 0.0
        %6894 = vmatprep.subr.mxu0 0.0
        %6895 = vmatpush2.msra.mxu0 0.0
        %6896 = vmatprep.mubr.f32.mxu0 0.0
        %6897 = vmatmul.mubr.f32.gmra.mxu0 %v3378
        %v6898 = vpop.f32.mrf.mxu0
        %v6899 = vadd.f32 0.0, %v6898
        %v6900 = vpop.f32.mrf.mxu0
        %v6901 = vadd.f32 0.0, %v6900
        %6902 = vmatprep.mubr.f32.mxu0 0.0
        %6903 = vmatmul.mubr.f32.gmra.mxu0 %v3381
        %v6904 = vpop.f32.mrf.mxu0
        %v6905 = vadd.f32 0.0, %v6904
        %v6906 = vpop.f32.mrf.mxu0
        %v6907 = vadd.f32 0.0, %v6906
        %6908 = vmatprep.mubr.f32.mxu0 0.0
        %6909 = vmatmul.mubr.f32.gmra.mxu0 %v3384
        %v6910 = vpop.f32.mrf.mxu0
        %v6911 = vadd.f32 0.0, %v6910
        %v6912 = vpop.f32.mrf.mxu0
        %v6913 = vadd.f32 0.0, %v6912
        %6914 = vmatprep.mubr.f32.mxu0 0.0
        %6915 = vmatmul.mubr.f32.gmra.mxu0 %v3387
        %v6916 = vpop.f32.mrf.mxu0
        %v6917 = vadd.f32 0.0, %v6916
        %v6918 = vpop.f32.mrf.mxu0
        %v6919 = vadd.f32 0.0, %v6918
        %6920 = vmatprep.mubr.f32.mxu0 0.0
        %6921 = vmatmul.mubr.f32.gmra.mxu0 %v3390
        %v6922 = vpop.f32.mrf.mxu0
        %v6923 = vadd.f32 0.0, %v6922
        %v6924 = vpop.f32.mrf.mxu0
        %v6925 = vadd.f32 0.0, %v6924
        %6926 = vmatprep.mubr.f32.mxu0 0.0
        %6927 = vmatmul.mubr.f32.gmra.mxu0 %v3393
        %v6928 = vpop.f32.mrf.mxu0
        %v6929 = vadd.f32 0.0, %v6928
        %v6930 = vpop.f32.mrf.mxu0
        %v6931 = vadd.f32 0.0, %v6930
        %6932 = vmatprep.mubr.f32.mxu0 0.0
        %6933 = vmatmul.mubr.f32.gmra.mxu0 %v3396
        %v6934 = vpop.f32.mrf.mxu0
        %v6935 = vadd.f32 0.0, %v6934
        %v6936 = vpop.f32.mrf.mxu0
        %v6937 = vadd.f32 0.0, %v6936
        %6938 = vmatprep.mubr.f32.mxu0 0.0
        %6939 = vmatmul.mubr.f32.gmra.mxu0 %v3399
        %v6940 = vpop.f32.mrf.mxu0
        %v6941 = vadd.f32 0.0, %v6940
        %v6942 = vpop.f32.mrf.mxu0
        %v6943 = vadd.f32 0.0, %v6942
        %6944 = vmatprep.mubr.f32.mxu0 0.0
        %6945 = vmatmul.mubr.f32.gmra.mxu0 %v3402
        %v6946 = vpop.f32.mrf.mxu0
        %v6947 = vadd.f32 0.0, %v6946
        %v6948 = vpop.f32.mrf.mxu0
        %v6949 = vadd.f32 0.0, %v6948
        %6950 = vmatprep.mubr.f32.mxu0 0.0
        %6951 = vmatmul.mubr.f32.gmra.mxu0 %v3405
        %v6952 = vpop.f32.mrf.mxu0
        %v6953 = vadd.f32 0.0, %v6952
        %v6954 = vpop.f32.mrf.mxu0
        %v6955 = vadd.f32 0.0, %v6954
        %6956 = vmatprep.mubr.f32.mxu0 0.0
        %6957 = vmatmul.mubr.f32.gmra.mxu0 %v3408
        %v6958 = vpop.f32.mrf.mxu0
        %v6959 = vadd.f32 0.0, %v6958
        %v6960 = vpop.f32.mrf.mxu0
        %v6961 = vadd.f32 0.0, %v6960
        %6962 = vmatprep.mubr.f32.mxu0 0.0
        %6963 = vmatmul.mubr.f32.gmra.mxu0 %v3411
        %v6964 = vpop.f32.mrf.mxu0
        %v6965 = vadd.f32 0.0, %v6964
        %v6966 = vpop.f32.mrf.mxu0
        %v6967 = vadd.f32 0.0, %v6966
        %6968 = vdwg.mxu0
        %v6969 = vmul.f32 %v6488, %v466
        %v6970 = vmul.f32 %v6490, %v468
        %v6971 = vmul.f32 %v6625, %v603
        %v6972 = vmul.f32 %v6627, %v605
        %v6973 = vmul.f32 %v6762, %v740
        %v6974 = vmul.f32 %v6764, %v742
        %v6975 = vmul.f32 %v6899, %v877
        %v6976 = vmul.f32 %v6901, %v879
        %v6977 = vmul.f32 %v6494, %v472
        %v6978 = vmul.f32 %v6496, %v474
        %v6979 = vmul.f32 %v6631, %v609
        %v6980 = vmul.f32 %v6633, %v611
        %v6981 = vmul.f32 %v6768, %v746
        %v6982 = vmul.f32 %v6770, %v748
        %v6983 = vmul.f32 %v6905, %v883
        %v6984 = vmul.f32 %v6907, %v885
        %v6985 = vmul.f32 %v6500, %v478
        %v6986 = vmul.f32 %v6502, %v480
        %v6987 = vmul.f32 %v6637, %v615
        %v6988 = vmul.f32 %v6639, %v617
        %v6989 = vmul.f32 %v6774, %v752
        %v6990 = vmul.f32 %v6776, %v754
        %v6991 = vmul.f32 %v6911, %v889
        %v6992 = vmul.f32 %v6913, %v891
        %v6993 = vmul.f32 %v6506, %v484
        %v6994 = vmul.f32 %v6508, %v486
        %v6995 = vmul.f32 %v6643, %v621
        %v6996 = vmul.f32 %v6645, %v623
        %v6997 = vmul.f32 %v6780, %v758
        %v6998 = vmul.f32 %v6782, %v760
        %v6999 = vmul.f32 %v6917, %v895
        %v7000 = vmul.f32 %v6919, %v897
        %v7001 = vmul.f32 %v6512, %v490
        %v7002 = vmul.f32 %v6514, %v492
        %v7003 = vmul.f32 %v6649, %v627
        %v7004 = vmul.f32 %v6651, %v629
        %v7005 = vmul.f32 %v6786, %v764
        %v7006 = vmul.f32 %v6788, %v766
        %v7007 = vmul.f32 %v6923, %v901
        %v7008 = vmul.f32 %v6925, %v903
        %v7009 = vmul.f32 %v6518, %v496
        %v7010 = vmul.f32 %v6520, %v498
        %v7011 = vmul.f32 %v6655, %v633
        %v7012 = vmul.f32 %v6657, %v635
        %v7013 = vmul.f32 %v6792, %v770
        %v7014 = vmul.f32 %v6794, %v772
        %v7015 = vmul.f32 %v6929, %v907
        %v7016 = vmul.f32 %v6931, %v909
        %v7017 = vmul.f32 %v6524, %v502
        %v7018 = vmul.f32 %v6526, %v504
        %v7019 = vmul.f32 %v6661, %v639
        %v7020 = vmul.f32 %v6663, %v641
        %v7021 = vmul.f32 %v6798, %v776
        %v7022 = vmul.f32 %v6800, %v778
        %v7023 = vmul.f32 %v6935, %v913
        %v7024 = vmul.f32 %v6937, %v915
        %v7025 = vmul.f32 %v6530, %v508
        %v7026 = vmul.f32 %v6532, %v510
        %v7027 = vmul.f32 %v6667, %v645
        %v7028 = vmul.f32 %v6669, %v647
        %v7029 = vmul.f32 %v6804, %v782
        %v7030 = vmul.f32 %v6806, %v784
        %v7031 = vmul.f32 %v6941, %v919
        %v7032 = vmul.f32 %v6943, %v921
        %v7033 = vmul.f32 %v6536, %v514
        %v7034 = vmul.f32 %v6538, %v516
        %v7035 = vmul.f32 %v6673, %v651
        %v7036 = vmul.f32 %v6675, %v653
        %v7037 = vmul.f32 %v6810, %v788
        %v7038 = vmul.f32 %v6812, %v790
        %v7039 = vmul.f32 %v6947, %v925
        %v7040 = vmul.f32 %v6949, %v927
        %v7041 = vmul.f32 %v6542, %v520
        %v7042 = vmul.f32 %v6544, %v522
        %v7043 = vmul.f32 %v6679, %v657
        %v7044 = vmul.f32 %v6681, %v659
        %v7045 = vmul.f32 %v6816, %v794
        %v7046 = vmul.f32 %v6818, %v796
        %v7047 = vmul.f32 %v6953, %v931
        %v7048 = vmul.f32 %v6955, %v933
        %v7049 = vmul.f32 %v6548, %v526
        %v7050 = vmul.f32 %v6550, %v528
        %v7051 = vmul.f32 %v6685, %v663
        %v7052 = vmul.f32 %v6687, %v665
        %v7053 = vmul.f32 %v6822, %v800
        %v7054 = vmul.f32 %v6824, %v802
        %v7055 = vmul.f32 %v6959, %v937
        %v7056 = vmul.f32 %v6961, %v939
        %v7057 = vmul.f32 %v6554, %v532
        %v7058 = vmul.f32 %v6556, %v534
        %v7059 = vmul.f32 %v6691, %v669
        %v7060 = vmul.f32 %v6693, %v671
        %v7061 = vmul.f32 %v6828, %v806
        %v7062 = vmul.f32 %v6830, %v808
        %v7063 = vmul.f32 %v6965, %v943
        %v7064 = vmul.f32 %v6967, %v945
        %7065 = vmatprep.subr.mxu0 0.0
        %7066 = vmatpush1.msra.mxu0 0.0
        %7067 = vmatprep.subr.mxu0 0.0
        %7068 = vmatpush1.msra.mxu0 0.0
        %7069 = vmatprep.subr.mxu0 0.0
        %7070 = vmatpush1.msra.mxu0 0.0
        %7071 = vmatprep.subr.mxu0 0.0
        %7072 = vmatpush1.msra.mxu0 0.0
        %7073 = vmatprep.subr.mxu0 %v7058
        %7074 = vmatpush1.msra.mxu0 %v7057
        %7075 = vmatprep.subr.mxu0 %v7050
        %7076 = vmatpush1.msra.mxu0 %v7049
        %7077 = vmatprep.subr.mxu0 %v7042
        %7078 = vmatpush1.msra.mxu0 %v7041
        %7079 = vmatprep.subr.mxu0 %v7034
        %7080 = vmatpush1.msra.mxu0 %v7033
        %7081 = vmatprep.subr.mxu0 %v7026
        %7082 = vmatpush1.msra.mxu0 %v7025
        %7083 = vmatprep.subr.mxu0 %v7018
        %7084 = vmatpush1.msra.mxu0 %v7017
        %7085 = vmatprep.subr.mxu0 %v7010
        %7086 = vmatpush1.msra.mxu0 %v7009
        %7087 = vmatprep.subr.mxu0 %v7002
        %7088 = vmatpush1.msra.mxu0 %v7001
        %7089 = vmatprep.subr.mxu0 %v6994
        %7090 = vmatpush1.msra.mxu0 %v6993
        %7091 = vmatprep.subr.mxu0 %v6986
        %7092 = vmatpush1.msra.mxu0 %v6985
        %7093 = vmatprep.subr.mxu0 %v6978
        %7094 = vmatpush1.msra.mxu0 %v6977
        %7095 = vmatprep.subr.mxu0 %v6970
        %7096 = vmatpush1.msra.mxu0 %v6969
        %7097 = vmatprep.subr.mxu0 0.0
        %7098 = vmatpush2.msra.mxu0 0.0
        %7099 = vmatprep.subr.mxu0 0.0
        %7100 = vmatpush2.msra.mxu0 0.0
        %7101 = vmatprep.subr.mxu0 0.0
        %7102 = vmatpush2.msra.mxu0 0.0
        %7103 = vmatprep.subr.mxu0 0.0
        %7104 = vmatpush2.msra.mxu0 0.0
        %7105 = vmatprep.subr.mxu0 0.0
        %7106 = vmatpush2.msra.mxu0 0.0
        %7107 = vmatprep.subr.mxu0 0.0
        %7108 = vmatpush2.msra.mxu0 0.0
        %7109 = vmatprep.subr.mxu0 0.0
        %7110 = vmatpush2.msra.mxu0 0.0
        %7111 = vmatprep.subr.mxu0 0.0
        %7112 = vmatpush2.msra.mxu0 0.0
        %7113 = vmatprep.subr.mxu0 0.0
        %7114 = vmatpush2.msra.mxu0 0.0
        %7115 = vmatprep.subr.mxu0 0.0
        %7116 = vmatpush2.msra.mxu0 0.0
        %7117 = vmatprep.subr.mxu0 0.0
        %7118 = vmatpush2.msra.mxu0 0.0
        %7119 = vmatprep.subr.mxu0 0.0
        %7120 = vmatpush2.msra.mxu0 0.0
        %7121 = vmatprep.subr.mxu0 0.0
        %7122 = vmatpush2.msra.mxu0 0.0
        %7123 = vmatprep.subr.mxu0 0.0
        %7124 = vmatpush2.msra.mxu0 0.0
        %7125 = vmatprep.subr.mxu0 0.0
        %7126 = vmatpush2.msra.mxu0 0.0
        %7127 = vmatprep.subr.mxu0 0.0
        %7128 = vmatpush2.msra.mxu0 0.0
        %7129 = vmatprep.mubr.f32.mxu0 0.0
        %7130 = vmatmul.mubr.f32.gmra.mxu0 %v971
        %v7131 = vpop.f32.mrf.mxu0
        %v7132 = vadd.f32 0.0, %v7131
        %v7133 = vpop.f32.mrf.mxu0
        %v7134 = vadd.f32 0.0, %v7133
        %7135 = vmatprep.mubr.f32.mxu0 0.0
        %7136 = vmatmul.mubr.f32.gmra.mxu0 %v974
        %v7137 = vpop.f32.mrf.mxu0
        %v7138 = vadd.f32 0.0, %v7137
        %v7139 = vpop.f32.mrf.mxu0
        %v7140 = vadd.f32 0.0, %v7139
        %7141 = vmatprep.mubr.f32.mxu0 0.0
        %7142 = vmatmul.mubr.f32.gmra.mxu0 %v977
        %v7143 = vpop.f32.mrf.mxu0
        %v7144 = vadd.f32 0.0, %v7143
        %v7145 = vpop.f32.mrf.mxu0
        %v7146 = vadd.f32 0.0, %v7145
        %7147 = vdwg.mxu0
        %7148 = vmatprep.subr.mxu0 0.0
        %7149 = vmatpush1.msra.mxu0 0.0
        %7150 = vmatprep.subr.mxu0 0.0
        %7151 = vmatpush1.msra.mxu0 0.0
        %7152 = vmatprep.subr.mxu0 0.0
        %7153 = vmatpush1.msra.mxu0 0.0
        %7154 = vmatprep.subr.mxu0 0.0
        %7155 = vmatpush1.msra.mxu0 0.0
        %7156 = vmatprep.subr.mxu0 %v7060
        %7157 = vmatpush1.msra.mxu0 %v7059
        %7158 = vmatprep.subr.mxu0 %v7052
        %7159 = vmatpush1.msra.mxu0 %v7051
        %7160 = vmatprep.subr.mxu0 %v7044
        %7161 = vmatpush1.msra.mxu0 %v7043
        %7162 = vmatprep.subr.mxu0 %v7036
        %7163 = vmatpush1.msra.mxu0 %v7035
        %7164 = vmatprep.subr.mxu0 %v7028
        %7165 = vmatpush1.msra.mxu0 %v7027
        %7166 = vmatprep.subr.mxu0 %v7020
        %7167 = vmatpush1.msra.mxu0 %v7019
        %7168 = vmatprep.subr.mxu0 %v7012
        %7169 = vmatpush1.msra.mxu0 %v7011
        %7170 = vmatprep.subr.mxu0 %v7004
        %7171 = vmatpush1.msra.mxu0 %v7003
        %7172 = vmatprep.subr.mxu0 %v6996
        %7173 = vmatpush1.msra.mxu0 %v6995
        %7174 = vmatprep.subr.mxu0 %v6988
        %7175 = vmatpush1.msra.mxu0 %v6987
        %7176 = vmatprep.subr.mxu0 %v6980
        %7177 = vmatpush1.msra.mxu0 %v6979
        %7178 = vmatprep.subr.mxu0 %v6972
        %7179 = vmatpush1.msra.mxu0 %v6971
        %7180 = vmatprep.subr.mxu0 0.0
        %7181 = vmatpush2.msra.mxu0 0.0
        %7182 = vmatprep.subr.mxu0 0.0
        %7183 = vmatpush2.msra.mxu0 0.0
        %7184 = vmatprep.subr.mxu0 0.0
        %7185 = vmatpush2.msra.mxu0 0.0
        %7186 = vmatprep.subr.mxu0 0.0
        %7187 = vmatpush2.msra.mxu0 0.0
        %7188 = vmatprep.subr.mxu0 0.0
        %7189 = vmatpush2.msra.mxu0 0.0
        %7190 = vmatprep.subr.mxu0 0.0
        %7191 = vmatpush2.msra.mxu0 0.0
        %7192 = vmatprep.subr.mxu0 0.0
        %7193 = vmatpush2.msra.mxu0 0.0
        %7194 = vmatprep.subr.mxu0 0.0
        %7195 = vmatpush2.msra.mxu0 0.0
        %7196 = vmatprep.subr.mxu0 0.0
        %7197 = vmatpush2.msra.mxu0 0.0
        %7198 = vmatprep.subr.mxu0 0.0
        %7199 = vmatpush2.msra.mxu0 0.0
        %7200 = vmatprep.subr.mxu0 0.0
        %7201 = vmatpush2.msra.mxu0 0.0
        %7202 = vmatprep.subr.mxu0 0.0
        %7203 = vmatpush2.msra.mxu0 0.0
        %7204 = vmatprep.subr.mxu0 0.0
        %7205 = vmatpush2.msra.mxu0 0.0
        %7206 = vmatprep.subr.mxu0 0.0
        %7207 = vmatpush2.msra.mxu0 0.0
        %7208 = vmatprep.subr.mxu0 0.0
        %7209 = vmatpush2.msra.mxu0 0.0
        %7210 = vmatprep.subr.mxu0 0.0
        %7211 = vmatpush2.msra.mxu0 0.0
        %7212 = vmatprep.mubr.f32.mxu0 0.0
        %7213 = vmatmul.mubr.f32.gmra.mxu0 %v971
        %v7214 = vpop.f32.mrf.mxu0
        %v7215 = vadd.f32 0.0, %v7214
        %v7216 = vpop.f32.mrf.mxu0
        %v7217 = vadd.f32 0.0, %v7216
        %7218 = vmatprep.mubr.f32.mxu0 0.0
        %7219 = vmatmul.mubr.f32.gmra.mxu0 %v974
        %v7220 = vpop.f32.mrf.mxu0
        %v7221 = vadd.f32 0.0, %v7220
        %v7222 = vpop.f32.mrf.mxu0
        %v7223 = vadd.f32 0.0, %v7222
        %7224 = vmatprep.mubr.f32.mxu0 0.0
        %7225 = vmatmul.mubr.f32.gmra.mxu0 %v977
        %v7226 = vpop.f32.mrf.mxu0
        %v7227 = vadd.f32 0.0, %v7226
        %v7228 = vpop.f32.mrf.mxu0
        %v7229 = vadd.f32 0.0, %v7228
        %7230 = vdwg.mxu0
        %7231 = vmatprep.subr.mxu0 0.0
        %7232 = vmatpush1.msra.mxu0 0.0
        %7233 = vmatprep.subr.mxu0 0.0
        %7234 = vmatpush1.msra.mxu0 0.0
        %7235 = vmatprep.subr.mxu0 0.0
        %7236 = vmatpush1.msra.mxu0 0.0
        %7237 = vmatprep.subr.mxu0 0.0
        %7238 = vmatpush1.msra.mxu0 0.0
        %7239 = vmatprep.subr.mxu0 %v7062
        %7240 = vmatpush1.msra.mxu0 %v7061
        %7241 = vmatprep.subr.mxu0 %v7054
        %7242 = vmatpush1.msra.mxu0 %v7053
        %7243 = vmatprep.subr.mxu0 %v7046
        %7244 = vmatpush1.msra.mxu0 %v7045
        %7245 = vmatprep.subr.mxu0 %v7038
        %7246 = vmatpush1.msra.mxu0 %v7037
        %7247 = vmatprep.subr.mxu0 %v7030
        %7248 = vmatpush1.msra.mxu0 %v7029
        %7249 = vmatprep.subr.mxu0 %v7022
        %7250 = vmatpush1.msra.mxu0 %v7021
        %7251 = vmatprep.subr.mxu0 %v7014
        %7252 = vmatpush1.msra.mxu0 %v7013
        %7253 = vmatprep.subr.mxu0 %v7006
        %7254 = vmatpush1.msra.mxu0 %v7005
        %7255 = vmatprep.subr.mxu0 %v6998
        %7256 = vmatpush1.msra.mxu0 %v6997
        %7257 = vmatprep.subr.mxu0 %v6990
        %7258 = vmatpush1.msra.mxu0 %v6989
        %7259 = vmatprep.subr.mxu0 %v6982
        %7260 = vmatpush1.msra.mxu0 %v6981
        %7261 = vmatprep.subr.mxu0 %v6974
        %7262 = vmatpush1.msra.mxu0 %v6973
        %7263 = vmatprep.subr.mxu0 0.0
        %7264 = vmatpush2.msra.mxu0 0.0
        %7265 = vmatprep.subr.mxu0 0.0
        %7266 = vmatpush2.msra.mxu0 0.0
        %7267 = vmatprep.subr.mxu0 0.0
        %7268 = vmatpush2.msra.mxu0 0.0
        %7269 = vmatprep.subr.mxu0 0.0
        %7270 = vmatpush2.msra.mxu0 0.0
        %7271 = vmatprep.subr.mxu0 0.0
        %7272 = vmatpush2.msra.mxu0 0.0
        %7273 = vmatprep.subr.mxu0 0.0
        %7274 = vmatpush2.msra.mxu0 0.0
        %7275 = vmatprep.subr.mxu0 0.0
        %7276 = vmatpush2.msra.mxu0 0.0
        %7277 = vmatprep.subr.mxu0 0.0
        %7278 = vmatpush2.msra.mxu0 0.0
        %7279 = vmatprep.subr.mxu0 0.0
        %7280 = vmatpush2.msra.mxu0 0.0
        %7281 = vmatprep.subr.mxu0 0.0
        %7282 = vmatpush2.msra.mxu0 0.0
        %7283 = vmatprep.subr.mxu0 0.0
        %7284 = vmatpush2.msra.mxu0 0.0
        %7285 = vmatprep.subr.mxu0 0.0
        %7286 = vmatpush2.msra.mxu0 0.0
        %7287 = vmatprep.subr.mxu0 0.0
        %7288 = vmatpush2.msra.mxu0 0.0
        %7289 = vmatprep.subr.mxu0 0.0
        %7290 = vmatpush2.msra.mxu0 0.0
        %7291 = vmatprep.subr.mxu0 0.0
        %7292 = vmatpush2.msra.mxu0 0.0
        %7293 = vmatprep.subr.mxu0 0.0
        %7294 = vmatpush2.msra.mxu0 0.0
        %7295 = vmatprep.mubr.f32.mxu0 0.0
        %7296 = vmatmul.mubr.f32.gmra.mxu0 %v971
        %v7297 = vpop.f32.mrf.mxu0
        %v7298 = vadd.f32 0.0, %v7297
        %v7299 = vpop.f32.mrf.mxu0
        %v7300 = vadd.f32 0.0, %v7299
        %7301 = vmatprep.mubr.f32.mxu0 0.0
        %7302 = vmatmul.mubr.f32.gmra.mxu0 %v974
        %v7303 = vpop.f32.mrf.mxu0
        %v7304 = vadd.f32 0.0, %v7303
        %v7305 = vpop.f32.mrf.mxu0
        %v7306 = vadd.f32 0.0, %v7305
        %7307 = vmatprep.mubr.f32.mxu0 0.0
        %7308 = vmatmul.mubr.f32.gmra.mxu0 %v977
        %v7309 = vpop.f32.mrf.mxu0
        %v7310 = vadd.f32 0.0, %v7309
        %v7311 = vpop.f32.mrf.mxu0
        %v7312 = vadd.f32 0.0, %v7311
        %7313 = vdwg.mxu0
        %7314 = vmatprep.subr.mxu0 0.0
        %7315 = vmatpush1.msra.mxu0 0.0
        %7316 = vmatprep.subr.mxu0 0.0
        %7317 = vmatpush1.msra.mxu0 0.0
        %7318 = vmatprep.subr.mxu0 0.0
        %7319 = vmatpush1.msra.mxu0 0.0
        %7320 = vmatprep.subr.mxu0 0.0
        %7321 = vmatpush1.msra.mxu0 0.0
        %7322 = vmatprep.subr.mxu0 %v7064
        %7323 = vmatpush1.msra.mxu0 %v7063
        %7324 = vmatprep.subr.mxu0 %v7056
        %7325 = vmatpush1.msra.mxu0 %v7055
        %7326 = vmatprep.subr.mxu0 %v7048
        %7327 = vmatpush1.msra.mxu0 %v7047
        %7328 = vmatprep.subr.mxu0 %v7040
        %7329 = vmatpush1.msra.mxu0 %v7039
        %7330 = vmatprep.subr.mxu0 %v7032
        %7331 = vmatpush1.msra.mxu0 %v7031
        %7332 = vmatprep.subr.mxu0 %v7024
        %7333 = vmatpush1.msra.mxu0 %v7023
        %7334 = vmatprep.subr.mxu0 %v7016
        %7335 = vmatpush1.msra.mxu0 %v7015
        %7336 = vmatprep.subr.mxu0 %v7008
        %7337 = vmatpush1.msra.mxu0 %v7007
        %7338 = vmatprep.subr.mxu0 %v7000
        %7339 = vmatpush1.msra.mxu0 %v6999
        %7340 = vmatprep.subr.mxu0 %v6992
        %7341 = vmatpush1.msra.mxu0 %v6991
        %7342 = vmatprep.subr.mxu0 %v6984
        %7343 = vmatpush1.msra.mxu0 %v6983
        %7344 = vmatprep.subr.mxu0 %v6976
        %7345 = vmatpush1.msra.mxu0 %v6975
        %7346 = vmatprep.subr.mxu0 0.0
        %7347 = vmatpush2.msra.mxu0 0.0
        %7348 = vmatprep.subr.mxu0 0.0
        %7349 = vmatpush2.msra.mxu0 0.0
        %7350 = vmatprep.subr.mxu0 0.0
        %7351 = vmatpush2.msra.mxu0 0.0
        %7352 = vmatprep.subr.mxu0 0.0
        %7353 = vmatpush2.msra.mxu0 0.0
        %7354 = vmatprep.subr.mxu0 0.0
        %7355 = vmatpush2.msra.mxu0 0.0
        %7356 = vmatprep.subr.mxu0 0.0
        %7357 = vmatpush2.msra.mxu0 0.0
        %7358 = vmatprep.subr.mxu0 0.0
        %7359 = vmatpush2.msra.mxu0 0.0
        %7360 = vmatprep.subr.mxu0 0.0
        %7361 = vmatpush2.msra.mxu0 0.0
        %7362 = vmatprep.subr.mxu0 0.0
        %7363 = vmatpush2.msra.mxu0 0.0
        %7364 = vmatprep.subr.mxu0 0.0
        %7365 = vmatpush2.msra.mxu0 0.0
        %7366 = vmatprep.subr.mxu0 0.0
        %7367 = vmatpush2.msra.mxu0 0.0
        %7368 = vmatprep.subr.mxu0 0.0
        %7369 = vmatpush2.msra.mxu0 0.0
        %7370 = vmatprep.subr.mxu0 0.0
        %7371 = vmatpush2.msra.mxu0 0.0
        %7372 = vmatprep.subr.mxu0 0.0
        %7373 = vmatpush2.msra.mxu0 0.0
        %7374 = vmatprep.subr.mxu0 0.0
        %7375 = vmatpush2.msra.mxu0 0.0
        %7376 = vmatprep.subr.mxu0 0.0
        %7377 = vmatpush2.msra.mxu0 0.0
        %7378 = vmatprep.mubr.f32.mxu0 0.0
        %7379 = vmatmul.mubr.f32.gmra.mxu0 %v971
        %v7380 = vpop.f32.mrf.mxu0
        %v7381 = vadd.f32 0.0, %v7380
        %v7382 = vpop.f32.mrf.mxu0
        %v7383 = vadd.f32 0.0, %v7382
        %7384 = vmatprep.mubr.f32.mxu0 0.0
        %7385 = vmatmul.mubr.f32.gmra.mxu0 %v974
        %v7386 = vpop.f32.mrf.mxu0
        %v7387 = vadd.f32 0.0, %v7386
        %v7388 = vpop.f32.mrf.mxu0
        %v7389 = vadd.f32 0.0, %v7388
        %7390 = vmatprep.mubr.f32.mxu0 0.0
        %7391 = vmatmul.mubr.f32.gmra.mxu0 %v977
        %v7392 = vpop.f32.mrf.mxu0
        %v7393 = vadd.f32 0.0, %v7392
        %v7394 = vpop.f32.mrf.mxu0
        %v7395 = vadd.f32 0.0, %v7394
        %7396 = vdwg.mxu0
        %v7397 = vmul.f32 %v7132, %v7132
        %v7398 = vmul.f32 %v7134, %v7134
        %v7399 = vmul.f32 %v7215, %v7215
        %v7400 = vmul.f32 %v7217, %v7217
        %v7401 = vmul.f32 %v7298, %v7298
        %v7402 = vmul.f32 %v7300, %v7300
        %v7403 = vmul.f32 %v7381, %v7381
        %v7404 = vmul.f32 %v7383, %v7383
        %v7405 = vmul.f32 %v7138, %v7138
        %v7406 = vmul.f32 %v7140, %v7140
        %v7407 = vmul.f32 %v7221, %v7221
        %v7408 = vmul.f32 %v7223, %v7223
        %v7409 = vmul.f32 %v7304, %v7304
        %v7410 = vmul.f32 %v7306, %v7306
        %v7411 = vmul.f32 %v7387, %v7387
        %v7412 = vmul.f32 %v7389, %v7389
        %v7413 = vmul.f32 %v7144, %v7144
        %v7414 = vmul.f32 %v7146, %v7146
        %v7415 = vmul.f32 %v7227, %v7227
        %v7416 = vmul.f32 %v7229, %v7229
        %v7417 = vmul.f32 %v7310, %v7310
        %v7418 = vmul.f32 %v7312, %v7312
        %v7419 = vmul.f32 %v7393, %v7393
        %v7420 = vmul.f32 %v7395, %v7395
        %7421 = vmatprep.subr.mxu0 0.0
        %7422 = vmatpush1.msra.mxu0 0.0
        %7423 = vmatprep.subr.mxu0 0.0
        %7424 = vmatpush1.msra.mxu0 0.0
        %7425 = vmatprep.subr.mxu0 0.0
        %7426 = vmatpush1.msra.mxu0 0.0
        %7427 = vmatprep.subr.mxu0 0.0
        %7428 = vmatpush1.msra.mxu0 0.0
        %7429 = vmatprep.subr.mxu0 0.0
        %7430 = vmatpush1.msra.mxu0 0.0
        %7431 = vmatprep.subr.mxu0 0.0
        %7432 = vmatpush1.msra.mxu0 0.0
        %7433 = vmatprep.subr.mxu0 0.0
        %7434 = vmatpush1.msra.mxu0 0.0
        %7435 = vmatprep.subr.mxu0 0.0
        %7436 = vmatpush1.msra.mxu0 0.0
        %7437 = vmatprep.subr.mxu0 0.0
        %7438 = vmatpush1.msra.mxu0 0.0
        %7439 = vmatprep.subr.mxu0 0.0
        %7440 = vmatpush1.msra.mxu0 0.0
        %7441 = vmatprep.subr.mxu0 0.0
        %7442 = vmatpush1.msra.mxu0 0.0
        %7443 = vmatprep.subr.mxu0 0.0
        %7444 = vmatpush1.msra.mxu0 0.0
        %7445 = vmatprep.subr.mxu0 0.0
        %7446 = vmatpush1.msra.mxu0 0.0
        %7447 = vmatprep.subr.mxu0 %v7414
        %7448 = vmatpush1.msra.mxu0 %v7413
        %7449 = vmatprep.subr.mxu0 %v7406
        %7450 = vmatpush1.msra.mxu0 %v7405
        %7451 = vmatprep.subr.mxu0 %v7398
        %7452 = vmatpush1.msra.mxu0 %v7397
        %7453 = vmatprep.subr.mxu0 0.0
        %7454 = vmatpush2.msra.mxu0 0.0
        %7455 = vmatprep.subr.mxu0 0.0
        %7456 = vmatpush2.msra.mxu0 0.0
        %7457 = vmatprep.subr.mxu0 0.0
        %7458 = vmatpush2.msra.mxu0 0.0
        %7459 = vmatprep.subr.mxu0 0.0
        %7460 = vmatpush2.msra.mxu0 0.0
        %7461 = vmatprep.subr.mxu0 0.0
        %7462 = vmatpush2.msra.mxu0 0.0
        %7463 = vmatprep.subr.mxu0 0.0
        %7464 = vmatpush2.msra.mxu0 0.0
        %7465 = vmatprep.subr.mxu0 0.0
        %7466 = vmatpush2.msra.mxu0 0.0
        %7467 = vmatprep.subr.mxu0 0.0
        %7468 = vmatpush2.msra.mxu0 0.0
        %7469 = vmatprep.subr.mxu0 0.0
        %7470 = vmatpush2.msra.mxu0 0.0
        %7471 = vmatprep.subr.mxu0 0.0
        %7472 = vmatpush2.msra.mxu0 0.0
        %7473 = vmatprep.subr.mxu0 0.0
        %7474 = vmatpush2.msra.mxu0 0.0
        %7475 = vmatprep.subr.mxu0 0.0
        %7476 = vmatpush2.msra.mxu0 0.0
        %7477 = vmatprep.subr.mxu0 0.0
        %7478 = vmatpush2.msra.mxu0 0.0
        %7479 = vmatprep.subr.mxu0 0.0
        %7480 = vmatpush2.msra.mxu0 0.0
        %7481 = vmatprep.subr.mxu0 0.0
        %7482 = vmatpush2.msra.mxu0 0.0
        %7483 = vmatprep.subr.mxu0 0.0
        %7484 = vmatpush2.msra.mxu0 0.0
        %7485 = vmatprep.mubr.f32.mxu0 0.0
        %7486 = vmatmul.mubr.f32.gmra.mxu0 %v1361
        %v7487 = vpop.f32.mrf.mxu0
        %v7488 = vadd.f32 0.0, %v7487
        %v7489 = vpop.f32.mrf.mxu0
        %v7490 = vadd.f32 0.0, %v7489
        %7491 = vmatprep.mubr.f32.mxu0 0.0
        %7492 = vmatmul.mubr.f32.gmra.mxu0 %v1364
        %v7493 = vpop.f32.mrf.mxu0
        %v7494 = vadd.f32 0.0, %v7493
        %v7495 = vpop.f32.mrf.mxu0
        %v7496 = vadd.f32 0.0, %v7495
        %7497 = vmatprep.mubr.f32.mxu0 0.0
        %7498 = vmatmul.mubr.f32.gmra.mxu0 %v1367
        %v7499 = vpop.f32.mrf.mxu0
        %v7500 = vadd.f32 0.0, %v7499
        %v7501 = vpop.f32.mrf.mxu0
        %v7502 = vadd.f32 0.0, %v7501
        %7503 = vdwg.mxu0
        %7504 = vmatprep.subr.mxu0 0.0
        %7505 = vmatpush1.msra.mxu0 0.0
        %7506 = vmatprep.subr.mxu0 0.0
        %7507 = vmatpush1.msra.mxu0 0.0
        %7508 = vmatprep.subr.mxu0 0.0
        %7509 = vmatpush1.msra.mxu0 0.0
        %7510 = vmatprep.subr.mxu0 0.0
        %7511 = vmatpush1.msra.mxu0 0.0
        %7512 = vmatprep.subr.mxu0 0.0
        %7513 = vmatpush1.msra.mxu0 0.0
        %7514 = vmatprep.subr.mxu0 0.0
        %7515 = vmatpush1.msra.mxu0 0.0
        %7516 = vmatprep.subr.mxu0 0.0
        %7517 = vmatpush1.msra.mxu0 0.0
        %7518 = vmatprep.subr.mxu0 0.0
        %7519 = vmatpush1.msra.mxu0 0.0
        %7520 = vmatprep.subr.mxu0 0.0
        %7521 = vmatpush1.msra.mxu0 0.0
        %7522 = vmatprep.subr.mxu0 0.0
        %7523 = vmatpush1.msra.mxu0 0.0
        %7524 = vmatprep.subr.mxu0 0.0
        %7525 = vmatpush1.msra.mxu0 0.0
        %7526 = vmatprep.subr.mxu0 0.0
        %7527 = vmatpush1.msra.mxu0 0.0
        %7528 = vmatprep.subr.mxu0 0.0
        %7529 = vmatpush1.msra.mxu0 0.0
        %7530 = vmatprep.subr.mxu0 %v7416
        %7531 = vmatpush1.msra.mxu0 %v7415
        %7532 = vmatprep.subr.mxu0 %v7408
        %7533 = vmatpush1.msra.mxu0 %v7407
        %7534 = vmatprep.subr.mxu0 %v7400
        %7535 = vmatpush1.msra.mxu0 %v7399
        %7536 = vmatprep.subr.mxu0 0.0
        %7537 = vmatpush2.msra.mxu0 0.0
        %7538 = vmatprep.subr.mxu0 0.0
        %7539 = vmatpush2.msra.mxu0 0.0
        %7540 = vmatprep.subr.mxu0 0.0
        %7541 = vmatpush2.msra.mxu0 0.0
        %7542 = vmatprep.subr.mxu0 0.0
        %7543 = vmatpush2.msra.mxu0 0.0
        %7544 = vmatprep.subr.mxu0 0.0
        %7545 = vmatpush2.msra.mxu0 0.0
        %7546 = vmatprep.subr.mxu0 0.0
        %7547 = vmatpush2.msra.mxu0 0.0
        %7548 = vmatprep.subr.mxu0 0.0
        %7549 = vmatpush2.msra.mxu0 0.0
        %7550 = vmatprep.subr.mxu0 0.0
        %7551 = vmatpush2.msra.mxu0 0.0
        %7552 = vmatprep.subr.mxu0 0.0
        %7553 = vmatpush2.msra.mxu0 0.0
        %7554 = vmatprep.subr.mxu0 0.0
        %7555 = vmatpush2.msra.mxu0 0.0
        %7556 = vmatprep.subr.mxu0 0.0
        %7557 = vmatpush2.msra.mxu0 0.0
        %7558 = vmatprep.subr.mxu0 0.0
        %7559 = vmatpush2.msra.mxu0 0.0
        %7560 = vmatprep.subr.mxu0 0.0
        %7561 = vmatpush2.msra.mxu0 0.0
        %7562 = vmatprep.subr.mxu0 0.0
        %7563 = vmatpush2.msra.mxu0 0.0
        %7564 = vmatprep.subr.mxu0 0.0
        %7565 = vmatpush2.msra.mxu0 0.0
        %7566 = vmatprep.subr.mxu0 0.0
        %7567 = vmatpush2.msra.mxu0 0.0
        %7568 = vmatprep.mubr.f32.mxu0 0.0
        %7569 = vmatmul.mubr.f32.gmra.mxu0 %v1361
        %v7570 = vpop.f32.mrf.mxu0
        %v7571 = vadd.f32 0.0, %v7570
        %v7572 = vpop.f32.mrf.mxu0
        %v7573 = vadd.f32 0.0, %v7572
        %7574 = vmatprep.mubr.f32.mxu0 0.0
        %7575 = vmatmul.mubr.f32.gmra.mxu0 %v1364
        %v7576 = vpop.f32.mrf.mxu0
        %v7577 = vadd.f32 0.0, %v7576
        %v7578 = vpop.f32.mrf.mxu0
        %v7579 = vadd.f32 0.0, %v7578
        %7580 = vmatprep.mubr.f32.mxu0 0.0
        %7581 = vmatmul.mubr.f32.gmra.mxu0 %v1367
        %v7582 = vpop.f32.mrf.mxu0
        %v7583 = vadd.f32 0.0, %v7582
        %v7584 = vpop.f32.mrf.mxu0
        %v7585 = vadd.f32 0.0, %v7584
        %7586 = vdwg.mxu0
        %7587 = vmatprep.subr.mxu0 0.0
        %7588 = vmatpush1.msra.mxu0 0.0
        %7589 = vmatprep.subr.mxu0 0.0
        %7590 = vmatpush1.msra.mxu0 0.0
        %7591 = vmatprep.subr.mxu0 0.0
        %7592 = vmatpush1.msra.mxu0 0.0
        %7593 = vmatprep.subr.mxu0 0.0
        %7594 = vmatpush1.msra.mxu0 0.0
        %7595 = vmatprep.subr.mxu0 0.0
        %7596 = vmatpush1.msra.mxu0 0.0
        %7597 = vmatprep.subr.mxu0 0.0
        %7598 = vmatpush1.msra.mxu0 0.0
        %7599 = vmatprep.subr.mxu0 0.0
        %7600 = vmatpush1.msra.mxu0 0.0
        %7601 = vmatprep.subr.mxu0 0.0
        %7602 = vmatpush1.msra.mxu0 0.0
        %7603 = vmatprep.subr.mxu0 0.0
        %7604 = vmatpush1.msra.mxu0 0.0
        %7605 = vmatprep.subr.mxu0 0.0
        %7606 = vmatpush1.msra.mxu0 0.0
        %7607 = vmatprep.subr.mxu0 0.0
        %7608 = vmatpush1.msra.mxu0 0.0
        %7609 = vmatprep.subr.mxu0 0.0
        %7610 = vmatpush1.msra.mxu0 0.0
        %7611 = vmatprep.subr.mxu0 0.0
        %7612 = vmatpush1.msra.mxu0 0.0
        %7613 = vmatprep.subr.mxu0 %v7418
        %7614 = vmatpush1.msra.mxu0 %v7417
        %7615 = vmatprep.subr.mxu0 %v7410
        %7616 = vmatpush1.msra.mxu0 %v7409
        %7617 = vmatprep.subr.mxu0 %v7402
        %7618 = vmatpush1.msra.mxu0 %v7401
        %7619 = vmatprep.subr.mxu0 0.0
        %7620 = vmatpush2.msra.mxu0 0.0
        %7621 = vmatprep.subr.mxu0 0.0
        %7622 = vmatpush2.msra.mxu0 0.0
        %7623 = vmatprep.subr.mxu0 0.0
        %7624 = vmatpush2.msra.mxu0 0.0
        %7625 = vmatprep.subr.mxu0 0.0
        %7626 = vmatpush2.msra.mxu0 0.0
        %7627 = vmatprep.subr.mxu0 0.0
        %7628 = vmatpush2.msra.mxu0 0.0
        %7629 = vmatprep.subr.mxu0 0.0
        %7630 = vmatpush2.msra.mxu0 0.0
        %7631 = vmatprep.subr.mxu0 0.0
        %7632 = vmatpush2.msra.mxu0 0.0
        %7633 = vmatprep.subr.mxu0 0.0
        %7634 = vmatpush2.msra.mxu0 0.0
        %7635 = vmatprep.subr.mxu0 0.0
        %7636 = vmatpush2.msra.mxu0 0.0
        %7637 = vmatprep.subr.mxu0 0.0
        %7638 = vmatpush2.msra.mxu0 0.0
        %7639 = vmatprep.subr.mxu0 0.0
        %7640 = vmatpush2.msra.mxu0 0.0
        %7641 = vmatprep.subr.mxu0 0.0
        %7642 = vmatpush2.msra.mxu0 0.0
        %7643 = vmatprep.subr.mxu0 0.0
        %7644 = vmatpush2.msra.mxu0 0.0
        %7645 = vmatprep.subr.mxu0 0.0
        %7646 = vmatpush2.msra.mxu0 0.0
        %7647 = vmatprep.subr.mxu0 0.0
        %7648 = vmatpush2.msra.mxu0 0.0
        %7649 = vmatprep.subr.mxu0 0.0
        %7650 = vmatpush2.msra.mxu0 0.0
        %7651 = vmatprep.mubr.f32.mxu0 0.0
        %7652 = vmatmul.mubr.f32.gmra.mxu0 %v1361
        %v7653 = vpop.f32.mrf.mxu0
        %v7654 = vadd.f32 0.0, %v7653
        %v7655 = vpop.f32.mrf.mxu0
        %v7656 = vadd.f32 0.0, %v7655
        %7657 = vmatprep.mubr.f32.mxu0 0.0
        %7658 = vmatmul.mubr.f32.gmra.mxu0 %v1364
        %v7659 = vpop.f32.mrf.mxu0
        %v7660 = vadd.f32 0.0, %v7659
        %v7661 = vpop.f32.mrf.mxu0
        %v7662 = vadd.f32 0.0, %v7661
        %7663 = vmatprep.mubr.f32.mxu0 0.0
        %7664 = vmatmul.mubr.f32.gmra.mxu0 %v1367
        %v7665 = vpop.f32.mrf.mxu0
        %v7666 = vadd.f32 0.0, %v7665
        %v7667 = vpop.f32.mrf.mxu0
        %v7668 = vadd.f32 0.0, %v7667
        %7669 = vdwg.mxu0
        %7670 = vmatprep.subr.mxu0 0.0
        %7671 = vmatpush1.msra.mxu0 0.0
        %7672 = vmatprep.subr.mxu0 0.0
        %7673 = vmatpush1.msra.mxu0 0.0
        %7674 = vmatprep.subr.mxu0 0.0
        %7675 = vmatpush1.msra.mxu0 0.0
        %7676 = vmatprep.subr.mxu0 0.0
        %7677 = vmatpush1.msra.mxu0 0.0
        %7678 = vmatprep.subr.mxu0 0.0
        %7679 = vmatpush1.msra.mxu0 0.0
        %7680 = vmatprep.subr.mxu0 0.0
        %7681 = vmatpush1.msra.mxu0 0.0
        %7682 = vmatprep.subr.mxu0 0.0
        %7683 = vmatpush1.msra.mxu0 0.0
        %7684 = vmatprep.subr.mxu0 0.0
        %7685 = vmatpush1.msra.mxu0 0.0
        %7686 = vmatprep.subr.mxu0 0.0
        %7687 = vmatpush1.msra.mxu0 0.0
        %7688 = vmatprep.subr.mxu0 0.0
        %7689 = vmatpush1.msra.mxu0 0.0
        %7690 = vmatprep.subr.mxu0 0.0
        %7691 = vmatpush1.msra.mxu0 0.0
        %7692 = vmatprep.subr.mxu0 0.0
        %7693 = vmatpush1.msra.mxu0 0.0
        %7694 = vmatprep.subr.mxu0 0.0
        %7695 = vmatpush1.msra.mxu0 0.0
        %7696 = vmatprep.subr.mxu0 %v7420
        %7697 = vmatpush1.msra.mxu0 %v7419
        %7698 = vmatprep.subr.mxu0 %v7412
        %7699 = vmatpush1.msra.mxu0 %v7411
        %7700 = vmatprep.subr.mxu0 %v7404
        %7701 = vmatpush1.msra.mxu0 %v7403
        %7702 = vmatprep.subr.mxu0 0.0
        %7703 = vmatpush2.msra.mxu0 0.0
        %7704 = vmatprep.subr.mxu0 0.0
        %7705 = vmatpush2.msra.mxu0 0.0
        %7706 = vmatprep.subr.mxu0 0.0
        %7707 = vmatpush2.msra.mxu0 0.0
        %7708 = vmatprep.subr.mxu0 0.0
        %7709 = vmatpush2.msra.mxu0 0.0
        %7710 = vmatprep.subr.mxu0 0.0
        %7711 = vmatpush2.msra.mxu0 0.0
        %7712 = vmatprep.subr.mxu0 0.0
        %7713 = vmatpush2.msra.mxu0 0.0
        %7714 = vmatprep.subr.mxu0 0.0
        %7715 = vmatpush2.msra.mxu0 0.0
        %7716 = vmatprep.subr.mxu0 0.0
        %7717 = vmatpush2.msra.mxu0 0.0
        %7718 = vmatprep.subr.mxu0 0.0
        %7719 = vmatpush2.msra.mxu0 0.0
        %7720 = vmatprep.subr.mxu0 0.0
        %7721 = vmatpush2.msra.mxu0 0.0
        %7722 = vmatprep.subr.mxu0 0.0
        %7723 = vmatpush2.msra.mxu0 0.0
        %7724 = vmatprep.subr.mxu0 0.0
        %7725 = vmatpush2.msra.mxu0 0.0
        %7726 = vmatprep.subr.mxu0 0.0
        %7727 = vmatpush2.msra.mxu0 0.0
        %7728 = vmatprep.subr.mxu0 0.0
        %7729 = vmatpush2.msra.mxu0 0.0
        %7730 = vmatprep.subr.mxu0 0.0
        %7731 = vmatpush2.msra.mxu0 0.0
        %7732 = vmatprep.subr.mxu0 0.0
        %7733 = vmatpush2.msra.mxu0 0.0
        %7734 = vmatprep.mubr.f32.mxu0 0.0
        %7735 = vmatmul.mubr.f32.gmra.mxu0 %v1361
        %v7736 = vpop.f32.mrf.mxu0
        %v7737 = vadd.f32 0.0, %v7736
        %v7738 = vpop.f32.mrf.mxu0
        %v7739 = vadd.f32 0.0, %v7738
        %7740 = vmatprep.mubr.f32.mxu0 0.0
        %7741 = vmatmul.mubr.f32.gmra.mxu0 %v1364
        %v7742 = vpop.f32.mrf.mxu0
        %v7743 = vadd.f32 0.0, %v7742
        %v7744 = vpop.f32.mrf.mxu0
        %v7745 = vadd.f32 0.0, %v7744
        %7746 = vmatprep.mubr.f32.mxu0 0.0
        %7747 = vmatmul.mubr.f32.gmra.mxu0 %v1367
        %v7748 = vpop.f32.mrf.mxu0
        %v7749 = vadd.f32 0.0, %v7748
        %v7750 = vpop.f32.mrf.mxu0
        %v7751 = vadd.f32 0.0, %v7750
        %7752 = vdwg.mxu0
        %v7753 = vadd.f32 %v7488, 1.0
        %v7754 = vadd.f32 %v7490, 1.0
        %v7755 = vadd.f32 %v7571, 1.0
        %v7756 = vadd.f32 %v7573, 1.0
        %v7757 = vadd.f32 %v7654, 1.0
        %v7758 = vadd.f32 %v7656, 1.0
        %v7759 = vadd.f32 %v7737, 1.0
        %v7760 = vadd.f32 %v7739, 1.0
        %v7761 = vadd.f32 %v7494, 1.0
        %v7762 = vadd.f32 %v7496, 1.0
        %v7763 = vadd.f32 %v7577, 1.0
        %v7764 = vadd.f32 %v7579, 1.0
        %v7765 = vadd.f32 %v7660, 1.0
        %v7766 = vadd.f32 %v7662, 1.0
        %v7767 = vadd.f32 %v7743, 1.0
        %v7768 = vadd.f32 %v7745, 1.0
        %v7769 = vadd.f32 %v7500, 1.0
        %v7770 = vadd.f32 %v7502, 1.0
        %v7771 = vadd.f32 %v7583, 1.0
        %v7772 = vadd.f32 %v7585, 1.0
        %v7773 = vadd.f32 %v7666, 1.0
        %v7774 = vadd.f32 %v7668, 1.0
        %v7775 = vadd.f32 %v7749, 1.0
        %v7776 = vadd.f32 %v7751, 1.0
        %v7777 = vrcp.pop %v7753
        %v7778 = vmul.f32 %v7488, %v7777
        %v7779 = vrcp.pop %v7754
        %v7780 = vmul.f32 %v7490, %v7779
        %v7781 = vrcp.pop %v7755
        %v7782 = vmul.f32 %v7571, %v7781
        %v7783 = vrcp.pop %v7756
        %v7784 = vmul.f32 %v7573, %v7783
        %v7785 = vrcp.pop %v7757
        %v7786 = vmul.f32 %v7654, %v7785
        %v7787 = vrcp.pop %v7758
        %v7788 = vmul.f32 %v7656, %v7787
        %v7789 = vrcp.pop %v7759
        %v7790 = vmul.f32 %v7737, %v7789
        %v7791 = vrcp.pop %v7760
        %v7792 = vmul.f32 %v7739, %v7791
        %v7793 = vrcp.pop %v7761
        %v7794 = vmul.f32 %v7494, %v7793
        %v7795 = vrcp.pop %v7762
        %v7796 = vmul.f32 %v7496, %v7795
        %v7797 = vrcp.pop %v7763
        %v7798 = vmul.f32 %v7577, %v7797
        %v7799 = vrcp.pop %v7764
        %v7800 = vmul.f32 %v7579, %v7799
        %v7801 = vrcp.pop %v7765
        %v7802 = vmul.f32 %v7660, %v7801
        %v7803 = vrcp.pop %v7766
        %v7804 = vmul.f32 %v7662, %v7803
        %v7805 = vrcp.pop %v7767
        %v7806 = vmul.f32 %v7743, %v7805
        %v7807 = vrcp.pop %v7768
        %v7808 = vmul.f32 %v7745, %v7807
        %v7809 = vrcp.pop %v7769
        %v7810 = vmul.f32 %v7500, %v7809
        %v7811 = vrcp.pop %v7770
        %v7812 = vmul.f32 %v7502, %v7811
        %v7813 = vrcp.pop %v7771
        %v7814 = vmul.f32 %v7583, %v7813
        %v7815 = vrcp.pop %v7772
        %v7816 = vmul.f32 %v7585, %v7815
        %v7817 = vrcp.pop %v7773
        %v7818 = vmul.f32 %v7666, %v7817
        %v7819 = vrcp.pop %v7774
        %v7820 = vmul.f32 %v7668, %v7819
        %v7821 = vrcp.pop %v7775
        %v7822 = vmul.f32 %v7749, %v7821
        %v7823 = vrcp.pop %v7776
        %v7824 = vmul.f32 %v7751, %v7823
        %v7825 = vadd.f32 %v7488, 1e-08
        %v7826 = vadd.f32 %v7490, 1e-08
        %v7827 = vadd.f32 %v7571, 1e-08
        %v7828 = vadd.f32 %v7573, 1e-08
        %v7829 = vadd.f32 %v7654, 1e-08
        %v7830 = vadd.f32 %v7656, 1e-08
        %v7831 = vadd.f32 %v7737, 1e-08
        %v7832 = vadd.f32 %v7739, 1e-08
        %v7833 = vadd.f32 %v7494, 1e-08
        %v7834 = vadd.f32 %v7496, 1e-08
        %v7835 = vadd.f32 %v7577, 1e-08
        %v7836 = vadd.f32 %v7579, 1e-08
        %v7837 = vadd.f32 %v7660, 1e-08
        %v7838 = vadd.f32 %v7662, 1e-08
        %v7839 = vadd.f32 %v7743, 1e-08
        %v7840 = vadd.f32 %v7745, 1e-08
        %v7841 = vadd.f32 %v7500, 1e-08
        %v7842 = vadd.f32 %v7502, 1e-08
        %v7843 = vadd.f32 %v7583, 1e-08
        %v7844 = vadd.f32 %v7585, 1e-08
        %v7845 = vadd.f32 %v7666, 1e-08
        %v7846 = vadd.f32 %v7668, 1e-08
        %v7847 = vadd.f32 %v7749, 1e-08
        %v7848 = vadd.f32 %v7751, 1e-08
        %v7849 = vrsqrt.pop %v7825
        %v7850 = vrsqrt.pop %v7826
        %v7851 = vrsqrt.pop %v7827
        %v7852 = vrsqrt.pop %v7828
        %v7853 = vrsqrt.pop %v7829
        %v7854 = vrsqrt.pop %v7830
        %v7855 = vrsqrt.pop %v7831
        %v7856 = vrsqrt.pop %v7832
        %v7857 = vrsqrt.pop %v7833
        %v7858 = vrsqrt.pop %v7834
        %v7859 = vrsqrt.pop %v7835
        %v7860 = vrsqrt.pop %v7836
        %v7861 = vrsqrt.pop %v7837
        %v7862 = vrsqrt.pop %v7838
        %v7863 = vrsqrt.pop %v7839
        %v7864 = vrsqrt.pop %v7840
        %v7865 = vrsqrt.pop %v7841
        %v7866 = vrsqrt.pop %v7842
        %v7867 = vrsqrt.pop %v7843
        %v7868 = vrsqrt.pop %v7844
        %v7869 = vrsqrt.pop %v7845
        %v7870 = vrsqrt.pop %v7846
        %v7871 = vrsqrt.pop %v7847
        %v7872 = vrsqrt.pop %v7848
        %v7873 = vmul.f32 %v7778, %v7849
        %v7874 = vmul.f32 %v7780, %v7850
        %v7875 = vmul.f32 %v7782, %v7851
        %v7876 = vmul.f32 %v7784, %v7852
        %v7877 = vmul.f32 %v7786, %v7853
        %v7878 = vmul.f32 %v7788, %v7854
        %v7879 = vmul.f32 %v7790, %v7855
        %v7880 = vmul.f32 %v7792, %v7856
        %v7881 = vmul.f32 %v7794, %v7857
        %v7882 = vmul.f32 %v7796, %v7858
        %v7883 = vmul.f32 %v7798, %v7859
        %v7884 = vmul.f32 %v7800, %v7860
        %v7885 = vmul.f32 %v7802, %v7861
        %v7886 = vmul.f32 %v7804, %v7862
        %v7887 = vmul.f32 %v7806, %v7863
        %v7888 = vmul.f32 %v7808, %v7864
        %v7889 = vmul.f32 %v7810, %v7865
        %v7890 = vmul.f32 %v7812, %v7866
        %v7891 = vmul.f32 %v7814, %v7867
        %v7892 = vmul.f32 %v7816, %v7868
        %v7893 = vmul.f32 %v7818, %v7869
        %v7894 = vmul.f32 %v7820, %v7870
        %v7895 = vmul.f32 %v7822, %v7871
        %v7896 = vmul.f32 %v7824, %v7872
        %v7897 = vmul.f32 %v7873, %v7132
        %v7898 = vmul.f32 %v7874, %v7134
        %v7899 = vmul.f32 %v7875, %v7215
        %v7900 = vmul.f32 %v7876, %v7217
        %v7901 = vmul.f32 %v7877, %v7298
        %v7902 = vmul.f32 %v7878, %v7300
        %v7903 = vmul.f32 %v7879, %v7381
        %v7904 = vmul.f32 %v7880, %v7383
        %v7905 = vmul.f32 %v7881, %v7138
        %v7906 = vmul.f32 %v7882, %v7140
        %v7907 = vmul.f32 %v7883, %v7221
        %v7908 = vmul.f32 %v7884, %v7223
        %v7909 = vmul.f32 %v7885, %v7304
        %v7910 = vmul.f32 %v7886, %v7306
        %v7911 = vmul.f32 %v7887, %v7387
        %v7912 = vmul.f32 %v7888, %v7389
        %v7913 = vmul.f32 %v7889, %v7144
        %v7914 = vmul.f32 %v7890, %v7146
        %v7915 = vmul.f32 %v7891, %v7227
        %v7916 = vmul.f32 %v7892, %v7229
        %v7917 = vmul.f32 %v7893, %v7310
        %v7918 = vmul.f32 %v7894, %v7312
        %v7919 = vmul.f32 %v7895, %v7393
        %v7920 = vmul.f32 %v7896, %v7395
        %v7921 = vmul.f32 %v7897, %v7897
        %v7922 = vmul.f32 %v7898, %v7898
        %v7923 = vmul.f32 %v7899, %v7899
        %v7924 = vmul.f32 %v7900, %v7900
        %v7925 = vmul.f32 %v7901, %v7901
        %v7926 = vmul.f32 %v7902, %v7902
        %v7927 = vmul.f32 %v7903, %v7903
        %v7928 = vmul.f32 %v7904, %v7904
        %v7929 = vmul.f32 %v7905, %v7905
        %v7930 = vmul.f32 %v7906, %v7906
        %v7931 = vmul.f32 %v7907, %v7907
        %v7932 = vmul.f32 %v7908, %v7908
        %v7933 = vmul.f32 %v7909, %v7909
        %v7934 = vmul.f32 %v7910, %v7910
        %v7935 = vmul.f32 %v7911, %v7911
        %v7936 = vmul.f32 %v7912, %v7912
        %v7937 = vmul.f32 %v7913, %v7913
        %v7938 = vmul.f32 %v7914, %v7914
        %v7939 = vmul.f32 %v7915, %v7915
        %v7940 = vmul.f32 %v7916, %v7916
        %v7941 = vmul.f32 %v7917, %v7917
        %v7942 = vmul.f32 %v7918, %v7918
        %v7943 = vmul.f32 %v7919, %v7919
        %v7944 = vmul.f32 %v7920, %v7920
        %v7946 = vsel %vm1359, %v967, 0
        %7948 = vmatprep.subr.mxu0 0.0
        %7949 = vmatpush1.msra.mxu0 0.0
        %7950 = vmatprep.subr.mxu0 0.0
        %7951 = vmatpush1.msra.mxu0 0.0
        %7952 = vmatprep.subr.mxu0 0.0
        %7953 = vmatpush1.msra.mxu0 0.0
        %7954 = vmatprep.subr.mxu0 0.0
        %7955 = vmatpush1.msra.mxu0 0.0
        %7956 = vmatprep.subr.mxu0 0.0
        %7957 = vmatpush1.msra.mxu0 0.0
        %7958 = vmatprep.subr.mxu0 0.0
        %7959 = vmatpush1.msra.mxu0 0.0
        %7960 = vmatprep.subr.mxu0 0.0
        %7961 = vmatpush1.msra.mxu0 0.0
        %7962 = vmatprep.subr.mxu0 0.0
        %7963 = vmatpush1.msra.mxu0 0.0
        %7964 = vmatprep.subr.mxu0 0.0
        %7965 = vmatpush1.msra.mxu0 0.0
        %7966 = vmatprep.subr.mxu0 0.0
        %7967 = vmatpush1.msra.mxu0 0.0
        %7968 = vmatprep.subr.mxu0 0.0
        %7969 = vmatpush1.msra.mxu0 0.0
        %7970 = vmatprep.subr.mxu0 0.0
        %7971 = vmatpush1.msra.mxu0 0.0
        %7972 = vmatprep.subr.mxu0 0.0
        %7973 = vmatpush1.msra.mxu0 0.0
        %7974 = vmatprep.subr.mxu0 %v7938
        %7975 = vmatpush1.msra.mxu0 %v7937
        %7976 = vmatprep.subr.mxu0 %v7930
        %7977 = vmatpush1.msra.mxu0 %v7929
        %7978 = vmatprep.subr.mxu0 %v7922
        %7979 = vmatpush1.msra.mxu0 %v7921
        %7980 = vmatprep.subr.mxu0 0.0
        %7981 = vmatpush2.msra.mxu0 0.0
        %7982 = vmatprep.subr.mxu0 0.0
        %7983 = vmatpush2.msra.mxu0 0.0
        %7984 = vmatprep.subr.mxu0 0.0
        %7985 = vmatpush2.msra.mxu0 0.0
        %7986 = vmatprep.subr.mxu0 0.0
        %7987 = vmatpush2.msra.mxu0 0.0
        %7988 = vmatprep.subr.mxu0 0.0
        %7989 = vmatpush2.msra.mxu0 0.0
        %7990 = vmatprep.subr.mxu0 0.0
        %7991 = vmatpush2.msra.mxu0 0.0
        %7992 = vmatprep.subr.mxu0 0.0
        %7993 = vmatpush2.msra.mxu0 0.0
        %7994 = vmatprep.subr.mxu0 0.0
        %7995 = vmatpush2.msra.mxu0 0.0
        %7996 = vmatprep.subr.mxu0 0.0
        %7997 = vmatpush2.msra.mxu0 0.0
        %7998 = vmatprep.subr.mxu0 0.0
        %7999 = vmatpush2.msra.mxu0 0.0
        %8000 = vmatprep.subr.mxu0 0.0
        %8001 = vmatpush2.msra.mxu0 0.0
        %8002 = vmatprep.subr.mxu0 0.0
        %8003 = vmatpush2.msra.mxu0 0.0
        %8004 = vmatprep.subr.mxu0 0.0
        %8005 = vmatpush2.msra.mxu0 0.0
        %8006 = vmatprep.subr.mxu0 0.0
        %8007 = vmatpush2.msra.mxu0 0.0
        %8008 = vmatprep.subr.mxu0 0.0
        %8009 = vmatpush2.msra.mxu0 0.0
        %8010 = vmatprep.subr.mxu0 0.0
        %8011 = vmatpush2.msra.mxu0 0.0
        %8012 = vmatprep.mubr.f32.mxu0 0.0
        %8013 = vmatmul.mubr.f32.gmra.mxu0 %v7946
        %v8014 = vpop.f32.mrf.mxu0
        %v8015 = vadd.f32 0.0, %v8014
        %v8016 = vpop.f32.mrf.mxu0
        %v8017 = vadd.f32 0.0, %v8016
        %8018 = vdwg.mxu0
        %8019 = vmatprep.subr.mxu0 0.0
        %8020 = vmatpush1.msra.mxu0 0.0
        %8021 = vmatprep.subr.mxu0 0.0
        %8022 = vmatpush1.msra.mxu0 0.0
        %8023 = vmatprep.subr.mxu0 0.0
        %8024 = vmatpush1.msra.mxu0 0.0
        %8025 = vmatprep.subr.mxu0 0.0
        %8026 = vmatpush1.msra.mxu0 0.0
        %8027 = vmatprep.subr.mxu0 0.0
        %8028 = vmatpush1.msra.mxu0 0.0
        %8029 = vmatprep.subr.mxu0 0.0
        %8030 = vmatpush1.msra.mxu0 0.0
        %8031 = vmatprep.subr.mxu0 0.0
        %8032 = vmatpush1.msra.mxu0 0.0
        %8033 = vmatprep.subr.mxu0 0.0
        %8034 = vmatpush1.msra.mxu0 0.0
        %8035 = vmatprep.subr.mxu0 0.0
        %8036 = vmatpush1.msra.mxu0 0.0
        %8037 = vmatprep.subr.mxu0 0.0
        %8038 = vmatpush1.msra.mxu0 0.0
        %8039 = vmatprep.subr.mxu0 0.0
        %8040 = vmatpush1.msra.mxu0 0.0
        %8041 = vmatprep.subr.mxu0 0.0
        %8042 = vmatpush1.msra.mxu0 0.0
        %8043 = vmatprep.subr.mxu0 0.0
        %8044 = vmatpush1.msra.mxu0 0.0
        %8045 = vmatprep.subr.mxu0 %v7940
        %8046 = vmatpush1.msra.mxu0 %v7939
        %8047 = vmatprep.subr.mxu0 %v7932
        %8048 = vmatpush1.msra.mxu0 %v7931
        %8049 = vmatprep.subr.mxu0 %v7924
        %8050 = vmatpush1.msra.mxu0 %v7923
        %8051 = vmatprep.subr.mxu0 0.0
        %8052 = vmatpush2.msra.mxu0 0.0
        %8053 = vmatprep.subr.mxu0 0.0
        %8054 = vmatpush2.msra.mxu0 0.0
        %8055 = vmatprep.subr.mxu0 0.0
        %8056 = vmatpush2.msra.mxu0 0.0
        %8057 = vmatprep.subr.mxu0 0.0
        %8058 = vmatpush2.msra.mxu0 0.0
        %8059 = vmatprep.subr.mxu0 0.0
        %8060 = vmatpush2.msra.mxu0 0.0
        %8061 = vmatprep.subr.mxu0 0.0
        %8062 = vmatpush2.msra.mxu0 0.0
        %8063 = vmatprep.subr.mxu0 0.0
        %8064 = vmatpush2.msra.mxu0 0.0
        %8065 = vmatprep.subr.mxu0 0.0
        %8066 = vmatpush2.msra.mxu0 0.0
        %8067 = vmatprep.subr.mxu0 0.0
        %8068 = vmatpush2.msra.mxu0 0.0
        %8069 = vmatprep.subr.mxu0 0.0
        %8070 = vmatpush2.msra.mxu0 0.0
        %8071 = vmatprep.subr.mxu0 0.0
        %8072 = vmatpush2.msra.mxu0 0.0
        %8073 = vmatprep.subr.mxu0 0.0
        %8074 = vmatpush2.msra.mxu0 0.0
        %8075 = vmatprep.subr.mxu0 0.0
        %8076 = vmatpush2.msra.mxu0 0.0
        %8077 = vmatprep.subr.mxu0 0.0
        %8078 = vmatpush2.msra.mxu0 0.0
        %8079 = vmatprep.subr.mxu0 0.0
        %8080 = vmatpush2.msra.mxu0 0.0
        %8081 = vmatprep.subr.mxu0 0.0
        %8082 = vmatpush2.msra.mxu0 0.0
        %8083 = vmatprep.mubr.f32.mxu0 0.0
        %8084 = vmatmul.mubr.f32.gmra.mxu0 %v7946
        %v8085 = vpop.f32.mrf.mxu0
        %v8086 = vadd.f32 0.0, %v8085
        %v8087 = vpop.f32.mrf.mxu0
        %v8088 = vadd.f32 0.0, %v8087
        %8089 = vdwg.mxu0
        %8090 = vmatprep.subr.mxu0 0.0
        %8091 = vmatpush1.msra.mxu0 0.0
        %8092 = vmatprep.subr.mxu0 0.0
        %8093 = vmatpush1.msra.mxu0 0.0
        %8094 = vmatprep.subr.mxu0 0.0
        %8095 = vmatpush1.msra.mxu0 0.0
        %8096 = vmatprep.subr.mxu0 0.0
        %8097 = vmatpush1.msra.mxu0 0.0
        %8098 = vmatprep.subr.mxu0 0.0
        %8099 = vmatpush1.msra.mxu0 0.0
        %8100 = vmatprep.subr.mxu0 0.0
        %8101 = vmatpush1.msra.mxu0 0.0
        %8102 = vmatprep.subr.mxu0 0.0
        %8103 = vmatpush1.msra.mxu0 0.0
        %8104 = vmatprep.subr.mxu0 0.0
        %8105 = vmatpush1.msra.mxu0 0.0
        %8106 = vmatprep.subr.mxu0 0.0
        %8107 = vmatpush1.msra.mxu0 0.0
        %8108 = vmatprep.subr.mxu0 0.0
        %8109 = vmatpush1.msra.mxu0 0.0
        %8110 = vmatprep.subr.mxu0 0.0
        %8111 = vmatpush1.msra.mxu0 0.0
        %8112 = vmatprep.subr.mxu0 0.0
        %8113 = vmatpush1.msra.mxu0 0.0
        %8114 = vmatprep.subr.mxu0 0.0
        %8115 = vmatpush1.msra.mxu0 0.0
        %8116 = vmatprep.subr.mxu0 %v7942
        %8117 = vmatpush1.msra.mxu0 %v7941
        %8118 = vmatprep.subr.mxu0 %v7934
        %8119 = vmatpush1.msra.mxu0 %v7933
        %8120 = vmatprep.subr.mxu0 %v7926
        %8121 = vmatpush1.msra.mxu0 %v7925
        %8122 = vmatprep.subr.mxu0 0.0
        %8123 = vmatpush2.msra.mxu0 0.0
        %8124 = vmatprep.subr.mxu0 0.0
        %8125 = vmatpush2.msra.mxu0 0.0
        %8126 = vmatprep.subr.mxu0 0.0
        %8127 = vmatpush2.msra.mxu0 0.0
        %8128 = vmatprep.subr.mxu0 0.0
        %8129 = vmatpush2.msra.mxu0 0.0
        %8130 = vmatprep.subr.mxu0 0.0
        %8131 = vmatpush2.msra.mxu0 0.0
        %8132 = vmatprep.subr.mxu0 0.0
        %8133 = vmatpush2.msra.mxu0 0.0
        %8134 = vmatprep.subr.mxu0 0.0
        %8135 = vmatpush2.msra.mxu0 0.0
        %8136 = vmatprep.subr.mxu0 0.0
        %8137 = vmatpush2.msra.mxu0 0.0
        %8138 = vmatprep.subr.mxu0 0.0
        %8139 = vmatpush2.msra.mxu0 0.0
        %8140 = vmatprep.subr.mxu0 0.0
        %8141 = vmatpush2.msra.mxu0 0.0
        %8142 = vmatprep.subr.mxu0 0.0
        %8143 = vmatpush2.msra.mxu0 0.0
        %8144 = vmatprep.subr.mxu0 0.0
        %8145 = vmatpush2.msra.mxu0 0.0
        %8146 = vmatprep.subr.mxu0 0.0
        %8147 = vmatpush2.msra.mxu0 0.0
        %8148 = vmatprep.subr.mxu0 0.0
        %8149 = vmatpush2.msra.mxu0 0.0
        %8150 = vmatprep.subr.mxu0 0.0
        %8151 = vmatpush2.msra.mxu0 0.0
        %8152 = vmatprep.subr.mxu0 0.0
        %8153 = vmatpush2.msra.mxu0 0.0
        %8154 = vmatprep.mubr.f32.mxu0 0.0
        %8155 = vmatmul.mubr.f32.gmra.mxu0 %v7946
        %v8156 = vpop.f32.mrf.mxu0
        %v8157 = vadd.f32 0.0, %v8156
        %v8158 = vpop.f32.mrf.mxu0
        %v8159 = vadd.f32 0.0, %v8158
        %8160 = vdwg.mxu0
        %8161 = vmatprep.subr.mxu0 0.0
        %8162 = vmatpush1.msra.mxu0 0.0
        %8163 = vmatprep.subr.mxu0 0.0
        %8164 = vmatpush1.msra.mxu0 0.0
        %8165 = vmatprep.subr.mxu0 0.0
        %8166 = vmatpush1.msra.mxu0 0.0
        %8167 = vmatprep.subr.mxu0 0.0
        %8168 = vmatpush1.msra.mxu0 0.0
        %8169 = vmatprep.subr.mxu0 0.0
        %8170 = vmatpush1.msra.mxu0 0.0
        %8171 = vmatprep.subr.mxu0 0.0
        %8172 = vmatpush1.msra.mxu0 0.0
        %8173 = vmatprep.subr.mxu0 0.0
        %8174 = vmatpush1.msra.mxu0 0.0
        %8175 = vmatprep.subr.mxu0 0.0
        %8176 = vmatpush1.msra.mxu0 0.0
        %8177 = vmatprep.subr.mxu0 0.0
        %8178 = vmatpush1.msra.mxu0 0.0
        %8179 = vmatprep.subr.mxu0 0.0
        %8180 = vmatpush1.msra.mxu0 0.0
        %8181 = vmatprep.subr.mxu0 0.0
        %8182 = vmatpush1.msra.mxu0 0.0
        %8183 = vmatprep.subr.mxu0 0.0
        %8184 = vmatpush1.msra.mxu0 0.0
        %8185 = vmatprep.subr.mxu0 0.0
        %8186 = vmatpush1.msra.mxu0 0.0
        %8187 = vmatprep.subr.mxu0 %v7944
        %8188 = vmatpush1.msra.mxu0 %v7943
        %8189 = vmatprep.subr.mxu0 %v7936
        %8190 = vmatpush1.msra.mxu0 %v7935
        %8191 = vmatprep.subr.mxu0 %v7928
        %8192 = vmatpush1.msra.mxu0 %v7927
        %8193 = vmatprep.subr.mxu0 0.0
        %8194 = vmatpush2.msra.mxu0 0.0
        %8195 = vmatprep.subr.mxu0 0.0
        %8196 = vmatpush2.msra.mxu0 0.0
        %8197 = vmatprep.subr.mxu0 0.0
        %8198 = vmatpush2.msra.mxu0 0.0
        %8199 = vmatprep.subr.mxu0 0.0
        %8200 = vmatpush2.msra.mxu0 0.0
        %8201 = vmatprep.subr.mxu0 0.0
        %8202 = vmatpush2.msra.mxu0 0.0
        %8203 = vmatprep.subr.mxu0 0.0
        %8204 = vmatpush2.msra.mxu0 0.0
        %8205 = vmatprep.subr.mxu0 0.0
        %8206 = vmatpush2.msra.mxu0 0.0
        %8207 = vmatprep.subr.mxu0 0.0
        %8208 = vmatpush2.msra.mxu0 0.0
        %8209 = vmatprep.subr.mxu0 0.0
        %8210 = vmatpush2.msra.mxu0 0.0
        %8211 = vmatprep.subr.mxu0 0.0
        %8212 = vmatpush2.msra.mxu0 0.0
        %8213 = vmatprep.subr.mxu0 0.0
        %8214 = vmatpush2.msra.mxu0 0.0
        %8215 = vmatprep.subr.mxu0 0.0
        %8216 = vmatpush2.msra.mxu0 0.0
        %8217 = vmatprep.subr.mxu0 0.0
        %8218 = vmatpush2.msra.mxu0 0.0
        %8219 = vmatprep.subr.mxu0 0.0
        %8220 = vmatpush2.msra.mxu0 0.0
        %8221 = vmatprep.subr.mxu0 0.0
        %8222 = vmatpush2.msra.mxu0 0.0
        %8223 = vmatprep.subr.mxu0 0.0
        %8224 = vmatpush2.msra.mxu0 0.0
        %8225 = vmatprep.mubr.f32.mxu0 0.0
        %8226 = vmatmul.mubr.f32.gmra.mxu0 %v7946
        %v8227 = vpop.f32.mrf.mxu0
        %v8228 = vadd.f32 0.0, %v8227
        %v8229 = vpop.f32.mrf.mxu0
        %v8230 = vadd.f32 0.0, %v8229
        %8231 = vdwg.mxu0
        %v8232 = vrsqrt.pop %v8015
        %v8233 = vmul.f32 %v8015, %v8232
        %vm8234 = vcmp.eq.f32.partialorder %v8015, inf
        %v8235 = vsel %vm8234, %v8015, %v8233
        %vm8236 = vcmp.eq.f32.partialorder %v8015, 0.0
        %v8237 = vand.u32 %v8015, 2147483648
        %v8238 = vsel %vm8236, %v8237, %v8235
        %v8239 = vrsqrt.pop %v8017
        %v8240 = vmul.f32 %v8017, %v8239
        %vm8241 = vcmp.eq.f32.partialorder %v8017, inf
        %v8242 = vsel %vm8241, %v8017, %v8240
        %vm8243 = vcmp.eq.f32.partialorder %v8017, 0.0
        %v8244 = vand.u32 %v8017, 2147483648
        %v8245 = vsel %vm8243, %v8244, %v8242
        %v8246 = vrsqrt.pop %v8086
        %v8247 = vmul.f32 %v8086, %v8246
        %vm8248 = vcmp.eq.f32.partialorder %v8086, inf
        %v8249 = vsel %vm8248, %v8086, %v8247
        %vm8250 = vcmp.eq.f32.partialorder %v8086, 0.0
        %v8251 = vand.u32 %v8086, 2147483648
        %v8252 = vsel %vm8250, %v8251, %v8249
        %v8253 = vrsqrt.pop %v8088
        %v8254 = vmul.f32 %v8088, %v8253
        %vm8255 = vcmp.eq.f32.partialorder %v8088, inf
        %v8256 = vsel %vm8255, %v8088, %v8254
        %vm8257 = vcmp.eq.f32.partialorder %v8088, 0.0
        %v8258 = vand.u32 %v8088, 2147483648
        %v8259 = vsel %vm8257, %v8258, %v8256
        %v8260 = vrsqrt.pop %v8157
        %v8261 = vmul.f32 %v8157, %v8260
        %vm8262 = vcmp.eq.f32.partialorder %v8157, inf
        %v8263 = vsel %vm8262, %v8157, %v8261
        %vm8264 = vcmp.eq.f32.partialorder %v8157, 0.0
        %v8265 = vand.u32 %v8157, 2147483648
        %v8266 = vsel %vm8264, %v8265, %v8263
        %v8267 = vrsqrt.pop %v8159
        %v8268 = vmul.f32 %v8159, %v8267
        %vm8269 = vcmp.eq.f32.partialorder %v8159, inf
        %v8270 = vsel %vm8269, %v8159, %v8268
        %vm8271 = vcmp.eq.f32.partialorder %v8159, 0.0
        %v8272 = vand.u32 %v8159, 2147483648
        %v8273 = vsel %vm8271, %v8272, %v8270
        %v8274 = vrsqrt.pop %v8228
        %v8275 = vmul.f32 %v8228, %v8274
        %vm8276 = vcmp.eq.f32.partialorder %v8228, inf
        %v8277 = vsel %vm8276, %v8228, %v8275
        %vm8278 = vcmp.eq.f32.partialorder %v8228, 0.0
        %v8279 = vand.u32 %v8228, 2147483648
        %v8280 = vsel %vm8278, %v8279, %v8277
        %v8281 = vrsqrt.pop %v8230
        %v8282 = vmul.f32 %v8230, %v8281
        %vm8283 = vcmp.eq.f32.partialorder %v8230, inf
        %v8284 = vsel %vm8283, %v8230, %v8282
        %vm8285 = vcmp.eq.f32.partialorder %v8230, 0.0
        %v8286 = vand.u32 %v8230, 2147483648
        %v8287 = vsel %vm8285, %v8286, %v8284
        %v8289 = vsel %vm1359, %v968, 0
        %8291 = vmatprep.subr.mxu0 0.0
        %8292 = vmatpush1.msra.mxu0 0.0
        %8293 = vmatprep.subr.mxu0 0.0
        %8294 = vmatpush1.msra.mxu0 0.0
        %8295 = vmatprep.subr.mxu0 0.0
        %8296 = vmatpush1.msra.mxu0 0.0
        %8297 = vmatprep.subr.mxu0 0.0
        %8298 = vmatpush1.msra.mxu0 0.0
        %8299 = vmatprep.subr.mxu0 0.0
        %8300 = vmatpush1.msra.mxu0 0.0
        %8301 = vmatprep.subr.mxu0 0.0
        %8302 = vmatpush1.msra.mxu0 0.0
        %8303 = vmatprep.subr.mxu0 0.0
        %8304 = vmatpush1.msra.mxu0 0.0
        %8305 = vmatprep.subr.mxu0 0.0
        %8306 = vmatpush1.msra.mxu0 0.0
        %8307 = vmatprep.subr.mxu0 0.0
        %8308 = vmatpush1.msra.mxu0 0.0
        %8309 = vmatprep.subr.mxu0 0.0
        %8310 = vmatpush1.msra.mxu0 0.0
        %8311 = vmatprep.subr.mxu0 0.0
        %8312 = vmatpush1.msra.mxu0 0.0
        %8313 = vmatprep.subr.mxu0 0.0
        %8314 = vmatpush1.msra.mxu0 0.0
        %8315 = vmatprep.subr.mxu0 0.0
        %8316 = vmatpush1.msra.mxu0 0.0
        %8317 = vmatprep.subr.mxu0 %v7914
        %8318 = vmatpush1.msra.mxu0 %v7913
        %8319 = vmatprep.subr.mxu0 %v7906
        %8320 = vmatpush1.msra.mxu0 %v7905
        %8321 = vmatprep.subr.mxu0 %v7898
        %8322 = vmatpush1.msra.mxu0 %v7897
        %8323 = vmatprep.subr.mxu0 0.0
        %8324 = vmatpush2.msra.mxu0 0.0
        %8325 = vmatprep.subr.mxu0 0.0
        %8326 = vmatpush2.msra.mxu0 0.0
        %8327 = vmatprep.subr.mxu0 0.0
        %8328 = vmatpush2.msra.mxu0 0.0
        %8329 = vmatprep.subr.mxu0 0.0
        %8330 = vmatpush2.msra.mxu0 0.0
        %8331 = vmatprep.subr.mxu0 0.0
        %8332 = vmatpush2.msra.mxu0 0.0
        %8333 = vmatprep.subr.mxu0 0.0
        %8334 = vmatpush2.msra.mxu0 0.0
        %8335 = vmatprep.subr.mxu0 0.0
        %8336 = vmatpush2.msra.mxu0 0.0
        %8337 = vmatprep.subr.mxu0 0.0
        %8338 = vmatpush2.msra.mxu0 0.0
        %8339 = vmatprep.subr.mxu0 0.0
        %8340 = vmatpush2.msra.mxu0 0.0
        %8341 = vmatprep.subr.mxu0 0.0
        %8342 = vmatpush2.msra.mxu0 0.0
        %8343 = vmatprep.subr.mxu0 0.0
        %8344 = vmatpush2.msra.mxu0 0.0
        %8345 = vmatprep.subr.mxu0 0.0
        %8346 = vmatpush2.msra.mxu0 0.0
        %8347 = vmatprep.subr.mxu0 0.0
        %8348 = vmatpush2.msra.mxu0 0.0
        %8349 = vmatprep.subr.mxu0 0.0
        %8350 = vmatpush2.msra.mxu0 0.0
        %8351 = vmatprep.subr.mxu0 0.0
        %8352 = vmatpush2.msra.mxu0 0.0
        %8353 = vmatprep.subr.mxu0 0.0
        %8354 = vmatpush2.msra.mxu0 0.0
        %8355 = vmatprep.mubr.f32.mxu0 0.0
        %8356 = vmatmul.mubr.f32.gmra.mxu0 %v8289
        %v8357 = vpop.f32.mrf.mxu0
        %v8358 = vadd.f32 0.0, %v8357
        %v8359 = vpop.f32.mrf.mxu0
        %v8360 = vadd.f32 0.0, %v8359
        %8361 = vdwg.mxu0
        %8362 = vmatprep.subr.mxu0 0.0
        %8363 = vmatpush1.msra.mxu0 0.0
        %8364 = vmatprep.subr.mxu0 0.0
        %8365 = vmatpush1.msra.mxu0 0.0
        %8366 = vmatprep.subr.mxu0 0.0
        %8367 = vmatpush1.msra.mxu0 0.0
        %8368 = vmatprep.subr.mxu0 0.0
        %8369 = vmatpush1.msra.mxu0 0.0
        %8370 = vmatprep.subr.mxu0 0.0
        %8371 = vmatpush1.msra.mxu0 0.0
        %8372 = vmatprep.subr.mxu0 0.0
        %8373 = vmatpush1.msra.mxu0 0.0
        %8374 = vmatprep.subr.mxu0 0.0
        %8375 = vmatpush1.msra.mxu0 0.0
        %8376 = vmatprep.subr.mxu0 0.0
        %8377 = vmatpush1.msra.mxu0 0.0
        %8378 = vmatprep.subr.mxu0 0.0
        %8379 = vmatpush1.msra.mxu0 0.0
        %8380 = vmatprep.subr.mxu0 0.0
        %8381 = vmatpush1.msra.mxu0 0.0
        %8382 = vmatprep.subr.mxu0 0.0
        %8383 = vmatpush1.msra.mxu0 0.0
        %8384 = vmatprep.subr.mxu0 0.0
        %8385 = vmatpush1.msra.mxu0 0.0
        %8386 = vmatprep.subr.mxu0 0.0
        %8387 = vmatpush1.msra.mxu0 0.0
        %8388 = vmatprep.subr.mxu0 %v7916
        %8389 = vmatpush1.msra.mxu0 %v7915
        %8390 = vmatprep.subr.mxu0 %v7908
        %8391 = vmatpush1.msra.mxu0 %v7907
        %8392 = vmatprep.subr.mxu0 %v7900
        %8393 = vmatpush1.msra.mxu0 %v7899
        %8394 = vmatprep.subr.mxu0 0.0
        %8395 = vmatpush2.msra.mxu0 0.0
        %8396 = vmatprep.subr.mxu0 0.0
        %8397 = vmatpush2.msra.mxu0 0.0
        %8398 = vmatprep.subr.mxu0 0.0
        %8399 = vmatpush2.msra.mxu0 0.0
        %8400 = vmatprep.subr.mxu0 0.0
        %8401 = vmatpush2.msra.mxu0 0.0
        %8402 = vmatprep.subr.mxu0 0.0
        %8403 = vmatpush2.msra.mxu0 0.0
        %8404 = vmatprep.subr.mxu0 0.0
        %8405 = vmatpush2.msra.mxu0 0.0
        %8406 = vmatprep.subr.mxu0 0.0
        %8407 = vmatpush2.msra.mxu0 0.0
        %8408 = vmatprep.subr.mxu0 0.0
        %8409 = vmatpush2.msra.mxu0 0.0
        %8410 = vmatprep.subr.mxu0 0.0
        %8411 = vmatpush2.msra.mxu0 0.0
        %8412 = vmatprep.subr.mxu0 0.0
        %8413 = vmatpush2.msra.mxu0 0.0
        %8414 = vmatprep.subr.mxu0 0.0
        %8415 = vmatpush2.msra.mxu0 0.0
        %8416 = vmatprep.subr.mxu0 0.0
        %8417 = vmatpush2.msra.mxu0 0.0
        %8418 = vmatprep.subr.mxu0 0.0
        %8419 = vmatpush2.msra.mxu0 0.0
        %8420 = vmatprep.subr.mxu0 0.0
        %8421 = vmatpush2.msra.mxu0 0.0
        %8422 = vmatprep.subr.mxu0 0.0
        %8423 = vmatpush2.msra.mxu0 0.0
        %8424 = vmatprep.subr.mxu0 0.0
        %8425 = vmatpush2.msra.mxu0 0.0
        %8426 = vmatprep.mubr.f32.mxu0 0.0
        %8427 = vmatmul.mubr.f32.gmra.mxu0 %v8289
        %v8428 = vpop.f32.mrf.mxu0
        %v8429 = vadd.f32 0.0, %v8428
        %v8430 = vpop.f32.mrf.mxu0
        %v8431 = vadd.f32 0.0, %v8430
        %8432 = vdwg.mxu0
        %8433 = vmatprep.subr.mxu0 0.0
        %8434 = vmatpush1.msra.mxu0 0.0
        %8435 = vmatprep.subr.mxu0 0.0
        %8436 = vmatpush1.msra.mxu0 0.0
        %8437 = vmatprep.subr.mxu0 0.0
        %8438 = vmatpush1.msra.mxu0 0.0
        %8439 = vmatprep.subr.mxu0 0.0
        %8440 = vmatpush1.msra.mxu0 0.0
        %8441 = vmatprep.subr.mxu0 0.0
        %8442 = vmatpush1.msra.mxu0 0.0
        %8443 = vmatprep.subr.mxu0 0.0
        %8444 = vmatpush1.msra.mxu0 0.0
        %8445 = vmatprep.subr.mxu0 0.0
        %8446 = vmatpush1.msra.mxu0 0.0
        %8447 = vmatprep.subr.mxu0 0.0
        %8448 = vmatpush1.msra.mxu0 0.0
        %8449 = vmatprep.subr.mxu0 0.0
        %8450 = vmatpush1.msra.mxu0 0.0
        %8451 = vmatprep.subr.mxu0 0.0
        %8452 = vmatpush1.msra.mxu0 0.0
        %8453 = vmatprep.subr.mxu0 0.0
        %8454 = vmatpush1.msra.mxu0 0.0
        %8455 = vmatprep.subr.mxu0 0.0
        %8456 = vmatpush1.msra.mxu0 0.0
        %8457 = vmatprep.subr.mxu0 0.0
        %8458 = vmatpush1.msra.mxu0 0.0
        %8459 = vmatprep.subr.mxu0 %v7918
        %8460 = vmatpush1.msra.mxu0 %v7917
        %8461 = vmatprep.subr.mxu0 %v7910
        %8462 = vmatpush1.msra.mxu0 %v7909
        %8463 = vmatprep.subr.mxu0 %v7902
        %8464 = vmatpush1.msra.mxu0 %v7901
        %8465 = vmatprep.subr.mxu0 0.0
        %8466 = vmatpush2.msra.mxu0 0.0
        %8467 = vmatprep.subr.mxu0 0.0
        %8468 = vmatpush2.msra.mxu0 0.0
        %8469 = vmatprep.subr.mxu0 0.0
        %8470 = vmatpush2.msra.mxu0 0.0
        %8471 = vmatprep.subr.mxu0 0.0
        %8472 = vmatpush2.msra.mxu0 0.0
        %8473 = vmatprep.subr.mxu0 0.0
        %8474 = vmatpush2.msra.mxu0 0.0
        %8475 = vmatprep.subr.mxu0 0.0
        %8476 = vmatpush2.msra.mxu0 0.0
        %8477 = vmatprep.subr.mxu0 0.0
        %8478 = vmatpush2.msra.mxu0 0.0
        %8479 = vmatprep.subr.mxu0 0.0
        %8480 = vmatpush2.msra.mxu0 0.0
        %8481 = vmatprep.subr.mxu0 0.0
        %8482 = vmatpush2.msra.mxu0 0.0
        %8483 = vmatprep.subr.mxu0 0.0
        %8484 = vmatpush2.msra.mxu0 0.0
        %8485 = vmatprep.subr.mxu0 0.0
        %8486 = vmatpush2.msra.mxu0 0.0
        %8487 = vmatprep.subr.mxu0 0.0
        %8488 = vmatpush2.msra.mxu0 0.0
        %8489 = vmatprep.subr.mxu0 0.0
        %8490 = vmatpush2.msra.mxu0 0.0
        %8491 = vmatprep.subr.mxu0 0.0
        %8492 = vmatpush2.msra.mxu0 0.0
        %8493 = vmatprep.subr.mxu0 0.0
        %8494 = vmatpush2.msra.mxu0 0.0
        %8495 = vmatprep.subr.mxu0 0.0
        %8496 = vmatpush2.msra.mxu0 0.0
        %8497 = vmatprep.mubr.f32.mxu0 0.0
        %8498 = vmatmul.mubr.f32.gmra.mxu0 %v8289
        %v8499 = vpop.f32.mrf.mxu0
        %v8500 = vadd.f32 0.0, %v8499
        %v8501 = vpop.f32.mrf.mxu0
        %v8502 = vadd.f32 0.0, %v8501
        %8503 = vdwg.mxu0
        %8504 = vmatprep.subr.mxu0 0.0
        %8505 = vmatpush1.msra.mxu0 0.0
        %8506 = vmatprep.subr.mxu0 0.0
        %8507 = vmatpush1.msra.mxu0 0.0
        %8508 = vmatprep.subr.mxu0 0.0
        %8509 = vmatpush1.msra.mxu0 0.0
        %8510 = vmatprep.subr.mxu0 0.0
        %8511 = vmatpush1.msra.mxu0 0.0
        %8512 = vmatprep.subr.mxu0 0.0
        %8513 = vmatpush1.msra.mxu0 0.0
        %8514 = vmatprep.subr.mxu0 0.0
        %8515 = vmatpush1.msra.mxu0 0.0
        %8516 = vmatprep.subr.mxu0 0.0
        %8517 = vmatpush1.msra.mxu0 0.0
        %8518 = vmatprep.subr.mxu0 0.0
        %8519 = vmatpush1.msra.mxu0 0.0
        %8520 = vmatprep.subr.mxu0 0.0
        %8521 = vmatpush1.msra.mxu0 0.0
        %8522 = vmatprep.subr.mxu0 0.0
        %8523 = vmatpush1.msra.mxu0 0.0
        %8524 = vmatprep.subr.mxu0 0.0
        %8525 = vmatpush1.msra.mxu0 0.0
        %8526 = vmatprep.subr.mxu0 0.0
        %8527 = vmatpush1.msra.mxu0 0.0
        %8528 = vmatprep.subr.mxu0 0.0
        %8529 = vmatpush1.msra.mxu0 0.0
        %8530 = vmatprep.subr.mxu0 %v7920
        %8531 = vmatpush1.msra.mxu0 %v7919
        %8532 = vmatprep.subr.mxu0 %v7912
        %8533 = vmatpush1.msra.mxu0 %v7911
        %8534 = vmatprep.subr.mxu0 %v7904
        %8535 = vmatpush1.msra.mxu0 %v7903
        %8536 = vmatprep.subr.mxu0 0.0
        %8537 = vmatpush2.msra.mxu0 0.0
        %8538 = vmatprep.subr.mxu0 0.0
        %8539 = vmatpush2.msra.mxu0 0.0
        %8540 = vmatprep.subr.mxu0 0.0
        %8541 = vmatpush2.msra.mxu0 0.0
        %8542 = vmatprep.subr.mxu0 0.0
        %8543 = vmatpush2.msra.mxu0 0.0
        %8544 = vmatprep.subr.mxu0 0.0
        %8545 = vmatpush2.msra.mxu0 0.0
        %8546 = vmatprep.subr.mxu0 0.0
        %8547 = vmatpush2.msra.mxu0 0.0
        %8548 = vmatprep.subr.mxu0 0.0
        %8549 = vmatpush2.msra.mxu0 0.0
        %8550 = vmatprep.subr.mxu0 0.0
        %8551 = vmatpush2.msra.mxu0 0.0
        %8552 = vmatprep.subr.mxu0 0.0
        %8553 = vmatpush2.msra.mxu0 0.0
        %8554 = vmatprep.subr.mxu0 0.0
        %8555 = vmatpush2.msra.mxu0 0.0
        %8556 = vmatprep.subr.mxu0 0.0
        %8557 = vmatpush2.msra.mxu0 0.0
        %8558 = vmatprep.subr.mxu0 0.0
        %8559 = vmatpush2.msra.mxu0 0.0
        %8560 = vmatprep.subr.mxu0 0.0
        %8561 = vmatpush2.msra.mxu0 0.0
        %8562 = vmatprep.subr.mxu0 0.0
        %8563 = vmatpush2.msra.mxu0 0.0
        %8564 = vmatprep.subr.mxu0 0.0
        %8565 = vmatpush2.msra.mxu0 0.0
        %8566 = vmatprep.subr.mxu0 0.0
        %8567 = vmatpush2.msra.mxu0 0.0
        %8568 = vmatprep.mubr.f32.mxu0 0.0
        %8569 = vmatmul.mubr.f32.gmra.mxu0 %v8289
        %v8570 = vpop.f32.mrf.mxu0
        %v8571 = vadd.f32 0.0, %v8570
        %v8572 = vpop.f32.mrf.mxu0
        %v8573 = vadd.f32 0.0, %v8572
        %8574 = vdwg.mxu0
        %v8575 = vadd.f32 %v8238, %v8358
        %v8576 = vadd.f32 %v8245, %v8360
        %v8577 = vadd.f32 %v8252, %v8429
        %v8578 = vadd.f32 %v8259, %v8431
        %v8579 = vadd.f32 %v8266, %v8500
        %v8580 = vadd.f32 %v8273, %v8502
        %v8581 = vadd.f32 %v8280, %v8571
        %v8582 = vadd.f32 %v8287, %v8573
        %8583 = vst [vmem:[%s319] sm:$0xff] %v8575
        %8584 = vst [vmem:[%s319 + $0x8] sm:$0xff] %v8576
        %8585 = vst [vmem:[%s319 + $0x10] sm:$0xff] %v8577
        %8586 = vst [vmem:[%s319 + $0x18] sm:$0xff] %v8578
        %8587 = vst [vmem:[%s319 + $0x20] sm:$0xff] %v8579
        %8588 = vst [vmem:[%s319 + $0x28] sm:$0xff] %v8580
        %8589 = vst [vmem:[%s319 + $0x30] sm:$0xff] %v8581
        %8590 = vst [vmem:[%s319 + $0x38] sm:$0xff] %v8582
        %s8591 = smul.u32 8, %s24
        %p8592 = scmp.lt.s32.totalorder %s23, 1
        %s8593 = scalar_select %p8592, %s23, 1
        %p8594 = scmp.lt.s32.totalorder %s8591, 7
        %s8595 = scalar_select %p8594, %s8591, 7
        %s8596 = smul.addr %s8593, 8
        %s8597 = sadd.s32 %s8595, %s8596
        %s8598 = smul.addr %s8597, 8
        %s8599 = scalar_lea.vmem %s6, %s8598
        // Predicated region
        $region53: #{application_with_ssc_forward.2} parent=43 // pred_check
          %p8600 = pneg %p184
        $region54: #{application_with_ssc_forward.2} parent=43 // pred_check_branch
          %8602 = sbr.rel (%p8600) target = $region56
        $region55: #{application_with_ssc_forward.2} parent=43 // pred_region
          %s8603 = smul.u32 8, %s24
        $region56: #{application_with_ssc_forward.2} parent=43 // pred_fallthru
          _
      $region44: #{application_with_ssc_forward.2} parent=5 // pred_fallthru
        _
      %p8604 = scmp.le.s32.totalorder 2, %s14
      // Predicated region
      $region57: #{application_with_ssc_forward.2} parent=5 // pred_check
        %p8605 = pneg %p8604
      $region58: #{application_with_ssc_forward.2} parent=5 // pred_check_branch
        %8607 = sbr.rel (%p8605) target = $region60
      $region59: #{application_with_ssc_forward.2} parent=5 // pred_region
        %s8608 = ssub.s32 %s14, 2
        // Predicated region
        $region61: #{application_with_ssc_forward.2} parent=59 // pred_check
          %p8609 = pneg %p190
        $region62: #{application_with_ssc_forward.2} parent=59 // pred_check_branch
          %8611 = sbr.rel (%p8609) target = $region64
        $region63: #{application_with_ssc_forward.2} parent=59 // pred_region
          %s8612 = smul.u32 8, %s26
          %p8613 = scmp.lt.s32.totalorder %s25, 1
          %s8614 = scalar_select %p8613, %s25, 1
          %p8615 = scmp.lt.s32.totalorder %s8612, 7
          %s8616 = scalar_select %p8615, %s8612, 7
          %s8617 = smul.addr %s8614, 8
          %s8618 = sadd.s32 %s8616, %s8617
          %s8619 = smul.addr %s8618, 8
          %s8620 = scalar_lea.vmem %s6, %s8619
        $region64: #{application_with_ssc_forward.2} parent=59 // pred_fallthru
          _
      $region60: #{application_with_ssc_forward.2} parent=5 // pred_fallthru
        _
    $region6: #{application_with_ssc_forward.2} parent=1 // loop_footer
      %s18 = sadd.s32 1, %s14
    $region7: #{application_with_ssc_forward.2} parent=1 // loop_footer_branch
      %13 = sbr.rel target = $region3
    $region8: #{application_with_ssc_forward.2} parent=1 // loop_exit
      _
    %8621 = vsyncpa [#allocation3], 1
    %s8622 = scalar_lea.sflag [#allocation3], 1
    %8623 = vsyncpa %s8622, 1
    %8624 = vsyncpa [#allocation5], 1

// kernel: application_with_ssc_forward.3
$region0: #{application_with_ssc_forward.3}
  #allocation0 [shape = 'u32[]', space=smem, size = 0x4, offset = 0x4, fixed_abs, tag = 'smem constant byte address 0x4 - core index']
  #allocation1 [shape = 'u32[144,128]{1,0:T(1,128)}', space=vmem, size = 0x12000, scoped, tag = 'internal scratch']
  #allocation2 [shape = 'f32[8,64]{1,0:T(8,128)}', space=vmem, size = 0x1000, scoped, tag = 'scratch operand']
  %s0 = inlined_call_operand.vmem [shape: bf16[2,256,147], index: 0, kind: input, shape index: {}]
  %s1 = inlined_call_operand.vmem [shape: bf16[147,64], index: 1, kind: input, shape index: {}]
  %s2 = inlined_call_operand.vmem [shape: f32[64,4], index: 2, kind: input, shape index: {}]
  %s3 = inlined_call_operand.vmem [shape: f32[1,4], index: 3, kind: input, shape index: {}]
  %s4 = inlined_call_operand.vmem [shape: f32[2,8,4], index: 4, kind: output, shape index: {}]
  %s5 = sld [smem:[#allocation0]]
  $region57: #{application_with_ssc_forward.3} parent=0
    _
  %s7 = ssub.s32 1, %s5
  %s8 = scalar_select 0, %s7, %s5
  loop: start=0, step=1, limit=4
  $region2: #{application_with_ssc_forward.3} parent=0 // loop_pre_header
    _
  $region3: #{application_with_ssc_forward.3} parent=0 // loop_header
    %s10 = sphi 0, %s14
    %p11 = scmp.ge.s32.totalorder %s10, 4
    %s17 = sphi 0, %s29
    %s18 = sphi 0, %s25
    %s19 = sphi 0, %s17
    %s20 = sphi 0, %s18
    %s21 = sphi 0, %s19
    %s22 = sphi 0, %s20
    %s34 = sphi 0, %s36
    %s37 = sphi 0, %s34
    %s38 = sphi 0, %s37
    %s54 = sphi 0, %s38
    %s58 = sphi 0, %s58
    %s60 = sphi 0, %s58
    %s61 = sphi 0, %s60
    %s75 = sphi 0, %s61
    %s79 = sphi 0, %s79
    %s81 = sphi 0, %s79
    %s82 = sphi 0, %s81
    %s96 = sphi 0, %s82
    %s100 = sphi 0, %s100
    %s102 = sphi 0, %s100
    %s103 = sphi 0, %s102
    %s117 = sphi 0, %s103
    %s123 = sphi 0, %s125
    %s126 = sphi 0, %s123
    %s127 = sphi 0, %s126
    %s143 = sphi 0, %s127
  $region4: #{application_with_ssc_forward.3} parent=0 // loop_header_branch
    %13 = sbr.rel (%p11) target = $region8
  $region5: #{application_with_ssc_forward.3} parent=0 // loop_body
    %s15 = ssub.s32 %s10, 1
    %s16 = ssub.s32 %s10, 2
    %s23 = sadd.s32 1, %s18
    %p24 = scmp.ge.s32.totalorder %s23, 1
    %s25 = scalar_select %p24, 0, %s23
    %s26 = sadd.s32 1, %s17
    %s27 = scalar_select %p24, %s26, %s17
    %p28 = scmp.ge.s32.totalorder %s27, 2
    %s29 = scalar_select %p28, 0, %s27
    %s30 = ssub.s32 %s17, %s29
    %s31 = ssub.s32 %s18, %s25
    %s32 = sor.u32 %s30, %s31
    %p33 = scmp.eq.s32.totalorder %s32, 0
    %s35 = sadd.s32 %s34, 1
    %s36 = scalar_select %p33, %s34, %s35
    %p39 = pneg %p33
    %p40 = scmp.eq.s32.totalorder %s10, 1
    %p41 = por %p39, %p40
    %p42 = scmp.ne.s32.totalorder %s34, %s37
    %p43 = scmp.eq.s32.totalorder %s10, 0
    %p44 = por %p42, %p43
    %p45 = scmp.ne.s32.totalorder %s34, %s37
    %p46 = scmp.eq.s32.totalorder %s15, 1
    %p47 = por %p45, %p46
    %p48 = scmp.ne.s32.totalorder %s37, %s38
    %p49 = scmp.eq.s32.totalorder %s15, 0
    %p50 = por %p48, %p49
    %p51 = scmp.ne.s32.totalorder %s37, %s38
    %p52 = scmp.eq.s32.totalorder %s16, 1
    %p53 = por %p51, %p52
    %p55 = scmp.ne.s32.totalorder %s38, %s54
    %p56 = scmp.eq.s32.totalorder %s16, 0
    %p57 = por %p55, %p56
    %s59 = sadd.s32 %s58, 1
    %p62 = scmp.eq.s32.totalorder %s10, 1
    %p63 = scmp.ne.s32.totalorder %s58, %s60
    %p64 = scmp.eq.s32.totalorder %s10, 0
    %p65 = por %p63, %p64
    %p66 = scmp.ne.s32.totalorder %s58, %s60
    %p67 = scmp.eq.s32.totalorder %s15, 1
    %p68 = por %p66, %p67
    %p69 = scmp.ne.s32.totalorder %s60, %s61
    %p70 = scmp.eq.s32.totalorder %s15, 0
    %p71 = por %p69, %p70
    %p72 = scmp.ne.s32.totalorder %s60, %s61
    %p73 = scmp.eq.s32.totalorder %s16, 1
    %p74 = por %p72, %p73
    %p76 = scmp.ne.s32.totalorder %s61, %s75
    %p77 = scmp.eq.s32.totalorder %s16, 0
    %p78 = por %p76, %p77
    %s80 = sadd.s32 %s79, 1
    %p83 = scmp.eq.s32.totalorder %s10, 1
    %p84 = scmp.ne.s32.totalorder %s79, %s81
    %p85 = scmp.eq.s32.totalorder %s10, 0
    %p86 = por %p84, %p85
    %p87 = scmp.ne.s32.totalorder %s79, %s81
    %p88 = scmp.eq.s32.totalorder %s15, 1
    %p89 = por %p87, %p88
    %p90 = scmp.ne.s32.totalorder %s81, %s82
    %p91 = scmp.eq.s32.totalorder %s15, 0
    %p92 = por %p90, %p91
    %p93 = scmp.ne.s32.totalorder %s81, %s82
    %p94 = scmp.eq.s32.totalorder %s16, 1
    %p95 = por %p93, %p94
    %p97 = scmp.ne.s32.totalorder %s82, %s96
    %p98 = scmp.eq.s32.totalorder %s16, 0
    %p99 = por %p97, %p98
    %s101 = sadd.s32 %s100, 1
    %p104 = scmp.eq.s32.totalorder %s10, 1
    %p105 = scmp.ne.s32.totalorder %s100, %s102
    %p106 = scmp.eq.s32.totalorder %s10, 0
    %p107 = por %p105, %p106
    %p108 = scmp.ne.s32.totalorder %s100, %s102
    %p109 = scmp.eq.s32.totalorder %s15, 1
    %p110 = por %p108, %p109
    %p111 = scmp.ne.s32.totalorder %s102, %s103
    %p112 = scmp.eq.s32.totalorder %s15, 0
    %p113 = por %p111, %p112
    %p114 = scmp.ne.s32.totalorder %s102, %s103
    %p115 = scmp.eq.s32.totalorder %s16, 1
    %p116 = por %p114, %p115
    %p118 = scmp.ne.s32.totalorder %s103, %s117
    %p119 = scmp.eq.s32.totalorder %s16, 0
    %p120 = por %p118, %p119
    %s121 = ssub.s32 %s17, %s29
    %p122 = scmp.eq.s32.totalorder %s121, 0
    %s124 = sadd.s32 %s123, 1
    %s125 = scalar_select %p122, %s123, %s124
    %p128 = pneg %p122
    %p129 = scmp.eq.s32.totalorder %s10, 1
    %p130 = por %p128, %p129
    %p131 = scmp.ne.s32.totalorder %s123, %s126
    %p132 = scmp.eq.s32.totalorder %s10, 0
    %p133 = por %p131, %p132
    %p134 = scmp.ne.s32.totalorder %s123, %s126
    %p135 = scmp.eq.s32.totalorder %s15, 1
    %p136 = por %p134, %p135
    %p137 = scmp.ne.s32.totalorder %s126, %s127
    %p138 = scmp.eq.s32.totalorder %s15, 0
    %p139 = por %p137, %p138
    %p140 = scmp.ne.s32.totalorder %s126, %s127
    %p141 = scmp.eq.s32.totalorder %s16, 1
    %p142 = por %p140, %p141
    %p144 = scmp.ne.s32.totalorder %s127, %s143
    %p145 = scmp.eq.s32.totalorder %s16, 0
    %p146 = por %p144, %p145
    %p147 = scmp.le.s32.totalorder 1, %s10
    %p148 = scmp.lt.s32.totalorder %s10, 3
    %p149 = pnand %p147, %p148
    %p150 = pneg %p149
    // Predicated region
    $region9: #{application_with_ssc_forward.3} parent=5 // pred_check
      _
    $region10: #{application_with_ssc_forward.3} parent=5 // pred_check_branch
      %152 = sbr.rel (%p149) target = $region12
    $region11: #{application_with_ssc_forward.3} parent=5 // pred_region
      %s153 = ssub.s32 %s10, 1
      // Predicated region
      $region13: #{application_with_ssc_forward.3} parent=11 // pred_check
        %p154 = pneg %p71
      $region14: #{application_with_ssc_forward.3} parent=11 // pred_check_branch
        %156 = sbr.rel (%p154) target = $region16
      $region15: #{application_with_ssc_forward.3} parent=11 // pred_region
        _
      $region16: #{application_with_ssc_forward.3} parent=11 // pred_fallthru
        _
      // Predicated region
      $region17: #{application_with_ssc_forward.3} parent=11 // pred_check
        %p157 = pneg %p92
      $region18: #{application_with_ssc_forward.3} parent=11 // pred_check_branch
        %159 = sbr.rel (%p157) target = $region20
      $region19: #{application_with_ssc_forward.3} parent=11 // pred_region
        _
      $region20: #{application_with_ssc_forward.3} parent=11 // pred_fallthru
        _
      // Predicated region
      $region21: #{application_with_ssc_forward.3} parent=11 // pred_check
        %p160 = pneg %p113
      $region22: #{application_with_ssc_forward.3} parent=11 // pred_check_branch
        %162 = sbr.rel (%p160) target = $region24
      $region23: #{application_with_ssc_forward.3} parent=11 // pred_region
        _
      $region24: #{application_with_ssc_forward.3} parent=11 // pred_fallthru
        _
    $region12: #{application_with_ssc_forward.3} parent=5 // pred_fallthru
      _
    %p163 = scmp.lt.s32.totalorder %s10, 2
    // Predicated region
    $region25: #{application_with_ssc_forward.3} parent=5 // pred_check
      %p164 = pneg %p163
    $region26: #{application_with_ssc_forward.3} parent=5 // pred_check_branch
      %166 = sbr.rel (%p164) target = $region28
    $region27: #{application_with_ssc_forward.3} parent=5 // pred_region
      // Predicated region
      $region29: #{application_with_ssc_forward.3} parent=27 // pred_check
        %p167 = pneg %p44
      $region30: #{application_with_ssc_forward.3} parent=27 // pred_check_branch
        %169 = sbr.rel (%p167) target = $region32
      $region31: #{application_with_ssc_forward.3} parent=27 // pred_region
        %s170 = smul.u32 32, %s18
        %p171 = scmp.lt.s32.totalorder %s17, 1
        %s172 = scalar_select %p171, %s17, 1
        %p173 = scmp.lt.s32.totalorder %s170, 31
        %s174 = scalar_select %p173, %s170, 31
        %s175 = smul.addr %s174, 2
        %s176 = smul.addr %s172, 64
        %s177 = sadd.s32 %s175, %s176
        %s178 = smul.addr %s177, 4
        %s179 = scalar_lea.vmem %s0, %s178
        %s180 = smul.u32 32, %s18
      $region32: #{application_with_ssc_forward.3} parent=27 // pred_fallthru
        _
    $region28: #{application_with_ssc_forward.3} parent=5 // pred_fallthru
      _
    %p181 = scmp.le.s32.totalorder 1, %s10
    %p182 = scmp.lt.s32.totalorder %s10, 3
    %p183 = pnand %p181, %p182
    %p184 = pneg %p183
    // Predicated region
    $region33: #{application_with_ssc_forward.3} parent=5 // pred_check
      _
    $region34: #{application_with_ssc_forward.3} parent=5 // pred_check_branch
      %186 = sbr.rel (%p183) target = $region36
    $region35: #{application_with_ssc_forward.3} parent=5 // pred_region
      %s187 = ssub.s32 %s10, 1
      %s188 = smul.u32 32, %s20
      %p189 = scmp.lt.s32.totalorder %s19, 1
      %s190 = scalar_select %p189, %s19, 1
      %p191 = scmp.lt.s32.totalorder %s188, 31
      %s192 = scalar_select %p191, %s188, 31
      %s193 = smul.addr %s192, 2
      %s194 = smul.addr %s190, 64
      %s195 = sadd.s32 %s193, %s194
      %s196 = smul.addr %s195, 4
      %s197 = scalar_lea.vmem %s0, %s196
      %p198 = pneg %p50
      %p199 = pneg %p47
      %p200 = pneg %p71
      %p201 = pneg %p68
      %p202 = pneg %p92
      %p203 = pneg %p89
      %p204 = pneg %p113
      %p205 = pneg %p110
      %p206 = pneg %p139
      %p207 = pneg %p136
      %p208 = scmp.lt.s32.totalorder %s19, 1
      %s209 = scalar_select %p208, %s19, 1
      %s210 = smul.addr %s209, 8
      %s211 = scalar_lea.vmem %s4, %s210
      %s212 = smul.u32 32, %s20
      %p213 = scmp.lt.s32.totalorder %s19, 1
      %s214 = scalar_select %p213, %s19, 1
      %p215 = scmp.lt.s32.totalorder %s212, 31
      %s216 = scalar_select %p215, %s212, 31
      %s217 = smul.addr %s216, 2
      %s218 = smul.addr %s214, 64
      %s219 = sadd.s32 %s217, %s218
      %s220 = smul.addr %s219, 4
      %s221 = scalar_lea.vmem %s0, %s220
      %s222 = smul.u32 32, %s20
      %p223 = scmp.lt.s32.totalorder %s19, 1
      %s224 = scalar_select %p223, %s19, 1
      %s225 = smul.addr %s224, 8
      %s226 = scalar_lea.vmem %s4, %s225
      %p228 = scmp.eq.s32.totalorder %s20, 0
      // Predicated region
      $region37: #{application_with_ssc_forward.3} parent=35 // pred_check
        %p229 = pneg %p228
      $region38: #{application_with_ssc_forward.3} parent=35 // pred_check_branch
        %231 = sbr.rel (%p229) target = $region40
      $region39: #{application_with_ssc_forward.3} parent=35 // pred_region
        %vm232 = vcmask 523264
        %233 = vst.msk [vmem:[#allocation2] sm:$0xff] %vm232, 0.0
      $region40: #{application_with_ssc_forward.3} parent=35 // pred_fallthru
        _
      %v234 = vld [vmem:[%s221] sm:$0xff]
      %v235 = vld [vmem:[%s221 + $0x8] sm:$0xff]
      %v236 = vld [vmem:[%s221 + $0x10] sm:$0xff]
      %v237 = vld [vmem:[%s221 + $0x18] sm:$0xff]
      %v238 = vld [vmem:[%s221 + $0x20] sm:$0xff]
      %v239 = vld [vmem:[%s221 + $0x28] sm:$0xff]
      %v240 = vld [vmem:[%s221 + $0x30] sm:$0xff]
      %v241 = vld [vmem:[%s221 + $0x38] sm:$0xff]
      %v242 = vld [vmem:[%s221 + $0x40] sm:$0xff]
      %v243 = vld [vmem:[%s221 + $0x48] sm:$0xff]
      %v244 = vld [vmem:[%s221 + $0x50] sm:$0xff]
      %v245 = vld [vmem:[%s221 + $0x58] sm:$0xff]
      %v246 = vld [vmem:[%s221 + $0x60] sm:$0xff]
      %v247 = vld [vmem:[%s221 + $0x68] sm:$0xff]
      %v248 = vld [vmem:[%s221 + $0x70] sm:$0xff]
      %v249 = vld [vmem:[%s221 + $0x78] sm:$0xff]
      %v250 = vld [vmem:[%s221 + $0x80] sm:$0xff]
      %v251 = vld [vmem:[%s221 + $0x88] sm:$0xff]
      %v252 = vld [vmem:[%s221 + $0x90] sm:$0xff]
      %v253 = vld [vmem:[%s221 + $0x98] sm:$0xff]
      %v254 = vld [vmem:[%s221 + $0xa0] sm:$0xff]
      %v255 = vld [vmem:[%s221 + $0xa8] sm:$0xff]
      %v256 = vld [vmem:[%s221 + $0xb0] sm:$0xff]
      %v257 = vld [vmem:[%s221 + $0xb8] sm:$0xff]
      %v258 = vld [vmem:[%s221 + $0xc0] sm:$0xff]
      %v259 = vld [vmem:[%s221 + $0xc8] sm:$0xff]
      %v260 = vld [vmem:[%s221 + $0xd0] sm:$0xff]
      %v261 = vld [vmem:[%s221 + $0xd8] sm:$0xff]
      %v262 = vld [vmem:[%s221 + $0xe0] sm:$0xff]
      %v263 = vld [vmem:[%s221 + $0xe8] sm:$0xff]
      %v264 = vld [vmem:[%s221 + $0xf0] sm:$0xff]
      %v265 = vld [vmem:[%s221 + $0xf8] sm:$0xff]
      %v266 = vld [vmem:[%s1] sm:$0xf]
      %v267 = vld [vmem:[%s1 + $0x4] sm:$0xf]
      %v268 = vld [vmem:[%s1 + $0x8] sm:$0xf]
      %v269 = vld [vmem:[%s1 + $0xc] sm:$0xf]
      %v270 = vld [vmem:[%s1 + $0x10] sm:$0xf]
      %v271 = vld [vmem:[%s1 + $0x14] sm:$0xf]
      %v272 = vld [vmem:[%s1 + $0x18] sm:$0xf]
      %v273 = vld [vmem:[%s1 + $0x1c] sm:$0xf]
      %v274 = vld [vmem:[%s1 + $0x20] sm:$0xf]
      %v275 = vld [vmem:[%s1 + $0x24] sm:$0xf]
      %v276 = vld [vmem:[%s1 + $0x28] sm:$0xf]
      %v277 = vld [vmem:[%s1 + $0x2c] sm:$0xf]
      %v278 = vld [vmem:[%s1 + $0x30] sm:$0xf]
      %v279 = vld [vmem:[%s1 + $0x34] sm:$0xf]
      %v280 = vld [vmem:[%s1 + $0x38] sm:$0xf]
      %v281 = vld [vmem:[%s1 + $0x3c] sm:$0xf]
      %v282 = vld [vmem:[%s1 + $0x40] sm:$0xf]
      %v283 = vld [vmem:[%s1 + $0x44] sm:$0xf]
      %v284 = vld [vmem:[%s1 + $0x48] sm:$0x3]
      %v317 = vunpack.c.l.b16 %v234
      %v318 = vunpack.c.h.b16 %v234
      %v319 = vunpack.c.l.b16 %v235
      %v320 = vunpack.c.h.b16 %v235
      %v321 = vunpack.c.l.b16 %v236
      %v322 = vunpack.c.h.b16 %v236
      %v323 = vunpack.c.l.b16 %v237
      %v324 = vunpack.c.h.b16 %v237
      %v325 = vunpack.c.l.b16 %v238
      %v326 = vunpack.c.h.b16 %v238
      %v327 = vunpack.c.l.b16 %v239
      %v328 = vunpack.c.h.b16 %v239
      %v329 = vunpack.c.l.b16 %v240
      %v330 = vunpack.c.h.b16 %v240
      %v331 = vunpack.c.l.b16 %v241
      %v332 = vunpack.c.h.b16 %v241
      %v333 = vunpack.c.l.b16 %v242
      %v334 = vunpack.c.h.b16 %v242
      %v335 = vunpack.c.l.b16 %v243
      %v336 = vunpack.c.h.b16 %v243
      %v337 = vunpack.c.l.b16 %v244
      %v338 = vunpack.c.h.b16 %v244
      %v339 = vunpack.c.l.b16 %v245
      %v340 = vunpack.c.h.b16 %v245
      %v341 = vunpack.c.l.b16 %v246
      %v342 = vunpack.c.h.b16 %v246
      %v343 = vunpack.c.l.b16 %v247
      %v344 = vunpack.c.h.b16 %v247
      %v345 = vunpack.c.l.b16 %v248
      %v346 = vunpack.c.h.b16 %v248
      %v347 = vunpack.c.l.b16 %v249
      %v348 = vunpack.c.h.b16 %v249
      %v349 = vunpack.c.l.b16 %v250
      %v350 = vunpack.c.h.b16 %v250
      %v351 = vunpack.c.l.b16 %v251
      %v352 = vunpack.c.h.b16 %v251
      %v353 = vunpack.c.l.b16 %v252
      %v354 = vunpack.c.h.b16 %v252
      %v355 = vunpack.c.l.b16 %v253
      %v356 = vunpack.c.h.b16 %v253
      %v357 = vunpack.c.l.b16 %v254
      %v358 = vunpack.c.h.b16 %v254
      %v359 = vunpack.c.l.b16 %v255
      %v360 = vunpack.c.h.b16 %v255
      %v361 = vunpack.c.l.b16 %v256
      %v362 = vunpack.c.h.b16 %v256
      %v363 = vunpack.c.l.b16 %v257
      %v364 = vunpack.c.h.b16 %v257
      %v365 = vunpack.c.l.b16 %v258
      %v366 = vunpack.c.h.b16 %v258
      %v367 = vunpack.c.l.b16 %v259
      %v368 = vunpack.c.h.b16 %v259
      %v369 = vunpack.c.l.b16 %v260
      %v370 = vunpack.c.h.b16 %v260
      %v371 = vunpack.c.l.b16 %v261
      %v372 = vunpack.c.h.b16 %v261
      %v373 = vunpack.c.l.b16 %v262
      %v374 = vunpack.c.h.b16 %v262
      %v375 = vunpack.c.l.b16 %v263
      %v376 = vunpack.c.h.b16 %v263
      %v377 = vunpack.c.l.b16 %v264
      %v378 = vunpack.c.h.b16 %v264
      %v379 = vunpack.c.l.b16 %v265
      %v380 = vunpack.c.h.b16 %v265
      %v381 = vpack.c.b16 %v319, %v317
      %v382 = vpack.c.b16 %v320, %v318
      %v383 = vpack.c.b16 %v323, %v321
      %v384 = vpack.c.b16 %v324, %v322
      %v385 = vpack.c.b16 %v327, %v325
      %v386 = vpack.c.b16 %v328, %v326
      %v387 = vpack.c.b16 %v331, %v329
      %v388 = vpack.c.b16 %v332, %v330
      %v389 = vpack.c.b16 %v335, %v333
      %v390 = vpack.c.b16 %v336, %v334
      %v391 = vpack.c.b16 %v339, %v337
      %v392 = vpack.c.b16 %v340, %v338
      %v393 = vpack.c.b16 %v343, %v341
      %v394 = vpack.c.b16 %v344, %v342
      %v395 = vpack.c.b16 %v347, %v345
      %v396 = vpack.c.b16 %v348, %v346
      %v397 = vpack.c.b16 %v351, %v349
      %v398 = vpack.c.b16 %v352, %v350
      %v399 = vpack.c.b16 %v355, %v353
      %v400 = vpack.c.b16 %v356, %v354
      %v401 = vpack.c.b16 %v359, %v357
      %v402 = vpack.c.b16 %v360, %v358
      %v403 = vpack.c.b16 %v363, %v361
      %v404 = vpack.c.b16 %v364, %v362
      %v405 = vpack.c.b16 %v367, %v365
      %v406 = vpack.c.b16 %v368, %v366
      %v407 = vpack.c.b16 %v371, %v369
      %v408 = vpack.c.b16 %v372, %v370
      %v409 = vpack.c.b16 %v375, %v373
      %v410 = vpack.c.b16 %v376, %v374
      %v411 = vpack.c.b16 %v379, %v377
      %v412 = vpack.c.b16 %v380, %v378
      %v448 = vunpack.c.l.b16 %v266
      %v449 = vunpack.c.l.b16 %v267
      %v450 = vunpack.c.l.b16 %v268
      %v451 = vunpack.c.l.b16 %v269
      %v452 = vunpack.c.l.b16 %v270
      %v453 = vunpack.c.l.b16 %v271
      %v454 = vunpack.c.l.b16 %v272
      %v455 = vunpack.c.l.b16 %v273
      %v456 = vunpack.c.l.b16 %v274
      %v457 = vunpack.c.l.b16 %v275
      %v458 = vunpack.c.l.b16 %v276
      %v459 = vunpack.c.l.b16 %v277
      %v460 = vunpack.c.l.b16 %v278
      %v461 = vunpack.c.l.b16 %v279
      %v462 = vunpack.c.l.b16 %v280
      %v463 = vunpack.c.l.b16 %v281
      %v464 = vunpack.c.l.b16 %v282
      %v465 = vunpack.c.l.b16 %v283
      %v466 = vunpack.c.l.b16 %v284
      %v467 = vpack.c.b16 %v449, %v448
      %v468 = vpack.c.b16 %v451, %v450
      %v469 = vpack.c.b16 %v453, %v452
      %v470 = vpack.c.b16 %v455, %v454
      %v471 = vpack.c.b16 %v457, %v456
      %v472 = vpack.c.b16 %v459, %v458
      %v473 = vpack.c.b16 %v461, %v460
      %v474 = vpack.c.b16 %v463, %v462
      %v475 = vpack.c.b16 %v465, %v464
      %v476 = vpack.c.b16 %v466, %v466
      %vm486 = vcmask 154624
      %v488 = vsel %vm486, %v382, 0
      %v491 = vsel %vm486, %v384, 0
      %v494 = vsel %vm486, %v386, 0
      %v497 = vsel %vm486, %v388, 0
      %v500 = vsel %vm486, %v390, 0
      %v503 = vsel %vm486, %v392, 0
      %v506 = vsel %vm486, %v394, 0
      %v509 = vsel %vm486, %v396, 0
      %v512 = vsel %vm486, %v398, 0
      %v515 = vsel %vm486, %v400, 0
      %v518 = vsel %vm486, %v402, 0
      %v521 = vsel %vm486, %v404, 0
      %v524 = vsel %vm486, %v406, 0
      %v527 = vsel %vm486, %v408, 0
      %v530 = vsel %vm486, %v410, 0
      %v533 = vsel %vm486, %v412, 0
      %vm535 = vcmask 1040384
      %vm536 = vcmask 1041408
      %v537 = vsel %vm535, 4294967295, 65535
      %v538 = vsel %vm536, %v537, 0
      %v540 = vand.u32 %v476, %v538
      %542 = vmatprep.subr.bf16.mxu0 0
      %543 = vmatpush1.bf16.msra.mxu0 %v474
      %544 = vmatprep.subr.bf16.mxu0 0
      %545 = vmatpush1.bf16.msra.mxu0 %v473
      %546 = vmatprep.subr.bf16.mxu0 0
      %547 = vmatpush1.bf16.msra.mxu0 %v472
      %548 = vmatprep.subr.bf16.mxu0 0
      %549 = vmatpush1.bf16.msra.mxu0 %v471
      %550 = vmatprep.subr.bf16.mxu0 0
      %551 = vmatpush1.bf16.msra.mxu0 %v470
      %552 = vmatprep.subr.bf16.mxu0 0
      %553 = vmatpush1.bf16.msra.mxu0 %v469
      %554 = vmatprep.subr.bf16.mxu0 0
      %555 = vmatpush1.bf16.msra.mxu0 %v468
      %556 = vmatprep.subr.bf16.mxu0 0
      %557 = vmatpush1.bf16.msra.mxu0 %v467
      %558 = vmatprep.subr.bf16.mxu0 0
      %559 = vmatpush2.bf16.msra.mxu0 0
      %560 = vmatprep.subr.bf16.mxu0 0
      %561 = vmatpush2.bf16.msra.mxu0 0
      %562 = vmatprep.subr.bf16.mxu0 0
      %563 = vmatpush2.bf16.msra.mxu0 0
      %564 = vmatprep.subr.bf16.mxu0 0
      %565 = vmatpush2.bf16.msra.mxu0 0
      %566 = vmatprep.subr.bf16.mxu0 0
      %567 = vmatpush2.bf16.msra.mxu0 0
      %568 = vmatprep.subr.bf16.mxu0 0
      %569 = vmatpush2.bf16.msra.mxu0 0
      %570 = vmatprep.subr.bf16.mxu0 0
      %571 = vmatpush2.bf16.msra.mxu0 %v540
      %572 = vmatprep.subr.bf16.mxu0 0
      %573 = vmatpush2.bf16.msra.mxu0 %v475
      %574 = vmatprep.mubr.bf16.mxu0 %v488
      %575 = vmatmul.mubr.bf16.gmra.mxu0 %v381
      %v576 = vpop.f32.mrf.mxu0
      %v577 = vadd.f32 0.0, %v576
      %v578 = vpop.f32.mrf.mxu0
      %v579 = vpop.f32.mrf.mxu0
      %v580 = vadd.f32 0.0, %v579
      %v581 = vpop.f32.mrf.mxu0
      %582 = vmatprep.mubr.bf16.mxu0 %v491
      %583 = vmatmul.mubr.bf16.gmra.mxu0 %v383
      %v584 = vpop.f32.mrf.mxu0
      %v585 = vadd.f32 0.0, %v584
      %v586 = vpop.f32.mrf.mxu0
      %v587 = vpop.f32.mrf.mxu0
      %v588 = vadd.f32 0.0, %v587
      %v589 = vpop.f32.mrf.mxu0
      %590 = vmatprep.mubr.bf16.mxu0 %v494
      %591 = vmatmul.mubr.bf16.gmra.mxu0 %v385
      %v592 = vpop.f32.mrf.mxu0
      %v593 = vadd.f32 0.0, %v592
      %v594 = vpop.f32.mrf.mxu0
      %v595 = vpop.f32.mrf.mxu0
      %v596 = vadd.f32 0.0, %v595
      %v597 = vpop.f32.mrf.mxu0
      %598 = vmatprep.mubr.bf16.mxu0 %v497
      %599 = vmatmul.mubr.bf16.gmra.mxu0 %v387
      %v600 = vpop.f32.mrf.mxu0
      %v601 = vadd.f32 0.0, %v600
      %v602 = vpop.f32.mrf.mxu0
      %v603 = vpop.f32.mrf.mxu0
      %v604 = vadd.f32 0.0, %v603
      %v605 = vpop.f32.mrf.mxu0
      %606 = vmatprep.mubr.bf16.mxu0 %v500
      %607 = vmatmul.mubr.bf16.gmra.mxu0 %v389
      %v608 = vpop.f32.mrf.mxu0
      %v609 = vadd.f32 0.0, %v608
      %v610 = vpop.f32.mrf.mxu0
      %v611 = vpop.f32.mrf.mxu0
      %v612 = vadd.f32 0.0, %v611
      %v613 = vpop.f32.mrf.mxu0
      %614 = vmatprep.mubr.bf16.mxu0 %v503
      %615 = vmatmul.mubr.bf16.gmra.mxu0 %v391
      %v616 = vpop.f32.mrf.mxu0
      %v617 = vadd.f32 0.0, %v616
      %v618 = vpop.f32.mrf.mxu0
      %v619 = vpop.f32.mrf.mxu0
      %v620 = vadd.f32 0.0, %v619
      %v621 = vpop.f32.mrf.mxu0
      %622 = vmatprep.mubr.bf16.mxu0 %v506
      %623 = vmatmul.mubr.bf16.gmra.mxu0 %v393
      %v624 = vpop.f32.mrf.mxu0
      %v625 = vadd.f32 0.0, %v624
      %v626 = vpop.f32.mrf.mxu0
      %v627 = vpop.f32.mrf.mxu0
      %v628 = vadd.f32 0.0, %v627
      %v629 = vpop.f32.mrf.mxu0
      %630 = vmatprep.mubr.bf16.mxu0 %v509
      %631 = vmatmul.mubr.bf16.gmra.mxu0 %v395
      %v632 = vpop.f32.mrf.mxu0
      %v633 = vadd.f32 0.0, %v632
      %v634 = vpop.f32.mrf.mxu0
      %v635 = vpop.f32.mrf.mxu0
      %v636 = vadd.f32 0.0, %v635
      %v637 = vpop.f32.mrf.mxu0
      %638 = vmatprep.mubr.bf16.mxu0 %v512
      %639 = vmatmul.mubr.bf16.gmra.mxu0 %v397
      %v640 = vpop.f32.mrf.mxu0
      %v641 = vadd.f32 0.0, %v640
      %v642 = vpop.f32.mrf.mxu0
      %v643 = vpop.f32.mrf.mxu0
      %v644 = vadd.f32 0.0, %v643
      %v645 = vpop.f32.mrf.mxu0
      %646 = vmatprep.mubr.bf16.mxu0 %v515
      %647 = vmatmul.mubr.bf16.gmra.mxu0 %v399
      %v648 = vpop.f32.mrf.mxu0
      %v649 = vadd.f32 0.0, %v648
      %v650 = vpop.f32.mrf.mxu0
      %v651 = vpop.f32.mrf.mxu0
      %v652 = vadd.f32 0.0, %v651
      %v653 = vpop.f32.mrf.mxu0
      %654 = vmatprep.mubr.bf16.mxu0 %v518
      %655 = vmatmul.mubr.bf16.gmra.mxu0 %v401
      %v656 = vpop.f32.mrf.mxu0
      %v657 = vadd.f32 0.0, %v656
      %v658 = vpop.f32.mrf.mxu0
      %v659 = vpop.f32.mrf.mxu0
      %v660 = vadd.f32 0.0, %v659
      %v661 = vpop.f32.mrf.mxu0
      %662 = vmatprep.mubr.bf16.mxu0 %v521
      %663 = vmatmul.mubr.bf16.gmra.mxu0 %v403
      %v664 = vpop.f32.mrf.mxu0
      %v665 = vadd.f32 0.0, %v664
      %v666 = vpop.f32.mrf.mxu0
      %v667 = vpop.f32.mrf.mxu0
      %v668 = vadd.f32 0.0, %v667
      %v669 = vpop.f32.mrf.mxu0
      %670 = vmatprep.mubr.bf16.mxu0 %v524
      %671 = vmatmul.mubr.bf16.gmra.mxu0 %v405
      %v672 = vpop.f32.mrf.mxu0
      %v673 = vadd.f32 0.0, %v672
      %v674 = vpop.f32.mrf.mxu0
      %v675 = vpop.f32.mrf.mxu0
      %v676 = vadd.f32 0.0, %v675
      %v677 = vpop.f32.mrf.mxu0
      %678 = vmatprep.mubr.bf16.mxu0 %v527
      %679 = vmatmul.mubr.bf16.gmra.mxu0 %v407
      %v680 = vpop.f32.mrf.mxu0
      %v681 = vadd.f32 0.0, %v680
      %v682 = vpop.f32.mrf.mxu0
      %v683 = vpop.f32.mrf.mxu0
      %v684 = vadd.f32 0.0, %v683
      %v685 = vpop.f32.mrf.mxu0
      %686 = vmatprep.mubr.bf16.mxu0 %v530
      %687 = vmatmul.mubr.bf16.gmra.mxu0 %v409
      %v688 = vpop.f32.mrf.mxu0
      %v689 = vadd.f32 0.0, %v688
      %v690 = vpop.f32.mrf.mxu0
      %v691 = vpop.f32.mrf.mxu0
      %v692 = vadd.f32 0.0, %v691
      %v693 = vpop.f32.mrf.mxu0
      %694 = vmatprep.mubr.bf16.mxu0 %v533
      %695 = vmatmul.mubr.bf16.gmra.mxu0 %v411
      %v696 = vpop.f32.mrf.mxu0
      %v697 = vadd.f32 0.0, %v696
      %v698 = vpop.f32.mrf.mxu0
      %v699 = vpop.f32.mrf.mxu0
      %v700 = vadd.f32 0.0, %v699
      %v701 = vpop.f32.mrf.mxu0
      %702 = vdwg.mxu0
      %v703 = vmax.f32 %v577, 0.0
      %v704 = vmax.f32 %v580, 0.0
      %v705 = vmax.f32 %v585, 0.0
      %v706 = vmax.f32 %v588, 0.0
      %v707 = vmax.f32 %v593, 0.0
      %v708 = vmax.f32 %v596, 0.0
      %v709 = vmax.f32 %v601, 0.0
      %v710 = vmax.f32 %v604, 0.0
      %v711 = vmax.f32 %v609, 0.0
      %v712 = vmax.f32 %v612, 0.0
      %v713 = vmax.f32 %v617, 0.0
      %v714 = vmax.f32 %v620, 0.0
      %v715 = vmax.f32 %v625, 0.0
      %v716 = vmax.f32 %v628, 0.0
      %v717 = vmax.f32 %v633, 0.0
      %v718 = vmax.f32 %v636, 0.0
      %v719 = vmax.f32 %v641, 0.0
      %v720 = vmax.f32 %v644, 0.0
      %v721 = vmax.f32 %v649, 0.0
      %v722 = vmax.f32 %v652, 0.0
      %v723 = vmax.f32 %v657, 0.0
      %v724 = vmax.f32 %v660, 0.0
      %v725 = vmax.f32 %v665, 0.0
      %v726 = vmax.f32 %v668, 0.0
      %v727 = vmax.f32 %v673, 0.0
      %v728 = vmax.f32 %v676, 0.0
      %v729 = vmax.f32 %v681, 0.0
      %v730 = vmax.f32 %v684, 0.0
      %v731 = vmax.f32 %v689, 0.0
      %v732 = vmax.f32 %v692, 0.0
      %v733 = vmax.f32 %v697, 0.0
      %v734 = vmax.f32 %v700, 0.0
      %v735 = vld [vmem:[#allocation2] sm:$0xff]
      %vm736 = vcmask 523264
      %v737 = vsel %vm736, %v703, 0.0
      %v738 = vsel %vm736, %v704, 0.0
      %v739 = vadd.f32 %v737, %v738
      %v740 = vsel %vm736, %v705, 0.0
      %v741 = vadd.f32 %v739, %v740
      %v742 = vsel %vm736, %v706, 0.0
      %v743 = vadd.f32 %v741, %v742
      %v744 = vsel %vm736, %v707, 0.0
      %v745 = vadd.f32 %v743, %v744
      %v746 = vsel %vm736, %v708, 0.0
      %v747 = vadd.f32 %v745, %v746
      %v748 = vsel %vm736, %v709, 0.0
      %v749 = vadd.f32 %v747, %v748
      %v750 = vsel %vm736, %v710, 0.0
      %v751 = vadd.f32 %v749, %v750
      %v752 = vsel %vm736, %v711, 0.0
      %v753 = vadd.f32 %v751, %v752
      %v754 = vsel %vm736, %v712, 0.0
      %v755 = vadd.f32 %v753, %v754
      %v756 = vsel %vm736, %v713, 0.0
      %v757 = vadd.f32 %v755, %v756
      %v758 = vsel %vm736, %v714, 0.0
      %v759 = vadd.f32 %v757, %v758
      %v760 = vsel %vm736, %v715, 0.0
      %v761 = vadd.f32 %v759, %v760
      %v762 = vsel %vm736, %v716, 0.0
      %v763 = vadd.f32 %v761, %v762
      %v764 = vsel %vm736, %v717, 0.0
      %v765 = vadd.f32 %v763, %v764
      %v766 = vsel %vm736, %v718, 0.0
      %v767 = vadd.f32 %v765, %v766
      %v768 = vsel %vm736, %v719, 0.0
      %v769 = vadd.f32 %v767, %v768
      %v770 = vsel %vm736, %v720, 0.0
      %v771 = vadd.f32 %v769, %v770
      %v772 = vsel %vm736, %v721, 0.0
      %v773 = vadd.f32 %v771, %v772
      %v774 = vsel %vm736, %v722, 0.0
      %v775 = vadd.f32 %v773, %v774
      %v776 = vsel %vm736, %v723, 0.0
      %v777 = vadd.f32 %v775, %v776
      %v778 = vsel %vm736, %v724, 0.0
      %v779 = vadd.f32 %v777, %v778
      %v780 = vsel %vm736, %v725, 0.0
      %v781 = vadd.f32 %v779, %v780
      %v782 = vsel %vm736, %v726, 0.0
      %v783 = vadd.f32 %v781, %v782
      %v784 = vsel %vm736, %v727, 0.0
      %v785 = vadd.f32 %v783, %v784
      %v786 = vsel %vm736, %v728, 0.0
      %v787 = vadd.f32 %v785, %v786
      %v788 = vsel %vm736, %v729, 0.0
      %v789 = vadd.f32 %v787, %v788
      %v790 = vsel %vm736, %v730, 0.0
      %v791 = vadd.f32 %v789, %v790
      %v792 = vsel %vm736, %v731, 0.0
      %v793 = vadd.f32 %v791, %v792
      %v794 = vsel %vm736, %v732, 0.0
      %v795 = vadd.f32 %v793, %v794
      %v796 = vsel %vm736, %v733, 0.0
      %v797 = vadd.f32 %v795, %v796
      %v798 = vsel %vm736, %v734, 0.0
      %v799 = vadd.f32 %v797, %v798
      %v800 = vadd.f32 %v735, %v799
      %801 = vst.msk [vmem:[#allocation2] sm:$0xff] %vm736, %v800
      // Predicated region
      $region41: #{application_with_ssc_forward.3} parent=35 // pred_check
        %p802 = pneg %p228
      $region42: #{application_with_ssc_forward.3} parent=35 // pred_check_branch
        %804 = sbr.rel (%p802) target = $region44
      $region43: #{application_with_ssc_forward.3} parent=35 // pred_region
        %v805 = vld [vmem:[#allocation2] sm:$0xff]
        %v806 = vsel %vm736, %v805, 0.0
        %v807 = vrot.slane %v806, 4
        %v808 = vadd.f32 %v806, %v807
        %v809 = vrot.slane %v808, 2
        %v810 = vadd.f32 %v808, %v809
        %v811 = vrot.slane %v810, 1
        %v812 = vadd.f32 %v810, %v811
        %v813 = vmul.f32 %v812, 0.00390625
        %v814 = vld [vmem:[%s2] sm:$0xff]
        %v815 = vld [vmem:[%s2 + $0x8] sm:$0xff]
        %v816 = vld [vmem:[%s2 + $0x10] sm:$0xff]
        %v817 = vld [vmem:[%s2 + $0x18] sm:$0xff]
        %v818 = vld [vmem:[%s2 + $0x20] sm:$0xff]
        %v819 = vld [vmem:[%s2 + $0x28] sm:$0xff]
        %v820 = vld [vmem:[%s2 + $0x30] sm:$0xff]
        %v821 = vld [vmem:[%s2 + $0x38] sm:$0xff]
        %v822 = vld [vmem:[%s3] sm:$0x1]
        %v824 = vsel %vm736, %v813, 0
        %826 = vmatprep.subr.mxu0 0.0
        %827 = vmatpush1.msra.mxu0 0.0
        %828 = vmatprep.subr.mxu0 0.0
        %829 = vmatpush1.msra.mxu0 0.0
        %830 = vmatprep.subr.mxu0 0.0
        %831 = vmatpush1.msra.mxu0 0.0
        %832 = vmatprep.subr.mxu0 0.0
        %833 = vmatpush1.msra.mxu0 0.0
        %834 = vmatprep.subr.mxu0 0.0
        %835 = vmatpush1.msra.mxu0 0.0
        %836 = vmatprep.subr.mxu0 0.0
        %837 = vmatpush1.msra.mxu0 0.0
        %838 = vmatprep.subr.mxu0 0.0
        %839 = vmatpush1.msra.mxu0 0.0
        %840 = vmatprep.subr.mxu0 0.0
        %841 = vmatpush1.msra.mxu0 0.0
        %842 = vmatprep.subr.mxu0 0.0
        %843 = vmatpush1.msra.mxu0 %v821
        %844 = vmatprep.subr.mxu0 0.0
        %845 = vmatpush1.msra.mxu0 %v820
        %846 = vmatprep.subr.mxu0 0.0
        %847 = vmatpush1.msra.mxu0 %v819
        %848 = vmatprep.subr.mxu0 0.0
        %849 = vmatpush1.msra.mxu0 %v818
        %850 = vmatprep.subr.mxu0 0.0
        %851 = vmatpush1.msra.mxu0 %v817
        %852 = vmatprep.subr.mxu0 0.0
        %853 = vmatpush1.msra.mxu0 %v816
        %854 = vmatprep.subr.mxu0 0.0
        %855 = vmatpush1.msra.mxu0 %v815
        %856 = vmatprep.subr.mxu0 0.0
        %857 = vmatpush1.msra.mxu0 %v814
        %858 = vmatprep.subr.mxu0 0.0
        %859 = vmatpush2.msra.mxu0 0.0
        %860 = vmatprep.subr.mxu0 0.0
        %861 = vmatpush2.msra.mxu0 0.0
        %862 = vmatprep.subr.mxu0 0.0
        %863 = vmatpush2.msra.mxu0 0.0
        %864 = vmatprep.subr.mxu0 0.0
        %865 = vmatpush2.msra.mxu0 0.0
        %866 = vmatprep.subr.mxu0 0.0
        %867 = vmatpush2.msra.mxu0 0.0
        %868 = vmatprep.subr.mxu0 0.0
        %869 = vmatpush2.msra.mxu0 0.0
        %870 = vmatprep.subr.mxu0 0.0
        %871 = vmatpush2.msra.mxu0 0.0
        %872 = vmatprep.subr.mxu0 0.0
        %873 = vmatpush2.msra.mxu0 0.0
        %874 = vmatprep.subr.mxu0 0.0
        %875 = vmatpush2.msra.mxu0 0.0
        %876 = vmatprep.subr.mxu0 0.0
        %877 = vmatpush2.msra.mxu0 0.0
        %878 = vmatprep.subr.mxu0 0.0
        %879 = vmatpush2.msra.mxu0 0.0
        %880 = vmatprep.subr.mxu0 0.0
        %881 = vmatpush2.msra.mxu0 0.0
        %882 = vmatprep.subr.mxu0 0.0
        %883 = vmatpush2.msra.mxu0 0.0
        %884 = vmatprep.subr.mxu0 0.0
        %885 = vmatpush2.msra.mxu0 0.0
        %886 = vmatprep.subr.mxu0 0.0
        %887 = vmatpush2.msra.mxu0 0.0
        %888 = vmatprep.subr.mxu0 0.0
        %889 = vmatpush2.msra.mxu0 0.0
        %890 = vmatprep.mubr.f32.mxu0 0.0
        %891 = vmatmul.mubr.f32.gmra.mxu0 %v824
        %v892 = vpop.f32.mrf.mxu0
        %v893 = vadd.f32 %v822, %v892
        %v894 = vpop.f32.mrf.mxu0
        %895 = vdwg.mxu0
        %v896 = vlaneseq
        %v897 = vshrl.u32 %v896, 7
        %v898 = vsub.s32 0, %v897
        %v899 = vrot.slane %v893, %v898
        %v900 = vadd.f32 %v899, 0.0
        %vm901 = vcmask 31744
        %902 = vst.msk [vmem:[%s226] sm:$0xff] %vm901, %v900
      $region44: #{application_with_ssc_forward.3} parent=35 // pred_fallthru
        _
      %p903 = scmp.lt.s32.totalorder %s19, 1
      %s904 = scalar_select %p903, %s19, 1
      %s905 = smul.addr %s904, 8
      %s906 = scalar_lea.vmem %s4, %s905
      // Predicated region
      $region45: #{application_with_ssc_forward.3} parent=35 // pred_check
        %p907 = pneg %p136
      $region46: #{application_with_ssc_forward.3} parent=35 // pred_check_branch
        %909 = sbr.rel (%p907) target = $region48
      $region47: #{application_with_ssc_forward.3} parent=35 // pred_region
        _
      $region48: #{application_with_ssc_forward.3} parent=35 // pred_fallthru
        _
    $region36: #{application_with_ssc_forward.3} parent=5 // pred_fallthru
      _
    %p910 = scmp.le.s32.totalorder 2, %s10
    // Predicated region
    $region49: #{application_with_ssc_forward.3} parent=5 // pred_check
      %p911 = pneg %p910
    $region50: #{application_with_ssc_forward.3} parent=5 // pred_check_branch
      %913 = sbr.rel (%p911) target = $region52
    $region51: #{application_with_ssc_forward.3} parent=5 // pred_region
      %s914 = ssub.s32 %s10, 2
      // Predicated region
      $region53: #{application_with_ssc_forward.3} parent=51 // pred_check
        %p915 = pneg %p142
      $region54: #{application_with_ssc_forward.3} parent=51 // pred_check_branch
        %917 = sbr.rel (%p915) target = $region56
      $region55: #{application_with_ssc_forward.3} parent=51 // pred_region
        %p918 = scmp.lt.s32.totalorder %s21, 1
        %s919 = scalar_select %p918, %s21, 1
        %s920 = smul.addr %s919, 8
        %s921 = scalar_lea.vmem %s4, %s920
      $region56: #{application_with_ssc_forward.3} parent=51 // pred_fallthru
        _
    $region52: #{application_with_ssc_forward.3} parent=5 // pred_fallthru
      _
  $region6: #{application_with_ssc_forward.3} parent=0 // loop_footer
    %s14 = sadd.s32 1, %s10
  $region7: #{application_with_ssc_forward.3} parent=0 // loop_footer_branch
    %9 = sbr.rel target = $region3
  $region8: #{application_with_ssc_forward.3} parent=0 // loop_exit
    _

</llo_original>
